<compile_context>
chip_gen: v5e
topology: v5e:2x2
jax: 0.10.0
libtpu: 0.0.40
codegen_flags: <defaults>
</compile_context>

<pallas_src>
import jax
import jax.numpy as jnp
from jax import lax
from jax.experimental import pallas as pl
from jax.experimental.pallas import tpu as pltpu

# ----------------------------- config ---------------------------------------
B          = 2
C_IN       = 3
IMG        = 32
PATCH      = 8
N_PATCH    = (IMG // PATCH) ** 2          # 16
SEQ        = N_PATCH + 1                  # 17 (CLS + patches)
D          = 32                           # vision hidden size
N_HEADS    = 4
HEAD_DIM   = D // N_HEADS                 # 8
MLP        = 4 * D                        # 128
N_LAYERS   = 3
LORA_LAYERS = (N_LAYERS - 2, N_LAYERS - 1)  # LoRA only on the last two layers
N_LORA     = len(LORA_LAYERS)
LORA_R     = 8
LORA_ALPHA = 16
LORA_SCALE = float(LORA_ALPHA) / float(LORA_R)
PROJ_DIM   = 16                           # CLIP projection_dim (512 in real model)
PATCH_FLAT = C_IN * PATCH * PATCH         # 192
EPS        = 1e-5

# TODO(synk): CLIPProcessor / PIL preprocessing and pretrained-weight loading have
#             no Pallas equivalent; weights here are deterministic synthetic tensors.
# NOTE: lora_dropout is inactive at inference time (identity), so it is omitted.


# --------------------------- kernel helpers ----------------------------------
def _ln(x, g, b):
    mu  = jnp.mean(x, axis=-1, keepdims=True)
    var = jnp.mean((x - mu) ** 2, axis=-1, keepdims=True)
    return (x - mu) * lax.rsqrt(var + EPS) * g + b


def _mm(a, b):
    return jnp.dot(a, b, preferred_element_type=jnp.float32)


# --------------------------- fused kernel ------------------------------------
def fused_kernel(patch_ref, wp_ref, cls_ref, pos_ref, pre_g_ref, pre_b_ref,
                 ln1g_ref, ln1b_ref, wq_ref, bq_ref, wk_ref, bk_ref,
                 wv_ref, bv_ref, wo_ref, bo_ref,
                 aq_ref, bql_ref, av_ref, bvl_ref,
                 ln2g_ref, ln2b_ref, w1_ref, b1_ref, w2_ref, b2_ref,
                 post_g_ref, post_b_ref, wproj_ref, wc_ref, bc_ref,
                 out_ref,
                 tok_scratch, attn_scratch):
    # ---- patch embed (conv stride==kernel == matmul) + CLS + pos + pre-LN ----
    patches = patch_ref[0]                                   # (N_PATCH, PATCH_FLAT)
    emb = _mm(patches, wp_ref[...])                          # (N_PATCH, D)
    # Assemble tokens with two direct slice stores (no sublane-axis concat).
    tok_scratch[0:1, :]   = cls_ref[...] + pos_ref[0:1, :]
    tok_scratch[1:SEQ, :] = emb + pos_ref[1:SEQ, :]
    x = _ln(tok_scratch[...], pre_g_ref[...], pre_b_ref[...])  # pre_layrnorm

    scale = HEAD_DIM ** -0.5
    for l in range(N_LAYERS):                                # static unroll, weights VMEM-resident
        # --- self-attention block (pre-LN) ---
        res = x
        xn = _ln(x, ln1g_ref[l], ln1b_ref[l])
        q = _mm(xn, wq_ref[l]) + bq_ref[l]
        k = _mm(xn, wk_ref[l]) + bk_ref[l]
        v = _mm(xn, wv_ref[l]) + bv_ref[l]
        if l in LORA_LAYERS:                                 # static gating: layer 0 skips LoRA entirely
            li = LORA_LAYERS.index(l)
            q = q + LORA_SCALE * _mm(_mm(xn, aq_ref[li]), bql_ref[li])   # LoRA on q_proj
            v = v + LORA_SCALE * _mm(_mm(xn, av_ref[li]), bvl_ref[li])   # LoRA on v_proj

        # Per-head attention; head outputs written into scratch column slices
        # (no jnp.concatenate of head results).
        for h in range(N_HEADS):
            sl = slice(h * HEAD_DIM, (h + 1) * HEAD_DIM)
            qh = q[:, sl] * scale
            kh = k[:, sl]
            vh = v[:, sl]
            s = lax.dot_general(qh, kh, (((1,), (1,)), ((), ())),
                                preferred_element_type=jnp.float32)      # (SEQ, SEQ)
            s = s - jnp.max(s, axis=-1, keepdims=True)
            p = jnp.exp(s)
            p = p / jnp.sum(p, axis=-1, keepdims=True)
            attn_scratch[:, sl] = _mm(p, vh)                 # (SEQ, HEAD_DIM)
        attn = attn_scratch[...]                             # (SEQ, D)
        x = res + _mm(attn, wo_ref[l]) + bo_ref[l]

        # --- MLP block (pre-LN, QuickGELU) ---
        res = x
        xn = _ln(x, ln2g_ref[l], ln2b_ref[l])
        u = _mm(xn, w1_ref[l]) + b1_ref[l]
        u = u * jax.nn.sigmoid(1.702 * u)                    # QuickGELU
        x = res + _mm(u, w2_ref[l]) + b2_ref[l]

    # ---- head: post-LN on CLS token, visual_projection (no bias), classifier ----
    pooled = _ln(x[0:1, :], post_g_ref[...], post_b_ref[...])
    feat = _mm(pooled, wproj_ref[...])                       # (1, PROJ_DIM)
    out_ref[0] = _mm(feat, wc_ref[...]) + bc_ref[...]        # (1, 1)


# --------------------------- pallas_call wrapper ------------------------------
def _wspec(shape):
    n = len(shape)
    return pl.BlockSpec(shape, lambda i, _n=n: (0,) * _n)


@jax.jit
def vlm_detector_forward(pixel_values, p):
    # NCHW -> [B, N_PATCH, C*P*P] with (c, kh, kw) flatten order (matches conv weight)
    xp = pixel_values.reshape(B, C_IN, IMG // PATCH, PATCH, IMG // PATCH, PATCH)
    xp = xp.transpose(0, 2, 4, 1, 3, 5).reshape(B, N_PATCH, PATCH_FLAT)

    args = [xp, p["wp_t"], p["cls"], p["pos"], p["pre_g"], p["pre_b"],
            p["ln1_g"], p["ln1_b"], p["wq"], p["bq"], p["wk"], p["bk"],
            p["wv"], p["bv"], p["wo"], p["bo"],
            p["aq"], p["bq_l"], p["av"], p["bv_l"],
            p["ln2_g"], p["ln2_b"], p["w1"], p["b1"], p["w2"], p["b2"],
            p["post_g"], p["post_b"], p["wproj_t"], p["wc_t"], p["bc"]]

    in_specs = ([pl.BlockSpec((1, N_PATCH, PATCH_FLAT), lambda i: (i, 0, 0))] +
                [_wspec(tuple(a.shape)) for a in args[1:]])

    out = pl.pallas_call(
        fused_kernel,
        out_shape=jax.ShapeDtypeStruct((B, 1, 1), jnp.float32),
        grid=(B,),
        in_specs=in_specs,
        out_specs=pl.BlockSpec((1, 1, 1), lambda i: (i, 0, 0)),
        scratch_shapes=[pltpu.VMEM((SEQ, D), jnp.float32),   # token assembly
                        pltpu.VMEM((SEQ, D), jnp.float32)],  # per-head attention output
        compiler_params=pltpu.CompilerParams(dimension_semantics=("parallel",)),
    )(*args)
    return out[:, 0, 0]                                      # squeeze -> (B,)


# --------------------------- parameters ---------------------------------------
def init_params(key):
    ks = jax.random.split(key, 8 + N_LAYERS)

    def nrm(k, shape, s=0.02):
        return s * jax.random.normal(k, shape, dtype=jnp.float32)

    p = {}
    # patch_embedding conv weight (D, C, P, P), bias=False in CLIP; stored as (C*P*P, D)
    p["wp_t"] = nrm(ks[0], (D, C_IN, PATCH, PATCH)).reshape(D, PATCH_FLAT).T
    p["cls"]  = nrm(ks[1], (1, D))
    p["pos"]  = nrm(ks[2], (SEQ, D))
    p["pre_g"]  = jnp.ones((1, D), jnp.float32)
    p["pre_b"]  = jnp.zeros((1, D), jnp.float32)
    p["post_g"] = jnp.ones((1, D), jnp.float32)
    p["post_b"] = jnp.zeros((1, D), jnp.float32)
    p["wproj_t"] = nrm(ks[3], (PROJ_DIM, D)).T               # visual_projection, no bias
    p["wc_t"]    = nrm(ks[4], (1, PROJ_DIM)).T               # classifier weight
    p["bc"]      = jnp.zeros((1, 1), jnp.float32)            # classifier bias

    names = ["ln1_g", "ln1_b", "wq", "bq", "wk", "bk", "wv", "bv",
             "wo", "bo", "ln2_g", "ln2_b", "w1", "b1", "w2", "b2"]
    stack = {n: [] for n in names}
    lora  = {n: [] for n in ["aq", "bq_l", "av", "bv_l"]}

    for l in range(N_LAYERS):
        kl = jax.random.split(ks[5 + l], 12)
        stack["ln1_g"].append(jnp.ones((1, D), jnp.float32))
        stack["ln1_b"].append(jnp.zeros((1, D), jnp.float32))
        # nn.Linear weights are (out, in); stored transposed as (in, out)
        stack["wq"].append(nrm(kl[0], (D, D)).T)
        stack["bq"].append(jnp.zeros((1, D), jnp.float32))
        stack["wk"].append(nrm(kl[1], (D, D)).T)
        stack["bk"].append(jnp.zeros((1, D), jnp.float32))
        stack["wv"].append(nrm(kl[2], (D, D)).T)
        stack["bv"].append(jnp.zeros((1, D), jnp.float32))
        stack["wo"].append(nrm(kl[3], (D, D)).T)
        stack["bo"].append(jnp.zeros((1, D), jnp.float32))
        stack["ln2_g"].append(jnp.ones((1, D), jnp.float32))
        stack["ln2_b"].append(jnp.zeros((1, D), jnp.float32))
        stack["w1"].append(nrm(kl[4], (MLP, D)).T)
        stack["b1"].append(jnp.zeros((1, MLP), jnp.float32))
        stack["w2"].append(nrm(kl[5], (D, MLP)).T)
        stack["b2"].append(jnp.zeros((1, D), jnp.float32))
        if l in LORA_LAYERS:
            # LoRA A: (r, in) -> stored (in, r);  LoRA B: (out, r) -> stored (r, out)
            lora["aq"].append(nrm(kl[6], (LORA_R, D)).T)
            lora["bq_l"].append(nrm(kl[7], (D, LORA_R)).T)
            lora["av"].append(nrm(kl[8], (LORA_R, D)).T)
            lora["bv_l"].append(nrm(kl[9], (D, LORA_R)).T)

    for n, v in stack.items():
        p[n] = jnp.stack(v, axis=0)                          # (N_LAYERS, ...)
    for n, v in lora.items():
        p[n] = jnp.stack(v, axis=0)                          # (N_LORA, ...)
    return p


# --------------------------- main ----------------------------------------------
if __name__ == "__main__":
    key = jax.random.PRNGKey(0)
    k_in, k_par = jax.random.split(key)
    pixel_values = jax.random.normal(k_in, (B, C_IN, IMG, IMG), dtype=jnp.float32)
    params = init_params(k_par)

    logits = vlm_detector_forward(pixel_values, params)
    logits = jax.block_until_ready(logits)

    assert logits.shape == (B,), logits.shape
    assert logits.dtype == jnp.float32
    assert bool(jnp.all(jnp.isfinite(logits)))
    print("KERNEL_OK")
</pallas_src>

<mosaic_0001>
module attributes {stable_mosaic.version = 11 : i64} {
  func.func @fused_kernel(%arg0: i32, %arg1: memref<1x16x192xf32, #tpu.memory_space<vmem>>, %arg2: memref<192x32xf32, #tpu.memory_space<vmem>>, %arg3: memref<1x32xf32, #tpu.memory_space<vmem>>, %arg4: memref<17x32xf32, #tpu.memory_space<vmem>>, %arg5: memref<1x32xf32, #tpu.memory_space<vmem>>, %arg6: memref<1x32xf32, #tpu.memory_space<vmem>>, %arg7: memref<3x1x32xf32, #tpu.memory_space<vmem>>, %arg8: memref<3x1x32xf32, #tpu.memory_space<vmem>>, %arg9: memref<3x32x32xf32, #tpu.memory_space<vmem>>, %arg10: memref<3x1x32xf32, #tpu.memory_space<vmem>>, %arg11: memref<3x32x32xf32, #tpu.memory_space<vmem>>, %arg12: memref<3x1x32xf32, #tpu.memory_space<vmem>>, %arg13: memref<3x32x32xf32, #tpu.memory_space<vmem>>, %arg14: memref<3x1x32xf32, #tpu.memory_space<vmem>>, %arg15: memref<3x32x32xf32, #tpu.memory_space<vmem>>, %arg16: memref<3x1x32xf32, #tpu.memory_space<vmem>>, %arg17: memref<2x32x8xf32, #tpu.memory_space<vmem>>, %arg18: memref<2x8x32xf32, #tpu.memory_space<vmem>>, %arg19: memref<2x32x8xf32, #tpu.memory_space<vmem>>, %arg20: memref<2x8x32xf32, #tpu.memory_space<vmem>>, %arg21: memref<3x1x32xf32, #tpu.memory_space<vmem>>, %arg22: memref<3x1x32xf32, #tpu.memory_space<vmem>>, %arg23: memref<3x32x128xf32, #tpu.memory_space<vmem>>, %arg24: memref<3x1x128xf32, #tpu.memory_space<vmem>>, %arg25: memref<3x128x32xf32, #tpu.memory_space<vmem>>, %arg26: memref<3x1x32xf32, #tpu.memory_space<vmem>>, %arg27: memref<1x32xf32, #tpu.memory_space<vmem>>, %arg28: memref<1x32xf32, #tpu.memory_space<vmem>>, %arg29: memref<32x16xf32, #tpu.memory_space<vmem>>, %arg30: memref<16x1xf32, #tpu.memory_space<vmem>>, %arg31: memref<1x1xf32, #tpu.memory_space<vmem>>, %arg32: memref<1x1x1xf32, #tpu.memory_space<vmem>>, %arg33: memref<17x32xf32, #tpu.memory_space<vmem>>, %arg34: memref<17x32xf32, #tpu.memory_space<vmem>>) attributes {dimension_semantics = [#tpu.dimension_semantics<parallel>], iteration_bounds = array<i64: 2>, scalar_prefetch = 0 : i64, scratch_operands = 2 : i64, tpu.core_type = #tpu.core_type<tc>, window_params = [{transform_indices = @transform_0, window_bounds = array<i64: 1, 16, 192>}, {pipeline_mode = #tpu.pipeline_mode<synchronous>, transform_indices = @transform_1, window_bounds = array<i64: 192, 32>}, {pipeline_mode = #tpu.pipeline_mode<synchronous>, transform_indices = @transform_2, window_bounds = array<i64: 1, 32>}, {pipeline_mode = #tpu.pipeline_mode<synchronous>, transform_indices = @transform_3, window_bounds = array<i64: 17, 32>}, {pipeline_mode = #tpu.pipeline_mode<synchronous>, transform_indices = @transform_4, window_bounds = array<i64: 1, 32>}, {pipeline_mode = #tpu.pipeline_mode<synchronous>, transform_indices = @transform_5, window_bounds = array<i64: 1, 32>}, {pipeline_mode = #tpu.pipeline_mode<synchronous>, transform_indices = @transform_6, window_bounds = array<i64: 3, 1, 32>}, {pipeline_mode = #tpu.pipeline_mode<synchronous>, transform_indices = @transform_7, window_bounds = array<i64: 3, 1, 32>}, {pipeline_mode = #tpu.pipeline_mode<synchronous>, transform_indices = @transform_8, window_bounds = array<i64: 3, 32, 32>}, {pipeline_mode = #tpu.pipeline_mode<synchronous>, transform_indices = @transform_9, window_bounds = array<i64: 3, 1, 32>}, {pipeline_mode = #tpu.pipeline_mode<synchronous>, transform_indices = @transform_10, window_bounds = array<i64: 3, 32, 32>}, {pipeline_mode = #tpu.pipeline_mode<synchronous>, transform_indices = @transform_11, window_bounds = array<i64: 3, 1, 32>}, {pipeline_mode = #tpu.pipeline_mode<synchronous>, transform_indices = @transform_12, window_bounds = array<i64: 3, 32, 32>}, {pipeline_mode = #tpu.pipeline_mode<synchronous>, transform_indices = @transform_13, window_bounds = array<i64: 3, 1, 32>}, {pipeline_mode = #tpu.pipeline_mode<synchronous>, transform_indices = @transform_14, window_bounds = array<i64: 3, 32, 32>}, {pipeline_mode = #tpu.pipeline_mode<synchronous>, transform_indices = @transform_15, window_bounds = array<i64: 3, 1, 32>}, {pipeline_mode = #tpu.pipeline_mode<synchronous>, transform_indices = @transform_16, window_bounds = array<i64: 2, 32, 8>}, {pipeline_mode = #tpu.pipeline_mode<synchronous>, transform_indices = @transform_17, window_bounds = array<i64: 2, 8, 32>}, {pipeline_mode = #tpu.pipeline_mode<synchronous>, transform_indices = @transform_18, window_bounds = array<i64: 2, 32, 8>}, {pipeline_mode = #tpu.pipeline_mode<synchronous>, transform_indices = @transform_19, window_bounds = array<i64: 2, 8, 32>}, {pipeline_mode = #tpu.pipeline_mode<synchronous>, transform_indices = @transform_20, window_bounds = array<i64: 3, 1, 32>}, {pipeline_mode = #tpu.pipeline_mode<synchronous>, transform_indices = @transform_21, window_bounds = array<i64: 3, 1, 32>}, {pipeline_mode = #tpu.pipeline_mode<synchronous>, transform_indices = @transform_22, window_bounds = array<i64: 3, 32, 128>}, {pipeline_mode = #tpu.pipeline_mode<synchronous>, transform_indices = @transform_23, window_bounds = array<i64: 3, 1, 128>}, {pipeline_mode = #tpu.pipeline_mode<synchronous>, transform_indices = @transform_24, window_bounds = array<i64: 3, 128, 32>}, {pipeline_mode = #tpu.pipeline_mode<synchronous>, transform_indices = @transform_25, window_bounds = array<i64: 3, 1, 32>}, {pipeline_mode = #tpu.pipeline_mode<synchronous>, transform_indices = @transform_26, window_bounds = array<i64: 1, 32>}, {pipeline_mode = #tpu.pipeline_mode<synchronous>, transform_indices = @transform_27, window_bounds = array<i64: 1, 32>}, {pipeline_mode = #tpu.pipeline_mode<synchronous>, transform_indices = @transform_28, window_bounds = array<i64: 32, 16>}, {pipeline_mode = #tpu.pipeline_mode<synchronous>, transform_indices = @transform_29, window_bounds = array<i64: 16, 1>}, {pipeline_mode = #tpu.pipeline_mode<synchronous>, transform_indices = @transform_30, window_bounds = array<i64: 1, 1>}, {transform_indices = @transform_31, window_bounds = array<i64: 1, 1, 1>}]} {
    %c0 = arith.constant 0 : index
    %c0_0 = arith.constant 0 : index
    %c0_1 = arith.constant 0 : index
    %0 = vector.load %arg1[%c0, %c0_0, %c0_1] : memref<1x16x192xf32, #tpu.memory_space<vmem>>, vector<1x16x192xf32>
    %1 = vector.shape_cast %0 : vector<1x16x192xf32> to vector<16x192xf32>
    %c0_2 = arith.constant 0 : index
    %c0_3 = arith.constant 0 : index
    %2 = vector.load %arg2[%c0_2, %c0_3] : memref<192x32xf32, #tpu.memory_space<vmem>>, vector<192x32xf32>
    %cst = arith.constant dense<0.000000e+00> : vector<16x32xf32>
    %3 = tpu.matmul %1, %2, %cst {dimension_numbers = #tpu.dot_dimension_numbers<[1], [0], [0], [1], [0, 0, 1, 1], [], []>} : vector<16x192xf32>, vector<192x32xf32>, vector<16x32xf32> -> vector<16x32xf32>
    %c0_4 = arith.constant 0 : index
    %c0_5 = arith.constant 0 : index
    %4 = vector.load %arg3[%c0_4, %c0_5] : memref<1x32xf32, #tpu.memory_space<vmem>>, vector<1x32xf32>
    %c0_6 = arith.constant 0 : index
    %c0_7 = arith.constant 0 : index
    %5 = vector.load %arg4[%c0_6, %c0_7] : memref<17x32xf32, #tpu.memory_space<vmem>>, vector<1x32xf32>
    %6 = arith.addf %4, %5 : vector<1x32xf32>
    %c0_8 = arith.constant 0 : index
    %c0_9 = arith.constant 0 : index
    %7 = vector.load %arg33[%c0_8, %c0_9] : memref<17x32xf32, #tpu.memory_space<vmem>>, vector<1x32xf32>
    tpu.vector_store %arg33[%c0_8, %c0_9], %6 {strides = array<i32>} : memref<17x32xf32, #tpu.memory_space<vmem>>, vector<1x32xf32>,
    %c1 = arith.constant 1 : index
    %c0_10 = arith.constant 0 : index
    %8 = vector.load %arg4[%c1, %c0_10] : memref<17x32xf32, #tpu.memory_space<vmem>>, vector<16x32xf32>
    %9 = arith.addf %3, %8 : vector<16x32xf32>
    %c1_11 = arith.constant 1 : index
    %c0_12 = arith.constant 0 : index
    %10 = vector.load %arg33[%c1_11, %c0_12] : memref<17x32xf32, #tpu.memory_space<vmem>>, vector<16x32xf32>
    tpu.vector_store %arg33[%c1_11, %c0_12], %9 {strides = array<i32>} : memref<17x32xf32, #tpu.memory_space<vmem>>, vector<16x32xf32>,
    %c0_13 = arith.constant 0 : index
    %c0_14 = arith.constant 0 : index
    %11 = vector.load %arg33[%c0_13, %c0_14] : memref<17x32xf32, #tpu.memory_space<vmem>>, vector<17x32xf32>
    %c0_15 = arith.constant 0 : index
    %c0_16 = arith.constant 0 : index
    %12 = vector.load %arg5[%c0_15, %c0_16] : memref<1x32xf32, #tpu.memory_space<vmem>>, vector<1x32xf32>
    %c0_17 = arith.constant 0 : index
    %c0_18 = arith.constant 0 : index
    %13 = vector.load %arg6[%c0_17, %c0_18] : memref<1x32xf32, #tpu.memory_space<vmem>>, vector<1x32xf32>
    %cst_19 = arith.constant dense<0.000000e+00> : vector<17xf32>
    %14 = vector.multi_reduction <add>, %11, %cst_19 [1] : vector<17x32xf32> to vector<17xf32>
    %15 = vector.shape_cast %14 : vector<17xf32> to vector<17x1xf32>
    %cst_20 = arith.constant 3.200000e+01 : f32
    %16 = vector.broadcast %cst_20 : f32 to vector<17x1xf32>
    %17 = arith.divf %15, %16 : vector<17x1xf32>
    %18 = vector.broadcast %17 : vector<17x1xf32> to vector<17x32xf32>
    %19 = arith.subf %11, %18 : vector<17x32xf32>
    %20 = arith.mulf %19, %19 : vector<17x32xf32>
    %cst_21 = arith.constant dense<0.000000e+00> : vector<17xf32>
    %21 = vector.multi_reduction <add>, %20, %cst_21 [1] : vector<17x32xf32> to vector<17xf32>
    %22 = vector.shape_cast %21 : vector<17xf32> to vector<17x1xf32>
    %cst_22 = arith.constant 3.200000e+01 : f32
    %23 = vector.broadcast %cst_22 : f32 to vector<17x1xf32>
    %24 = arith.divf %22, %23 : vector<17x1xf32>
    %25 = vector.broadcast %17 : vector<17x1xf32> to vector<17x32xf32>
    %26 = arith.subf %11, %25 : vector<17x32xf32>
    %cst_23 = arith.constant 9.99999974E-6 : f32
    %27 = vector.broadcast %cst_23 : f32 to vector<17x1xf32>
    %28 = arith.addf %24, %27 : vector<17x1xf32>
    %29 = math.rsqrt %28 : vector<17x1xf32>
    %30 = vector.broadcast %29 : vector<17x1xf32> to vector<17x32xf32>
    %31 = arith.mulf %26, %30 : vector<17x32xf32>
    %32 = vector.broadcast %12 : vector<1x32xf32> to vector<17x32xf32>
    %33 = arith.mulf %31, %32 : vector<17x32xf32>
    %34 = vector.broadcast %13 : vector<1x32xf32> to vector<17x32xf32>
    %35 = arith.addf %33, %34 : vector<17x32xf32>
    %c0_24 = arith.constant 0 : index
    %c0_25 = arith.constant 0 : index
    %c0_26 = arith.constant 0 : index
    %36 = vector.load %arg7[%c0_24, %c0_25, %c0_26] : memref<3x1x32xf32, #tpu.memory_space<vmem>>, vector<1x1x32xf32>
    %37 = vector.shape_cast %36 : vector<1x1x32xf32> to vector<1x32xf32>
    %c0_27 = arith.constant 0 : index
    %c0_28 = arith.constant 0 : index
    %c0_29 = arith.constant 0 : index
    %38 = vector.load %arg8[%c0_27, %c0_28, %c0_29] : memref<3x1x32xf32, #tpu.memory_space<vmem>>, vector<1x1x32xf32>
    %39 = vector.shape_cast %38 : vector<1x1x32xf32> to vector<1x32xf32>
    %cst_30 = arith.constant dense<0.000000e+00> : vector<17xf32>
    %40 = vector.multi_reduction <add>, %35, %cst_30 [1] : vector<17x32xf32> to vector<17xf32>
    %41 = vector.shape_cast %40 : vector<17xf32> to vector<17x1xf32>
    %cst_31 = arith.constant 3.200000e+01 : f32
    %42 = vector.broadcast %cst_31 : f32 to vector<17x1xf32>
    %43 = arith.divf %41, %42 : vector<17x1xf32>
    %44 = vector.broadcast %43 : vector<17x1xf32> to vector<17x32xf32>
    %45 = arith.subf %35, %44 : vector<17x32xf32>
    %46 = arith.mulf %45, %45 : vector<17x32xf32>
    %cst_32 = arith.constant dense<0.000000e+00> : vector<17xf32>
    %47 = vector.multi_reduction <add>, %46, %cst_32 [1] : vector<17x32xf32> to vector<17xf32>
    %48 = vector.shape_cast %47 : vector<17xf32> to vector<17x1xf32>
    %cst_33 = arith.constant 3.200000e+01 : f32
    %49 = vector.broadcast %cst_33 : f32 to vector<17x1xf32>
    %50 = arith.divf %48, %49 : vector<17x1xf32>
    %51 = vector.broadcast %43 : vector<17x1xf32> to vector<17x32xf32>
    %52 = arith.subf %35, %51 : vector<17x32xf32>
    %cst_34 = arith.constant 9.99999974E-6 : f32
    %53 = vector.broadcast %cst_34 : f32 to vector<17x1xf32>
    %54 = arith.addf %50, %53 : vector<17x1xf32>
    %55 = math.rsqrt %54 : vector<17x1xf32>
    %56 = vector.broadcast %55 : vector<17x1xf32> to vector<17x32xf32>
    %57 = arith.mulf %52, %56 : vector<17x32xf32>
    %58 = vector.broadcast %37 : vector<1x32xf32> to vector<17x32xf32>
    %59 = arith.mulf %57, %58 : vector<17x32xf32>
    %60 = vector.broadcast %39 : vector<1x32xf32> to vector<17x32xf32>
    %61 = arith.addf %59, %60 : vector<17x32xf32>
    %c0_35 = arith.constant 0 : index
    %c0_36 = arith.constant 0 : index
    %c0_37 = arith.constant 0 : index
    %62 = vector.load %arg9[%c0_35, %c0_36, %c0_37] : memref<3x32x32xf32, #tpu.memory_space<vmem>>, vector<1x32x32xf32>
    %63 = vector.shape_cast %62 : vector<1x32x32xf32> to vector<32x32xf32>
    %cst_38 = arith.constant dense<0.000000e+00> : vector<17x32xf32>
    %64 = tpu.matmul %61, %63, %cst_38 {dimension_numbers = #tpu.dot_dimension_numbers<[1], [0], [0], [1], [0, 0, 1, 1], [], []>} : vector<17x32xf32>, vector<32x32xf32>, vector<17x32xf32> -> vector<17x32xf32>
    %c0_39 = arith.constant 0 : index
    %c0_40 = arith.constant 0 : index
    %c0_41 = arith.constant 0 : index
    %65 = vector.load %arg10[%c0_39, %c0_40, %c0_41] : memref<3x1x32xf32, #tpu.memory_space<vmem>>, vector<1x1x32xf32>
    %66 = vector.shape_cast %65 : vector<1x1x32xf32> to vector<1x32xf32>
    %67 = vector.broadcast %66 : vector<1x32xf32> to vector<17x32xf32>
    %68 = arith.addf %64, %67 : vector<17x32xf32>
    %c0_42 = arith.constant 0 : index
    %c0_43 = arith.constant 0 : index
    %c0_44 = arith.constant 0 : index
    %69 = vector.load %arg11[%c0_42, %c0_43, %c0_44] : memref<3x32x32xf32, #tpu.memory_space<vmem>>, vector<1x32x32xf32>
    %70 = vector.shape_cast %69 : vector<1x32x32xf32> to vector<32x32xf32>
    %cst_45 = arith.constant dense<0.000000e+00> : vector<17x32xf32>
    %71 = tpu.matmul %61, %70, %cst_45 {dimension_numbers = #tpu.dot_dimension_numbers<[1], [0], [0], [1], [0, 0, 1, 1], [], []>} : vector<17x32xf32>, vector<32x32xf32>, vector<17x32xf32> -> vector<17x32xf32>
    %c0_46 = arith.constant 0 : index
    %c0_47 = arith.constant 0 : index
    %c0_48 = arith.constant 0 : index
    %72 = vector.load %arg12[%c0_46, %c0_47, %c0_48] : memref<3x1x32xf32, #tpu.memory_space<vmem>>, vector<1x1x32xf32>
    %73 = vector.shape_cast %72 : vector<1x1x32xf32> to vector<1x32xf32>
    %74 = vector.broadcast %73 : vector<1x32xf32> to vector<17x32xf32>
    %75 = arith.addf %71, %74 : vector<17x32xf32>
    %c0_49 = arith.constant 0 : index
    %c0_50 = arith.constant 0 : index
    %c0_51 = arith.constant 0 : index
    %76 = vector.load %arg13[%c0_49, %c0_50, %c0_51] : memref<3x32x32xf32, #tpu.memory_space<vmem>>, vector<1x32x32xf32>
    %77 = vector.shape_cast %76 : vector<1x32x32xf32> to vector<32x32xf32>
    %cst_52 = arith.constant dense<0.000000e+00> : vector<17x32xf32>
    %78 = tpu.matmul %61, %77, %cst_52 {dimension_numbers = #tpu.dot_dimension_numbers<[1], [0], [0], [1], [0, 0, 1, 1], [], []>} : vector<17x32xf32>, vector<32x32xf32>, vector<17x32xf32> -> vector<17x32xf32>
    %c0_53 = arith.constant 0 : index
    %c0_54 = arith.constant 0 : index
    %c0_55 = arith.constant 0 : index
    %79 = vector.load %arg14[%c0_53, %c0_54, %c0_55] : memref<3x1x32xf32, #tpu.memory_space<vmem>>, vector<1x1x32xf32>
    %80 = vector.shape_cast %79 : vector<1x1x32xf32> to vector<1x32xf32>
    %81 = vector.broadcast %80 : vector<1x32xf32> to vector<17x32xf32>
    %82 = arith.addf %78, %81 : vector<17x32xf32>
    %83 = vector.extract_strided_slice %68 {offsets = [0, 0], sizes = [17, 8], strides = [1, 1]} : vector<17x32xf32> to vector<17x8xf32>
    %cst_56 = arith.constant 0.353553385 : f32
    %84 = vector.broadcast %cst_56 : f32 to vector<17x8xf32>
    %85 = arith.mulf %83, %84 : vector<17x8xf32>
    %86 = vector.extract_strided_slice %75 {offsets = [0, 0], sizes = [17, 8], strides = [1, 1]} : vector<17x32xf32> to vector<17x8xf32>
    %87 = vector.extract_strided_slice %82 {offsets = [0, 0], sizes = [17, 8], strides = [1, 1]} : vector<17x32xf32> to vector<17x8xf32>
    %cst_57 = arith.constant dense<0.000000e+00> : vector<17x17xf32>
    %88 = tpu.matmul %85, %86, %cst_57 {dimension_numbers = #tpu.dot_dimension_numbers<[1], [1], [0], [0], [0, 0, 1, 0], [], []>} : vector<17x8xf32>, vector<17x8xf32>, vector<17x17xf32> -> vector<17x17xf32>
    %cst_58 = arith.constant dense<0xFF800000> : vector<17xf32>
    %89 = vector.multi_reduction <maximumf>, %88, %cst_58 [1] : vector<17x17xf32> to vector<17xf32>
    %90 = vector.shape_cast %89 : vector<17xf32> to vector<17x1xf32>
    %91 = vector.broadcast %90 : vector<17x1xf32> to vector<17x17xf32>
    %92 = arith.subf %88, %91 : vector<17x17xf32>
    %93 = math.exp %92 : vector<17x17xf32>
    %cst_59 = arith.constant dense<0.000000e+00> : vector<17xf32>
    %94 = vector.multi_reduction <add>, %93, %cst_59 [1] : vector<17x17xf32> to vector<17xf32>
    %95 = vector.shape_cast %94 : vector<17xf32> to vector<17x1xf32>
    %96 = vector.broadcast %95 : vector<17x1xf32> to vector<17x17xf32>
    %97 = arith.divf %93, %96 : vector<17x17xf32>
    %cst_60 = arith.constant dense<0.000000e+00> : vector<17x8xf32>
    %98 = tpu.matmul %97, %87, %cst_60 {dimension_numbers = #tpu.dot_dimension_numbers<[1], [0], [0], [1], [0, 0, 1, 1], [], []>} : vector<17x17xf32>, vector<17x8xf32>, vector<17x8xf32> -> vector<17x8xf32>
    %c0_61 = arith.constant 0 : index
    %c0_62 = arith.constant 0 : index
    %99 = vector.load %arg34[%c0_61, %c0_62] : memref<17x32xf32, #tpu.memory_space<vmem>>, vector<17x8xf32>
    tpu.vector_store %arg34[%c0_61, %c0_62], %98 {strides = array<i32>} : memref<17x32xf32, #tpu.memory_space<vmem>>, vector<17x8xf32>,
    %100 = vector.extract_strided_slice %68 {offsets = [0, 8], sizes = [17, 8], strides = [1, 1]} : vector<17x32xf32> to vector<17x8xf32>
    %cst_63 = arith.constant 0.353553385 : f32
    %101 = vector.broadcast %cst_63 : f32 to vector<17x8xf32>
    %102 = arith.mulf %100, %101 : vector<17x8xf32>
    %103 = vector.extract_strided_slice %75 {offsets = [0, 8], sizes = [17, 8], strides = [1, 1]} : vector<17x32xf32> to vector<17x8xf32>
    %104 = vector.extract_strided_slice %82 {offsets = [0, 8], sizes = [17, 8], strides = [1, 1]} : vector<17x32xf32> to vector<17x8xf32>
    %cst_64 = arith.constant dense<0.000000e+00> : vector<17x17xf32>
    %105 = tpu.matmul %102, %103, %cst_64 {dimension_numbers = #tpu.dot_dimension_numbers<[1], [1], [0], [0], [0, 0, 1, 0], [], []>} : vector<17x8xf32>, vector<17x8xf32>, vector<17x17xf32> -> vector<17x17xf32>
    %cst_65 = arith.constant dense<0xFF800000> : vector<17xf32>
    %106 = vector.multi_reduction <maximumf>, %105, %cst_65 [1] : vector<17x17xf32> to vector<17xf32>
    %107 = vector.shape_cast %106 : vector<17xf32> to vector<17x1xf32>
    %108 = vector.broadcast %107 : vector<17x1xf32> to vector<17x17xf32>
    %109 = arith.subf %105, %108 : vector<17x17xf32>
    %110 = math.exp %109 : vector<17x17xf32>
    %cst_66 = arith.constant dense<0.000000e+00> : vector<17xf32>
    %111 = vector.multi_reduction <add>, %110, %cst_66 [1] : vector<17x17xf32> to vector<17xf32>
    %112 = vector.shape_cast %111 : vector<17xf32> to vector<17x1xf32>
    %113 = vector.broadcast %112 : vector<17x1xf32> to vector<17x17xf32>
    %114 = arith.divf %110, %113 : vector<17x17xf32>
    %cst_67 = arith.constant dense<0.000000e+00> : vector<17x8xf32>
    %115 = tpu.matmul %114, %104, %cst_67 {dimension_numbers = #tpu.dot_dimension_numbers<[1], [0], [0], [1], [0, 0, 1, 1], [], []>} : vector<17x17xf32>, vector<17x8xf32>, vector<17x8xf32> -> vector<17x8xf32>
    %c0_68 = arith.constant 0 : index
    %c8 = arith.constant 8 : index
    %116 = vector.load %arg34[%c0_68, %c8] : memref<17x32xf32, #tpu.memory_space<vmem>>, vector<17x8xf32>
    tpu.vector_store %arg34[%c0_68, %c8], %115 {strides = array<i32>} : memref<17x32xf32, #tpu.memory_space<vmem>>, vector<17x8xf32>,
    %117 = vector.extract_strided_slice %68 {offsets = [0, 16], sizes = [17, 8], strides = [1, 1]} : vector<17x32xf32> to vector<17x8xf32>
    %cst_69 = arith.constant 0.353553385 : f32
    %118 = vector.broadcast %cst_69 : f32 to vector<17x8xf32>
    %119 = arith.mulf %117, %118 : vector<17x8xf32>
    %120 = vector.extract_strided_slice %75 {offsets = [0, 16], sizes = [17, 8], strides = [1, 1]} : vector<17x32xf32> to vector<17x8xf32>
    %121 = vector.extract_strided_slice %82 {offsets = [0, 16], sizes = [17, 8], strides = [1, 1]} : vector<17x32xf32> to vector<17x8xf32>
    %cst_70 = arith.constant dense<0.000000e+00> : vector<17x17xf32>
    %122 = tpu.matmul %119, %120, %cst_70 {dimension_numbers = #tpu.dot_dimension_numbers<[1], [1], [0], [0], [0, 0, 1, 0], [], []>} : vector<17x8xf32>, vector<17x8xf32>, vector<17x17xf32> -> vector<17x17xf32>
    %cst_71 = arith.constant dense<0xFF800000> : vector<17xf32>
    %123 = vector.multi_reduction <maximumf>, %122, %cst_71 [1] : vector<17x17xf32> to vector<17xf32>
    %124 = vector.shape_cast %123 : vector<17xf32> to vector<17x1xf32>
    %125 = vector.broadcast %124 : vector<17x1xf32> to vector<17x17xf32>
    %126 = arith.subf %122, %125 : vector<17x17xf32>
    %127 = math.exp %126 : vector<17x17xf32>
    %cst_72 = arith.constant dense<0.000000e+00> : vector<17xf32>
    %128 = vector.multi_reduction <add>, %127, %cst_72 [1] : vector<17x17xf32> to vector<17xf32>
    %129 = vector.shape_cast %128 : vector<17xf32> to vector<17x1xf32>
    %130 = vector.broadcast %129 : vector<17x1xf32> to vector<17x17xf32>
    %131 = arith.divf %127, %130 : vector<17x17xf32>
    %cst_73 = arith.constant dense<0.000000e+00> : vector<17x8xf32>
    %132 = tpu.matmul %131, %121, %cst_73 {dimension_numbers = #tpu.dot_dimension_numbers<[1], [0], [0], [1], [0, 0, 1, 1], [], []>} : vector<17x17xf32>, vector<17x8xf32>, vector<17x8xf32> -> vector<17x8xf32>
    %c0_74 = arith.constant 0 : index
    %c16 = arith.constant 16 : index
    %133 = vector.load %arg34[%c0_74, %c16] : memref<17x32xf32, #tpu.memory_space<vmem>>, vector<17x8xf32>
    tpu.vector_store %arg34[%c0_74, %c16], %132 {strides = array<i32>} : memref<17x32xf32, #tpu.memory_space<vmem>>, vector<17x8xf32>,
    %134 = vector.extract_strided_slice %68 {offsets = [0, 24], sizes = [17, 8], strides = [1, 1]} : vector<17x32xf32> to vector<17x8xf32>
    %cst_75 = arith.constant 0.353553385 : f32
    %135 = vector.broadcast %cst_75 : f32 to vector<17x8xf32>
    %136 = arith.mulf %134, %135 : vector<17x8xf32>
    %137 = vector.extract_strided_slice %75 {offsets = [0, 24], sizes = [17, 8], strides = [1, 1]} : vector<17x32xf32> to vector<17x8xf32>
    %138 = vector.extract_strided_slice %82 {offsets = [0, 24], sizes = [17, 8], strides = [1, 1]} : vector<17x32xf32> to vector<17x8xf32>
    %cst_76 = arith.constant dense<0.000000e+00> : vector<17x17xf32>
    %139 = tpu.matmul %136, %137, %cst_76 {dimension_numbers = #tpu.dot_dimension_numbers<[1], [1], [0], [0], [0, 0, 1, 0], [], []>} : vector<17x8xf32>, vector<17x8xf32>, vector<17x17xf32> -> vector<17x17xf32>
    %cst_77 = arith.constant dense<0xFF800000> : vector<17xf32>
    %140 = vector.multi_reduction <maximumf>, %139, %cst_77 [1] : vector<17x17xf32> to vector<17xf32>
    %141 = vector.shape_cast %140 : vector<17xf32> to vector<17x1xf32>
    %142 = vector.broadcast %141 : vector<17x1xf32> to vector<17x17xf32>
    %143 = arith.subf %139, %142 : vector<17x17xf32>
    %144 = math.exp %143 : vector<17x17xf32>
    %cst_78 = arith.constant dense<0.000000e+00> : vector<17xf32>
    %145 = vector.multi_reduction <add>, %144, %cst_78 [1] : vector<17x17xf32> to vector<17xf32>
    %146 = vector.shape_cast %145 : vector<17xf32> to vector<17x1xf32>
    %147 = vector.broadcast %146 : vector<17x1xf32> to vector<17x17xf32>
    %148 = arith.divf %144, %147 : vector<17x17xf32>
    %cst_79 = arith.constant dense<0.000000e+00> : vector<17x8xf32>
    %149 = tpu.matmul %148, %138, %cst_79 {dimension_numbers = #tpu.dot_dimension_numbers<[1], [0], [0], [1], [0, 0, 1, 1], [], []>} : vector<17x17xf32>, vector<17x8xf32>, vector<17x8xf32> -> vector<17x8xf32>
    %c0_80 = arith.constant 0 : index
    %c24 = arith.constant 24 : index
    %150 = vector.load %arg34[%c0_80, %c24] : memref<17x32xf32, #tpu.memory_space<vmem>>, vector<17x8xf32>
    tpu.vector_store %arg34[%c0_80, %c24], %149 {strides = array<i32>} : memref<17x32xf32, #tpu.memory_space<vmem>>, vector<17x8xf32>,
    %c0_81 = arith.constant 0 : index
    %c0_82 = arith.constant 0 : index
    %151 = vector.load %arg34[%c0_81, %c0_82] : memref<17x32xf32, #tpu.memory_space<vmem>>, vector<17x32xf32>
    %c0_83 = arith.constant 0 : index
    %c0_84 = arith.constant 0 : index
    %c0_85 = arith.constant 0 : index
    %152 = vector.load %arg15[%c0_83, %c0_84, %c0_85] : memref<3x32x32xf32, #tpu.memory_space<vmem>>, vector<1x32x32xf32>
    %153 = vector.shape_cast %152 : vector<1x32x32xf32> to vector<32x32xf32>
    %cst_86 = arith.constant dense<0.000000e+00> : vector<17x32xf32>
    %154 = tpu.matmul %151, %153, %cst_86 {dimension_numbers = #tpu.dot_dimension_numbers<[1], [0], [0], [1], [0, 0, 1, 1], [], []>} : vector<17x32xf32>, vector<32x32xf32>, vector<17x32xf32> -> vector<17x32xf32>
    %155 = arith.addf %35, %154 : vector<17x32xf32>
    %c0_87 = arith.constant 0 : index
    %c0_88 = arith.constant 0 : index
    %c0_89 = arith.constant 0 : index
    %156 = vector.load %arg16[%c0_87, %c0_88, %c0_89] : memref<3x1x32xf32, #tpu.memory_space<vmem>>, vector<1x1x32xf32>
    %157 = vector.shape_cast %156 : vector<1x1x32xf32> to vector<1x32xf32>
    %158 = vector.broadcast %157 : vector<1x32xf32> to vector<17x32xf32>
    %159 = arith.addf %155, %158 : vector<17x32xf32>
    %c0_90 = arith.constant 0 : index
    %c0_91 = arith.constant 0 : index
    %c0_92 = arith.constant 0 : index
    %160 = vector.load %arg21[%c0_90, %c0_91, %c0_92] : memref<3x1x32xf32, #tpu.memory_space<vmem>>, vector<1x1x32xf32>
    %161 = vector.shape_cast %160 : vector<1x1x32xf32> to vector<1x32xf32>
    %c0_93 = arith.constant 0 : index
    %c0_94 = arith.constant 0 : index
    %c0_95 = arith.constant 0 : index
    %162 = vector.load %arg22[%c0_93, %c0_94, %c0_95] : memref<3x1x32xf32, #tpu.memory_space<vmem>>, vector<1x1x32xf32>
    %163 = vector.shape_cast %162 : vector<1x1x32xf32> to vector<1x32xf32>
    %cst_96 = arith.constant dense<0.000000e+00> : vector<17xf32>
    %164 = vector.multi_reduction <add>, %159, %cst_96 [1] : vector<17x32xf32> to vector<17xf32>
    %165 = vector.shape_cast %164 : vector<17xf32> to vector<17x1xf32>
    %cst_97 = arith.constant 3.200000e+01 : f32
    %166 = vector.broadcast %cst_97 : f32 to vector<17x1xf32>
    %167 = arith.divf %165, %166 : vector<17x1xf32>
    %168 = vector.broadcast %167 : vector<17x1xf32> to vector<17x32xf32>
    %169 = arith.subf %159, %168 : vector<17x32xf32>
    %170 = arith.mulf %169, %169 : vector<17x32xf32>
    %cst_98 = arith.constant dense<0.000000e+00> : vector<17xf32>
    %171 = vector.multi_reduction <add>, %170, %cst_98 [1] : vector<17x32xf32> to vector<17xf32>
    %172 = vector.shape_cast %171 : vector<17xf32> to vector<17x1xf32>
    %cst_99 = arith.constant 3.200000e+01 : f32
    %173 = vector.broadcast %cst_99 : f32 to vector<17x1xf32>
    %174 = arith.divf %172, %173 : vector<17x1xf32>
    %175 = vector.broadcast %167 : vector<17x1xf32> to vector<17x32xf32>
    %176 = arith.subf %159, %175 : vector<17x32xf32>
    %cst_100 = arith.constant 9.99999974E-6 : f32
    %177 = vector.broadcast %cst_100 : f32 to vector<17x1xf32>
    %178 = arith.addf %174, %177 : vector<17x1xf32>
    %179 = math.rsqrt %178 : vector<17x1xf32>
    %180 = vector.broadcast %179 : vector<17x1xf32> to vector<17x32xf32>
    %181 = arith.mulf %176, %180 : vector<17x32xf32>
    %182 = vector.broadcast %161 : vector<1x32xf32> to vector<17x32xf32>
    %183 = arith.mulf %181, %182 : vector<17x32xf32>
    %184 = vector.broadcast %163 : vector<1x32xf32> to vector<17x32xf32>
    %185 = arith.addf %183, %184 : vector<17x32xf32>
    %c0_101 = arith.constant 0 : index
    %c0_102 = arith.constant 0 : index
    %c0_103 = arith.constant 0 : index
    %186 = vector.load %arg23[%c0_101, %c0_102, %c0_103] : memref<3x32x128xf32, #tpu.memory_space<vmem>>, vector<1x32x128xf32>
    %187 = vector.shape_cast %186 : vector<1x32x128xf32> to vector<32x128xf32>
    %cst_104 = arith.constant dense<0.000000e+00> : vector<17x128xf32>
    %188 = tpu.matmul %185, %187, %cst_104 {dimension_numbers = #tpu.dot_dimension_numbers<[1], [0], [0], [1], [0, 0, 1, 1], [], []>} : vector<17x32xf32>, vector<32x128xf32>, vector<17x128xf32> -> vector<17x128xf32>
    %c0_105 = arith.constant 0 : index
    %c0_106 = arith.constant 0 : index
    %c0_107 = arith.constant 0 : index
    %189 = vector.load %arg24[%c0_105, %c0_106, %c0_107] : memref<3x1x128xf32, #tpu.memory_space<vmem>>, vector<1x1x128xf32>
    %190 = vector.shape_cast %189 : vector<1x1x128xf32> to vector<1x128xf32>
    %191 = vector.broadcast %190 : vector<1x128xf32> to vector<17x128xf32>
    %192 = arith.addf %188, %191 : vector<17x128xf32>
    %cst_108 = arith.constant 1.702000e+00 : f32
    %193 = vector.broadcast %cst_108 : f32 to vector<17x128xf32>
    %194 = arith.mulf %193, %192 : vector<17x128xf32>
    %195 = arith.negf %194 : vector<17x128xf32>
    %196 = math.exp %195 : vector<17x128xf32>
    %cst_109 = arith.constant 1.000000e+00 : f32
    %197 = vector.broadcast %cst_109 : f32 to vector<17x128xf32>
    %198 = arith.addf %197, %196 : vector<17x128xf32>
    %199 = arith.divf %197, %198 : vector<17x128xf32>
    %200 = arith.mulf %192, %199 : vector<17x128xf32>
    %c0_110 = arith.constant 0 : index
    %c0_111 = arith.constant 0 : index
    %c0_112 = arith.constant 0 : index
    %201 = vector.load %arg25[%c0_110, %c0_111, %c0_112] : memref<3x128x32xf32, #tpu.memory_space<vmem>>, vector<1x128x32xf32>
    %202 = vector.shape_cast %201 : vector<1x128x32xf32> to vector<128x32xf32>
    %cst_113 = arith.constant dense<0.000000e+00> : vector<17x32xf32>
    %203 = tpu.matmul %200, %202, %cst_113 {dimension_numbers = #tpu.dot_dimension_numbers<[1], [0], [0], [1], [0, 0, 1, 1], [], []>} : vector<17x128xf32>, vector<128x32xf32>, vector<17x32xf32> -> vector<17x32xf32>
    %204 = arith.addf %159, %203 : vector<17x32xf32>
    %c0_114 = arith.constant 0 : index
    %c0_115 = arith.constant 0 : index
    %c0_116 = arith.constant 0 : index
    %205 = vector.load %arg26[%c0_114, %c0_115, %c0_116] : memref<3x1x32xf32, #tpu.memory_space<vmem>>, vector<1x1x32xf32>
    %206 = vector.shape_cast %205 : vector<1x1x32xf32> to vector<1x32xf32>
    %207 = vector.broadcast %206 : vector<1x32xf32> to vector<17x32xf32>
    %208 = arith.addf %204, %207 : vector<17x32xf32>
    %c1_117 = arith.constant 1 : index
    %c0_118 = arith.constant 0 : index
    %c0_119 = arith.constant 0 : index
    %209 = vector.load %arg7[%c1_117, %c0_118, %c0_119] : memref<3x1x32xf32, #tpu.memory_space<vmem>>, vector<1x1x32xf32>
    %210 = vector.shape_cast %209 : vector<1x1x32xf32> to vector<1x32xf32>
    %c1_120 = arith.constant 1 : index
    %c0_121 = arith.constant 0 : index
    %c0_122 = arith.constant 0 : index
    %211 = vector.load %arg8[%c1_120, %c0_121, %c0_122] : memref<3x1x32xf32, #tpu.memory_space<vmem>>, vector<1x1x32xf32>
    %212 = vector.shape_cast %211 : vector<1x1x32xf32> to vector<1x32xf32>
    %cst_123 = arith.constant dense<0.000000e+00> : vector<17xf32>
    %213 = vector.multi_reduction <add>, %208, %cst_123 [1] : vector<17x32xf32> to vector<17xf32>
    %214 = vector.shape_cast %213 : vector<17xf32> to vector<17x1xf32>
    %cst_124 = arith.constant 3.200000e+01 : f32
    %215 = vector.broadcast %cst_124 : f32 to vector<17x1xf32>
    %216 = arith.divf %214, %215 : vector<17x1xf32>
    %217 = vector.broadcast %216 : vector<17x1xf32> to vector<17x32xf32>
    %218 = arith.subf %208, %217 : vector<17x32xf32>
    %219 = arith.mulf %218, %218 : vector<17x32xf32>
    %cst_125 = arith.constant dense<0.000000e+00> : vector<17xf32>
    %220 = vector.multi_reduction <add>, %219, %cst_125 [1] : vector<17x32xf32> to vector<17xf32>
    %221 = vector.shape_cast %220 : vector<17xf32> to vector<17x1xf32>
    %cst_126 = arith.constant 3.200000e+01 : f32
    %222 = vector.broadcast %cst_126 : f32 to vector<17x1xf32>
    %223 = arith.divf %221, %222 : vector<17x1xf32>
    %224 = vector.broadcast %216 : vector<17x1xf32> to vector<17x32xf32>
    %225 = arith.subf %208, %224 : vector<17x32xf32>
    %cst_127 = arith.constant 9.99999974E-6 : f32
    %226 = vector.broadcast %cst_127 : f32 to vector<17x1xf32>
    %227 = arith.addf %223, %226 : vector<17x1xf32>
    %228 = math.rsqrt %227 : vector<17x1xf32>
    %229 = vector.broadcast %228 : vector<17x1xf32> to vector<17x32xf32>
    %230 = arith.mulf %225, %229 : vector<17x32xf32>
    %231 = vector.broadcast %210 : vector<1x32xf32> to vector<17x32xf32>
    %232 = arith.mulf %230, %231 : vector<17x32xf32>
    %233 = vector.broadcast %212 : vector<1x32xf32> to vector<17x32xf32>
    %234 = arith.addf %232, %233 : vector<17x32xf32>
    %c1_128 = arith.constant 1 : index
    %c0_129 = arith.constant 0 : index
    %c0_130 = arith.constant 0 : index
    %235 = vector.load %arg9[%c1_128, %c0_129, %c0_130] : memref<3x32x32xf32, #tpu.memory_space<vmem>>, vector<1x32x32xf32>
    %236 = vector.shape_cast %235 : vector<1x32x32xf32> to vector<32x32xf32>
    %cst_131 = arith.constant dense<0.000000e+00> : vector<17x32xf32>
    %237 = tpu.matmul %234, %236, %cst_131 {dimension_numbers = #tpu.dot_dimension_numbers<[1], [0], [0], [1], [0, 0, 1, 1], [], []>} : vector<17x32xf32>, vector<32x32xf32>, vector<17x32xf32> -> vector<17x32xf32>
    %c1_132 = arith.constant 1 : index
    %c0_133 = arith.constant 0 : index
    %c0_134 = arith.constant 0 : index
    %238 = vector.load %arg10[%c1_132, %c0_133, %c0_134] : memref<3x1x32xf32, #tpu.memory_space<vmem>>, vector<1x1x32xf32>
    %239 = vector.shape_cast %238 : vector<1x1x32xf32> to vector<1x32xf32>
    %240 = vector.broadcast %239 : vector<1x32xf32> to vector<17x32xf32>
    %241 = arith.addf %237, %240 : vector<17x32xf32>
    %c1_135 = arith.constant 1 : index
    %c0_136 = arith.constant 0 : index
    %c0_137 = arith.constant 0 : index
    %242 = vector.load %arg11[%c1_135, %c0_136, %c0_137] : memref<3x32x32xf32, #tpu.memory_space<vmem>>, vector<1x32x32xf32>
    %243 = vector.shape_cast %242 : vector<1x32x32xf32> to vector<32x32xf32>
    %cst_138 = arith.constant dense<0.000000e+00> : vector<17x32xf32>
    %244 = tpu.matmul %234, %243, %cst_138 {dimension_numbers = #tpu.dot_dimension_numbers<[1], [0], [0], [1], [0, 0, 1, 1], [], []>} : vector<17x32xf32>, vector<32x32xf32>, vector<17x32xf32> -> vector<17x32xf32>
    %c1_139 = arith.constant 1 : index
    %c0_140 = arith.constant 0 : index
    %c0_141 = arith.constant 0 : index
    %245 = vector.load %arg12[%c1_139, %c0_140, %c0_141] : memref<3x1x32xf32, #tpu.memory_space<vmem>>, vector<1x1x32xf32>
    %246 = vector.shape_cast %245 : vector<1x1x32xf32> to vector<1x32xf32>
    %247 = vector.broadcast %246 : vector<1x32xf32> to vector<17x32xf32>
    %248 = arith.addf %244, %247 : vector<17x32xf32>
    %c1_142 = arith.constant 1 : index
    %c0_143 = arith.constant 0 : index
    %c0_144 = arith.constant 0 : index
    %249 = vector.load %arg13[%c1_142, %c0_143, %c0_144] : memref<3x32x32xf32, #tpu.memory_space<vmem>>, vector<1x32x32xf32>
    %250 = vector.shape_cast %249 : vector<1x32x32xf32> to vector<32x32xf32>
    %cst_145 = arith.constant dense<0.000000e+00> : vector<17x32xf32>
    %251 = tpu.matmul %234, %250, %cst_145 {dimension_numbers = #tpu.dot_dimension_numbers<[1], [0], [0], [1], [0, 0, 1, 1], [], []>} : vector<17x32xf32>, vector<32x32xf32>, vector<17x32xf32> -> vector<17x32xf32>
    %c1_146 = arith.constant 1 : index
    %c0_147 = arith.constant 0 : index
    %c0_148 = arith.constant 0 : index
    %252 = vector.load %arg14[%c1_146, %c0_147, %c0_148] : memref<3x1x32xf32, #tpu.memory_space<vmem>>, vector<1x1x32xf32>
    %253 = vector.shape_cast %252 : vector<1x1x32xf32> to vector<1x32xf32>
    %254 = vector.broadcast %253 : vector<1x32xf32> to vector<17x32xf32>
    %255 = arith.addf %251, %254 : vector<17x32xf32>
    %c0_149 = arith.constant 0 : index
    %c0_150 = arith.constant 0 : index
    %c0_151 = arith.constant 0 : index
    %256 = vector.load %arg17[%c0_149, %c0_150, %c0_151] : memref<2x32x8xf32, #tpu.memory_space<vmem>>, vector<1x32x8xf32>
    %257 = vector.shape_cast %256 : vector<1x32x8xf32> to vector<32x8xf32>
    %cst_152 = arith.constant dense<0.000000e+00> : vector<17x8xf32>
    %258 = tpu.matmul %234, %257, %cst_152 {dimension_numbers = #tpu.dot_dimension_numbers<[1], [0], [0], [1], [0, 0, 1, 1], [], []>} : vector<17x32xf32>, vector<32x8xf32>, vector<17x8xf32> -> vector<17x8xf32>
    %c0_153 = arith.constant 0 : index
    %c0_154 = arith.constant 0 : index
    %c0_155 = arith.constant 0 : index
    %259 = vector.load %arg18[%c0_153, %c0_154, %c0_155] : memref<2x8x32xf32, #tpu.memory_space<vmem>>, vector<1x8x32xf32>
    %260 = vector.shape_cast %259 : vector<1x8x32xf32> to vector<8x32xf32>
    %cst_156 = arith.constant dense<0.000000e+00> : vector<17x32xf32>
    %261 = tpu.matmul %258, %260, %cst_156 {dimension_numbers = #tpu.dot_dimension_numbers<[1], [0], [0], [1], [0, 0, 1, 1], [], []>} : vector<17x8xf32>, vector<8x32xf32>, vector<17x32xf32> -> vector<17x32xf32>
    %cst_157 = arith.constant 2.000000e+00 : f32
    %262 = vector.broadcast %cst_157 : f32 to vector<17x32xf32>
    %263 = arith.mulf %262, %261 : vector<17x32xf32>
    %264 = arith.addf %241, %263 : vector<17x32xf32>
    %c0_158 = arith.constant 0 : index
    %c0_159 = arith.constant 0 : index
    %c0_160 = arith.constant 0 : index
    %265 = vector.load %arg19[%c0_158, %c0_159, %c0_160] : memref<2x32x8xf32, #tpu.memory_space<vmem>>, vector<1x32x8xf32>
    %266 = vector.shape_cast %265 : vector<1x32x8xf32> to vector<32x8xf32>
    %cst_161 = arith.constant dense<0.000000e+00> : vector<17x8xf32>
    %267 = tpu.matmul %234, %266, %cst_161 {dimension_numbers = #tpu.dot_dimension_numbers<[1], [0], [0], [1], [0, 0, 1, 1], [], []>} : vector<17x32xf32>, vector<32x8xf32>, vector<17x8xf32> -> vector<17x8xf32>
    %c0_162 = arith.constant 0 : index
    %c0_163 = arith.constant 0 : index
    %c0_164 = arith.constant 0 : index
    %268 = vector.load %arg20[%c0_162, %c0_163, %c0_164] : memref<2x8x32xf32, #tpu.memory_space<vmem>>, vector<1x8x32xf32>
    %269 = vector.shape_cast %268 : vector<1x8x32xf32> to vector<8x32xf32>
    %cst_165 = arith.constant dense<0.000000e+00> : vector<17x32xf32>
    %270 = tpu.matmul %267, %269, %cst_165 {dimension_numbers = #tpu.dot_dimension_numbers<[1], [0], [0], [1], [0, 0, 1, 1], [], []>} : vector<17x8xf32>, vector<8x32xf32>, vector<17x32xf32> -> vector<17x32xf32>
    %cst_166 = arith.constant 2.000000e+00 : f32
    %271 = vector.broadcast %cst_166 : f32 to vector<17x32xf32>
    %272 = arith.mulf %271, %270 : vector<17x32xf32>
    %273 = arith.addf %255, %272 : vector<17x32xf32>
    %274 = vector.extract_strided_slice %264 {offsets = [0, 0], sizes = [17, 8], strides = [1, 1]} : vector<17x32xf32> to vector<17x8xf32>
    %cst_167 = arith.constant 0.353553385 : f32
    %275 = vector.broadcast %cst_167 : f32 to vector<17x8xf32>
    %276 = arith.mulf %274, %275 : vector<17x8xf32>
    %277 = vector.extract_strided_slice %248 {offsets = [0, 0], sizes = [17, 8], strides = [1, 1]} : vector<17x32xf32> to vector<17x8xf32>
    %278 = vector.extract_strided_slice %273 {offsets = [0, 0], sizes = [17, 8], strides = [1, 1]} : vector<17x32xf32> to vector<17x8xf32>
    %cst_168 = arith.constant dense<0.000000e+00> : vector<17x17xf32>
    %279 = tpu.matmul %276, %277, %cst_168 {dimension_numbers = #tpu.dot_dimension_numbers<[1], [1], [0], [0], [0, 0, 1, 0], [], []>} : vector<17x8xf32>, vector<17x8xf32>, vector<17x17xf32> -> vector<17x17xf32>
    %cst_169 = arith.constant dense<0xFF800000> : vector<17xf32>
    %280 = vector.multi_reduction <maximumf>, %279, %cst_169 [1] : vector<17x17xf32> to vector<17xf32>
    %281 = vector.shape_cast %280 : vector<17xf32> to vector<17x1xf32>
    %282 = vector.broadcast %281 : vector<17x1xf32> to vector<17x17xf32>
    %283 = arith.subf %279, %282 : vector<17x17xf32>
    %284 = math.exp %283 : vector<17x17xf32>
    %cst_170 = arith.constant dense<0.000000e+00> : vector<17xf32>
    %285 = vector.multi_reduction <add>, %284, %cst_170 [1] : vector<17x17xf32> to vector<17xf32>
    %286 = vector.shape_cast %285 : vector<17xf32> to vector<17x1xf32>
    %287 = vector.broadcast %286 : vector<17x1xf32> to vector<17x17xf32>
    %288 = arith.divf %284, %287 : vector<17x17xf32>
    %cst_171 = arith.constant dense<0.000000e+00> : vector<17x8xf32>
    %289 = tpu.matmul %288, %278, %cst_171 {dimension_numbers = #tpu.dot_dimension_numbers<[1], [0], [0], [1], [0, 0, 1, 1], [], []>} : vector<17x17xf32>, vector<17x8xf32>, vector<17x8xf32> -> vector<17x8xf32>
    %c0_172 = arith.constant 0 : index
    %c0_173 = arith.constant 0 : index
    %290 = vector.load %arg34[%c0_172, %c0_173] : memref<17x32xf32, #tpu.memory_space<vmem>>, vector<17x8xf32>
    tpu.vector_store %arg34[%c0_172, %c0_173], %289 {strides = array<i32>} : memref<17x32xf32, #tpu.memory_space<vmem>>, vector<17x8xf32>,
    %291 = vector.extract_strided_slice %264 {offsets = [0, 8], sizes = [17, 8], strides = [1, 1]} : vector<17x32xf32> to vector<17x8xf32>
    %cst_174 = arith.constant 0.353553385 : f32
    %292 = vector.broadcast %cst_174 : f32 to vector<17x8xf32>
    %293 = arith.mulf %291, %292 : vector<17x8xf32>
    %294 = vector.extract_strided_slice %248 {offsets = [0, 8], sizes = [17, 8], strides = [1, 1]} : vector<17x32xf32> to vector<17x8xf32>
    %295 = vector.extract_strided_slice %273 {offsets = [0, 8], sizes = [17, 8], strides = [1, 1]} : vector<17x32xf32> to vector<17x8xf32>
    %cst_175 = arith.constant dense<0.000000e+00> : vector<17x17xf32>
    %296 = tpu.matmul %293, %294, %cst_175 {dimension_numbers = #tpu.dot_dimension_numbers<[1], [1], [0], [0], [0, 0, 1, 0], [], []>} : vector<17x8xf32>, vector<17x8xf32>, vector<17x17xf32> -> vector<17x17xf32>
    %cst_176 = arith.constant dense<0xFF800000> : vector<17xf32>
    %297 = vector.multi_reduction <maximumf>, %296, %cst_176 [1] : vector<17x17xf32> to vector<17xf32>
    %298 = vector.shape_cast %297 : vector<17xf32> to vector<17x1xf32>
    %299 = vector.broadcast %298 : vector<17x1xf32> to vector<17x17xf32>
    %300 = arith.subf %296, %299 : vector<17x17xf32>
    %301 = math.exp %300 : vector<17x17xf32>
    %cst_177 = arith.constant dense<0.000000e+00> : vector<17xf32>
    %302 = vector.multi_reduction <add>, %301, %cst_177 [1] : vector<17x17xf32> to vector<17xf32>
    %303 = vector.shape_cast %302 : vector<17xf32> to vector<17x1xf32>
    %304 = vector.broadcast %303 : vector<17x1xf32> to vector<17x17xf32>
    %305 = arith.divf %301, %304 : vector<17x17xf32>
    %cst_178 = arith.constant dense<0.000000e+00> : vector<17x8xf32>
    %306 = tpu.matmul %305, %295, %cst_178 {dimension_numbers = #tpu.dot_dimension_numbers<[1], [0], [0], [1], [0, 0, 1, 1], [], []>} : vector<17x17xf32>, vector<17x8xf32>, vector<17x8xf32> -> vector<17x8xf32>
    %c0_179 = arith.constant 0 : index
    %c8_180 = arith.constant 8 : index
    %307 = vector.load %arg34[%c0_179, %c8_180] : memref<17x32xf32, #tpu.memory_space<vmem>>, vector<17x8xf32>
    tpu.vector_store %arg34[%c0_179, %c8_180], %306 {strides = array<i32>} : memref<17x32xf32, #tpu.memory_space<vmem>>, vector<17x8xf32>,
    %308 = vector.extract_strided_slice %264 {offsets = [0, 16], sizes = [17, 8], strides = [1, 1]} : vector<17x32xf32> to vector<17x8xf32>
    %cst_181 = arith.constant 0.353553385 : f32
    %309 = vector.broadcast %cst_181 : f32 to vector<17x8xf32>
    %310 = arith.mulf %308, %309 : vector<17x8xf32>
    %311 = vector.extract_strided_slice %248 {offsets = [0, 16], sizes = [17, 8], strides = [1, 1]} : vector<17x32xf32> to vector<17x8xf32>
    %312 = vector.extract_strided_slice %273 {offsets = [0, 16], sizes = [17, 8], strides = [1, 1]} : vector<17x32xf32> to vector<17x8xf32>
    %cst_182 = arith.constant dense<0.000000e+00> : vector<17x17xf32>
    %313 = tpu.matmul %310, %311, %cst_182 {dimension_numbers = #tpu.dot_dimension_numbers<[1], [1], [0], [0], [0, 0, 1, 0], [], []>} : vector<17x8xf32>, vector<17x8xf32>, vector<17x17xf32> -> vector<17x17xf32>
    %cst_183 = arith.constant dense<0xFF800000> : vector<17xf32>
    %314 = vector.multi_reduction <maximumf>, %313, %cst_183 [1] : vector<17x17xf32> to vector<17xf32>
    %315 = vector.shape_cast %314 : vector<17xf32> to vector<17x1xf32>
    %316 = vector.broadcast %315 : vector<17x1xf32> to vector<17x17xf32>
    %317 = arith.subf %313, %316 : vector<17x17xf32>
    %318 = math.exp %317 : vector<17x17xf32>
    %cst_184 = arith.constant dense<0.000000e+00> : vector<17xf32>
    %319 = vector.multi_reduction <add>, %318, %cst_184 [1] : vector<17x17xf32> to vector<17xf32>
    %320 = vector.shape_cast %319 : vector<17xf32> to vector<17x1xf32>
    %321 = vector.broadcast %320 : vector<17x1xf32> to vector<17x17xf32>
    %322 = arith.divf %318, %321 : vector<17x17xf32>
    %cst_185 = arith.constant dense<0.000000e+00> : vector<17x8xf32>
    %323 = tpu.matmul %322, %312, %cst_185 {dimension_numbers = #tpu.dot_dimension_numbers<[1], [0], [0], [1], [0, 0, 1, 1], [], []>} : vector<17x17xf32>, vector<17x8xf32>, vector<17x8xf32> -> vector<17x8xf32>
    %c0_186 = arith.constant 0 : index
    %c16_187 = arith.constant 16 : index
    %324 = vector.load %arg34[%c0_186, %c16_187] : memref<17x32xf32, #tpu.memory_space<vmem>>, vector<17x8xf32>
    tpu.vector_store %arg34[%c0_186, %c16_187], %323 {strides = array<i32>} : memref<17x32xf32, #tpu.memory_space<vmem>>, vector<17x8xf32>,
    %325 = vector.extract_strided_slice %264 {offsets = [0, 24], sizes = [17, 8], strides = [1, 1]} : vector<17x32xf32> to vector<17x8xf32>
    %cst_188 = arith.constant 0.353553385 : f32
    %326 = vector.broadcast %cst_188 : f32 to vector<17x8xf32>
    %327 = arith.mulf %325, %326 : vector<17x8xf32>
    %328 = vector.extract_strided_slice %248 {offsets = [0, 24], sizes = [17, 8], strides = [1, 1]} : vector<17x32xf32> to vector<17x8xf32>
    %329 = vector.extract_strided_slice %273 {offsets = [0, 24], sizes = [17, 8], strides = [1, 1]} : vector<17x32xf32> to vector<17x8xf32>
    %cst_189 = arith.constant dense<0.000000e+00> : vector<17x17xf32>
    %330 = tpu.matmul %327, %328, %cst_189 {dimension_numbers = #tpu.dot_dimension_numbers<[1], [1], [0], [0], [0, 0, 1, 0], [], []>} : vector<17x8xf32>, vector<17x8xf32>, vector<17x17xf32> -> vector<17x17xf32>
    %cst_190 = arith.constant dense<0xFF800000> : vector<17xf32>
    %331 = vector.multi_reduction <maximumf>, %330, %cst_190 [1] : vector<17x17xf32> to vector<17xf32>
    %332 = vector.shape_cast %331 : vector<17xf32> to vector<17x1xf32>
    %333 = vector.broadcast %332 : vector<17x1xf32> to vector<17x17xf32>
    %334 = arith.subf %330, %333 : vector<17x17xf32>
    %335 = math.exp %334 : vector<17x17xf32>
    %cst_191 = arith.constant dense<0.000000e+00> : vector<17xf32>
    %336 = vector.multi_reduction <add>, %335, %cst_191 [1] : vector<17x17xf32> to vector<17xf32>
    %337 = vector.shape_cast %336 : vector<17xf32> to vector<17x1xf32>
    %338 = vector.broadcast %337 : vector<17x1xf32> to vector<17x17xf32>
    %339 = arith.divf %335, %338 : vector<17x17xf32>
    %cst_192 = arith.constant dense<0.000000e+00> : vector<17x8xf32>
    %340 = tpu.matmul %339, %329, %cst_192 {dimension_numbers = #tpu.dot_dimension_numbers<[1], [0], [0], [1], [0, 0, 1, 1], [], []>} : vector<17x17xf32>, vector<17x8xf32>, vector<17x8xf32> -> vector<17x8xf32>
    %c0_193 = arith.constant 0 : index
    %c24_194 = arith.constant 24 : index
    %341 = vector.load %arg34[%c0_193, %c24_194] : memref<17x32xf32, #tpu.memory_space<vmem>>, vector<17x8xf32>
    tpu.vector_store %arg34[%c0_193, %c24_194], %340 {strides = array<i32>} : memref<17x32xf32, #tpu.memory_space<vmem>>, vector<17x8xf32>,
    %c0_195 = arith.constant 0 : index
    %c0_196 = arith.constant 0 : index
    %342 = vector.load %arg34[%c0_195, %c0_196] : memref<17x32xf32, #tpu.memory_space<vmem>>, vector<17x32xf32>
    %c1_197 = arith.constant 1 : index
    %c0_198 = arith.constant 0 : index
    %c0_199 = arith.constant 0 : index
    %343 = vector.load %arg15[%c1_197, %c0_198, %c0_199] : memref<3x32x32xf32, #tpu.memory_space<vmem>>, vector<1x32x32xf32>
    %344 = vector.shape_cast %343 : vector<1x32x32xf32> to vector<32x32xf32>
    %cst_200 = arith.constant dense<0.000000e+00> : vector<17x32xf32>
    %345 = tpu.matmul %342, %344, %cst_200 {dimension_numbers = #tpu.dot_dimension_numbers<[1], [0], [0], [1], [0, 0, 1, 1], [], []>} : vector<17x32xf32>, vector<32x32xf32>, vector<17x32xf32> -> vector<17x32xf32>
    %346 = arith.addf %208, %345 : vector<17x32xf32>
    %c1_201 = arith.constant 1 : index
    %c0_202 = arith.constant 0 : index
    %c0_203 = arith.constant 0 : index
    %347 = vector.load %arg16[%c1_201, %c0_202, %c0_203] : memref<3x1x32xf32, #tpu.memory_space<vmem>>, vector<1x1x32xf32>
    %348 = vector.shape_cast %347 : vector<1x1x32xf32> to vector<1x32xf32>
    %349 = vector.broadcast %348 : vector<1x32xf32> to vector<17x32xf32>
    %350 = arith.addf %346, %349 : vector<17x32xf32>
    %c1_204 = arith.constant 1 : index
    %c0_205 = arith.constant 0 : index
    %c0_206 = arith.constant 0 : index
    %351 = vector.load %arg21[%c1_204, %c0_205, %c0_206] : memref<3x1x32xf32, #tpu.memory_space<vmem>>, vector<1x1x32xf32>
    %352 = vector.shape_cast %351 : vector<1x1x32xf32> to vector<1x32xf32>
    %c1_207 = arith.constant 1 : index
    %c0_208 = arith.constant 0 : index
    %c0_209 = arith.constant 0 : index
    %353 = vector.load %arg22[%c1_207, %c0_208, %c0_209] : memref<3x1x32xf32, #tpu.memory_space<vmem>>, vector<1x1x32xf32>
    %354 = vector.shape_cast %353 : vector<1x1x32xf32> to vector<1x32xf32>
    %cst_210 = arith.constant dense<0.000000e+00> : vector<17xf32>
    %355 = vector.multi_reduction <add>, %350, %cst_210 [1] : vector<17x32xf32> to vector<17xf32>
    %356 = vector.shape_cast %355 : vector<17xf32> to vector<17x1xf32>
    %cst_211 = arith.constant 3.200000e+01 : f32
    %357 = vector.broadcast %cst_211 : f32 to vector<17x1xf32>
    %358 = arith.divf %356, %357 : vector<17x1xf32>
    %359 = vector.broadcast %358 : vector<17x1xf32> to vector<17x32xf32>
    %360 = arith.subf %350, %359 : vector<17x32xf32>
    %361 = arith.mulf %360, %360 : vector<17x32xf32>
    %cst_212 = arith.constant dense<0.000000e+00> : vector<17xf32>
    %362 = vector.multi_reduction <add>, %361, %cst_212 [1] : vector<17x32xf32> to vector<17xf32>
    %363 = vector.shape_cast %362 : vector<17xf32> to vector<17x1xf32>
    %cst_213 = arith.constant 3.200000e+01 : f32
    %364 = vector.broadcast %cst_213 : f32 to vector<17x1xf32>
    %365 = arith.divf %363, %364 : vector<17x1xf32>
    %366 = vector.broadcast %358 : vector<17x1xf32> to vector<17x32xf32>
    %367 = arith.subf %350, %366 : vector<17x32xf32>
    %cst_214 = arith.constant 9.99999974E-6 : f32
    %368 = vector.broadcast %cst_214 : f32 to vector<17x1xf32>
    %369 = arith.addf %365, %368 : vector<17x1xf32>
    %370 = math.rsqrt %369 : vector<17x1xf32>
    %371 = vector.broadcast %370 : vector<17x1xf32> to vector<17x32xf32>
    %372 = arith.mulf %367, %371 : vector<17x32xf32>
    %373 = vector.broadcast %352 : vector<1x32xf32> to vector<17x32xf32>
    %374 = arith.mulf %372, %373 : vector<17x32xf32>
    %375 = vector.broadcast %354 : vector<1x32xf32> to vector<17x32xf32>
    %376 = arith.addf %374, %375 : vector<17x32xf32>
    %c1_215 = arith.constant 1 : index
    %c0_216 = arith.constant 0 : index
    %c0_217 = arith.constant 0 : index
    %377 = vector.load %arg23[%c1_215, %c0_216, %c0_217] : memref<3x32x128xf32, #tpu.memory_space<vmem>>, vector<1x32x128xf32>
    %378 = vector.shape_cast %377 : vector<1x32x128xf32> to vector<32x128xf32>
    %cst_218 = arith.constant dense<0.000000e+00> : vector<17x128xf32>
    %379 = tpu.matmul %376, %378, %cst_218 {dimension_numbers = #tpu.dot_dimension_numbers<[1], [0], [0], [1], [0, 0, 1, 1], [], []>} : vector<17x32xf32>, vector<32x128xf32>, vector<17x128xf32> -> vector<17x128xf32>
    %c1_219 = arith.constant 1 : index
    %c0_220 = arith.constant 0 : index
    %c0_221 = arith.constant 0 : index
    %380 = vector.load %arg24[%c1_219, %c0_220, %c0_221] : memref<3x1x128xf32, #tpu.memory_space<vmem>>, vector<1x1x128xf32>
    %381 = vector.shape_cast %380 : vector<1x1x128xf32> to vector<1x128xf32>
    %382 = vector.broadcast %381 : vector<1x128xf32> to vector<17x128xf32>
    %383 = arith.addf %379, %382 : vector<17x128xf32>
    %cst_222 = arith.constant 1.702000e+00 : f32
    %384 = vector.broadcast %cst_222 : f32 to vector<17x128xf32>
    %385 = arith.mulf %384, %383 : vector<17x128xf32>
    %386 = arith.negf %385 : vector<17x128xf32>
    %387 = math.exp %386 : vector<17x128xf32>
    %cst_223 = arith.constant 1.000000e+00 : f32
    %388 = vector.broadcast %cst_223 : f32 to vector<17x128xf32>
    %389 = arith.addf %388, %387 : vector<17x128xf32>
    %390 = arith.divf %388, %389 : vector<17x128xf32>
    %391 = arith.mulf %383, %390 : vector<17x128xf32>
    %c1_224 = arith.constant 1 : index
    %c0_225 = arith.constant 0 : index
    %c0_226 = arith.constant 0 : index
    %392 = vector.load %arg25[%c1_224, %c0_225, %c0_226] : memref<3x128x32xf32, #tpu.memory_space<vmem>>, vector<1x128x32xf32>
    %393 = vector.shape_cast %392 : vector<1x128x32xf32> to vector<128x32xf32>
    %cst_227 = arith.constant dense<0.000000e+00> : vector<17x32xf32>
    %394 = tpu.matmul %391, %393, %cst_227 {dimension_numbers = #tpu.dot_dimension_numbers<[1], [0], [0], [1], [0, 0, 1, 1], [], []>} : vector<17x128xf32>, vector<128x32xf32>, vector<17x32xf32> -> vector<17x32xf32>
    %395 = arith.addf %350, %394 : vector<17x32xf32>
    %c1_228 = arith.constant 1 : index
    %c0_229 = arith.constant 0 : index
    %c0_230 = arith.constant 0 : index
    %396 = vector.load %arg26[%c1_228, %c0_229, %c0_230] : memref<3x1x32xf32, #tpu.memory_space<vmem>>, vector<1x1x32xf32>
    %397 = vector.shape_cast %396 : vector<1x1x32xf32> to vector<1x32xf32>
    %398 = vector.broadcast %397 : vector<1x32xf32> to vector<17x32xf32>
    %399 = arith.addf %395, %398 : vector<17x32xf32>
    %c2 = arith.constant 2 : index
    %c0_231 = arith.constant 0 : index
    %c0_232 = arith.constant 0 : index
    %400 = vector.load %arg7[%c2, %c0_231, %c0_232] : memref<3x1x32xf32, #tpu.memory_space<vmem>>, vector<1x1x32xf32>
    %401 = vector.shape_cast %400 : vector<1x1x32xf32> to vector<1x32xf32>
    %c2_233 = arith.constant 2 : index
    %c0_234 = arith.constant 0 : index
    %c0_235 = arith.constant 0 : index
    %402 = vector.load %arg8[%c2_233, %c0_234, %c0_235] : memref<3x1x32xf32, #tpu.memory_space<vmem>>, vector<1x1x32xf32>
    %403 = vector.shape_cast %402 : vector<1x1x32xf32> to vector<1x32xf32>
    %cst_236 = arith.constant dense<0.000000e+00> : vector<17xf32>
    %404 = vector.multi_reduction <add>, %399, %cst_236 [1] : vector<17x32xf32> to vector<17xf32>
    %405 = vector.shape_cast %404 : vector<17xf32> to vector<17x1xf32>
    %cst_237 = arith.constant 3.200000e+01 : f32
    %406 = vector.broadcast %cst_237 : f32 to vector<17x1xf32>
    %407 = arith.divf %405, %406 : vector<17x1xf32>
    %408 = vector.broadcast %407 : vector<17x1xf32> to vector<17x32xf32>
    %409 = arith.subf %399, %408 : vector<17x32xf32>
    %410 = arith.mulf %409, %409 : vector<17x32xf32>
    %cst_238 = arith.constant dense<0.000000e+00> : vector<17xf32>
    %411 = vector.multi_reduction <add>, %410, %cst_238 [1] : vector<17x32xf32> to vector<17xf32>
    %412 = vector.shape_cast %411 : vector<17xf32> to vector<17x1xf32>
    %cst_239 = arith.constant 3.200000e+01 : f32
    %413 = vector.broadcast %cst_239 : f32 to vector<17x1xf32>
    %414 = arith.divf %412, %413 : vector<17x1xf32>
    %415 = vector.broadcast %407 : vector<17x1xf32> to vector<17x32xf32>
    %416 = arith.subf %399, %415 : vector<17x32xf32>
    %cst_240 = arith.constant 9.99999974E-6 : f32
    %417 = vector.broadcast %cst_240 : f32 to vector<17x1xf32>
    %418 = arith.addf %414, %417 : vector<17x1xf32>
    %419 = math.rsqrt %418 : vector<17x1xf32>
    %420 = vector.broadcast %419 : vector<17x1xf32> to vector<17x32xf32>
    %421 = arith.mulf %416, %420 : vector<17x32xf32>
    %422 = vector.broadcast %401 : vector<1x32xf32> to vector<17x32xf32>
    %423 = arith.mulf %421, %422 : vector<17x32xf32>
    %424 = vector.broadcast %403 : vector<1x32xf32> to vector<17x32xf32>
    %425 = arith.addf %423, %424 : vector<17x32xf32>
    %c2_241 = arith.constant 2 : index
    %c0_242 = arith.constant 0 : index
    %c0_243 = arith.constant 0 : index
    %426 = vector.load %arg9[%c2_241, %c0_242, %c0_243] : memref<3x32x32xf32, #tpu.memory_space<vmem>>, vector<1x32x32xf32>
    %427 = vector.shape_cast %426 : vector<1x32x32xf32> to vector<32x32xf32>
    %cst_244 = arith.constant dense<0.000000e+00> : vector<17x32xf32>
    %428 = tpu.matmul %425, %427, %cst_244 {dimension_numbers = #tpu.dot_dimension_numbers<[1], [0], [0], [1], [0, 0, 1, 1], [], []>} : vector<17x32xf32>, vector<32x32xf32>, vector<17x32xf32> -> vector<17x32xf32>
    %c2_245 = arith.constant 2 : index
    %c0_246 = arith.constant 0 : index
    %c0_247 = arith.constant 0 : index
    %429 = vector.load %arg10[%c2_245, %c0_246, %c0_247] : memref<3x1x32xf32, #tpu.memory_space<vmem>>, vector<1x1x32xf32>
    %430 = vector.shape_cast %429 : vector<1x1x32xf32> to vector<1x32xf32>
    %431 = vector.broadcast %430 : vector<1x32xf32> to vector<17x32xf32>
    %432 = arith.addf %428, %431 : vector<17x32xf32>
    %c2_248 = arith.constant 2 : index
    %c0_249 = arith.constant 0 : index
    %c0_250 = arith.constant 0 : index
    %433 = vector.load %arg11[%c2_248, %c0_249, %c0_250] : memref<3x32x32xf32, #tpu.memory_space<vmem>>, vector<1x32x32xf32>
    %434 = vector.shape_cast %433 : vector<1x32x32xf32> to vector<32x32xf32>
    %cst_251 = arith.constant dense<0.000000e+00> : vector<17x32xf32>
    %435 = tpu.matmul %425, %434, %cst_251 {dimension_numbers = #tpu.dot_dimension_numbers<[1], [0], [0], [1], [0, 0, 1, 1], [], []>} : vector<17x32xf32>, vector<32x32xf32>, vector<17x32xf32> -> vector<17x32xf32>
    %c2_252 = arith.constant 2 : index
    %c0_253 = arith.constant 0 : index
    %c0_254 = arith.constant 0 : index
    %436 = vector.load %arg12[%c2_252, %c0_253, %c0_254] : memref<3x1x32xf32, #tpu.memory_space<vmem>>, vector<1x1x32xf32>
    %437 = vector.shape_cast %436 : vector<1x1x32xf32> to vector<1x32xf32>
    %438 = vector.broadcast %437 : vector<1x32xf32> to vector<17x32xf32>
    %439 = arith.addf %435, %438 : vector<17x32xf32>
    %c2_255 = arith.constant 2 : index
    %c0_256 = arith.constant 0 : index
    %c0_257 = arith.constant 0 : index
    %440 = vector.load %arg13[%c2_255, %c0_256, %c0_257] : memref<3x32x32xf32, #tpu.memory_space<vmem>>, vector<1x32x32xf32>
    %441 = vector.shape_cast %440 : vector<1x32x32xf32> to vector<32x32xf32>
    %cst_258 = arith.constant dense<0.000000e+00> : vector<17x32xf32>
    %442 = tpu.matmul %425, %441, %cst_258 {dimension_numbers = #tpu.dot_dimension_numbers<[1], [0], [0], [1], [0, 0, 1, 1], [], []>} : vector<17x32xf32>, vector<32x32xf32>, vector<17x32xf32> -> vector<17x32xf32>
    %c2_259 = arith.constant 2 : index
    %c0_260 = arith.constant 0 : index
    %c0_261 = arith.constant 0 : index
    %443 = vector.load %arg14[%c2_259, %c0_260, %c0_261] : memref<3x1x32xf32, #tpu.memory_space<vmem>>, vector<1x1x32xf32>
    %444 = vector.shape_cast %443 : vector<1x1x32xf32> to vector<1x32xf32>
    %445 = vector.broadcast %444 : vector<1x32xf32> to vector<17x32xf32>
    %446 = arith.addf %442, %445 : vector<17x32xf32>
    %c1_262 = arith.constant 1 : index
    %c0_263 = arith.constant 0 : index
    %c0_264 = arith.constant 0 : index
    %447 = vector.load %arg17[%c1_262, %c0_263, %c0_264] : memref<2x32x8xf32, #tpu.memory_space<vmem>>, vector<1x32x8xf32>
    %448 = vector.shape_cast %447 : vector<1x32x8xf32> to vector<32x8xf32>
    %cst_265 = arith.constant dense<0.000000e+00> : vector<17x8xf32>
    %449 = tpu.matmul %425, %448, %cst_265 {dimension_numbers = #tpu.dot_dimension_numbers<[1], [0], [0], [1], [0, 0, 1, 1], [], []>} : vector<17x32xf32>, vector<32x8xf32>, vector<17x8xf32> -> vector<17x8xf32>
    %c1_266 = arith.constant 1 : index
    %c0_267 = arith.constant 0 : index
    %c0_268 = arith.constant 0 : index
    %450 = vector.load %arg18[%c1_266, %c0_267, %c0_268] : memref<2x8x32xf32, #tpu.memory_space<vmem>>, vector<1x8x32xf32>
    %451 = vector.shape_cast %450 : vector<1x8x32xf32> to vector<8x32xf32>
    %cst_269 = arith.constant dense<0.000000e+00> : vector<17x32xf32>
    %452 = tpu.matmul %449, %451, %cst_269 {dimension_numbers = #tpu.dot_dimension_numbers<[1], [0], [0], [1], [0, 0, 1, 1], [], []>} : vector<17x8xf32>, vector<8x32xf32>, vector<17x32xf32> -> vector<17x32xf32>
    %cst_270 = arith.constant 2.000000e+00 : f32
    %453 = vector.broadcast %cst_270 : f32 to vector<17x32xf32>
    %454 = arith.mulf %453, %452 : vector<17x32xf32>
    %455 = arith.addf %432, %454 : vector<17x32xf32>
    %c1_271 = arith.constant 1 : index
    %c0_272 = arith.constant 0 : index
    %c0_273 = arith.constant 0 : index
    %456 = vector.load %arg19[%c1_271, %c0_272, %c0_273] : memref<2x32x8xf32, #tpu.memory_space<vmem>>, vector<1x32x8xf32>
    %457 = vector.shape_cast %456 : vector<1x32x8xf32> to vector<32x8xf32>
    %cst_274 = arith.constant dense<0.000000e+00> : vector<17x8xf32>
    %458 = tpu.matmul %425, %457, %cst_274 {dimension_numbers = #tpu.dot_dimension_numbers<[1], [0], [0], [1], [0, 0, 1, 1], [], []>} : vector<17x32xf32>, vector<32x8xf32>, vector<17x8xf32> -> vector<17x8xf32>
    %c1_275 = arith.constant 1 : index
    %c0_276 = arith.constant 0 : index
    %c0_277 = arith.constant 0 : index
    %459 = vector.load %arg20[%c1_275, %c0_276, %c0_277] : memref<2x8x32xf32, #tpu.memory_space<vmem>>, vector<1x8x32xf32>
    %460 = vector.shape_cast %459 : vector<1x8x32xf32> to vector<8x32xf32>
    %cst_278 = arith.constant dense<0.000000e+00> : vector<17x32xf32>
    %461 = tpu.matmul %458, %460, %cst_278 {dimension_numbers = #tpu.dot_dimension_numbers<[1], [0], [0], [1], [0, 0, 1, 1], [], []>} : vector<17x8xf32>, vector<8x32xf32>, vector<17x32xf32> -> vector<17x32xf32>
    %cst_279 = arith.constant 2.000000e+00 : f32
    %462 = vector.broadcast %cst_279 : f32 to vector<17x32xf32>
    %463 = arith.mulf %462, %461 : vector<17x32xf32>
    %464 = arith.addf %446, %463 : vector<17x32xf32>
    %465 = vector.extract_strided_slice %455 {offsets = [0, 0], sizes = [17, 8], strides = [1, 1]} : vector<17x32xf32> to vector<17x8xf32>
    %cst_280 = arith.constant 0.353553385 : f32
    %466 = vector.broadcast %cst_280 : f32 to vector<17x8xf32>
    %467 = arith.mulf %465, %466 : vector<17x8xf32>
    %468 = vector.extract_strided_slice %439 {offsets = [0, 0], sizes = [17, 8], strides = [1, 1]} : vector<17x32xf32> to vector<17x8xf32>
    %469 = vector.extract_strided_slice %464 {offsets = [0, 0], sizes = [17, 8], strides = [1, 1]} : vector<17x32xf32> to vector<17x8xf32>
    %cst_281 = arith.constant dense<0.000000e+00> : vector<17x17xf32>
    %470 = tpu.matmul %467, %468, %cst_281 {dimension_numbers = #tpu.dot_dimension_numbers<[1], [1], [0], [0], [0, 0, 1, 0], [], []>} : vector<17x8xf32>, vector<17x8xf32>, vector<17x17xf32> -> vector<17x17xf32>
    %cst_282 = arith.constant dense<0xFF800000> : vector<17xf32>
    %471 = vector.multi_reduction <maximumf>, %470, %cst_282 [1] : vector<17x17xf32> to vector<17xf32>
    %472 = vector.shape_cast %471 : vector<17xf32> to vector<17x1xf32>
    %473 = vector.broadcast %472 : vector<17x1xf32> to vector<17x17xf32>
    %474 = arith.subf %470, %473 : vector<17x17xf32>
    %475 = math.exp %474 : vector<17x17xf32>
    %cst_283 = arith.constant dense<0.000000e+00> : vector<17xf32>
    %476 = vector.multi_reduction <add>, %475, %cst_283 [1] : vector<17x17xf32> to vector<17xf32>
    %477 = vector.shape_cast %476 : vector<17xf32> to vector<17x1xf32>
    %478 = vector.broadcast %477 : vector<17x1xf32> to vector<17x17xf32>
    %479 = arith.divf %475, %478 : vector<17x17xf32>
    %cst_284 = arith.constant dense<0.000000e+00> : vector<17x8xf32>
    %480 = tpu.matmul %479, %469, %cst_284 {dimension_numbers = #tpu.dot_dimension_numbers<[1], [0], [0], [1], [0, 0, 1, 1], [], []>} : vector<17x17xf32>, vector<17x8xf32>, vector<17x8xf32> -> vector<17x8xf32>
    %c0_285 = arith.constant 0 : index
    %c0_286 = arith.constant 0 : index
    %481 = vector.load %arg34[%c0_285, %c0_286] : memref<17x32xf32, #tpu.memory_space<vmem>>, vector<17x8xf32>
    tpu.vector_store %arg34[%c0_285, %c0_286], %480 {strides = array<i32>} : memref<17x32xf32, #tpu.memory_space<vmem>>, vector<17x8xf32>,
    %482 = vector.extract_strided_slice %455 {offsets = [0, 8], sizes = [17, 8], strides = [1, 1]} : vector<17x32xf32> to vector<17x8xf32>
    %cst_287 = arith.constant 0.353553385 : f32
    %483 = vector.broadcast %cst_287 : f32 to vector<17x8xf32>
    %484 = arith.mulf %482, %483 : vector<17x8xf32>
    %485 = vector.extract_strided_slice %439 {offsets = [0, 8], sizes = [17, 8], strides = [1, 1]} : vector<17x32xf32> to vector<17x8xf32>
    %486 = vector.extract_strided_slice %464 {offsets = [0, 8], sizes = [17, 8], strides = [1, 1]} : vector<17x32xf32> to vector<17x8xf32>
    %cst_288 = arith.constant dense<0.000000e+00> : vector<17x17xf32>
    %487 = tpu.matmul %484, %485, %cst_288 {dimension_numbers = #tpu.dot_dimension_numbers<[1], [1], [0], [0], [0, 0, 1, 0], [], []>} : vector<17x8xf32>, vector<17x8xf32>, vector<17x17xf32> -> vector<17x17xf32>
    %cst_289 = arith.constant dense<0xFF800000> : vector<17xf32>
    %488 = vector.multi_reduction <maximumf>, %487, %cst_289 [1] : vector<17x17xf32> to vector<17xf32>
    %489 = vector.shape_cast %488 : vector<17xf32> to vector<17x1xf32>
    %490 = vector.broadcast %489 : vector<17x1xf32> to vector<17x17xf32>
    %491 = arith.subf %487, %490 : vector<17x17xf32>
    %492 = math.exp %491 : vector<17x17xf32>
    %cst_290 = arith.constant dense<0.000000e+00> : vector<17xf32>
    %493 = vector.multi_reduction <add>, %492, %cst_290 [1] : vector<17x17xf32> to vector<17xf32>
    %494 = vector.shape_cast %493 : vector<17xf32> to vector<17x1xf32>
    %495 = vector.broadcast %494 : vector<17x1xf32> to vector<17x17xf32>
    %496 = arith.divf %492, %495 : vector<17x17xf32>
    %cst_291 = arith.constant dense<0.000000e+00> : vector<17x8xf32>
    %497 = tpu.matmul %496, %486, %cst_291 {dimension_numbers = #tpu.dot_dimension_numbers<[1], [0], [0], [1], [0, 0, 1, 1], [], []>} : vector<17x17xf32>, vector<17x8xf32>, vector<17x8xf32> -> vector<17x8xf32>
    %c0_292 = arith.constant 0 : index
    %c8_293 = arith.constant 8 : index
    %498 = vector.load %arg34[%c0_292, %c8_293] : memref<17x32xf32, #tpu.memory_space<vmem>>, vector<17x8xf32>
    tpu.vector_store %arg34[%c0_292, %c8_293], %497 {strides = array<i32>} : memref<17x32xf32, #tpu.memory_space<vmem>>, vector<17x8xf32>,
    %499 = vector.extract_strided_slice %455 {offsets = [0, 16], sizes = [17, 8], strides = [1, 1]} : vector<17x32xf32> to vector<17x8xf32>
    %cst_294 = arith.constant 0.353553385 : f32
    %500 = vector.broadcast %cst_294 : f32 to vector<17x8xf32>
    %501 = arith.mulf %499, %500 : vector<17x8xf32>
    %502 = vector.extract_strided_slice %439 {offsets = [0, 16], sizes = [17, 8], strides = [1, 1]} : vector<17x32xf32> to vector<17x8xf32>
    %503 = vector.extract_strided_slice %464 {offsets = [0, 16], sizes = [17, 8], strides = [1, 1]} : vector<17x32xf32> to vector<17x8xf32>
    %cst_295 = arith.constant dense<0.000000e+00> : vector<17x17xf32>
    %504 = tpu.matmul %501, %502, %cst_295 {dimension_numbers = #tpu.dot_dimension_numbers<[1], [1], [0], [0], [0, 0, 1, 0], [], []>} : vector<17x8xf32>, vector<17x8xf32>, vector<17x17xf32> -> vector<17x17xf32>
    %cst_296 = arith.constant dense<0xFF800000> : vector<17xf32>
    %505 = vector.multi_reduction <maximumf>, %504, %cst_296 [1] : vector<17x17xf32> to vector<17xf32>
    %506 = vector.shape_cast %505 : vector<17xf32> to vector<17x1xf32>
    %507 = vector.broadcast %506 : vector<17x1xf32> to vector<17x17xf32>
    %508 = arith.subf %504, %507 : vector<17x17xf32>
    %509 = math.exp %508 : vector<17x17xf32>
    %cst_297 = arith.constant dense<0.000000e+00> : vector<17xf32>
    %510 = vector.multi_reduction <add>, %509, %cst_297 [1] : vector<17x17xf32> to vector<17xf32>
    %511 = vector.shape_cast %510 : vector<17xf32> to vector<17x1xf32>
    %512 = vector.broadcast %511 : vector<17x1xf32> to vector<17x17xf32>
    %513 = arith.divf %509, %512 : vector<17x17xf32>
    %cst_298 = arith.constant dense<0.000000e+00> : vector<17x8xf32>
    %514 = tpu.matmul %513, %503, %cst_298 {dimension_numbers = #tpu.dot_dimension_numbers<[1], [0], [0], [1], [0, 0, 1, 1], [], []>} : vector<17x17xf32>, vector<17x8xf32>, vector<17x8xf32> -> vector<17x8xf32>
    %c0_299 = arith.constant 0 : index
    %c16_300 = arith.constant 16 : index
    %515 = vector.load %arg34[%c0_299, %c16_300] : memref<17x32xf32, #tpu.memory_space<vmem>>, vector<17x8xf32>
    tpu.vector_store %arg34[%c0_299, %c16_300], %514 {strides = array<i32>} : memref<17x32xf32, #tpu.memory_space<vmem>>, vector<17x8xf32>,
    %516 = vector.extract_strided_slice %455 {offsets = [0, 24], sizes = [17, 8], strides = [1, 1]} : vector<17x32xf32> to vector<17x8xf32>
    %cst_301 = arith.constant 0.353553385 : f32
    %517 = vector.broadcast %cst_301 : f32 to vector<17x8xf32>
    %518 = arith.mulf %516, %517 : vector<17x8xf32>
    %519 = vector.extract_strided_slice %439 {offsets = [0, 24], sizes = [17, 8], strides = [1, 1]} : vector<17x32xf32> to vector<17x8xf32>
    %520 = vector.extract_strided_slice %464 {offsets = [0, 24], sizes = [17, 8], strides = [1, 1]} : vector<17x32xf32> to vector<17x8xf32>
    %cst_302 = arith.constant dense<0.000000e+00> : vector<17x17xf32>
    %521 = tpu.matmul %518, %519, %cst_302 {dimension_numbers = #tpu.dot_dimension_numbers<[1], [1], [0], [0], [0, 0, 1, 0], [], []>} : vector<17x8xf32>, vector<17x8xf32>, vector<17x17xf32> -> vector<17x17xf32>
    %cst_303 = arith.constant dense<0xFF800000> : vector<17xf32>
    %522 = vector.multi_reduction <maximumf>, %521, %cst_303 [1] : vector<17x17xf32> to vector<17xf32>
    %523 = vector.shape_cast %522 : vector<17xf32> to vector<17x1xf32>
    %524 = vector.broadcast %523 : vector<17x1xf32> to vector<17x17xf32>
    %525 = arith.subf %521, %524 : vector<17x17xf32>
    %526 = math.exp %525 : vector<17x17xf32>
    %cst_304 = arith.constant dense<0.000000e+00> : vector<17xf32>
    %527 = vector.multi_reduction <add>, %526, %cst_304 [1] : vector<17x17xf32> to vector<17xf32>
    %528 = vector.shape_cast %527 : vector<17xf32> to vector<17x1xf32>
    %529 = vector.broadcast %528 : vector<17x1xf32> to vector<17x17xf32>
    %530 = arith.divf %526, %529 : vector<17x17xf32>
    %cst_305 = arith.constant dense<0.000000e+00> : vector<17x8xf32>
    %531 = tpu.matmul %530, %520, %cst_305 {dimension_numbers = #tpu.dot_dimension_numbers<[1], [0], [0], [1], [0, 0, 1, 1], [], []>} : vector<17x17xf32>, vector<17x8xf32>, vector<17x8xf32> -> vector<17x8xf32>
    %c0_306 = arith.constant 0 : index
    %c24_307 = arith.constant 24 : index
    %532 = vector.load %arg34[%c0_306, %c24_307] : memref<17x32xf32, #tpu.memory_space<vmem>>, vector<17x8xf32>
    tpu.vector_store %arg34[%c0_306, %c24_307], %531 {strides = array<i32>} : memref<17x32xf32, #tpu.memory_space<vmem>>, vector<17x8xf32>,
    %c0_308 = arith.constant 0 : index
    %c0_309 = arith.constant 0 : index
    %533 = vector.load %arg34[%c0_308, %c0_309] : memref<17x32xf32, #tpu.memory_space<vmem>>, vector<17x32xf32>
    %c2_310 = arith.constant 2 : index
    %c0_311 = arith.constant 0 : index
    %c0_312 = arith.constant 0 : index
    %534 = vector.load %arg15[%c2_310, %c0_311, %c0_312] : memref<3x32x32xf32, #tpu.memory_space<vmem>>, vector<1x32x32xf32>
    %535 = vector.shape_cast %534 : vector<1x32x32xf32> to vector<32x32xf32>
    %cst_313 = arith.constant dense<0.000000e+00> : vector<17x32xf32>
    %536 = tpu.matmul %533, %535, %cst_313 {dimension_numbers = #tpu.dot_dimension_numbers<[1], [0], [0], [1], [0, 0, 1, 1], [], []>} : vector<17x32xf32>, vector<32x32xf32>, vector<17x32xf32> -> vector<17x32xf32>
    %537 = arith.addf %399, %536 : vector<17x32xf32>
    %c2_314 = arith.constant 2 : index
    %c0_315 = arith.constant 0 : index
    %c0_316 = arith.constant 0 : index
    %538 = vector.load %arg16[%c2_314, %c0_315, %c0_316] : memref<3x1x32xf32, #tpu.memory_space<vmem>>, vector<1x1x32xf32>
    %539 = vector.shape_cast %538 : vector<1x1x32xf32> to vector<1x32xf32>
    %540 = vector.broadcast %539 : vector<1x32xf32> to vector<17x32xf32>
    %541 = arith.addf %537, %540 : vector<17x32xf32>
    %c2_317 = arith.constant 2 : index
    %c0_318 = arith.constant 0 : index
    %c0_319 = arith.constant 0 : index
    %542 = vector.load %arg21[%c2_317, %c0_318, %c0_319] : memref<3x1x32xf32, #tpu.memory_space<vmem>>, vector<1x1x32xf32>
    %543 = vector.shape_cast %542 : vector<1x1x32xf32> to vector<1x32xf32>
    %c2_320 = arith.constant 2 : index
    %c0_321 = arith.constant 0 : index
    %c0_322 = arith.constant 0 : index
    %544 = vector.load %arg22[%c2_320, %c0_321, %c0_322] : memref<3x1x32xf32, #tpu.memory_space<vmem>>, vector<1x1x32xf32>
    %545 = vector.shape_cast %544 : vector<1x1x32xf32> to vector<1x32xf32>
    %cst_323 = arith.constant dense<0.000000e+00> : vector<17xf32>
    %546 = vector.multi_reduction <add>, %541, %cst_323 [1] : vector<17x32xf32> to vector<17xf32>
    %547 = vector.shape_cast %546 : vector<17xf32> to vector<17x1xf32>
    %cst_324 = arith.constant 3.200000e+01 : f32
    %548 = vector.broadcast %cst_324 : f32 to vector<17x1xf32>
    %549 = arith.divf %547, %548 : vector<17x1xf32>
    %550 = vector.broadcast %549 : vector<17x1xf32> to vector<17x32xf32>
    %551 = arith.subf %541, %550 : vector<17x32xf32>
    %552 = arith.mulf %551, %551 : vector<17x32xf32>
    %cst_325 = arith.constant dense<0.000000e+00> : vector<17xf32>
    %553 = vector.multi_reduction <add>, %552, %cst_325 [1] : vector<17x32xf32> to vector<17xf32>
    %554 = vector.shape_cast %553 : vector<17xf32> to vector<17x1xf32>
    %cst_326 = arith.constant 3.200000e+01 : f32
    %555 = vector.broadcast %cst_326 : f32 to vector<17x1xf32>
    %556 = arith.divf %554, %555 : vector<17x1xf32>
    %557 = vector.broadcast %549 : vector<17x1xf32> to vector<17x32xf32>
    %558 = arith.subf %541, %557 : vector<17x32xf32>
    %cst_327 = arith.constant 9.99999974E-6 : f32
    %559 = vector.broadcast %cst_327 : f32 to vector<17x1xf32>
    %560 = arith.addf %556, %559 : vector<17x1xf32>
    %561 = math.rsqrt %560 : vector<17x1xf32>
    %562 = vector.broadcast %561 : vector<17x1xf32> to vector<17x32xf32>
    %563 = arith.mulf %558, %562 : vector<17x32xf32>
    %564 = vector.broadcast %543 : vector<1x32xf32> to vector<17x32xf32>
    %565 = arith.mulf %563, %564 : vector<17x32xf32>
    %566 = vector.broadcast %545 : vector<1x32xf32> to vector<17x32xf32>
    %567 = arith.addf %565, %566 : vector<17x32xf32>
    %c2_328 = arith.constant 2 : index
    %c0_329 = arith.constant 0 : index
    %c0_330 = arith.constant 0 : index
    %568 = vector.load %arg23[%c2_328, %c0_329, %c0_330] : memref<3x32x128xf32, #tpu.memory_space<vmem>>, vector<1x32x128xf32>
    %569 = vector.shape_cast %568 : vector<1x32x128xf32> to vector<32x128xf32>
    %cst_331 = arith.constant dense<0.000000e+00> : vector<17x128xf32>
    %570 = tpu.matmul %567, %569, %cst_331 {dimension_numbers = #tpu.dot_dimension_numbers<[1], [0], [0], [1], [0, 0, 1, 1], [], []>} : vector<17x32xf32>, vector<32x128xf32>, vector<17x128xf32> -> vector<17x128xf32>
    %c2_332 = arith.constant 2 : index
    %c0_333 = arith.constant 0 : index
    %c0_334 = arith.constant 0 : index
    %571 = vector.load %arg24[%c2_332, %c0_333, %c0_334] : memref<3x1x128xf32, #tpu.memory_space<vmem>>, vector<1x1x128xf32>
    %572 = vector.shape_cast %571 : vector<1x1x128xf32> to vector<1x128xf32>
    %573 = vector.broadcast %572 : vector<1x128xf32> to vector<17x128xf32>
    %574 = arith.addf %570, %573 : vector<17x128xf32>
    %cst_335 = arith.constant 1.702000e+00 : f32
    %575 = vector.broadcast %cst_335 : f32 to vector<17x128xf32>
    %576 = arith.mulf %575, %574 : vector<17x128xf32>
    %577 = arith.negf %576 : vector<17x128xf32>
    %578 = math.exp %577 : vector<17x128xf32>
    %cst_336 = arith.constant 1.000000e+00 : f32
    %579 = vector.broadcast %cst_336 : f32 to vector<17x128xf32>
    %580 = arith.addf %579, %578 : vector<17x128xf32>
    %581 = arith.divf %579, %580 : vector<17x128xf32>
    %582 = arith.mulf %574, %581 : vector<17x128xf32>
    %c2_337 = arith.constant 2 : index
    %c0_338 = arith.constant 0 : index
    %c0_339 = arith.constant 0 : index
    %583 = vector.load %arg25[%c2_337, %c0_338, %c0_339] : memref<3x128x32xf32, #tpu.memory_space<vmem>>, vector<1x128x32xf32>
    %584 = vector.shape_cast %583 : vector<1x128x32xf32> to vector<128x32xf32>
    %cst_340 = arith.constant dense<0.000000e+00> : vector<17x32xf32>
    %585 = tpu.matmul %582, %584, %cst_340 {dimension_numbers = #tpu.dot_dimension_numbers<[1], [0], [0], [1], [0, 0, 1, 1], [], []>} : vector<17x128xf32>, vector<128x32xf32>, vector<17x32xf32> -> vector<17x32xf32>
    %586 = arith.addf %541, %585 : vector<17x32xf32>
    %c2_341 = arith.constant 2 : index
    %c0_342 = arith.constant 0 : index
    %c0_343 = arith.constant 0 : index
    %587 = vector.load %arg26[%c2_341, %c0_342, %c0_343] : memref<3x1x32xf32, #tpu.memory_space<vmem>>, vector<1x1x32xf32>
    %588 = vector.shape_cast %587 : vector<1x1x32xf32> to vector<1x32xf32>
    %589 = vector.broadcast %588 : vector<1x32xf32> to vector<17x32xf32>
    %590 = arith.addf %586, %589 : vector<17x32xf32>
    %591 = vector.extract_strided_slice %590 {offsets = [0, 0], sizes = [1, 32], strides = [1, 1]} : vector<17x32xf32> to vector<1x32xf32>
    %c0_344 = arith.constant 0 : index
    %c0_345 = arith.constant 0 : index
    %592 = vector.load %arg27[%c0_344, %c0_345] : memref<1x32xf32, #tpu.memory_space<vmem>>, vector<1x32xf32>
    %c0_346 = arith.constant 0 : index
    %c0_347 = arith.constant 0 : index
    %593 = vector.load %arg28[%c0_346, %c0_347] : memref<1x32xf32, #tpu.memory_space<vmem>>, vector<1x32xf32>
    %cst_348 = arith.constant dense<0.000000e+00> : vector<1xf32>
    %594 = vector.multi_reduction <add>, %591, %cst_348 [1] : vector<1x32xf32> to vector<1xf32>
    %595 = vector.shape_cast %594 : vector<1xf32> to vector<1x1xf32>
    %cst_349 = arith.constant 3.200000e+01 : f32
    %596 = vector.broadcast %cst_349 : f32 to vector<1x1xf32>
    %597 = arith.divf %595, %596 : vector<1x1xf32>
    %598 = vector.broadcast %597 : vector<1x1xf32> to vector<1x32xf32>
    %599 = arith.subf %591, %598 : vector<1x32xf32>
    %600 = arith.mulf %599, %599 : vector<1x32xf32>
    %cst_350 = arith.constant dense<0.000000e+00> : vector<1xf32>
    %601 = vector.multi_reduction <add>, %600, %cst_350 [1] : vector<1x32xf32> to vector<1xf32>
    %602 = vector.shape_cast %601 : vector<1xf32> to vector<1x1xf32>
    %cst_351 = arith.constant 3.200000e+01 : f32
    %603 = vector.broadcast %cst_351 : f32 to vector<1x1xf32>
    %604 = arith.divf %602, %603 : vector<1x1xf32>
    %605 = vector.broadcast %597 : vector<1x1xf32> to vector<1x32xf32>
    %606 = arith.subf %591, %605 : vector<1x32xf32>
    %cst_352 = arith.constant 9.99999974E-6 : f32
    %607 = vector.broadcast %cst_352 : f32 to vector<1x1xf32>
    %608 = arith.addf %604, %607 : vector<1x1xf32>
    %609 = math.rsqrt %608 : vector<1x1xf32>
    %610 = vector.broadcast %609 : vector<1x1xf32> to vector<1x32xf32>
    %611 = arith.mulf %606, %610 : vector<1x32xf32>
    %612 = arith.mulf %611, %592 : vector<1x32xf32>
    %613 = arith.addf %612, %593 : vector<1x32xf32>
    %c0_353 = arith.constant 0 : index
    %c0_354 = arith.constant 0 : index
    %614 = vector.load %arg29[%c0_353, %c0_354] : memref<32x16xf32, #tpu.memory_space<vmem>>, vector<32x16xf32>
    %cst_355 = arith.constant dense<0.000000e+00> : vector<1x16xf32>
    %615 = tpu.matmul %613, %614, %cst_355 {dimension_numbers = #tpu.dot_dimension_numbers<[1], [0], [0], [1], [0, 0, 1, 1], [], []>} : vector<1x32xf32>, vector<32x16xf32>, vector<1x16xf32> -> vector<1x16xf32>
    %c0_356 = arith.constant 0 : index
    %c0_357 = arith.constant 0 : index
    %616 = vector.load %arg30[%c0_356, %c0_357] : memref<16x1xf32, #tpu.memory_space<vmem>>, vector<16x1xf32>
    %cst_358 = arith.constant dense<0.000000e+00> : vector<1x1xf32>
    %617 = tpu.matmul %615, %616, %cst_358 {dimension_numbers = #tpu.dot_dimension_numbers<[1], [0], [0], [1], [0, 0, 1, 1], [], []>} : vector<1x16xf32>, vector<16x1xf32>, vector<1x1xf32> -> vector<1x1xf32>
    %c0_359 = arith.constant 0 : index
    %c0_360 = arith.constant 0 : index
    %618 = vector.load %arg31[%c0_359, %c0_360] : memref<1x1xf32, #tpu.memory_space<vmem>>, vector<1x1xf32>
    %619 = arith.addf %617, %618 : vector<1x1xf32>
    %c0_361 = arith.constant 0 : index
    %c0_362 = arith.constant 0 : index
    %c0_363 = arith.constant 0 : index
    %620 = vector.load %arg32[%c0_361, %c0_362, %c0_363] : memref<1x1x1xf32, #tpu.memory_space<vmem>>, vector<1x1x1xf32>
    %621 = vector.shape_cast %620 : vector<1x1x1xf32> to vector<1x1xf32>
    %622 = vector.shape_cast %619 : vector<1x1xf32> to vector<1x1x1xf32>
    tpu.vector_store %arg32[%c0_361, %c0_362, %c0_363], %622 {strides = array<i32>} : memref<1x1x1xf32, #tpu.memory_space<vmem>>, vector<1x1x1xf32>,
    return
  }
  func.func @transform_0(%arg0: i32) -> (i32, i32, i32) {
    %c0_i32 = arith.constant 0 : i32
    %c0_i32_0 = arith.constant 0 : i32
    %c0_i32_1 = arith.constant 0 : i32
    return %arg0, %c0_i32, %c0_i32_0 : i32, i32, i32
  }
  func.func @transform_1(%arg0: i32) -> (i32, i32) {
    %c0_i32 = arith.constant 0 : i32
    %c0_i32_0 = arith.constant 0 : i32
    %c0_i32_1 = arith.constant 0 : i32
    return %c0_i32, %c0_i32_0 : i32, i32
  }
  func.func @transform_2(%arg0: i32) -> (i32, i32) {
    %c0_i32 = arith.constant 0 : i32
    %c0_i32_0 = arith.constant 0 : i32
    %c0_i32_1 = arith.constant 0 : i32
    return %c0_i32, %c0_i32_0 : i32, i32
  }
  func.func @transform_3(%arg0: i32) -> (i32, i32) {
    %c0_i32 = arith.constant 0 : i32
    %c0_i32_0 = arith.constant 0 : i32
    %c0_i32_1 = arith.constant 0 : i32
    return %c0_i32, %c0_i32_0 : i32, i32
  }
  func.func @transform_4(%arg0: i32) -> (i32, i32) {
    %c0_i32 = arith.constant 0 : i32
    %c0_i32_0 = arith.constant 0 : i32
    %c0_i32_1 = arith.constant 0 : i32
    return %c0_i32, %c0_i32_0 : i32, i32
  }
  func.func @transform_5(%arg0: i32) -> (i32, i32) {
    %c0_i32 = arith.constant 0 : i32
    %c0_i32_0 = arith.constant 0 : i32
    %c0_i32_1 = arith.constant 0 : i32
    return %c0_i32, %c0_i32_0 : i32, i32
  }
  func.func @transform_6(%arg0: i32) -> (i32, i32, i32) {
    %c0_i32 = arith.constant 0 : i32
    %c0_i32_0 = arith.constant 0 : i32
    %c0_i32_1 = arith.constant 0 : i32
    %c0_i32_2 = arith.constant 0 : i32
    return %c0_i32, %c0_i32_0, %c0_i32_1 : i32, i32, i32
  }
  func.func @transform_7(%arg0: i32) -> (i32, i32, i32) {
    %c0_i32 = arith.constant 0 : i32
    %c0_i32_0 = arith.constant 0 : i32
    %c0_i32_1 = arith.constant 0 : i32
    %c0_i32_2 = arith.constant 0 : i32
    return %c0_i32, %c0_i32_0, %c0_i32_1 : i32, i32, i32
  }
  func.func @transform_8(%arg0: i32) -> (i32, i32, i32) {
    %c0_i32 = arith.constant 0 : i32
    %c0_i32_0 = arith.constant 0 : i32
    %c0_i32_1 = arith.constant 0 : i32
    %c0_i32_2 = arith.constant 0 : i32
    return %c0_i32, %c0_i32_0, %c0_i32_1 : i32, i32, i32
  }
  func.func @transform_9(%arg0: i32) -> (i32, i32, i32) {
    %c0_i32 = arith.constant 0 : i32
    %c0_i32_0 = arith.constant 0 : i32
    %c0_i32_1 = arith.constant 0 : i32
    %c0_i32_2 = arith.constant 0 : i32
    return %c0_i32, %c0_i32_0, %c0_i32_1 : i32, i32, i32
  }
  func.func @transform_10(%arg0: i32) -> (i32, i32, i32) {
    %c0_i32 = arith.constant 0 : i32
    %c0_i32_0 = arith.constant 0 : i32
    %c0_i32_1 = arith.constant 0 : i32
    %c0_i32_2 = arith.constant 0 : i32
    return %c0_i32, %c0_i32_0, %c0_i32_1 : i32, i32, i32
  }
  func.func @transform_11(%arg0: i32) -> (i32, i32, i32) {
    %c0_i32 = arith.constant 0 : i32
    %c0_i32_0 = arith.constant 0 : i32
    %c0_i32_1 = arith.constant 0 : i32
    %c0_i32_2 = arith.constant 0 : i32
    return %c0_i32, %c0_i32_0, %c0_i32_1 : i32, i32, i32
  }
  func.func @transform_12(%arg0: i32) -> (i32, i32, i32) {
    %c0_i32 = arith.constant 0 : i32
    %c0_i32_0 = arith.constant 0 : i32
    %c0_i32_1 = arith.constant 0 : i32
    %c0_i32_2 = arith.constant 0 : i32
    return %c0_i32, %c0_i32_0, %c0_i32_1 : i32, i32, i32
  }
  func.func @transform_13(%arg0: i32) -> (i32, i32, i32) {
    %c0_i32 = arith.constant 0 : i32
    %c0_i32_0 = arith.constant 0 : i32
    %c0_i32_1 = arith.constant 0 : i32
    %c0_i32_2 = arith.constant 0 : i32
    return %c0_i32, %c0_i32_0, %c0_i32_1 : i32, i32, i32
  }
  func.func @transform_14(%arg0: i32) -> (i32, i32, i32) {
    %c0_i32 = arith.constant 0 : i32
    %c0_i32_0 = arith.constant 0 : i32
    %c0_i32_1 = arith.constant 0 : i32
    %c0_i32_2 = arith.constant 0 : i32
    return %c0_i32, %c0_i32_0, %c0_i32_1 : i32, i32, i32
  }
  func.func @transform_15(%arg0: i32) -> (i32, i32, i32) {
    %c0_i32 = arith.constant 0 : i32
    %c0_i32_0 = arith.constant 0 : i32
    %c0_i32_1 = arith.constant 0 : i32
    %c0_i32_2 = arith.constant 0 : i32
    return %c0_i32, %c0_i32_0, %c0_i32_1 : i32, i32, i32
  }
  func.func @transform_16(%arg0: i32) -> (i32, i32, i32) {
    %c0_i32 = arith.constant 0 : i32
    %c0_i32_0 = arith.constant 0 : i32
    %c0_i32_1 = arith.constant 0 : i32
    %c0_i32_2 = arith.constant 0 : i32
    return %c0_i32, %c0_i32_0, %c0_i32_1 : i32, i32, i32
  }
  func.func @transform_17(%arg0: i32) -> (i32, i32, i32) {
    %c0_i32 = arith.constant 0 : i32
    %c0_i32_0 = arith.constant 0 : i32
    %c0_i32_1 = arith.constant 0 : i32
    %c0_i32_2 = arith.constant 0 : i32
    return %c0_i32, %c0_i32_0, %c0_i32_1 : i32, i32, i32
  }
  func.func @transform_18(%arg0: i32) -> (i32, i32, i32) {
    %c0_i32 = arith.constant 0 : i32
    %c0_i32_0 = arith.constant 0 : i32
    %c0_i32_1 = arith.constant 0 : i32
    %c0_i32_2 = arith.constant 0 : i32
    return %c0_i32, %c0_i32_0, %c0_i32_1 : i32, i32, i32
  }
  func.func @transform_19(%arg0: i32) -> (i32, i32, i32) {
    %c0_i32 = arith.constant 0 : i32
    %c0_i32_0 = arith.constant 0 : i32
    %c0_i32_1 = arith.constant 0 : i32
    %c0_i32_2 = arith.constant 0 : i32
    return %c0_i32, %c0_i32_0, %c0_i32_1 : i32, i32, i32
  }
  func.func @transform_20(%arg0: i32) -> (i32, i32, i32) {
    %c0_i32 = arith.constant 0 : i32
    %c0_i32_0 = arith.constant 0 : i32
    %c0_i32_1 = arith.constant 0 : i32
    %c0_i32_2 = arith.constant 0 : i32
    return %c0_i32, %c0_i32_0, %c0_i32_1 : i32, i32, i32
  }
  func.func @transform_21(%arg0: i32) -> (i32, i32, i32) {
    %c0_i32 = arith.constant 0 : i32
    %c0_i32_0 = arith.constant 0 : i32
    %c0_i32_1 = arith.constant 0 : i32
    %c0_i32_2 = arith.constant 0 : i32
    return %c0_i32, %c0_i32_0, %c0_i32_1 : i32, i32, i32
  }
  func.func @transform_22(%arg0: i32) -> (i32, i32, i32) {
    %c0_i32 = arith.constant 0 : i32
    %c0_i32_0 = arith.constant 0 : i32
    %c0_i32_1 = arith.constant 0 : i32
    %c0_i32_2 = arith.constant 0 : i32
    return %c0_i32, %c0_i32_0, %c0_i32_1 : i32, i32, i32
  }
  func.func @transform_23(%arg0: i32) -> (i32, i32, i32) {
    %c0_i32 = arith.constant 0 : i32
    %c0_i32_0 = arith.constant 0 : i32
    %c0_i32_1 = arith.constant 0 : i32
    %c0_i32_2 = arith.constant 0 : i32
    return %c0_i32, %c0_i32_0, %c0_i32_1 : i32, i32, i32
  }
  func.func @transform_24(%arg0: i32) -> (i32, i32, i32) {
    %c0_i32 = arith.constant 0 : i32
    %c0_i32_0 = arith.constant 0 : i32
    %c0_i32_1 = arith.constant 0 : i32
    %c0_i32_2 = arith.constant 0 : i32
    return %c0_i32, %c0_i32_0, %c0_i32_1 : i32, i32, i32
  }
  func.func @transform_25(%arg0: i32) -> (i32, i32, i32) {
    %c0_i32 = arith.constant 0 : i32
    %c0_i32_0 = arith.constant 0 : i32
    %c0_i32_1 = arith.constant 0 : i32
    %c0_i32_2 = arith.constant 0 : i32
    return %c0_i32, %c0_i32_0, %c0_i32_1 : i32, i32, i32
  }
  func.func @transform_26(%arg0: i32) -> (i32, i32) {
    %c0_i32 = arith.constant 0 : i32
    %c0_i32_0 = arith.constant 0 : i32
    %c0_i32_1 = arith.constant 0 : i32
    return %c0_i32, %c0_i32_0 : i32, i32
  }
  func.func @transform_27(%arg0: i32) -> (i32, i32) {
    %c0_i32 = arith.constant 0 : i32
    %c0_i32_0 = arith.constant 0 : i32
    %c0_i32_1 = arith.constant 0 : i32
    return %c0_i32, %c0_i32_0 : i32, i32
  }
  func.func @transform_28(%arg0: i32) -> (i32, i32) {
    %c0_i32 = arith.constant 0 : i32
    %c0_i32_0 = arith.constant 0 : i32
    %c0_i32_1 = arith.constant 0 : i32
    return %c0_i32, %c0_i32_0 : i32, i32
  }
  func.func @transform_29(%arg0: i32) -> (i32, i32) {
    %c0_i32 = arith.constant 0 : i32
    %c0_i32_0 = arith.constant 0 : i32
    %c0_i32_1 = arith.constant 0 : i32
    return %c0_i32, %c0_i32_0 : i32, i32
  }
  func.func @transform_30(%arg0: i32) -> (i32, i32) {
    %c0_i32 = arith.constant 0 : i32
    %c0_i32_0 = arith.constant 0 : i32
    %c0_i32_1 = arith.constant 0 : i32
    return %c0_i32, %c0_i32_0 : i32, i32
  }
  func.func @transform_31(%arg0: i32) -> (i32, i32, i32) {
    %c0_i32 = arith.constant 0 : i32
    %c0_i32_0 = arith.constant 0 : i32
    %c0_i32_1 = arith.constant 0 : i32
    return %arg0, %c0_i32, %c0_i32_0 : i32, i32, i32
  }
}

</mosaic_0001>

<llo_original>
// kernel: vlm_detector_forward.1
$region0: #{vlm_detector_forward.1}
  #allocation0 [shape = 'u32[]', space=smem, size = 0x4, offset = 0x4, fixed_abs, tag = 'smem constant byte address 0x4 - core index']
  #allocation1 [shape = 'u32[72,128]{1,0:T(1,128)}', space=vmem, size = 0x9000, scoped, tag = 'internal scratch']
  #allocation2 [shape = 'f32[17,32]{1,0:T(8,128)}', space=vmem, size = 0x3000, scoped, tag = 'scratch operand']
  #allocation3 [shape = 'f32[17,32]{1,0:T(8,128)}', space=vmem, size = 0x3000, scoped, tag = 'scratch operand']
  #allocation4 [shape = 'f32[1,1]{1,0:T(1,128)S(1)}', space=vmem, size = 0x200, scoped, tag = 'scoped memory for vlm_detector_forward.1']
  %s0 = inlined_call_operand.smem [shape: u32[32], index: -1, kind: input, shape index: {}]
  %s1 = sld [smem:[%s0]]
  %s2 = scalar_lea.smem %s0, 1
  %s3 = sld [smem:[%s2]]
  %s4 = scalar_lea.smem %s0, 2
  %s5 = sld [smem:[%s4]]
  %s6 = scalar_lea.smem %s0, 3
  %s7 = sld [smem:[%s6]]
  %s8 = scalar_lea.smem %s0, 4
  %s9 = sld [smem:[%s8]]
  %s10 = scalar_lea.smem %s0, 5
  %s11 = sld [smem:[%s10]]
  %s12 = scalar_lea.smem %s0, 6
  %s13 = sld [smem:[%s12]]
  %s14 = scalar_lea.smem %s0, 7
  %s15 = sld [smem:[%s14]]
  %s16 = scalar_lea.smem %s0, 8
  %s17 = sld [smem:[%s16]]
  %s18 = scalar_lea.smem %s0, 9
  %s19 = sld [smem:[%s18]]
  %s20 = scalar_lea.smem %s0, 10
  %s21 = sld [smem:[%s20]]
  %s22 = scalar_lea.smem %s0, 11
  %s23 = sld [smem:[%s22]]
  %s24 = scalar_lea.smem %s0, 12
  %s25 = sld [smem:[%s24]]
  %s26 = scalar_lea.smem %s0, 13
  %s27 = sld [smem:[%s26]]
  %s28 = scalar_lea.smem %s0, 14
  %s29 = sld [smem:[%s28]]
  %s30 = scalar_lea.smem %s0, 15
  %s31 = sld [smem:[%s30]]
  %s32 = scalar_lea.smem %s0, 16
  %s33 = sld [smem:[%s32]]
  %s34 = scalar_lea.smem %s0, 17
  %s35 = sld [smem:[%s34]]
  %s36 = scalar_lea.smem %s0, 18
  %s37 = sld [smem:[%s36]]
  %s38 = scalar_lea.smem %s0, 19
  %s39 = sld [smem:[%s38]]
  %s40 = scalar_lea.smem %s0, 20
  %s41 = sld [smem:[%s40]]
  %s42 = scalar_lea.smem %s0, 21
  %s43 = sld [smem:[%s42]]
  %s44 = scalar_lea.smem %s0, 22
  %s45 = sld [smem:[%s44]]
  %s46 = scalar_lea.smem %s0, 23
  %s47 = sld [smem:[%s46]]
  %s48 = scalar_lea.smem %s0, 24
  %s49 = sld [smem:[%s48]]
  %s50 = scalar_lea.smem %s0, 25
  %s51 = sld [smem:[%s50]]
  %s52 = scalar_lea.smem %s0, 26
  %s53 = sld [smem:[%s52]]
  %s54 = scalar_lea.smem %s0, 27
  %s55 = sld [smem:[%s54]]
  %s56 = scalar_lea.smem %s0, 28
  %s57 = sld [smem:[%s56]]
  %s58 = scalar_lea.smem %s0, 29
  %s59 = sld [smem:[%s58]]
  %s60 = scalar_lea.smem %s0, 30
  %s61 = sld [smem:[%s60]]
  %s62 = scalar_lea.smem %s0, 31
  %s63 = sld [smem:[%s62]]
  %s64 = sld [smem:[#allocation0]]
  $region157: #{vlm_detector_forward.1} parent=0
    _
  %s66 = ssub.s32 1, %s64
  %s67 = scalar_select 0, %s66, %s64
  %v68 = vstv %s61
  %69 = vst [vmem:[#allocation4] sm:$0x1] %v68
  loop: start=0, step=1, limit=4
  $region2: #{vlm_detector_forward.1} parent=0 // loop_pre_header
    _
  $region3: #{vlm_detector_forward.1} parent=0 // loop_header
    %s71 = sphi 0, %s75
    %p72 = scmp.ge.s32.totalorder %s71, 4
    %s81 = sphi 0, %s83
    %s84 = sphi 0, %s81
    %s85 = sphi 0, %s84
    %s101 = sphi 0, %s85
    %s105 = sphi 0, %s105
    %s107 = sphi 0, %s105
    %s108 = sphi 0, %s107
    %s122 = sphi 0, %s108
    %s126 = sphi 0, %s126
    %s128 = sphi 0, %s126
    %s129 = sphi 0, %s128
    %s143 = sphi 0, %s129
    %s147 = sphi 0, %s147
    %s149 = sphi 0, %s147
    %s150 = sphi 0, %s149
    %s164 = sphi 0, %s150
    %s168 = sphi 0, %s168
    %s170 = sphi 0, %s168
    %s171 = sphi 0, %s170
    %s185 = sphi 0, %s171
    %s189 = sphi 0, %s189
    %s191 = sphi 0, %s189
    %s192 = sphi 0, %s191
    %s206 = sphi 0, %s192
    %s210 = sphi 0, %s210
    %s212 = sphi 0, %s210
    %s213 = sphi 0, %s212
    %s227 = sphi 0, %s213
    %s231 = sphi 0, %s231
    %s233 = sphi 0, %s231
    %s234 = sphi 0, %s233
    %s248 = sphi 0, %s234
    %s252 = sphi 0, %s252
    %s254 = sphi 0, %s252
    %s255 = sphi 0, %s254
    %s269 = sphi 0, %s255
    %s273 = sphi 0, %s273
    %s275 = sphi 0, %s273
    %s276 = sphi 0, %s275
    %s290 = sphi 0, %s276
    %s294 = sphi 0, %s294
    %s296 = sphi 0, %s294
    %s297 = sphi 0, %s296
    %s311 = sphi 0, %s297
    %s315 = sphi 0, %s315
    %s317 = sphi 0, %s315
    %s318 = sphi 0, %s317
    %s332 = sphi 0, %s318
    %s336 = sphi 0, %s336
    %s338 = sphi 0, %s336
    %s339 = sphi 0, %s338
    %s353 = sphi 0, %s339
    %s357 = sphi 0, %s357
    %s359 = sphi 0, %s357
    %s360 = sphi 0, %s359
    %s374 = sphi 0, %s360
    %s378 = sphi 0, %s378
    %s380 = sphi 0, %s378
    %s381 = sphi 0, %s380
    %s395 = sphi 0, %s381
    %s399 = sphi 0, %s399
    %s401 = sphi 0, %s399
    %s402 = sphi 0, %s401
    %s416 = sphi 0, %s402
    %s420 = sphi 0, %s420
    %s422 = sphi 0, %s420
    %s423 = sphi 0, %s422
    %s437 = sphi 0, %s423
    %s441 = sphi 0, %s441
    %s443 = sphi 0, %s441
    %s444 = sphi 0, %s443
    %s458 = sphi 0, %s444
    %s462 = sphi 0, %s462
    %s464 = sphi 0, %s462
    %s465 = sphi 0, %s464
    %s479 = sphi 0, %s465
    %s483 = sphi 0, %s483
    %s485 = sphi 0, %s483
    %s486 = sphi 0, %s485
    %s500 = sphi 0, %s486
    %s504 = sphi 0, %s504
    %s506 = sphi 0, %s504
    %s507 = sphi 0, %s506
    %s521 = sphi 0, %s507
    %s525 = sphi 0, %s525
    %s527 = sphi 0, %s525
    %s528 = sphi 0, %s527
    %s542 = sphi 0, %s528
    %s546 = sphi 0, %s546
    %s548 = sphi 0, %s546
    %s549 = sphi 0, %s548
    %s563 = sphi 0, %s549
    %s567 = sphi 0, %s567
    %s569 = sphi 0, %s567
    %s570 = sphi 0, %s569
    %s584 = sphi 0, %s570
    %s588 = sphi 0, %s588
    %s590 = sphi 0, %s588
    %s591 = sphi 0, %s590
    %s605 = sphi 0, %s591
    %s609 = sphi 0, %s609
    %s611 = sphi 0, %s609
    %s612 = sphi 0, %s611
    %s626 = sphi 0, %s612
    %s630 = sphi 0, %s630
    %s632 = sphi 0, %s630
    %s633 = sphi 0, %s632
    %s647 = sphi 0, %s633
    %s651 = sphi 0, %s651
    %s653 = sphi 0, %s651
    %s654 = sphi 0, %s653
    %s668 = sphi 0, %s654
    %s672 = sphi 0, %s672
    %s674 = sphi 0, %s672
    %s675 = sphi 0, %s674
    %s689 = sphi 0, %s675
    %s693 = sphi 0, %s693
    %s695 = sphi 0, %s693
    %s696 = sphi 0, %s695
    %s710 = sphi 0, %s696
    %s714 = sphi 0, %s714
    %s716 = sphi 0, %s714
    %s717 = sphi 0, %s716
    %s731 = sphi 0, %s717
    %s737 = sphi 0, %s739
    %s740 = sphi 0, %s737
    %s741 = sphi 0, %s740
    %s757 = sphi 0, %s741
  $region4: #{vlm_detector_forward.1} parent=0 // loop_header_branch
    %74 = sbr.rel (%p72) target = $region8
  $region5: #{vlm_detector_forward.1} parent=0 // loop_body
    %s76 = ssub.s32 %s71, 1
    %s77 = ssub.s32 %s71, 2
    %s78 = sadd.s32 %s71, 1
    %s79 = ssub.s32 %s71, %s78
    %p80 = scmp.eq.s32.totalorder %s79, 0
    %s82 = sadd.s32 %s81, 1
    %s83 = scalar_select %p80, %s81, %s82
    %p86 = pneg %p80
    %p87 = scmp.eq.s32.totalorder %s71, 1
    %p88 = por %p86, %p87
    %p89 = scmp.ne.s32.totalorder %s81, %s84
    %p90 = scmp.eq.s32.totalorder %s71, 0
    %p91 = por %p89, %p90
    %p92 = scmp.ne.s32.totalorder %s81, %s84
    %p93 = scmp.eq.s32.totalorder %s76, 1
    %p94 = por %p92, %p93
    %p95 = scmp.ne.s32.totalorder %s84, %s85
    %p96 = scmp.eq.s32.totalorder %s76, 0
    %p97 = por %p95, %p96
    %p98 = scmp.ne.s32.totalorder %s84, %s85
    %p99 = scmp.eq.s32.totalorder %s77, 1
    %p100 = por %p98, %p99
    %p102 = scmp.ne.s32.totalorder %s85, %s101
    %p103 = scmp.eq.s32.totalorder %s77, 0
    %p104 = por %p102, %p103
    %s106 = sadd.s32 %s105, 1
    %p109 = scmp.eq.s32.totalorder %s71, 1
    %p110 = scmp.ne.s32.totalorder %s105, %s107
    %p111 = scmp.eq.s32.totalorder %s71, 0
    %p112 = por %p110, %p111
    %p113 = scmp.ne.s32.totalorder %s105, %s107
    %p114 = scmp.eq.s32.totalorder %s76, 1
    %p115 = por %p113, %p114
    %p116 = scmp.ne.s32.totalorder %s107, %s108
    %p117 = scmp.eq.s32.totalorder %s76, 0
    %p118 = por %p116, %p117
    %p119 = scmp.ne.s32.totalorder %s107, %s108
    %p120 = scmp.eq.s32.totalorder %s77, 1
    %p121 = por %p119, %p120
    %p123 = scmp.ne.s32.totalorder %s108, %s122
    %p124 = scmp.eq.s32.totalorder %s77, 0
    %p125 = por %p123, %p124
    %s127 = sadd.s32 %s126, 1
    %p130 = scmp.eq.s32.totalorder %s71, 1
    %p131 = scmp.ne.s32.totalorder %s126, %s128
    %p132 = scmp.eq.s32.totalorder %s71, 0
    %p133 = por %p131, %p132
    %p134 = scmp.ne.s32.totalorder %s126, %s128
    %p135 = scmp.eq.s32.totalorder %s76, 1
    %p136 = por %p134, %p135
    %p137 = scmp.ne.s32.totalorder %s128, %s129
    %p138 = scmp.eq.s32.totalorder %s76, 0
    %p139 = por %p137, %p138
    %p140 = scmp.ne.s32.totalorder %s128, %s129
    %p141 = scmp.eq.s32.totalorder %s77, 1
    %p142 = por %p140, %p141
    %p144 = scmp.ne.s32.totalorder %s129, %s143
    %p145 = scmp.eq.s32.totalorder %s77, 0
    %p146 = por %p144, %p145
    %s148 = sadd.s32 %s147, 1
    %p151 = scmp.eq.s32.totalorder %s71, 1
    %p152 = scmp.ne.s32.totalorder %s147, %s149
    %p153 = scmp.eq.s32.totalorder %s71, 0
    %p154 = por %p152, %p153
    %p155 = scmp.ne.s32.totalorder %s147, %s149
    %p156 = scmp.eq.s32.totalorder %s76, 1
    %p157 = por %p155, %p156
    %p158 = scmp.ne.s32.totalorder %s149, %s150
    %p159 = scmp.eq.s32.totalorder %s76, 0
    %p160 = por %p158, %p159
    %p161 = scmp.ne.s32.totalorder %s149, %s150
    %p162 = scmp.eq.s32.totalorder %s77, 1
    %p163 = por %p161, %p162
    %p165 = scmp.ne.s32.totalorder %s150, %s164
    %p166 = scmp.eq.s32.totalorder %s77, 0
    %p167 = por %p165, %p166
    %s169 = sadd.s32 %s168, 1
    %p172 = scmp.eq.s32.totalorder %s71, 1
    %p173 = scmp.ne.s32.totalorder %s168, %s170
    %p174 = scmp.eq.s32.totalorder %s71, 0
    %p175 = por %p173, %p174
    %p176 = scmp.ne.s32.totalorder %s168, %s170
    %p177 = scmp.eq.s32.totalorder %s76, 1
    %p178 = por %p176, %p177
    %p179 = scmp.ne.s32.totalorder %s170, %s171
    %p180 = scmp.eq.s32.totalorder %s76, 0
    %p181 = por %p179, %p180
    %p182 = scmp.ne.s32.totalorder %s170, %s171
    %p183 = scmp.eq.s32.totalorder %s77, 1
    %p184 = por %p182, %p183
    %p186 = scmp.ne.s32.totalorder %s171, %s185
    %p187 = scmp.eq.s32.totalorder %s77, 0
    %p188 = por %p186, %p187
    %s190 = sadd.s32 %s189, 1
    %p193 = scmp.eq.s32.totalorder %s71, 1
    %p194 = scmp.ne.s32.totalorder %s189, %s191
    %p195 = scmp.eq.s32.totalorder %s71, 0
    %p196 = por %p194, %p195
    %p197 = scmp.ne.s32.totalorder %s189, %s191
    %p198 = scmp.eq.s32.totalorder %s76, 1
    %p199 = por %p197, %p198
    %p200 = scmp.ne.s32.totalorder %s191, %s192
    %p201 = scmp.eq.s32.totalorder %s76, 0
    %p202 = por %p200, %p201
    %p203 = scmp.ne.s32.totalorder %s191, %s192
    %p204 = scmp.eq.s32.totalorder %s77, 1
    %p205 = por %p203, %p204
    %p207 = scmp.ne.s32.totalorder %s192, %s206
    %p208 = scmp.eq.s32.totalorder %s77, 0
    %p209 = por %p207, %p208
    %s211 = sadd.s32 %s210, 1
    %p214 = scmp.eq.s32.totalorder %s71, 1
    %p215 = scmp.ne.s32.totalorder %s210, %s212
    %p216 = scmp.eq.s32.totalorder %s71, 0
    %p217 = por %p215, %p216
    %p218 = scmp.ne.s32.totalorder %s210, %s212
    %p219 = scmp.eq.s32.totalorder %s76, 1
    %p220 = por %p218, %p219
    %p221 = scmp.ne.s32.totalorder %s212, %s213
    %p222 = scmp.eq.s32.totalorder %s76, 0
    %p223 = por %p221, %p222
    %p224 = scmp.ne.s32.totalorder %s212, %s213
    %p225 = scmp.eq.s32.totalorder %s77, 1
    %p226 = por %p224, %p225
    %p228 = scmp.ne.s32.totalorder %s213, %s227
    %p229 = scmp.eq.s32.totalorder %s77, 0
    %p230 = por %p228, %p229
    %s232 = sadd.s32 %s231, 1
    %p235 = scmp.eq.s32.totalorder %s71, 1
    %p236 = scmp.ne.s32.totalorder %s231, %s233
    %p237 = scmp.eq.s32.totalorder %s71, 0
    %p238 = por %p236, %p237
    %p239 = scmp.ne.s32.totalorder %s231, %s233
    %p240 = scmp.eq.s32.totalorder %s76, 1
    %p241 = por %p239, %p240
    %p242 = scmp.ne.s32.totalorder %s233, %s234
    %p243 = scmp.eq.s32.totalorder %s76, 0
    %p244 = por %p242, %p243
    %p245 = scmp.ne.s32.totalorder %s233, %s234
    %p246 = scmp.eq.s32.totalorder %s77, 1
    %p247 = por %p245, %p246
    %p249 = scmp.ne.s32.totalorder %s234, %s248
    %p250 = scmp.eq.s32.totalorder %s77, 0
    %p251 = por %p249, %p250
    %s253 = sadd.s32 %s252, 1
    %p256 = scmp.eq.s32.totalorder %s71, 1
    %p257 = scmp.ne.s32.totalorder %s252, %s254
    %p258 = scmp.eq.s32.totalorder %s71, 0
    %p259 = por %p257, %p258
    %p260 = scmp.ne.s32.totalorder %s252, %s254
    %p261 = scmp.eq.s32.totalorder %s76, 1
    %p262 = por %p260, %p261
    %p263 = scmp.ne.s32.totalorder %s254, %s255
    %p264 = scmp.eq.s32.totalorder %s76, 0
    %p265 = por %p263, %p264
    %p266 = scmp.ne.s32.totalorder %s254, %s255
    %p267 = scmp.eq.s32.totalorder %s77, 1
    %p268 = por %p266, %p267
    %p270 = scmp.ne.s32.totalorder %s255, %s269
    %p271 = scmp.eq.s32.totalorder %s77, 0
    %p272 = por %p270, %p271
    %s274 = sadd.s32 %s273, 1
    %p277 = scmp.eq.s32.totalorder %s71, 1
    %p278 = scmp.ne.s32.totalorder %s273, %s275
    %p279 = scmp.eq.s32.totalorder %s71, 0
    %p280 = por %p278, %p279
    %p281 = scmp.ne.s32.totalorder %s273, %s275
    %p282 = scmp.eq.s32.totalorder %s76, 1
    %p283 = por %p281, %p282
    %p284 = scmp.ne.s32.totalorder %s275, %s276
    %p285 = scmp.eq.s32.totalorder %s76, 0
    %p286 = por %p284, %p285
    %p287 = scmp.ne.s32.totalorder %s275, %s276
    %p288 = scmp.eq.s32.totalorder %s77, 1
    %p289 = por %p287, %p288
    %p291 = scmp.ne.s32.totalorder %s276, %s290
    %p292 = scmp.eq.s32.totalorder %s77, 0
    %p293 = por %p291, %p292
    %s295 = sadd.s32 %s294, 1
    %p298 = scmp.eq.s32.totalorder %s71, 1
    %p299 = scmp.ne.s32.totalorder %s294, %s296
    %p300 = scmp.eq.s32.totalorder %s71, 0
    %p301 = por %p299, %p300
    %p302 = scmp.ne.s32.totalorder %s294, %s296
    %p303 = scmp.eq.s32.totalorder %s76, 1
    %p304 = por %p302, %p303
    %p305 = scmp.ne.s32.totalorder %s296, %s297
    %p306 = scmp.eq.s32.totalorder %s76, 0
    %p307 = por %p305, %p306
    %p308 = scmp.ne.s32.totalorder %s296, %s297
    %p309 = scmp.eq.s32.totalorder %s77, 1
    %p310 = por %p308, %p309
    %p312 = scmp.ne.s32.totalorder %s297, %s311
    %p313 = scmp.eq.s32.totalorder %s77, 0
    %p314 = por %p312, %p313
    %s316 = sadd.s32 %s315, 1
    %p319 = scmp.eq.s32.totalorder %s71, 1
    %p320 = scmp.ne.s32.totalorder %s315, %s317
    %p321 = scmp.eq.s32.totalorder %s71, 0
    %p322 = por %p320, %p321
    %p323 = scmp.ne.s32.totalorder %s315, %s317
    %p324 = scmp.eq.s32.totalorder %s76, 1
    %p325 = por %p323, %p324
    %p326 = scmp.ne.s32.totalorder %s317, %s318
    %p327 = scmp.eq.s32.totalorder %s76, 0
    %p328 = por %p326, %p327
    %p329 = scmp.ne.s32.totalorder %s317, %s318
    %p330 = scmp.eq.s32.totalorder %s77, 1
    %p331 = por %p329, %p330
    %p333 = scmp.ne.s32.totalorder %s318, %s332
    %p334 = scmp.eq.s32.totalorder %s77, 0
    %p335 = por %p333, %p334
    %s337 = sadd.s32 %s336, 1
    %p340 = scmp.eq.s32.totalorder %s71, 1
    %p341 = scmp.ne.s32.totalorder %s336, %s338
    %p342 = scmp.eq.s32.totalorder %s71, 0
    %p343 = por %p341, %p342
    %p344 = scmp.ne.s32.totalorder %s336, %s338
    %p345 = scmp.eq.s32.totalorder %s76, 1
    %p346 = por %p344, %p345
    %p347 = scmp.ne.s32.totalorder %s338, %s339
    %p348 = scmp.eq.s32.totalorder %s76, 0
    %p349 = por %p347, %p348
    %p350 = scmp.ne.s32.totalorder %s338, %s339
    %p351 = scmp.eq.s32.totalorder %s77, 1
    %p352 = por %p350, %p351
    %p354 = scmp.ne.s32.totalorder %s339, %s353
    %p355 = scmp.eq.s32.totalorder %s77, 0
    %p356 = por %p354, %p355
    %s358 = sadd.s32 %s357, 1
    %p361 = scmp.eq.s32.totalorder %s71, 1
    %p362 = scmp.ne.s32.totalorder %s357, %s359
    %p363 = scmp.eq.s32.totalorder %s71, 0
    %p364 = por %p362, %p363
    %p365 = scmp.ne.s32.totalorder %s357, %s359
    %p366 = scmp.eq.s32.totalorder %s76, 1
    %p367 = por %p365, %p366
    %p368 = scmp.ne.s32.totalorder %s359, %s360
    %p369 = scmp.eq.s32.totalorder %s76, 0
    %p370 = por %p368, %p369
    %p371 = scmp.ne.s32.totalorder %s359, %s360
    %p372 = scmp.eq.s32.totalorder %s77, 1
    %p373 = por %p371, %p372
    %p375 = scmp.ne.s32.totalorder %s360, %s374
    %p376 = scmp.eq.s32.totalorder %s77, 0
    %p377 = por %p375, %p376
    %s379 = sadd.s32 %s378, 1
    %p382 = scmp.eq.s32.totalorder %s71, 1
    %p383 = scmp.ne.s32.totalorder %s378, %s380
    %p384 = scmp.eq.s32.totalorder %s71, 0
    %p385 = por %p383, %p384
    %p386 = scmp.ne.s32.totalorder %s378, %s380
    %p387 = scmp.eq.s32.totalorder %s76, 1
    %p388 = por %p386, %p387
    %p389 = scmp.ne.s32.totalorder %s380, %s381
    %p390 = scmp.eq.s32.totalorder %s76, 0
    %p391 = por %p389, %p390
    %p392 = scmp.ne.s32.totalorder %s380, %s381
    %p393 = scmp.eq.s32.totalorder %s77, 1
    %p394 = por %p392, %p393
    %p396 = scmp.ne.s32.totalorder %s381, %s395
    %p397 = scmp.eq.s32.totalorder %s77, 0
    %p398 = por %p396, %p397
    %s400 = sadd.s32 %s399, 1
    %p403 = scmp.eq.s32.totalorder %s71, 1
    %p404 = scmp.ne.s32.totalorder %s399, %s401
    %p405 = scmp.eq.s32.totalorder %s71, 0
    %p406 = por %p404, %p405
    %p407 = scmp.ne.s32.totalorder %s399, %s401
    %p408 = scmp.eq.s32.totalorder %s76, 1
    %p409 = por %p407, %p408
    %p410 = scmp.ne.s32.totalorder %s401, %s402
    %p411 = scmp.eq.s32.totalorder %s76, 0
    %p412 = por %p410, %p411
    %p413 = scmp.ne.s32.totalorder %s401, %s402
    %p414 = scmp.eq.s32.totalorder %s77, 1
    %p415 = por %p413, %p414
    %p417 = scmp.ne.s32.totalorder %s402, %s416
    %p418 = scmp.eq.s32.totalorder %s77, 0
    %p419 = por %p417, %p418
    %s421 = sadd.s32 %s420, 1
    %p424 = scmp.eq.s32.totalorder %s71, 1
    %p425 = scmp.ne.s32.totalorder %s420, %s422
    %p426 = scmp.eq.s32.totalorder %s71, 0
    %p427 = por %p425, %p426
    %p428 = scmp.ne.s32.totalorder %s420, %s422
    %p429 = scmp.eq.s32.totalorder %s76, 1
    %p430 = por %p428, %p429
    %p431 = scmp.ne.s32.totalorder %s422, %s423
    %p432 = scmp.eq.s32.totalorder %s76, 0
    %p433 = por %p431, %p432
    %p434 = scmp.ne.s32.totalorder %s422, %s423
    %p435 = scmp.eq.s32.totalorder %s77, 1
    %p436 = por %p434, %p435
    %p438 = scmp.ne.s32.totalorder %s423, %s437
    %p439 = scmp.eq.s32.totalorder %s77, 0
    %p440 = por %p438, %p439
    %s442 = sadd.s32 %s441, 1
    %p445 = scmp.eq.s32.totalorder %s71, 1
    %p446 = scmp.ne.s32.totalorder %s441, %s443
    %p447 = scmp.eq.s32.totalorder %s71, 0
    %p448 = por %p446, %p447
    %p449 = scmp.ne.s32.totalorder %s441, %s443
    %p450 = scmp.eq.s32.totalorder %s76, 1
    %p451 = por %p449, %p450
    %p452 = scmp.ne.s32.totalorder %s443, %s444
    %p453 = scmp.eq.s32.totalorder %s76, 0
    %p454 = por %p452, %p453
    %p455 = scmp.ne.s32.totalorder %s443, %s444
    %p456 = scmp.eq.s32.totalorder %s77, 1
    %p457 = por %p455, %p456
    %p459 = scmp.ne.s32.totalorder %s444, %s458
    %p460 = scmp.eq.s32.totalorder %s77, 0
    %p461 = por %p459, %p460
    %s463 = sadd.s32 %s462, 1
    %p466 = scmp.eq.s32.totalorder %s71, 1
    %p467 = scmp.ne.s32.totalorder %s462, %s464
    %p468 = scmp.eq.s32.totalorder %s71, 0
    %p469 = por %p467, %p468
    %p470 = scmp.ne.s32.totalorder %s462, %s464
    %p471 = scmp.eq.s32.totalorder %s76, 1
    %p472 = por %p470, %p471
    %p473 = scmp.ne.s32.totalorder %s464, %s465
    %p474 = scmp.eq.s32.totalorder %s76, 0
    %p475 = por %p473, %p474
    %p476 = scmp.ne.s32.totalorder %s464, %s465
    %p477 = scmp.eq.s32.totalorder %s77, 1
    %p478 = por %p476, %p477
    %p480 = scmp.ne.s32.totalorder %s465, %s479
    %p481 = scmp.eq.s32.totalorder %s77, 0
    %p482 = por %p480, %p481
    %s484 = sadd.s32 %s483, 1
    %p487 = scmp.eq.s32.totalorder %s71, 1
    %p488 = scmp.ne.s32.totalorder %s483, %s485
    %p489 = scmp.eq.s32.totalorder %s71, 0
    %p490 = por %p488, %p489
    %p491 = scmp.ne.s32.totalorder %s483, %s485
    %p492 = scmp.eq.s32.totalorder %s76, 1
    %p493 = por %p491, %p492
    %p494 = scmp.ne.s32.totalorder %s485, %s486
    %p495 = scmp.eq.s32.totalorder %s76, 0
    %p496 = por %p494, %p495
    %p497 = scmp.ne.s32.totalorder %s485, %s486
    %p498 = scmp.eq.s32.totalorder %s77, 1
    %p499 = por %p497, %p498
    %p501 = scmp.ne.s32.totalorder %s486, %s500
    %p502 = scmp.eq.s32.totalorder %s77, 0
    %p503 = por %p501, %p502
    %s505 = sadd.s32 %s504, 1
    %p508 = scmp.eq.s32.totalorder %s71, 1
    %p509 = scmp.ne.s32.totalorder %s504, %s506
    %p510 = scmp.eq.s32.totalorder %s71, 0
    %p511 = por %p509, %p510
    %p512 = scmp.ne.s32.totalorder %s504, %s506
    %p513 = scmp.eq.s32.totalorder %s76, 1
    %p514 = por %p512, %p513
    %p515 = scmp.ne.s32.totalorder %s506, %s507
    %p516 = scmp.eq.s32.totalorder %s76, 0
    %p517 = por %p515, %p516
    %p518 = scmp.ne.s32.totalorder %s506, %s507
    %p519 = scmp.eq.s32.totalorder %s77, 1
    %p520 = por %p518, %p519
    %p522 = scmp.ne.s32.totalorder %s507, %s521
    %p523 = scmp.eq.s32.totalorder %s77, 0
    %p524 = por %p522, %p523
    %s526 = sadd.s32 %s525, 1
    %p529 = scmp.eq.s32.totalorder %s71, 1
    %p530 = scmp.ne.s32.totalorder %s525, %s527
    %p531 = scmp.eq.s32.totalorder %s71, 0
    %p532 = por %p530, %p531
    %p533 = scmp.ne.s32.totalorder %s525, %s527
    %p534 = scmp.eq.s32.totalorder %s76, 1
    %p535 = por %p533, %p534
    %p536 = scmp.ne.s32.totalorder %s527, %s528
    %p537 = scmp.eq.s32.totalorder %s76, 0
    %p538 = por %p536, %p537
    %p539 = scmp.ne.s32.totalorder %s527, %s528
    %p540 = scmp.eq.s32.totalorder %s77, 1
    %p541 = por %p539, %p540
    %p543 = scmp.ne.s32.totalorder %s528, %s542
    %p544 = scmp.eq.s32.totalorder %s77, 0
    %p545 = por %p543, %p544
    %s547 = sadd.s32 %s546, 1
    %p550 = scmp.eq.s32.totalorder %s71, 1
    %p551 = scmp.ne.s32.totalorder %s546, %s548
    %p552 = scmp.eq.s32.totalorder %s71, 0
    %p553 = por %p551, %p552
    %p554 = scmp.ne.s32.totalorder %s546, %s548
    %p555 = scmp.eq.s32.totalorder %s76, 1
    %p556 = por %p554, %p555
    %p557 = scmp.ne.s32.totalorder %s548, %s549
    %p558 = scmp.eq.s32.totalorder %s76, 0
    %p559 = por %p557, %p558
    %p560 = scmp.ne.s32.totalorder %s548, %s549
    %p561 = scmp.eq.s32.totalorder %s77, 1
    %p562 = por %p560, %p561
    %p564 = scmp.ne.s32.totalorder %s549, %s563
    %p565 = scmp.eq.s32.totalorder %s77, 0
    %p566 = por %p564, %p565
    %s568 = sadd.s32 %s567, 1
    %p571 = scmp.eq.s32.totalorder %s71, 1
    %p572 = scmp.ne.s32.totalorder %s567, %s569
    %p573 = scmp.eq.s32.totalorder %s71, 0
    %p574 = por %p572, %p573
    %p575 = scmp.ne.s32.totalorder %s567, %s569
    %p576 = scmp.eq.s32.totalorder %s76, 1
    %p577 = por %p575, %p576
    %p578 = scmp.ne.s32.totalorder %s569, %s570
    %p579 = scmp.eq.s32.totalorder %s76, 0
    %p580 = por %p578, %p579
    %p581 = scmp.ne.s32.totalorder %s569, %s570
    %p582 = scmp.eq.s32.totalorder %s77, 1
    %p583 = por %p581, %p582
    %p585 = scmp.ne.s32.totalorder %s570, %s584
    %p586 = scmp.eq.s32.totalorder %s77, 0
    %p587 = por %p585, %p586
    %s589 = sadd.s32 %s588, 1
    %p592 = scmp.eq.s32.totalorder %s71, 1
    %p593 = scmp.ne.s32.totalorder %s588, %s590
    %p594 = scmp.eq.s32.totalorder %s71, 0
    %p595 = por %p593, %p594
    %p596 = scmp.ne.s32.totalorder %s588, %s590
    %p597 = scmp.eq.s32.totalorder %s76, 1
    %p598 = por %p596, %p597
    %p599 = scmp.ne.s32.totalorder %s590, %s591
    %p600 = scmp.eq.s32.totalorder %s76, 0
    %p601 = por %p599, %p600
    %p602 = scmp.ne.s32.totalorder %s590, %s591
    %p603 = scmp.eq.s32.totalorder %s77, 1
    %p604 = por %p602, %p603
    %p606 = scmp.ne.s32.totalorder %s591, %s605
    %p607 = scmp.eq.s32.totalorder %s77, 0
    %p608 = por %p606, %p607
    %s610 = sadd.s32 %s609, 1
    %p613 = scmp.eq.s32.totalorder %s71, 1
    %p614 = scmp.ne.s32.totalorder %s609, %s611
    %p615 = scmp.eq.s32.totalorder %s71, 0
    %p616 = por %p614, %p615
    %p617 = scmp.ne.s32.totalorder %s609, %s611
    %p618 = scmp.eq.s32.totalorder %s76, 1
    %p619 = por %p617, %p618
    %p620 = scmp.ne.s32.totalorder %s611, %s612
    %p621 = scmp.eq.s32.totalorder %s76, 0
    %p622 = por %p620, %p621
    %p623 = scmp.ne.s32.totalorder %s611, %s612
    %p624 = scmp.eq.s32.totalorder %s77, 1
    %p625 = por %p623, %p624
    %p627 = scmp.ne.s32.totalorder %s612, %s626
    %p628 = scmp.eq.s32.totalorder %s77, 0
    %p629 = por %p627, %p628
    %s631 = sadd.s32 %s630, 1
    %p634 = scmp.eq.s32.totalorder %s71, 1
    %p635 = scmp.ne.s32.totalorder %s630, %s632
    %p636 = scmp.eq.s32.totalorder %s71, 0
    %p637 = por %p635, %p636
    %p638 = scmp.ne.s32.totalorder %s630, %s632
    %p639 = scmp.eq.s32.totalorder %s76, 1
    %p640 = por %p638, %p639
    %p641 = scmp.ne.s32.totalorder %s632, %s633
    %p642 = scmp.eq.s32.totalorder %s76, 0
    %p643 = por %p641, %p642
    %p644 = scmp.ne.s32.totalorder %s632, %s633
    %p645 = scmp.eq.s32.totalorder %s77, 1
    %p646 = por %p644, %p645
    %p648 = scmp.ne.s32.totalorder %s633, %s647
    %p649 = scmp.eq.s32.totalorder %s77, 0
    %p650 = por %p648, %p649
    %s652 = sadd.s32 %s651, 1
    %p655 = scmp.eq.s32.totalorder %s71, 1
    %p656 = scmp.ne.s32.totalorder %s651, %s653
    %p657 = scmp.eq.s32.totalorder %s71, 0
    %p658 = por %p656, %p657
    %p659 = scmp.ne.s32.totalorder %s651, %s653
    %p660 = scmp.eq.s32.totalorder %s76, 1
    %p661 = por %p659, %p660
    %p662 = scmp.ne.s32.totalorder %s653, %s654
    %p663 = scmp.eq.s32.totalorder %s76, 0
    %p664 = por %p662, %p663
    %p665 = scmp.ne.s32.totalorder %s653, %s654
    %p666 = scmp.eq.s32.totalorder %s77, 1
    %p667 = por %p665, %p666
    %p669 = scmp.ne.s32.totalorder %s654, %s668
    %p670 = scmp.eq.s32.totalorder %s77, 0
    %p671 = por %p669, %p670
    %s673 = sadd.s32 %s672, 1
    %p676 = scmp.eq.s32.totalorder %s71, 1
    %p677 = scmp.ne.s32.totalorder %s672, %s674
    %p678 = scmp.eq.s32.totalorder %s71, 0
    %p679 = por %p677, %p678
    %p680 = scmp.ne.s32.totalorder %s672, %s674
    %p681 = scmp.eq.s32.totalorder %s76, 1
    %p682 = por %p680, %p681
    %p683 = scmp.ne.s32.totalorder %s674, %s675
    %p684 = scmp.eq.s32.totalorder %s76, 0
    %p685 = por %p683, %p684
    %p686 = scmp.ne.s32.totalorder %s674, %s675
    %p687 = scmp.eq.s32.totalorder %s77, 1
    %p688 = por %p686, %p687
    %p690 = scmp.ne.s32.totalorder %s675, %s689
    %p691 = scmp.eq.s32.totalorder %s77, 0
    %p692 = por %p690, %p691
    %s694 = sadd.s32 %s693, 1
    %p697 = scmp.eq.s32.totalorder %s71, 1
    %p698 = scmp.ne.s32.totalorder %s693, %s695
    %p699 = scmp.eq.s32.totalorder %s71, 0
    %p700 = por %p698, %p699
    %p701 = scmp.ne.s32.totalorder %s693, %s695
    %p702 = scmp.eq.s32.totalorder %s76, 1
    %p703 = por %p701, %p702
    %p704 = scmp.ne.s32.totalorder %s695, %s696
    %p705 = scmp.eq.s32.totalorder %s76, 0
    %p706 = por %p704, %p705
    %p707 = scmp.ne.s32.totalorder %s695, %s696
    %p708 = scmp.eq.s32.totalorder %s77, 1
    %p709 = por %p707, %p708
    %p711 = scmp.ne.s32.totalorder %s696, %s710
    %p712 = scmp.eq.s32.totalorder %s77, 0
    %p713 = por %p711, %p712
    %s715 = sadd.s32 %s714, 1
    %p718 = scmp.eq.s32.totalorder %s71, 1
    %p719 = scmp.ne.s32.totalorder %s714, %s716
    %p720 = scmp.eq.s32.totalorder %s71, 0
    %p721 = por %p719, %p720
    %p722 = scmp.ne.s32.totalorder %s714, %s716
    %p723 = scmp.eq.s32.totalorder %s76, 1
    %p724 = por %p722, %p723
    %p725 = scmp.ne.s32.totalorder %s716, %s717
    %p726 = scmp.eq.s32.totalorder %s76, 0
    %p727 = por %p725, %p726
    %p728 = scmp.ne.s32.totalorder %s716, %s717
    %p729 = scmp.eq.s32.totalorder %s77, 1
    %p730 = por %p728, %p729
    %p732 = scmp.ne.s32.totalorder %s717, %s731
    %p733 = scmp.eq.s32.totalorder %s77, 0
    %p734 = por %p732, %p733
    %s735 = ssub.s32 %s71, %s78
    %p736 = scmp.eq.s32.totalorder %s735, 0
    %s738 = sadd.s32 %s737, 1
    %s739 = scalar_select %p736, %s737, %s738
    %p742 = pneg %p736
    %p743 = scmp.eq.s32.totalorder %s71, 1
    %p744 = por %p742, %p743
    %p745 = scmp.ne.s32.totalorder %s737, %s740
    %p746 = scmp.eq.s32.totalorder %s71, 0
    %p747 = por %p745, %p746
    %p748 = scmp.ne.s32.totalorder %s737, %s740
    %p749 = scmp.eq.s32.totalorder %s76, 1
    %p750 = por %p748, %p749
    %p751 = scmp.ne.s32.totalorder %s740, %s741
    %p752 = scmp.eq.s32.totalorder %s76, 0
    %p753 = por %p751, %p752
    %p754 = scmp.ne.s32.totalorder %s740, %s741
    %p755 = scmp.eq.s32.totalorder %s77, 1
    %p756 = por %p754, %p755
    %p758 = scmp.ne.s32.totalorder %s741, %s757
    %p759 = scmp.eq.s32.totalorder %s77, 0
    %p760 = por %p758, %p759
    %p761 = scmp.le.s32.totalorder 1, %s71
    %p762 = scmp.lt.s32.totalorder %s71, 3
    %p763 = pnand %p761, %p762
    %p764 = pneg %p763
    // Predicated region
    $region9: #{vlm_detector_forward.1} parent=5 // pred_check
      _
    $region10: #{vlm_detector_forward.1} parent=5 // pred_check_branch
      %766 = sbr.rel (%p763) target = $region12
    $region11: #{vlm_detector_forward.1} parent=5 // pred_region
      %s767 = ssub.s32 %s71, 1
      // Predicated region
      $region13: #{vlm_detector_forward.1} parent=11 // pred_check
        %p768 = pneg %p118
      $region14: #{vlm_detector_forward.1} parent=11 // pred_check_branch
        %770 = sbr.rel (%p768) target = $region16
      $region15: #{vlm_detector_forward.1} parent=11 // pred_region
        _
      $region16: #{vlm_detector_forward.1} parent=11 // pred_fallthru
        _
      // Predicated region
      $region17: #{vlm_detector_forward.1} parent=11 // pred_check
        %p771 = pneg %p139
      $region18: #{vlm_detector_forward.1} parent=11 // pred_check_branch
        %773 = sbr.rel (%p771) target = $region20
      $region19: #{vlm_detector_forward.1} parent=11 // pred_region
        _
      $region20: #{vlm_detector_forward.1} parent=11 // pred_fallthru
        _
      // Predicated region
      $region21: #{vlm_detector_forward.1} parent=11 // pred_check
        %p774 = pneg %p160
      $region22: #{vlm_detector_forward.1} parent=11 // pred_check_branch
        %776 = sbr.rel (%p774) target = $region24
      $region23: #{vlm_detector_forward.1} parent=11 // pred_region
        _
      $region24: #{vlm_detector_forward.1} parent=11 // pred_fallthru
        _
      // Predicated region
      $region25: #{vlm_detector_forward.1} parent=11 // pred_check
        %p777 = pneg %p181
      $region26: #{vlm_detector_forward.1} parent=11 // pred_check_branch
        %779 = sbr.rel (%p777) target = $region28
      $region27: #{vlm_detector_forward.1} parent=11 // pred_region
        _
      $region28: #{vlm_detector_forward.1} parent=11 // pred_fallthru
        _
      // Predicated region
      $region29: #{vlm_detector_forward.1} parent=11 // pred_check
        %p780 = pneg %p202
      $region30: #{vlm_detector_forward.1} parent=11 // pred_check_branch
        %782 = sbr.rel (%p780) target = $region32
      $region31: #{vlm_detector_forward.1} parent=11 // pred_region
        _
      $region32: #{vlm_detector_forward.1} parent=11 // pred_fallthru
        _
      // Predicated region
      $region33: #{vlm_detector_forward.1} parent=11 // pred_check
        %p783 = pneg %p223
      $region34: #{vlm_detector_forward.1} parent=11 // pred_check_branch
        %785 = sbr.rel (%p783) target = $region36
      $region35: #{vlm_detector_forward.1} parent=11 // pred_region
        _
      $region36: #{vlm_detector_forward.1} parent=11 // pred_fallthru
        _
      // Predicated region
      $region37: #{vlm_detector_forward.1} parent=11 // pred_check
        %p786 = pneg %p244
      $region38: #{vlm_detector_forward.1} parent=11 // pred_check_branch
        %788 = sbr.rel (%p786) target = $region40
      $region39: #{vlm_detector_forward.1} parent=11 // pred_region
        _
      $region40: #{vlm_detector_forward.1} parent=11 // pred_fallthru
        _
      // Predicated region
      $region41: #{vlm_detector_forward.1} parent=11 // pred_check
        %p789 = pneg %p265
      $region42: #{vlm_detector_forward.1} parent=11 // pred_check_branch
        %791 = sbr.rel (%p789) target = $region44
      $region43: #{vlm_detector_forward.1} parent=11 // pred_region
        _
      $region44: #{vlm_detector_forward.1} parent=11 // pred_fallthru
        _
      // Predicated region
      $region45: #{vlm_detector_forward.1} parent=11 // pred_check
        %p792 = pneg %p286
      $region46: #{vlm_detector_forward.1} parent=11 // pred_check_branch
        %794 = sbr.rel (%p792) target = $region48
      $region47: #{vlm_detector_forward.1} parent=11 // pred_region
        _
      $region48: #{vlm_detector_forward.1} parent=11 // pred_fallthru
        _
      // Predicated region
      $region49: #{vlm_detector_forward.1} parent=11 // pred_check
        %p795 = pneg %p307
      $region50: #{vlm_detector_forward.1} parent=11 // pred_check_branch
        %797 = sbr.rel (%p795) target = $region52
      $region51: #{vlm_detector_forward.1} parent=11 // pred_region
        _
      $region52: #{vlm_detector_forward.1} parent=11 // pred_fallthru
        _
      // Predicated region
      $region53: #{vlm_detector_forward.1} parent=11 // pred_check
        %p798 = pneg %p328
      $region54: #{vlm_detector_forward.1} parent=11 // pred_check_branch
        %800 = sbr.rel (%p798) target = $region56
      $region55: #{vlm_detector_forward.1} parent=11 // pred_region
        _
      $region56: #{vlm_detector_forward.1} parent=11 // pred_fallthru
        _
      // Predicated region
      $region57: #{vlm_detector_forward.1} parent=11 // pred_check
        %p801 = pneg %p349
      $region58: #{vlm_detector_forward.1} parent=11 // pred_check_branch
        %803 = sbr.rel (%p801) target = $region60
      $region59: #{vlm_detector_forward.1} parent=11 // pred_region
        _
      $region60: #{vlm_detector_forward.1} parent=11 // pred_fallthru
        _
      // Predicated region
      $region61: #{vlm_detector_forward.1} parent=11 // pred_check
        %p804 = pneg %p370
      $region62: #{vlm_detector_forward.1} parent=11 // pred_check_branch
        %806 = sbr.rel (%p804) target = $region64
      $region63: #{vlm_detector_forward.1} parent=11 // pred_region
        _
      $region64: #{vlm_detector_forward.1} parent=11 // pred_fallthru
        _
      // Predicated region
      $region65: #{vlm_detector_forward.1} parent=11 // pred_check
        %p807 = pneg %p391
      $region66: #{vlm_detector_forward.1} parent=11 // pred_check_branch
        %809 = sbr.rel (%p807) target = $region68
      $region67: #{vlm_detector_forward.1} parent=11 // pred_region
        _
      $region68: #{vlm_detector_forward.1} parent=11 // pred_fallthru
        _
      // Predicated region
      $region69: #{vlm_detector_forward.1} parent=11 // pred_check
        %p810 = pneg %p412
      $region70: #{vlm_detector_forward.1} parent=11 // pred_check_branch
        %812 = sbr.rel (%p810) target = $region72
      $region71: #{vlm_detector_forward.1} parent=11 // pred_region
        _
      $region72: #{vlm_detector_forward.1} parent=11 // pred_fallthru
        _
      // Predicated region
      $region73: #{vlm_detector_forward.1} parent=11 // pred_check
        %p813 = pneg %p433
      $region74: #{vlm_detector_forward.1} parent=11 // pred_check_branch
        %815 = sbr.rel (%p813) target = $region76
      $region75: #{vlm_detector_forward.1} parent=11 // pred_region
        _
      $region76: #{vlm_detector_forward.1} parent=11 // pred_fallthru
        _
      // Predicated region
      $region77: #{vlm_detector_forward.1} parent=11 // pred_check
        %p816 = pneg %p454
      $region78: #{vlm_detector_forward.1} parent=11 // pred_check_branch
        %818 = sbr.rel (%p816) target = $region80
      $region79: #{vlm_detector_forward.1} parent=11 // pred_region
        _
      $region80: #{vlm_detector_forward.1} parent=11 // pred_fallthru
        _
      // Predicated region
      $region81: #{vlm_detector_forward.1} parent=11 // pred_check
        %p819 = pneg %p475
      $region82: #{vlm_detector_forward.1} parent=11 // pred_check_branch
        %821 = sbr.rel (%p819) target = $region84
      $region83: #{vlm_detector_forward.1} parent=11 // pred_region
        _
      $region84: #{vlm_detector_forward.1} parent=11 // pred_fallthru
        _
      // Predicated region
      $region85: #{vlm_detector_forward.1} parent=11 // pred_check
        %p822 = pneg %p496
      $region86: #{vlm_detector_forward.1} parent=11 // pred_check_branch
        %824 = sbr.rel (%p822) target = $region88
      $region87: #{vlm_detector_forward.1} parent=11 // pred_region
        _
      $region88: #{vlm_detector_forward.1} parent=11 // pred_fallthru
        _
      // Predicated region
      $region89: #{vlm_detector_forward.1} parent=11 // pred_check
        %p825 = pneg %p517
      $region90: #{vlm_detector_forward.1} parent=11 // pred_check_branch
        %827 = sbr.rel (%p825) target = $region92
      $region91: #{vlm_detector_forward.1} parent=11 // pred_region
        _
      $region92: #{vlm_detector_forward.1} parent=11 // pred_fallthru
        _
      // Predicated region
      $region93: #{vlm_detector_forward.1} parent=11 // pred_check
        %p828 = pneg %p538
      $region94: #{vlm_detector_forward.1} parent=11 // pred_check_branch
        %830 = sbr.rel (%p828) target = $region96
      $region95: #{vlm_detector_forward.1} parent=11 // pred_region
        _
      $region96: #{vlm_detector_forward.1} parent=11 // pred_fallthru
        _
      // Predicated region
      $region97: #{vlm_detector_forward.1} parent=11 // pred_check
        %p831 = pneg %p559
      $region98: #{vlm_detector_forward.1} parent=11 // pred_check_branch
        %833 = sbr.rel (%p831) target = $region100
      $region99: #{vlm_detector_forward.1} parent=11 // pred_region
        _
      $region100: #{vlm_detector_forward.1} parent=11 // pred_fallthru
        _
      // Predicated region
      $region101: #{vlm_detector_forward.1} parent=11 // pred_check
        %p834 = pneg %p580
      $region102: #{vlm_detector_forward.1} parent=11 // pred_check_branch
        %836 = sbr.rel (%p834) target = $region104
      $region103: #{vlm_detector_forward.1} parent=11 // pred_region
        _
      $region104: #{vlm_detector_forward.1} parent=11 // pred_fallthru
        _
      // Predicated region
      $region105: #{vlm_detector_forward.1} parent=11 // pred_check
        %p837 = pneg %p601
      $region106: #{vlm_detector_forward.1} parent=11 // pred_check_branch
        %839 = sbr.rel (%p837) target = $region108
      $region107: #{vlm_detector_forward.1} parent=11 // pred_region
        _
      $region108: #{vlm_detector_forward.1} parent=11 // pred_fallthru
        _
      // Predicated region
      $region109: #{vlm_detector_forward.1} parent=11 // pred_check
        %p840 = pneg %p622
      $region110: #{vlm_detector_forward.1} parent=11 // pred_check_branch
        %842 = sbr.rel (%p840) target = $region112
      $region111: #{vlm_detector_forward.1} parent=11 // pred_region
        _
      $region112: #{vlm_detector_forward.1} parent=11 // pred_fallthru
        _
      // Predicated region
      $region113: #{vlm_detector_forward.1} parent=11 // pred_check
        %p843 = pneg %p643
      $region114: #{vlm_detector_forward.1} parent=11 // pred_check_branch
        %845 = sbr.rel (%p843) target = $region116
      $region115: #{vlm_detector_forward.1} parent=11 // pred_region
        _
      $region116: #{vlm_detector_forward.1} parent=11 // pred_fallthru
        _
      // Predicated region
      $region117: #{vlm_detector_forward.1} parent=11 // pred_check
        %p846 = pneg %p664
      $region118: #{vlm_detector_forward.1} parent=11 // pred_check_branch
        %848 = sbr.rel (%p846) target = $region120
      $region119: #{vlm_detector_forward.1} parent=11 // pred_region
        _
      $region120: #{vlm_detector_forward.1} parent=11 // pred_fallthru
        _
      // Predicated region
      $region121: #{vlm_detector_forward.1} parent=11 // pred_check
        %p849 = pneg %p685
      $region122: #{vlm_detector_forward.1} parent=11 // pred_check_branch
        %851 = sbr.rel (%p849) target = $region124
      $region123: #{vlm_detector_forward.1} parent=11 // pred_region
        _
      $region124: #{vlm_detector_forward.1} parent=11 // pred_fallthru
        _
      // Predicated region
      $region125: #{vlm_detector_forward.1} parent=11 // pred_check
        %p852 = pneg %p706
      $region126: #{vlm_detector_forward.1} parent=11 // pred_check_branch
        %854 = sbr.rel (%p852) target = $region128
      $region127: #{vlm_detector_forward.1} parent=11 // pred_region
        _
      $region128: #{vlm_detector_forward.1} parent=11 // pred_fallthru
        _
      // Predicated region
      $region129: #{vlm_detector_forward.1} parent=11 // pred_check
        %p855 = pneg %p727
      $region130: #{vlm_detector_forward.1} parent=11 // pred_check_branch
        %857 = sbr.rel (%p855) target = $region132
      $region131: #{vlm_detector_forward.1} parent=11 // pred_region
        _
      $region132: #{vlm_detector_forward.1} parent=11 // pred_fallthru
        _
    $region12: #{vlm_detector_forward.1} parent=5 // pred_fallthru
      _
    %p858 = scmp.lt.s32.totalorder %s71, 2
    // Predicated region
    $region133: #{vlm_detector_forward.1} parent=5 // pred_check
      %p859 = pneg %p858
    $region134: #{vlm_detector_forward.1} parent=5 // pred_check_branch
      %861 = sbr.rel (%p859) target = $region136
    $region135: #{vlm_detector_forward.1} parent=5 // pred_region
      // Predicated region
      $region137: #{vlm_detector_forward.1} parent=135 // pred_check
        %p862 = pneg %p91
      $region138: #{vlm_detector_forward.1} parent=135 // pred_check_branch
        %864 = sbr.rel (%p862) target = $region140
      $region139: #{vlm_detector_forward.1} parent=135 // pred_region
        %p865 = scmp.lt.s32.totalorder %s71, 1
        %s866 = scalar_select %p865, %s71, 1
        %s867 = smul.addr %s866, 4
        %s868 = smul.addr %s867, 8
        %s869 = scalar_lea.vmem %s1, %s868
      $region140: #{vlm_detector_forward.1} parent=135 // pred_fallthru
        _
    $region136: #{vlm_detector_forward.1} parent=5 // pred_fallthru
      _
    %p870 = scmp.le.s32.totalorder 1, %s71
    %p871 = scmp.lt.s32.totalorder %s71, 3
    %p872 = pnand %p870, %p871
    %p873 = pneg %p872
    // Predicated region
    $region141: #{vlm_detector_forward.1} parent=5 // pred_check
      _
    $region142: #{vlm_detector_forward.1} parent=5 // pred_check_branch
      %875 = sbr.rel (%p872) target = $region144
    $region143: #{vlm_detector_forward.1} parent=5 // pred_region
      %s876 = ssub.s32 %s71, 1
      %p877 = scmp.lt.s32.totalorder %s76, 1
      %s878 = scalar_select %p877, %s76, 1
      %s879 = smul.addr %s878, 4
      %s880 = smul.addr %s879, 8
      %s881 = scalar_lea.vmem %s1, %s880
      %p882 = pneg %p97
      %p883 = pneg %p94
      %p884 = pneg %p118
      %p885 = pneg %p115
      %p886 = pneg %p139
      %p887 = pneg %p136
      %p888 = pneg %p160
      %p889 = pneg %p157
      %p890 = pneg %p181
      %p891 = pneg %p178
      %p892 = pneg %p202
      %p893 = pneg %p199
      %p894 = pneg %p223
      %p895 = pneg %p220
      %p896 = pneg %p244
      %p897 = pneg %p241
      %p898 = pneg %p265
      %p899 = pneg %p262
      %p900 = pneg %p286
      %p901 = pneg %p283
      %p902 = pneg %p307
      %p903 = pneg %p304
      %p904 = pneg %p328
      %p905 = pneg %p325
      %p906 = pneg %p349
      %p907 = pneg %p346
      %p908 = pneg %p370
      %p909 = pneg %p367
      %p910 = pneg %p391
      %p911 = pneg %p388
      %p912 = pneg %p412
      %p913 = pneg %p409
      %p914 = pneg %p433
      %p915 = pneg %p430
      %p916 = pneg %p454
      %p917 = pneg %p451
      %p918 = pneg %p475
      %p919 = pneg %p472
      %p920 = pneg %p496
      %p921 = pneg %p493
      %p922 = pneg %p517
      %p923 = pneg %p514
      %p924 = pneg %p538
      %p925 = pneg %p535
      %p926 = pneg %p559
      %p927 = pneg %p556
      %p928 = pneg %p580
      %p929 = pneg %p577
      %p930 = pneg %p601
      %p931 = pneg %p598
      %p932 = pneg %p622
      %p933 = pneg %p619
      %p934 = pneg %p643
      %p935 = pneg %p640
      %p936 = pneg %p664
      %p937 = pneg %p661
      %p938 = pneg %p685
      %p939 = pneg %p682
      %p940 = pneg %p706
      %p941 = pneg %p703
      %p942 = pneg %p727
      %p943 = pneg %p724
      %p944 = pneg %p753
      %p945 = pneg %p750
      %p946 = scmp.lt.s32.totalorder %s76, 1
      %s947 = scalar_select %p946, %s76, 1
      %s948 = scalar_lea.vmem %s63, %s947
      %p949 = scmp.lt.s32.totalorder %s76, 1
      %s950 = scalar_select %p949, %s76, 1
      %s951 = smul.addr %s950, 4
      %s952 = smul.addr %s951, 8
      %s953 = scalar_lea.vmem %s1, %s952
      %p954 = scmp.lt.s32.totalorder %s76, 1
      %s955 = scalar_select %p954, %s76, 1
      %s956 = scalar_lea.vmem %s63, %s955
      %v957 = vld [vmem:[%s953] sm:$0xff]
      %v958 = vld [vmem:[%s953 + $0x8] sm:$0xff]
      %v959 = vld [vmem:[%s953 + $0x10] sm:$0xff]
      %v960 = vld [vmem:[%s953 + $0x18] sm:$0xff]
      %v961 = vld [vmem:[%s3] sm:$0xff]
      %v962 = vld [vmem:[%s3 + $0x8] sm:$0xff]
      %v963 = vld [vmem:[%s3 + $0x10] sm:$0xff]
      %v964 = vld [vmem:[%s3 + $0x18] sm:$0xff]
      %v965 = vld [vmem:[%s3 + $0x20] sm:$0xff]
      %v966 = vld [vmem:[%s3 + $0x28] sm:$0xff]
      %v967 = vld [vmem:[%s3 + $0x30] sm:$0xff]
      %v968 = vld [vmem:[%s3 + $0x38] sm:$0xff]
      %v969 = vld [vmem:[%s3 + $0x40] sm:$0xff]
      %v970 = vld [vmem:[%s3 + $0x48] sm:$0xff]
      %v971 = vld [vmem:[%s3 + $0x50] sm:$0xff]
      %v972 = vld [vmem:[%s3 + $0x58] sm:$0xff]
      %v973 = vld [vmem:[%s3 + $0x60] sm:$0xff]
      %v974 = vld [vmem:[%s3 + $0x68] sm:$0xff]
      %v975 = vld [vmem:[%s3 + $0x70] sm:$0xff]
      %v976 = vld [vmem:[%s3 + $0x78] sm:$0xff]
      %v977 = vld [vmem:[%s3 + $0x80] sm:$0xff]
      %v978 = vld [vmem:[%s3 + $0x88] sm:$0xff]
      %v979 = vld [vmem:[%s3 + $0x90] sm:$0xff]
      %v980 = vld [vmem:[%s3 + $0x98] sm:$0xff]
      %v981 = vld [vmem:[%s3 + $0xa0] sm:$0xff]
      %v982 = vld [vmem:[%s3 + $0xa8] sm:$0xff]
      %v983 = vld [vmem:[%s3 + $0xb0] sm:$0xff]
      %v984 = vld [vmem:[%s3 + $0xb8] sm:$0xff]
      %v985 = vld [vmem:[%s5] sm:$0x1]
      %v986 = vld [vmem:[%s7] sm:$0x1]
      %v987 = vadd.f32 %v985, %v986
      %vm988 = vcmask 253952
      %989 = vst.msk [vmem:[#allocation2] sm:$0x1] %vm988, %v987
      %v990 = vld [vmem:[%s7 + $0x1] sm:$0xff]
      %v991 = vld [vmem:[%s7 + $0x9] sm:$0xff]
      %vm992 = vcmask 523264
      %v994 = vsel %vm992, %v958, 0
      %v997 = vsel %vm992, %v960, 0
      %999 = vmatpush.msra.mxu0 %v976
      %1000 = vmatpush.msra.mxu0 %v975
      %1001 = vmatpush.msra.mxu0 %v974
      %1002 = vmatpush.msra.mxu0 %v973
      %1003 = vmatpush.msra.mxu0 %v972
      %1004 = vmatpush.msra.mxu0 %v971
      %1005 = vmatpush.msra.mxu0 %v970
      %1006 = vmatpush.msra.mxu0 %v969
      %1007 = vmatpush.msra.mxu0 %v968
      %1008 = vmatpush.msra.mxu0 %v967
      %1009 = vmatpush.msra.mxu0 %v966
      %1010 = vmatpush.msra.mxu0 %v965
      %1011 = vmatpush.msra.mxu0 %v964
      %1012 = vmatpush.msra.mxu0 %v963
      %1013 = vmatpush.msra.mxu0 %v962
      %1014 = vmatpush.msra.mxu0 %v961
      %1015 = vmatmul.f32.gmra.mxu0 %v957
      %v1016 = vpop.f32.mrf.mxu0
      %v1017 = vadd.f32 %v990, %v1016
      %1018 = vmatmul.f32.gmra.mxu0 %v959
      %v1019 = vpop.f32.mrf.mxu0
      %v1020 = vadd.f32 %v991, %v1019
      %1021 = vdwg.mxu0
      %1022 = vmatpush.msra.mxu0 0.0
      %1023 = vmatpush.msra.mxu0 0.0
      %1024 = vmatpush.msra.mxu0 0.0
      %1025 = vmatpush.msra.mxu0 0.0
      %1026 = vmatpush.msra.mxu0 0.0
      %1027 = vmatpush.msra.mxu0 0.0
      %1028 = vmatpush.msra.mxu0 0.0
      %1029 = vmatpush.msra.mxu0 0.0
      %1030 = vmatpush.msra.mxu0 %v984
      %1031 = vmatpush.msra.mxu0 %v983
      %1032 = vmatpush.msra.mxu0 %v982
      %1033 = vmatpush.msra.mxu0 %v981
      %1034 = vmatpush.msra.mxu0 %v980
      %1035 = vmatpush.msra.mxu0 %v979
      %1036 = vmatpush.msra.mxu0 %v978
      %1037 = vmatpush.msra.mxu0 %v977
      %1038 = vmatmul.f32.gmra.mxu0 %v994
      %v1039 = vpop.f32.mrf.mxu0
      %v1040 = vadd.f32 %v1017, %v1039
      %1041 = vmatmul.f32.gmra.mxu0 %v997
      %v1042 = vpop.f32.mrf.mxu0
      %v1043 = vadd.f32 %v1020, %v1042
      %1044 = vdwg.mxu0
      %vm1045 = vcmask 261120
      %1046 = vst.msk [vmem:[#allocation2 + $0x1] sm:$0xff] %vm1045, %v1040
      %1047 = vst.msk [vmem:[#allocation2 + $0x9] sm:$0xff] %vm1045, %v1043
      %v1048 = vld [vmem:[#allocation2] sm:$0xff]
      %v1049 = vld [vmem:[#allocation2 + $0x8] sm:$0xff]
      %v1050 = vld [vmem:[#allocation2 + $0x10] sm:$0x1]
      %v1051 = vld [vmem:[%s9] sm:$0x1]
      %v1052 = vld [vmem:[%s11] sm:$0x1]
      %v1053 = vsel %vm1045, %v1048, 0.0
      %1054 = vadd.xlane.f32.xlu0 %v1053
      %v1055 = vpop.xlane.xlu0 %1054
      %v1056 = vsel %vm1045, %v1049, 0.0
      %1057 = vadd.xlane.f32.xlu0 %v1056
      %v1058 = vpop.xlane.xlu0 %1057
      %v1059 = vsel %vm988, %v1050, 0.0
      %1060 = vadd.xlane.f32.xlu0 %v1059
      %v1061 = vpop.xlane.xlu0 %1060
      %v1062 = vrcp.pop 32.0
      %v1063 = vmul.f32 32.0, %v1062
      %v1064 = vsub.f32 1.0, %v1063
      %v1065 = vmul.f32 %v1062, %v1064
      %v1066 = vadd.f32 %v1062, %v1065
      %vm1067 = vweird.f32 %v1062
      %v1068 = vsel %vm1067, %v1062, %v1066
      %v1069 = vmul.f32 %v1055, %v1068
      %v1070 = vmul.f32 %v1058, %v1068
      %v1071 = vmul.f32 %v1061, %v1068
      %v1072 = vsub.f32 %v1048, %v1069
      %v1073 = vsub.f32 %v1049, %v1070
      %v1074 = vsub.f32 %v1050, %v1071
      %v1075 = vmul.f32 %v1072, %v1072
      %v1076 = vmul.f32 %v1073, %v1073
      %v1077 = vmul.f32 %v1074, %v1074
      %v1078 = vsel %vm1045, %v1075, 0.0
      %1079 = vadd.xlane.f32.xlu0 %v1078
      %v1080 = vpop.xlane.xlu0 %1079
      %v1081 = vsel %vm1045, %v1076, 0.0
      %1082 = vadd.xlane.f32.xlu0 %v1081
      %v1083 = vpop.xlane.xlu0 %1082
      %v1084 = vsel %vm988, %v1077, 0.0
      %1085 = vadd.xlane.f32.xlu0 %v1084
      %v1086 = vpop.xlane.xlu0 %1085
      %v1087 = vmul.f32 %v1080, %v1068
      %v1088 = vmul.f32 %v1083, %v1068
      %v1089 = vmul.f32 %v1086, %v1068
      %v1090 = vadd.f32 %v1087, 1e-05
      %v1091 = vadd.f32 %v1088, 1e-05
      %v1092 = vadd.f32 %v1089, 1e-05
      %v1093 = vrsqrt.pop %v1090
      %v1094 = vmul.f32 %v1093, %v1090
      %v1095 = vmul.f32 %v1094, %v1093
      %v1096 = vmul.f32 0.5, %v1095
      %v1097 = vsub.f32 1.5, %v1096
      %v1098 = vmul.f32 %v1093, %v1097
      %vm1099 = vweird.f32 %v1090
      %vm1100 = vweird.f32 %v1093
      %vm1101 = vmor %vm1099, %vm1100
      %v1102 = vsel %vm1101, %v1093, %v1098
      %v1103 = vrsqrt.pop %v1091
      %v1104 = vmul.f32 %v1103, %v1091
      %v1105 = vmul.f32 %v1104, %v1103
      %v1106 = vmul.f32 0.5, %v1105
      %v1107 = vsub.f32 1.5, %v1106
      %v1108 = vmul.f32 %v1103, %v1107
      %vm1109 = vweird.f32 %v1091
      %vm1110 = vweird.f32 %v1103
      %vm1111 = vmor %vm1109, %vm1110
      %v1112 = vsel %vm1111, %v1103, %v1108
      %v1113 = vrsqrt.pop %v1092
      %v1114 = vmul.f32 %v1113, %v1092
      %v1115 = vmul.f32 %v1114, %v1113
      %v1116 = vmul.f32 0.5, %v1115
      %v1117 = vsub.f32 1.5, %v1116
      %v1118 = vmul.f32 %v1113, %v1117
      %vm1119 = vweird.f32 %v1092
      %vm1120 = vweird.f32 %v1113
      %vm1121 = vmor %vm1119, %vm1120
      %v1122 = vsel %vm1121, %v1113, %v1118
      %v1123 = vmul.f32 %v1072, %v1102
      %v1124 = vmul.f32 %v1073, %v1112
      %v1125 = vmul.f32 %v1074, %v1122
      %v1127 = vperm.slane %v1051, 0
      %v1129 = vmul.f32 %v1123, %v1127
      %v1130 = vmul.f32 %v1124, %v1127
      %v1131 = vmul.f32 %v1125, %v1127
      %v1133 = vperm.slane %v1052, 0
      %v1135 = vadd.f32 %v1129, %v1133
      %v1136 = vadd.f32 %v1130, %v1133
      %v1137 = vadd.f32 %v1131, %v1133
      %v1138 = vld [vmem:[%s13] sm:$0x1]
      %v1139 = vld [vmem:[%s15] sm:$0x1]
      %v1140 = vsel %vm1045, %v1135, 0.0
      %1141 = vadd.xlane.f32.xlu0 %v1140
      %v1142 = vpop.xlane.xlu0 %1141
      %v1143 = vsel %vm1045, %v1136, 0.0
      %1144 = vadd.xlane.f32.xlu0 %v1143
      %v1145 = vpop.xlane.xlu0 %1144
      %v1146 = vsel %vm988, %v1137, 0.0
      %1147 = vadd.xlane.f32.xlu0 %v1146
      %v1148 = vpop.xlane.xlu0 %1147
      %v1149 = vmul.f32 %v1142, %v1068
      %v1150 = vmul.f32 %v1145, %v1068
      %v1151 = vmul.f32 %v1148, %v1068
      %v1152 = vsub.f32 %v1135, %v1149
      %v1153 = vsub.f32 %v1136, %v1150
      %v1154 = vsub.f32 %v1137, %v1151
      %v1155 = vmul.f32 %v1152, %v1152
      %v1156 = vmul.f32 %v1153, %v1153
      %v1157 = vmul.f32 %v1154, %v1154
      %v1158 = vsel %vm1045, %v1155, 0.0
      %1159 = vadd.xlane.f32.xlu0 %v1158
      %v1160 = vpop.xlane.xlu0 %1159
      %v1161 = vsel %vm1045, %v1156, 0.0
      %1162 = vadd.xlane.f32.xlu0 %v1161
      %v1163 = vpop.xlane.xlu0 %1162
      %v1164 = vsel %vm988, %v1157, 0.0
      %1165 = vadd.xlane.f32.xlu0 %v1164
      %v1166 = vpop.xlane.xlu0 %1165
      %v1167 = vmul.f32 %v1160, %v1068
      %v1168 = vmul.f32 %v1163, %v1068
      %v1169 = vmul.f32 %v1166, %v1068
      %v1170 = vadd.f32 %v1167, 1e-05
      %v1171 = vadd.f32 %v1168, 1e-05
      %v1172 = vadd.f32 %v1169, 1e-05
      %v1173 = vrsqrt.pop %v1170
      %v1174 = vmul.f32 %v1173, %v1170
      %v1175 = vmul.f32 %v1174, %v1173
      %v1176 = vmul.f32 0.5, %v1175
      %v1177 = vsub.f32 1.5, %v1176
      %v1178 = vmul.f32 %v1173, %v1177
      %vm1179 = vweird.f32 %v1170
      %vm1180 = vweird.f32 %v1173
      %vm1181 = vmor %vm1179, %vm1180
      %v1182 = vsel %vm1181, %v1173, %v1178
      %v1183 = vrsqrt.pop %v1171
      %v1184 = vmul.f32 %v1183, %v1171
      %v1185 = vmul.f32 %v1184, %v1183
      %v1186 = vmul.f32 0.5, %v1185
      %v1187 = vsub.f32 1.5, %v1186
      %v1188 = vmul.f32 %v1183, %v1187
      %vm1189 = vweird.f32 %v1171
      %vm1190 = vweird.f32 %v1183
      %vm1191 = vmor %vm1189, %vm1190
      %v1192 = vsel %vm1191, %v1183, %v1188
      %v1193 = vrsqrt.pop %v1172
      %v1194 = vmul.f32 %v1193, %v1172
      %v1195 = vmul.f32 %v1194, %v1193
      %v1196 = vmul.f32 0.5, %v1195
      %v1197 = vsub.f32 1.5, %v1196
      %v1198 = vmul.f32 %v1193, %v1197
      %vm1199 = vweird.f32 %v1172
      %vm1200 = vweird.f32 %v1193
      %vm1201 = vmor %vm1199, %vm1200
      %v1202 = vsel %vm1201, %v1193, %v1198
      %v1203 = vmul.f32 %v1152, %v1182
      %v1204 = vmul.f32 %v1153, %v1192
      %v1205 = vmul.f32 %v1154, %v1202
      %v1207 = vperm.slane %v1138, 0
      %v1209 = vmul.f32 %v1203, %v1207
      %v1210 = vmul.f32 %v1204, %v1207
      %v1211 = vmul.f32 %v1205, %v1207
      %v1213 = vperm.slane %v1139, 0
      %v1215 = vadd.f32 %v1209, %v1213
      %v1216 = vadd.f32 %v1210, %v1213
      %v1217 = vadd.f32 %v1211, %v1213
      %v1218 = vld [vmem:[%s17] sm:$0xff]
      %v1219 = vld [vmem:[%s17 + $0x8] sm:$0xff]
      %v1220 = vld [vmem:[%s17 + $0x10] sm:$0xff]
      %v1221 = vld [vmem:[%s17 + $0x18] sm:$0xff]
      %v1222 = vld [vmem:[%s19] sm:$0x1]
      %v1224 = vperm.slane %v1222, 0
      %v1227 = vsel %vm1045, %v1215, 0
      %v1230 = vsel %vm1045, %v1216, 0
      %v1233 = vsel %vm1045, %v1217, 0
      %1235 = vmatpush.msra.mxu0 0.0
      %1236 = vmatpush.msra.mxu0 0.0
      %1237 = vmatpush.msra.mxu0 0.0
      %1238 = vmatpush.msra.mxu0 0.0
      %1239 = vmatpush.msra.mxu0 0.0
      %1240 = vmatpush.msra.mxu0 0.0
      %1241 = vmatpush.msra.mxu0 0.0
      %1242 = vmatpush.msra.mxu0 0.0
      %1243 = vmatpush.msra.mxu0 0.0
      %1244 = vmatpush.msra.mxu0 0.0
      %1245 = vmatpush.msra.mxu0 0.0
      %1246 = vmatpush.msra.mxu0 0.0
      %1247 = vmatpush.msra.mxu0 %v1221
      %1248 = vmatpush.msra.mxu0 %v1220
      %1249 = vmatpush.msra.mxu0 %v1219
      %1250 = vmatpush.msra.mxu0 %v1218
      %1251 = vmatmul.f32.gmra.mxu0 %v1227
      %v1252 = vpop.f32.mrf.mxu0
      %v1253 = vadd.f32 %v1224, %v1252
      %1254 = vmatmul.f32.gmra.mxu0 %v1230
      %v1255 = vpop.f32.mrf.mxu0
      %v1256 = vadd.f32 %v1224, %v1255
      %1257 = vmatmul.f32.gmra.mxu0 %v1233
      %v1258 = vpop.f32.mrf.mxu0
      %v1259 = vadd.f32 %v1224, %v1258
      %1260 = vdwg.mxu0
      %v1261 = vld [vmem:[%s21] sm:$0xff]
      %v1262 = vld [vmem:[%s21 + $0x8] sm:$0xff]
      %v1263 = vld [vmem:[%s21 + $0x10] sm:$0xff]
      %v1264 = vld [vmem:[%s21 + $0x18] sm:$0xff]
      %v1265 = vld [vmem:[%s23] sm:$0x1]
      %v1267 = vperm.slane %v1265, 0
      %1269 = vmatpush.msra.mxu0 0.0
      %1270 = vmatpush.msra.mxu0 0.0
      %1271 = vmatpush.msra.mxu0 0.0
      %1272 = vmatpush.msra.mxu0 0.0
      %1273 = vmatpush.msra.mxu0 0.0
      %1274 = vmatpush.msra.mxu0 0.0
      %1275 = vmatpush.msra.mxu0 0.0
      %1276 = vmatpush.msra.mxu0 0.0
      %1277 = vmatpush.msra.mxu0 0.0
      %1278 = vmatpush.msra.mxu0 0.0
      %1279 = vmatpush.msra.mxu0 0.0
      %1280 = vmatpush.msra.mxu0 0.0
      %1281 = vmatpush.msra.mxu0 %v1264
      %1282 = vmatpush.msra.mxu0 %v1263
      %1283 = vmatpush.msra.mxu0 %v1262
      %1284 = vmatpush.msra.mxu0 %v1261
      %1285 = vmatmul.f32.gmra.mxu0 %v1227
      %v1286 = vpop.f32.mrf.mxu0
      %v1287 = vadd.f32 %v1267, %v1286
      %1288 = vmatmul.f32.gmra.mxu0 %v1230
      %v1289 = vpop.f32.mrf.mxu0
      %v1290 = vadd.f32 %v1267, %v1289
      %1291 = vmatmul.f32.gmra.mxu0 %v1233
      %v1292 = vpop.f32.mrf.mxu0
      %v1293 = vadd.f32 %v1267, %v1292
      %1294 = vdwg.mxu0
      %v1295 = vld [vmem:[%s25] sm:$0xff]
      %v1296 = vld [vmem:[%s25 + $0x8] sm:$0xff]
      %v1297 = vld [vmem:[%s25 + $0x10] sm:$0xff]
      %v1298 = vld [vmem:[%s25 + $0x18] sm:$0xff]
      %v1299 = vld [vmem:[%s27] sm:$0x1]
      %v1301 = vperm.slane %v1299, 0
      %1303 = vmatpush.msra.mxu0 0.0
      %1304 = vmatpush.msra.mxu0 0.0
      %1305 = vmatpush.msra.mxu0 0.0
      %1306 = vmatpush.msra.mxu0 0.0
      %1307 = vmatpush.msra.mxu0 0.0
      %1308 = vmatpush.msra.mxu0 0.0
      %1309 = vmatpush.msra.mxu0 0.0
      %1310 = vmatpush.msra.mxu0 0.0
      %1311 = vmatpush.msra.mxu0 0.0
      %1312 = vmatpush.msra.mxu0 0.0
      %1313 = vmatpush.msra.mxu0 0.0
      %1314 = vmatpush.msra.mxu0 0.0
      %1315 = vmatpush.msra.mxu0 %v1298
      %1316 = vmatpush.msra.mxu0 %v1297
      %1317 = vmatpush.msra.mxu0 %v1296
      %1318 = vmatpush.msra.mxu0 %v1295
      %1319 = vmatmul.f32.gmra.mxu0 %v1227
      %v1320 = vpop.f32.mrf.mxu0
      %v1321 = vadd.f32 %v1301, %v1320
      %1322 = vmatmul.f32.gmra.mxu0 %v1230
      %v1323 = vpop.f32.mrf.mxu0
      %v1324 = vadd.f32 %v1301, %v1323
      %1325 = vmatmul.f32.gmra.mxu0 %v1233
      %v1326 = vpop.f32.mrf.mxu0
      %v1327 = vadd.f32 %v1301, %v1326
      %1328 = vdwg.mxu0
      %v1329 = vmul.f32 %v1253, 0.35355338
      %v1330 = vmul.f32 %v1256, 0.35355338
      %v1331 = vmul.f32 %v1259, 0.35355338
      %vm1332 = vcmask 64512
      %v1334 = vsel %vm1332, %v1329, 0
      %v1337 = vsel %vm1332, %v1330, 0
      %v1340 = vsel %vm1332, %v1331, 0
      %v1343 = vsel %vm1332, %v1287, 0
      %v1346 = vsel %vm1332, %v1290, 0
      %v1349 = vsel %vm1332, %v1293, 0
      %1351 = vmatpush.xpose.msra.mxu0 0.0
      %1352 = vmatpush.xpose.msra.mxu0 0.0
      %1353 = vmatpush.xpose.msra.mxu0 0.0
      %1354 = vmatpush.xpose.msra.mxu0 0.0
      %1355 = vmatpush.xpose.msra.mxu0 0.0
      %1356 = vmatpush.xpose.msra.mxu0 0.0
      %1357 = vmatpush.xpose.msra.mxu0 0.0
      %1358 = vmatpush.xpose.msra.mxu0 0.0
      %1359 = vmatpush.xpose.msra.mxu0 0.0
      %1360 = vmatpush.xpose.msra.mxu0 0.0
      %1361 = vmatpush.xpose.msra.mxu0 0.0
      %1362 = vmatpush.xpose.msra.mxu0 0.0
      %1363 = vmatpush.xpose.msra.mxu0 0.0
      %1364 = vmatpush.xpose.msra.mxu0 %v1349
      %1365 = vmatpush.xpose.msra.mxu0 %v1346
      %1366 = vmatpush.xpose.msra.mxu0 %v1343
      %1367 = vmatmul.f32.gmra.mxu0 %v1334
      %v1368 = vpop.f32.mrf.mxu0
      %v1369 = vadd.f32 0.0, %v1368
      %1370 = vmatmul.f32.gmra.mxu0 %v1337
      %v1371 = vpop.f32.mrf.mxu0
      %v1372 = vadd.f32 0.0, %v1371
      %1373 = vmatmul.f32.gmra.mxu0 %v1340
      %v1374 = vpop.f32.mrf.mxu0
      %v1375 = vadd.f32 0.0, %v1374
      %1376 = vdwg.mxu0
      %vm1377 = vcmask 138240
      %v1378 = vsel %vm1377, %v1369, -inf
      %1379 = vmax.xlane.f32.xlu0 %v1378
      %v1380 = vpop.xlane.xlu0 %1379
      %v1381 = vsel %vm1377, %v1372, -inf
      %1382 = vmax.xlane.f32.xlu0 %v1381
      %v1383 = vpop.xlane.xlu0 %1382
      %vm1384 = vcmask 131072
      %v1385 = vsel %vm1384, %v1375, -inf
      %1386 = vmax.xlane.f32.xlu0 %v1385
      %v1387 = vpop.xlane.xlu0 %1386
      %v1388 = vsub.f32 %v1369, %v1380
      %v1389 = vsub.f32 %v1372, %v1383
      %v1390 = vsub.f32 %v1375, %v1387
      %v1391 = vmul.f32 %v1388, 1.442695
      %v1392 = vpow.pop %v1391
      %v1393 = vmul.f32 %v1389, 1.442695
      %v1394 = vpow.pop %v1393
      %v1395 = vmul.f32 %v1390, 1.442695
      %v1396 = vpow.pop %v1395
      %v1397 = vsel %vm1377, %v1392, 0.0
      %1398 = vadd.xlane.f32.xlu0 %v1397
      %v1399 = vpop.xlane.xlu0 %1398
      %v1400 = vsel %vm1377, %v1394, 0.0
      %1401 = vadd.xlane.f32.xlu0 %v1400
      %v1402 = vpop.xlane.xlu0 %1401
      %v1403 = vsel %vm1384, %v1396, 0.0
      %1404 = vadd.xlane.f32.xlu0 %v1403
      %v1405 = vpop.xlane.xlu0 %1404
      %v1406 = vrcp.pop %v1399
      %v1407 = vmul.f32 %v1399, %v1406
      %v1408 = vsub.f32 1.0, %v1407
      %v1409 = vmul.f32 %v1406, %v1408
      %v1410 = vadd.f32 %v1406, %v1409
      %vm1411 = vweird.f32 %v1399
      %vm1412 = vweird.f32 %v1406
      %vm1413 = vmor %vm1411, %vm1412
      %v1414 = vsel %vm1413, %v1406, %v1410
      %v1415 = vand.u32 2147483647, %v1399
      %vm1416 = vcmp.eq.f32.partialorder %v1415, 8.507059e+37
      %v1417 = vand.u32 %v1399, 2147483648
      %v1418 = vor.u32 1.1754944e-38, %v1417
      %v1419 = vsel %vm1416, %v1418, %v1414
      %v1420 = vmul.f32 %v1392, %v1419
      %v1421 = vrcp.pop %v1402
      %v1422 = vmul.f32 %v1402, %v1421
      %v1423 = vsub.f32 1.0, %v1422
      %v1424 = vmul.f32 %v1421, %v1423
      %v1425 = vadd.f32 %v1421, %v1424
      %vm1426 = vweird.f32 %v1402
      %vm1427 = vweird.f32 %v1421
      %vm1428 = vmor %vm1426, %vm1427
      %v1429 = vsel %vm1428, %v1421, %v1425
      %v1430 = vand.u32 2147483647, %v1402
      %vm1431 = vcmp.eq.f32.partialorder %v1430, 8.507059e+37
      %v1432 = vand.u32 %v1402, 2147483648
      %v1433 = vor.u32 1.1754944e-38, %v1432
      %v1434 = vsel %vm1431, %v1433, %v1429
      %v1435 = vmul.f32 %v1394, %v1434
      %v1436 = vrcp.pop %v1405
      %v1437 = vmul.f32 %v1405, %v1436
      %v1438 = vsub.f32 1.0, %v1437
      %v1439 = vmul.f32 %v1436, %v1438
      %v1440 = vadd.f32 %v1436, %v1439
      %vm1441 = vweird.f32 %v1405
      %vm1442 = vweird.f32 %v1436
      %vm1443 = vmor %vm1441, %vm1442
      %v1444 = vsel %vm1443, %v1436, %v1440
      %v1445 = vand.u32 2147483647, %v1405
      %vm1446 = vcmp.eq.f32.partialorder %v1445, 8.507059e+37
      %v1447 = vand.u32 %v1405, 2147483648
      %v1448 = vor.u32 1.1754944e-38, %v1447
      %v1449 = vsel %vm1446, %v1448, %v1444
      %v1450 = vmul.f32 %v1396, %v1449
      %v1452 = vsel %vm1377, %v1420, 0
      %v1455 = vsel %vm1377, %v1435, 0
      %v1458 = vsel %vm1377, %v1450, 0
      %vm1460 = vcmask 1040384
      %v1462 = vsel %vm1460, %v1327, 0
      %1464 = vmatpush.msra.mxu0 0.0
      %1465 = vmatpush.msra.mxu0 0.0
      %1466 = vmatpush.msra.mxu0 0.0
      %1467 = vmatpush.msra.mxu0 0.0
      %1468 = vmatpush.msra.mxu0 0.0
      %1469 = vmatpush.msra.mxu0 0.0
      %1470 = vmatpush.msra.mxu0 0.0
      %1471 = vmatpush.msra.mxu0 0.0
      %1472 = vmatpush.msra.mxu0 0.0
      %1473 = vmatpush.msra.mxu0 0.0
      %1474 = vmatpush.msra.mxu0 0.0
      %1475 = vmatpush.msra.mxu0 0.0
      %1476 = vmatpush.msra.mxu0 0.0
      %1477 = vmatpush.msra.mxu0 %v1462
      %1478 = vmatpush.msra.mxu0 %v1324
      %1479 = vmatpush.msra.mxu0 %v1321
      %1480 = vmatmul.f32.gmra.mxu0 %v1452
      %v1481 = vpop.f32.mrf.mxu0
      %v1482 = vadd.f32 0.0, %v1481
      %1483 = vmatmul.f32.gmra.mxu0 %v1455
      %v1484 = vpop.f32.mrf.mxu0
      %v1485 = vadd.f32 0.0, %v1484
      %1486 = vmatmul.f32.gmra.mxu0 %v1458
      %v1487 = vpop.f32.mrf.mxu0
      %v1488 = vadd.f32 0.0, %v1487
      %1489 = vdwg.mxu0
      %1490 = vst.msk [vmem:[#allocation3] sm:$0xff] %vm1332, %v1482
      %1491 = vst.msk [vmem:[#allocation3 + $0x8] sm:$0xff] %vm1332, %v1485
      %vm1492 = vcmask 57344
      %1493 = vst.msk [vmem:[#allocation3 + $0x10] sm:$0x1] %vm1492, %v1488
      %1494 = vrot.lane.b32.xlu0 %v1329, 120
      %v1495 = vpop.permute.xlu0 %1494
      %1496 = vrot.lane.b32.xlu0 %v1330, 120
      %v1497 = vpop.permute.xlu0 %1496
      %1498 = vrot.lane.b32.xlu0 %v1331, 120
      %v1499 = vpop.permute.xlu0 %1498
      %1500 = vrot.lane.b32.xlu0 %v1287, 120
      %v1501 = vpop.permute.xlu0 %1500
      %1502 = vrot.lane.b32.xlu0 %v1290, 120
      %v1503 = vpop.permute.xlu0 %1502
      %1504 = vrot.lane.b32.xlu0 %v1293, 120
      %v1505 = vpop.permute.xlu0 %1504
      %v1506 = vsel %vm1332, %v1495, 0
      %v1508 = vsel %vm1332, %v1497, 0
      %v1510 = vsel %vm1332, %v1499, 0
      %v1512 = vsel %vm1332, %v1501, 0
      %v1514 = vsel %vm1332, %v1503, 0
      %v1516 = vsel %vm1332, %v1505, 0
      %1518 = vmatpush.xpose.msra.mxu0 0.0
      %1519 = vmatpush.xpose.msra.mxu0 0.0
      %1520 = vmatpush.xpose.msra.mxu0 0.0
      %1521 = vmatpush.xpose.msra.mxu0 0.0
      %1522 = vmatpush.xpose.msra.mxu0 0.0
      %1523 = vmatpush.xpose.msra.mxu0 0.0
      %1524 = vmatpush.xpose.msra.mxu0 0.0
      %1525 = vmatpush.xpose.msra.mxu0 0.0
      %1526 = vmatpush.xpose.msra.mxu0 0.0
      %1527 = vmatpush.xpose.msra.mxu0 0.0
      %1528 = vmatpush.xpose.msra.mxu0 0.0
      %1529 = vmatpush.xpose.msra.mxu0 0.0
      %1530 = vmatpush.xpose.msra.mxu0 0.0
      %1531 = vmatpush.xpose.msra.mxu0 %v1516
      %1532 = vmatpush.xpose.msra.mxu0 %v1514
      %1533 = vmatpush.xpose.msra.mxu0 %v1512
      %1534 = vmatmul.f32.gmra.mxu0 %v1506
      %v1535 = vpop.f32.mrf.mxu0
      %v1536 = vadd.f32 0.0, %v1535
      %1537 = vmatmul.f32.gmra.mxu0 %v1508
      %v1538 = vpop.f32.mrf.mxu0
      %v1539 = vadd.f32 0.0, %v1538
      %1540 = vmatmul.f32.gmra.mxu0 %v1510
      %v1541 = vpop.f32.mrf.mxu0
      %v1542 = vadd.f32 0.0, %v1541
      %1543 = vdwg.mxu0
      %v1544 = vsel %vm1377, %v1536, -inf
      %1545 = vmax.xlane.f32.xlu0 %v1544
      %v1546 = vpop.xlane.xlu0 %1545
      %v1547 = vsel %vm1377, %v1539, -inf
      %1548 = vmax.xlane.f32.xlu0 %v1547
      %v1549 = vpop.xlane.xlu0 %1548
      %v1550 = vsel %vm1384, %v1542, -inf
      %1551 = vmax.xlane.f32.xlu0 %v1550
      %v1552 = vpop.xlane.xlu0 %1551
      %v1553 = vsub.f32 %v1536, %v1546
      %v1554 = vsub.f32 %v1539, %v1549
      %v1555 = vsub.f32 %v1542, %v1552
      %v1556 = vmul.f32 %v1553, 1.442695
      %v1557 = vpow.pop %v1556
      %v1558 = vmul.f32 %v1554, 1.442695
      %v1559 = vpow.pop %v1558
      %v1560 = vmul.f32 %v1555, 1.442695
      %v1561 = vpow.pop %v1560
      %v1562 = vsel %vm1377, %v1557, 0.0
      %1563 = vadd.xlane.f32.xlu0 %v1562
      %v1564 = vpop.xlane.xlu0 %1563
      %v1565 = vsel %vm1377, %v1559, 0.0
      %1566 = vadd.xlane.f32.xlu0 %v1565
      %v1567 = vpop.xlane.xlu0 %1566
      %v1568 = vsel %vm1384, %v1561, 0.0
      %1569 = vadd.xlane.f32.xlu0 %v1568
      %v1570 = vpop.xlane.xlu0 %1569
      %v1571 = vrcp.pop %v1564
      %v1572 = vmul.f32 %v1564, %v1571
      %v1573 = vsub.f32 1.0, %v1572
      %v1574 = vmul.f32 %v1571, %v1573
      %v1575 = vadd.f32 %v1571, %v1574
      %vm1576 = vweird.f32 %v1564
      %vm1577 = vweird.f32 %v1571
      %vm1578 = vmor %vm1576, %vm1577
      %v1579 = vsel %vm1578, %v1571, %v1575
      %v1580 = vand.u32 2147483647, %v1564
      %vm1581 = vcmp.eq.f32.partialorder %v1580, 8.507059e+37
      %v1582 = vand.u32 %v1564, 2147483648
      %v1583 = vor.u32 1.1754944e-38, %v1582
      %v1584 = vsel %vm1581, %v1583, %v1579
      %v1585 = vmul.f32 %v1557, %v1584
      %v1586 = vrcp.pop %v1567
      %v1587 = vmul.f32 %v1567, %v1586
      %v1588 = vsub.f32 1.0, %v1587
      %v1589 = vmul.f32 %v1586, %v1588
      %v1590 = vadd.f32 %v1586, %v1589
      %vm1591 = vweird.f32 %v1567
      %vm1592 = vweird.f32 %v1586
      %vm1593 = vmor %vm1591, %vm1592
      %v1594 = vsel %vm1593, %v1586, %v1590
      %v1595 = vand.u32 2147483647, %v1567
      %vm1596 = vcmp.eq.f32.partialorder %v1595, 8.507059e+37
      %v1597 = vand.u32 %v1567, 2147483648
      %v1598 = vor.u32 1.1754944e-38, %v1597
      %v1599 = vsel %vm1596, %v1598, %v1594
      %v1600 = vmul.f32 %v1559, %v1599
      %v1601 = vrcp.pop %v1570
      %v1602 = vmul.f32 %v1570, %v1601
      %v1603 = vsub.f32 1.0, %v1602
      %v1604 = vmul.f32 %v1601, %v1603
      %v1605 = vadd.f32 %v1601, %v1604
      %vm1606 = vweird.f32 %v1570
      %vm1607 = vweird.f32 %v1601
      %vm1608 = vmor %vm1606, %vm1607
      %v1609 = vsel %vm1608, %v1601, %v1605
      %v1610 = vand.u32 2147483647, %v1570
      %vm1611 = vcmp.eq.f32.partialorder %v1610, 8.507059e+37
      %v1612 = vand.u32 %v1570, 2147483648
      %v1613 = vor.u32 1.1754944e-38, %v1612
      %v1614 = vsel %vm1611, %v1613, %v1609
      %v1615 = vmul.f32 %v1561, %v1614
      %1618 = vrot.lane.b32.xlu0 %v1321, 120
      %v1619 = vpop.permute.xlu0 %1618
      %1620 = vrot.lane.b32.xlu0 %v1324, 120
      %v1621 = vpop.permute.xlu0 %1620
      %1622 = vrot.lane.b32.xlu0 %v1327, 120
      %v1623 = vpop.permute.xlu0 %1622
      %v1627 = vsel %vm1377, %v1585, 0
      %v1630 = vsel %vm1377, %v1600, 0
      %v1633 = vsel %vm1377, %v1615, 0
      %v1635 = vsel %vm1460, %v1623, 0
      %1637 = vmatpush.msra.mxu0 0.0
      %1638 = vmatpush.msra.mxu0 0.0
      %1639 = vmatpush.msra.mxu0 0.0
      %1640 = vmatpush.msra.mxu0 0.0
      %1641 = vmatpush.msra.mxu0 0.0
      %1642 = vmatpush.msra.mxu0 0.0
      %1643 = vmatpush.msra.mxu0 0.0
      %1644 = vmatpush.msra.mxu0 0.0
      %1645 = vmatpush.msra.mxu0 0.0
      %1646 = vmatpush.msra.mxu0 0.0
      %1647 = vmatpush.msra.mxu0 0.0
      %1648 = vmatpush.msra.mxu0 0.0
      %1649 = vmatpush.msra.mxu0 0.0
      %1650 = vmatpush.msra.mxu0 %v1635
      %1651 = vmatpush.msra.mxu0 %v1621
      %1652 = vmatpush.msra.mxu0 %v1619
      %1653 = vmatmul.f32.gmra.mxu0 %v1627
      %v1654 = vpop.f32.mrf.mxu0
      %v1655 = vadd.f32 0.0, %v1654
      %1656 = vmatmul.f32.gmra.mxu0 %v1630
      %v1657 = vpop.f32.mrf.mxu0
      %v1658 = vadd.f32 0.0, %v1657
      %1659 = vmatmul.f32.gmra.mxu0 %v1633
      %v1660 = vpop.f32.mrf.mxu0
      %v1661 = vadd.f32 0.0, %v1660
      %1662 = vdwg.mxu0
      %1666 = vrot.lane.b32.xlu0 %v1655, 8
      %v1667 = vpop.permute.xlu0 %1666
      %1668 = vrot.lane.b32.xlu0 %v1658, 8
      %v1669 = vpop.permute.xlu0 %1668
      %1670 = vrot.lane.b32.xlu0 %v1661, 8
      %v1671 = vpop.permute.xlu0 %1670
      %vm1675 = vcmask 130112
      %1676 = vst.msk [vmem:[#allocation3] sm:$0xff] %vm1675, %v1667
      %1677 = vst.msk [vmem:[#allocation3 + $0x8] sm:$0xff] %vm1675, %v1669
      %vm1678 = vcmask 122944
      %1679 = vst.msk [vmem:[#allocation3 + $0x10] sm:$0x1] %vm1678, %v1671
      %1680 = vrot.lane.b32.xlu0 %v1329, 112
      %v1681 = vpop.permute.xlu0 %1680
      %1682 = vrot.lane.b32.xlu0 %v1330, 112
      %v1683 = vpop.permute.xlu0 %1682
      %1684 = vrot.lane.b32.xlu0 %v1331, 112
      %v1685 = vpop.permute.xlu0 %1684
      %1686 = vrot.lane.b32.xlu0 %v1287, 112
      %v1687 = vpop.permute.xlu0 %1686
      %1688 = vrot.lane.b32.xlu0 %v1290, 112
      %v1689 = vpop.permute.xlu0 %1688
      %1690 = vrot.lane.b32.xlu0 %v1293, 112
      %v1691 = vpop.permute.xlu0 %1690
      %v1692 = vsel %vm1332, %v1681, 0
      %v1694 = vsel %vm1332, %v1683, 0
      %v1696 = vsel %vm1332, %v1685, 0
      %v1698 = vsel %vm1332, %v1687, 0
      %v1700 = vsel %vm1332, %v1689, 0
      %v1702 = vsel %vm1332, %v1691, 0
      %1704 = vmatpush.xpose.msra.mxu0 0.0
      %1705 = vmatpush.xpose.msra.mxu0 0.0
      %1706 = vmatpush.xpose.msra.mxu0 0.0
      %1707 = vmatpush.xpose.msra.mxu0 0.0
      %1708 = vmatpush.xpose.msra.mxu0 0.0
      %1709 = vmatpush.xpose.msra.mxu0 0.0
      %1710 = vmatpush.xpose.msra.mxu0 0.0
      %1711 = vmatpush.xpose.msra.mxu0 0.0
      %1712 = vmatpush.xpose.msra.mxu0 0.0
      %1713 = vmatpush.xpose.msra.mxu0 0.0
      %1714 = vmatpush.xpose.msra.mxu0 0.0
      %1715 = vmatpush.xpose.msra.mxu0 0.0
      %1716 = vmatpush.xpose.msra.mxu0 0.0
      %1717 = vmatpush.xpose.msra.mxu0 %v1702
      %1718 = vmatpush.xpose.msra.mxu0 %v1700
      %1719 = vmatpush.xpose.msra.mxu0 %v1698
      %1720 = vmatmul.f32.gmra.mxu0 %v1692
      %v1721 = vpop.f32.mrf.mxu0
      %v1722 = vadd.f32 0.0, %v1721
      %1723 = vmatmul.f32.gmra.mxu0 %v1694
      %v1724 = vpop.f32.mrf.mxu0
      %v1725 = vadd.f32 0.0, %v1724
      %1726 = vmatmul.f32.gmra.mxu0 %v1696
      %v1727 = vpop.f32.mrf.mxu0
      %v1728 = vadd.f32 0.0, %v1727
      %1729 = vdwg.mxu0
      %v1730 = vsel %vm1377, %v1722, -inf
      %1731 = vmax.xlane.f32.xlu0 %v1730
      %v1732 = vpop.xlane.xlu0 %1731
      %v1733 = vsel %vm1377, %v1725, -inf
      %1734 = vmax.xlane.f32.xlu0 %v1733
      %v1735 = vpop.xlane.xlu0 %1734
      %v1736 = vsel %vm1384, %v1728, -inf
      %1737 = vmax.xlane.f32.xlu0 %v1736
      %v1738 = vpop.xlane.xlu0 %1737
      %v1739 = vsub.f32 %v1722, %v1732
      %v1740 = vsub.f32 %v1725, %v1735
      %v1741 = vsub.f32 %v1728, %v1738
      %v1742 = vmul.f32 %v1739, 1.442695
      %v1743 = vpow.pop %v1742
      %v1744 = vmul.f32 %v1740, 1.442695
      %v1745 = vpow.pop %v1744
      %v1746 = vmul.f32 %v1741, 1.442695
      %v1747 = vpow.pop %v1746
      %v1748 = vsel %vm1377, %v1743, 0.0
      %1749 = vadd.xlane.f32.xlu0 %v1748
      %v1750 = vpop.xlane.xlu0 %1749
      %v1751 = vsel %vm1377, %v1745, 0.0
      %1752 = vadd.xlane.f32.xlu0 %v1751
      %v1753 = vpop.xlane.xlu0 %1752
      %v1754 = vsel %vm1384, %v1747, 0.0
      %1755 = vadd.xlane.f32.xlu0 %v1754
      %v1756 = vpop.xlane.xlu0 %1755
      %v1757 = vrcp.pop %v1750
      %v1758 = vmul.f32 %v1750, %v1757
      %v1759 = vsub.f32 1.0, %v1758
      %v1760 = vmul.f32 %v1757, %v1759
      %v1761 = vadd.f32 %v1757, %v1760
      %vm1762 = vweird.f32 %v1750
      %vm1763 = vweird.f32 %v1757
      %vm1764 = vmor %vm1762, %vm1763
      %v1765 = vsel %vm1764, %v1757, %v1761
      %v1766 = vand.u32 2147483647, %v1750
      %vm1767 = vcmp.eq.f32.partialorder %v1766, 8.507059e+37
      %v1768 = vand.u32 %v1750, 2147483648
      %v1769 = vor.u32 1.1754944e-38, %v1768
      %v1770 = vsel %vm1767, %v1769, %v1765
      %v1771 = vmul.f32 %v1743, %v1770
      %v1772 = vrcp.pop %v1753
      %v1773 = vmul.f32 %v1753, %v1772
      %v1774 = vsub.f32 1.0, %v1773
      %v1775 = vmul.f32 %v1772, %v1774
      %v1776 = vadd.f32 %v1772, %v1775
      %vm1777 = vweird.f32 %v1753
      %vm1778 = vweird.f32 %v1772
      %vm1779 = vmor %vm1777, %vm1778
      %v1780 = vsel %vm1779, %v1772, %v1776
      %v1781 = vand.u32 2147483647, %v1753
      %vm1782 = vcmp.eq.f32.partialorder %v1781, 8.507059e+37
      %v1783 = vand.u32 %v1753, 2147483648
      %v1784 = vor.u32 1.1754944e-38, %v1783
      %v1785 = vsel %vm1782, %v1784, %v1780
      %v1786 = vmul.f32 %v1745, %v1785
      %v1787 = vrcp.pop %v1756
      %v1788 = vmul.f32 %v1756, %v1787
      %v1789 = vsub.f32 1.0, %v1788
      %v1790 = vmul.f32 %v1787, %v1789
      %v1791 = vadd.f32 %v1787, %v1790
      %vm1792 = vweird.f32 %v1756
      %vm1793 = vweird.f32 %v1787
      %vm1794 = vmor %vm1792, %vm1793
      %v1795 = vsel %vm1794, %v1787, %v1791
      %v1796 = vand.u32 2147483647, %v1756
      %vm1797 = vcmp.eq.f32.partialorder %v1796, 8.507059e+37
      %v1798 = vand.u32 %v1756, 2147483648
      %v1799 = vor.u32 1.1754944e-38, %v1798
      %v1800 = vsel %vm1797, %v1799, %v1795
      %v1801 = vmul.f32 %v1747, %v1800
      %1802 = vrot.lane.b32.xlu0 %v1321, 112
      %v1803 = vpop.permute.xlu0 %1802
      %1804 = vrot.lane.b32.xlu0 %v1324, 112
      %v1805 = vpop.permute.xlu0 %1804
      %1806 = vrot.lane.b32.xlu0 %v1327, 112
      %v1807 = vpop.permute.xlu0 %1806
      %v1811 = vsel %vm1377, %v1771, 0
      %v1814 = vsel %vm1377, %v1786, 0
      %v1817 = vsel %vm1377, %v1801, 0
      %v1819 = vsel %vm1460, %v1807, 0
      %1821 = vmatpush.msra.mxu0 0.0
      %1822 = vmatpush.msra.mxu0 0.0
      %1823 = vmatpush.msra.mxu0 0.0
      %1824 = vmatpush.msra.mxu0 0.0
      %1825 = vmatpush.msra.mxu0 0.0
      %1826 = vmatpush.msra.mxu0 0.0
      %1827 = vmatpush.msra.mxu0 0.0
      %1828 = vmatpush.msra.mxu0 0.0
      %1829 = vmatpush.msra.mxu0 0.0
      %1830 = vmatpush.msra.mxu0 0.0
      %1831 = vmatpush.msra.mxu0 0.0
      %1832 = vmatpush.msra.mxu0 0.0
      %1833 = vmatpush.msra.mxu0 0.0
      %1834 = vmatpush.msra.mxu0 %v1819
      %1835 = vmatpush.msra.mxu0 %v1805
      %1836 = vmatpush.msra.mxu0 %v1803
      %1837 = vmatmul.f32.gmra.mxu0 %v1811
      %v1838 = vpop.f32.mrf.mxu0
      %v1839 = vadd.f32 0.0, %v1838
      %1840 = vmatmul.f32.gmra.mxu0 %v1814
      %v1841 = vpop.f32.mrf.mxu0
      %v1842 = vadd.f32 0.0, %v1841
      %1843 = vmatmul.f32.gmra.mxu0 %v1817
      %v1844 = vpop.f32.mrf.mxu0
      %v1845 = vadd.f32 0.0, %v1844
      %1846 = vdwg.mxu0
      %1850 = vrot.lane.b32.xlu0 %v1839, 16
      %v1851 = vpop.permute.xlu0 %1850
      %1852 = vrot.lane.b32.xlu0 %v1842, 16
      %v1853 = vpop.permute.xlu0 %1852
      %1854 = vrot.lane.b32.xlu0 %v1845, 16
      %v1855 = vpop.permute.xlu0 %1854
      %vm1859 = vcmask 195712
      %1860 = vst.msk [vmem:[#allocation3] sm:$0xff] %vm1859, %v1851
      %1861 = vst.msk [vmem:[#allocation3 + $0x8] sm:$0xff] %vm1859, %v1853
      %vm1862 = vcmask 188544
      %1863 = vst.msk [vmem:[#allocation3 + $0x10] sm:$0x1] %vm1862, %v1855
      %1864 = vrot.lane.b32.xlu0 %v1329, 104
      %v1865 = vpop.permute.xlu0 %1864
      %1866 = vrot.lane.b32.xlu0 %v1330, 104
      %v1867 = vpop.permute.xlu0 %1866
      %1868 = vrot.lane.b32.xlu0 %v1331, 104
      %v1869 = vpop.permute.xlu0 %1868
      %1870 = vrot.lane.b32.xlu0 %v1287, 104
      %v1871 = vpop.permute.xlu0 %1870
      %1872 = vrot.lane.b32.xlu0 %v1290, 104
      %v1873 = vpop.permute.xlu0 %1872
      %1874 = vrot.lane.b32.xlu0 %v1293, 104
      %v1875 = vpop.permute.xlu0 %1874
      %v1876 = vsel %vm1332, %v1865, 0
      %v1878 = vsel %vm1332, %v1867, 0
      %v1880 = vsel %vm1332, %v1869, 0
      %v1882 = vsel %vm1332, %v1871, 0
      %v1884 = vsel %vm1332, %v1873, 0
      %v1886 = vsel %vm1332, %v1875, 0
      %1888 = vmatpush.xpose.msra.mxu0 0.0
      %1889 = vmatpush.xpose.msra.mxu0 0.0
      %1890 = vmatpush.xpose.msra.mxu0 0.0
      %1891 = vmatpush.xpose.msra.mxu0 0.0
      %1892 = vmatpush.xpose.msra.mxu0 0.0
      %1893 = vmatpush.xpose.msra.mxu0 0.0
      %1894 = vmatpush.xpose.msra.mxu0 0.0
      %1895 = vmatpush.xpose.msra.mxu0 0.0
      %1896 = vmatpush.xpose.msra.mxu0 0.0
      %1897 = vmatpush.xpose.msra.mxu0 0.0
      %1898 = vmatpush.xpose.msra.mxu0 0.0
      %1899 = vmatpush.xpose.msra.mxu0 0.0
      %1900 = vmatpush.xpose.msra.mxu0 0.0
      %1901 = vmatpush.xpose.msra.mxu0 %v1886
      %1902 = vmatpush.xpose.msra.mxu0 %v1884
      %1903 = vmatpush.xpose.msra.mxu0 %v1882
      %1904 = vmatmul.f32.gmra.mxu0 %v1876
      %v1905 = vpop.f32.mrf.mxu0
      %v1906 = vadd.f32 0.0, %v1905
      %1907 = vmatmul.f32.gmra.mxu0 %v1878
      %v1908 = vpop.f32.mrf.mxu0
      %v1909 = vadd.f32 0.0, %v1908
      %1910 = vmatmul.f32.gmra.mxu0 %v1880
      %v1911 = vpop.f32.mrf.mxu0
      %v1912 = vadd.f32 0.0, %v1911
      %1913 = vdwg.mxu0
      %v1914 = vsel %vm1377, %v1906, -inf
      %1915 = vmax.xlane.f32.xlu0 %v1914
      %v1916 = vpop.xlane.xlu0 %1915
      %v1917 = vsel %vm1377, %v1909, -inf
      %1918 = vmax.xlane.f32.xlu0 %v1917
      %v1919 = vpop.xlane.xlu0 %1918
      %v1920 = vsel %vm1384, %v1912, -inf
      %1921 = vmax.xlane.f32.xlu0 %v1920
      %v1922 = vpop.xlane.xlu0 %1921
      %v1923 = vsub.f32 %v1906, %v1916
      %v1924 = vsub.f32 %v1909, %v1919
      %v1925 = vsub.f32 %v1912, %v1922
      %v1926 = vmul.f32 %v1923, 1.442695
      %v1927 = vpow.pop %v1926
      %v1928 = vmul.f32 %v1924, 1.442695
      %v1929 = vpow.pop %v1928
      %v1930 = vmul.f32 %v1925, 1.442695
      %v1931 = vpow.pop %v1930
      %v1932 = vsel %vm1377, %v1927, 0.0
      %1933 = vadd.xlane.f32.xlu0 %v1932
      %v1934 = vpop.xlane.xlu0 %1933
      %v1935 = vsel %vm1377, %v1929, 0.0
      %1936 = vadd.xlane.f32.xlu0 %v1935
      %v1937 = vpop.xlane.xlu0 %1936
      %v1938 = vsel %vm1384, %v1931, 0.0
      %1939 = vadd.xlane.f32.xlu0 %v1938
      %v1940 = vpop.xlane.xlu0 %1939
      %v1941 = vrcp.pop %v1934
      %v1942 = vmul.f32 %v1934, %v1941
      %v1943 = vsub.f32 1.0, %v1942
      %v1944 = vmul.f32 %v1941, %v1943
      %v1945 = vadd.f32 %v1941, %v1944
      %vm1946 = vweird.f32 %v1934
      %vm1947 = vweird.f32 %v1941
      %vm1948 = vmor %vm1946, %vm1947
      %v1949 = vsel %vm1948, %v1941, %v1945
      %v1950 = vand.u32 2147483647, %v1934
      %vm1951 = vcmp.eq.f32.partialorder %v1950, 8.507059e+37
      %v1952 = vand.u32 %v1934, 2147483648
      %v1953 = vor.u32 1.1754944e-38, %v1952
      %v1954 = vsel %vm1951, %v1953, %v1949
      %v1955 = vmul.f32 %v1927, %v1954
      %v1956 = vrcp.pop %v1937
      %v1957 = vmul.f32 %v1937, %v1956
      %v1958 = vsub.f32 1.0, %v1957
      %v1959 = vmul.f32 %v1956, %v1958
      %v1960 = vadd.f32 %v1956, %v1959
      %vm1961 = vweird.f32 %v1937
      %vm1962 = vweird.f32 %v1956
      %vm1963 = vmor %vm1961, %vm1962
      %v1964 = vsel %vm1963, %v1956, %v1960
      %v1965 = vand.u32 2147483647, %v1937
      %vm1966 = vcmp.eq.f32.partialorder %v1965, 8.507059e+37
      %v1967 = vand.u32 %v1937, 2147483648
      %v1968 = vor.u32 1.1754944e-38, %v1967
      %v1969 = vsel %vm1966, %v1968, %v1964
      %v1970 = vmul.f32 %v1929, %v1969
      %v1971 = vrcp.pop %v1940
      %v1972 = vmul.f32 %v1940, %v1971
      %v1973 = vsub.f32 1.0, %v1972
      %v1974 = vmul.f32 %v1971, %v1973
      %v1975 = vadd.f32 %v1971, %v1974
      %vm1976 = vweird.f32 %v1940
      %vm1977 = vweird.f32 %v1971
      %vm1978 = vmor %vm1976, %vm1977
      %v1979 = vsel %vm1978, %v1971, %v1975
      %v1980 = vand.u32 2147483647, %v1940
      %vm1981 = vcmp.eq.f32.partialorder %v1980, 8.507059e+37
      %v1982 = vand.u32 %v1940, 2147483648
      %v1983 = vor.u32 1.1754944e-38, %v1982
      %v1984 = vsel %vm1981, %v1983, %v1979
      %v1985 = vmul.f32 %v1931, %v1984
      %1986 = vrot.lane.b32.xlu0 %v1321, 104
      %v1987 = vpop.permute.xlu0 %1986
      %1988 = vrot.lane.b32.xlu0 %v1324, 104
      %v1989 = vpop.permute.xlu0 %1988
      %1990 = vrot.lane.b32.xlu0 %v1327, 104
      %v1991 = vpop.permute.xlu0 %1990
      %v1995 = vsel %vm1377, %v1955, 0
      %v1998 = vsel %vm1377, %v1970, 0
      %v2001 = vsel %vm1377, %v1985, 0
      %v2003 = vsel %vm1460, %v1991, 0
      %2005 = vmatpush.msra.mxu0 0.0
      %2006 = vmatpush.msra.mxu0 0.0
      %2007 = vmatpush.msra.mxu0 0.0
      %2008 = vmatpush.msra.mxu0 0.0
      %2009 = vmatpush.msra.mxu0 0.0
      %2010 = vmatpush.msra.mxu0 0.0
      %2011 = vmatpush.msra.mxu0 0.0
      %2012 = vmatpush.msra.mxu0 0.0
      %2013 = vmatpush.msra.mxu0 0.0
      %2014 = vmatpush.msra.mxu0 0.0
      %2015 = vmatpush.msra.mxu0 0.0
      %2016 = vmatpush.msra.mxu0 0.0
      %2017 = vmatpush.msra.mxu0 0.0
      %2018 = vmatpush.msra.mxu0 %v2003
      %2019 = vmatpush.msra.mxu0 %v1989
      %2020 = vmatpush.msra.mxu0 %v1987
      %2021 = vmatmul.f32.gmra.mxu0 %v1995
      %v2022 = vpop.f32.mrf.mxu0
      %v2023 = vadd.f32 0.0, %v2022
      %2024 = vmatmul.f32.gmra.mxu0 %v1998
      %v2025 = vpop.f32.mrf.mxu0
      %v2026 = vadd.f32 0.0, %v2025
      %2027 = vmatmul.f32.gmra.mxu0 %v2001
      %v2028 = vpop.f32.mrf.mxu0
      %v2029 = vadd.f32 0.0, %v2028
      %2030 = vdwg.mxu0
      %2034 = vrot.lane.b32.xlu0 %v2023, 24
      %v2035 = vpop.permute.xlu0 %2034
      %2036 = vrot.lane.b32.xlu0 %v2026, 24
      %v2037 = vpop.permute.xlu0 %2036
      %2038 = vrot.lane.b32.xlu0 %v2029, 24
      %v2039 = vpop.permute.xlu0 %2038
      %vm2043 = vcmask 261312
      %2044 = vst.msk [vmem:[#allocation3] sm:$0xff] %vm2043, %v2035
      %2045 = vst.msk [vmem:[#allocation3 + $0x8] sm:$0xff] %vm2043, %v2037
      %vm2046 = vcmask 254144
      %2047 = vst.msk [vmem:[#allocation3 + $0x10] sm:$0x1] %vm2046, %v2039
      %v2048 = vld [vmem:[#allocation3] sm:$0xff]
      %v2049 = vld [vmem:[#allocation3 + $0x8] sm:$0xff]
      %v2050 = vld [vmem:[#allocation3 + $0x10] sm:$0x1]
      %v2051 = vld [vmem:[%s29] sm:$0xff]
      %v2052 = vld [vmem:[%s29 + $0x8] sm:$0xff]
      %v2053 = vld [vmem:[%s29 + $0x10] sm:$0xff]
      %v2054 = vld [vmem:[%s29 + $0x18] sm:$0xff]
      %v2056 = vsel %vm1045, %v2048, 0
      %v2059 = vsel %vm1045, %v2049, 0
      %v2062 = vsel %vm1045, %v2050, 0
      %2064 = vmatpush.msra.mxu0 0.0
      %2065 = vmatpush.msra.mxu0 0.0
      %2066 = vmatpush.msra.mxu0 0.0
      %2067 = vmatpush.msra.mxu0 0.0
      %2068 = vmatpush.msra.mxu0 0.0
      %2069 = vmatpush.msra.mxu0 0.0
      %2070 = vmatpush.msra.mxu0 0.0
      %2071 = vmatpush.msra.mxu0 0.0
      %2072 = vmatpush.msra.mxu0 0.0
      %2073 = vmatpush.msra.mxu0 0.0
      %2074 = vmatpush.msra.mxu0 0.0
      %2075 = vmatpush.msra.mxu0 0.0
      %2076 = vmatpush.msra.mxu0 %v2054
      %2077 = vmatpush.msra.mxu0 %v2053
      %2078 = vmatpush.msra.mxu0 %v2052
      %2079 = vmatpush.msra.mxu0 %v2051
      %2080 = vmatmul.f32.gmra.mxu0 %v2056
      %v2081 = vpop.f32.mrf.mxu0
      %v2082 = vadd.f32 0.0, %v2081
      %2083 = vmatmul.f32.gmra.mxu0 %v2059
      %v2084 = vpop.f32.mrf.mxu0
      %v2085 = vadd.f32 0.0, %v2084
      %2086 = vmatmul.f32.gmra.mxu0 %v2062
      %v2087 = vpop.f32.mrf.mxu0
      %v2088 = vadd.f32 0.0, %v2087
      %2089 = vdwg.mxu0
      %v2090 = vadd.f32 %v1135, %v2082
      %v2091 = vadd.f32 %v1136, %v2085
      %v2092 = vadd.f32 %v1137, %v2088
      %v2093 = vld [vmem:[%s31] sm:$0x1]
      %v2095 = vperm.slane %v2093, 0
      %v2097 = vadd.f32 %v2090, %v2095
      %v2098 = vadd.f32 %v2091, %v2095
      %v2099 = vadd.f32 %v2092, %v2095
      %v2100 = vld [vmem:[%s41] sm:$0x1]
      %v2101 = vld [vmem:[%s43] sm:$0x1]
      %v2102 = vsel %vm1045, %v2097, 0.0
      %2103 = vadd.xlane.f32.xlu0 %v2102
      %v2104 = vpop.xlane.xlu0 %2103
      %v2105 = vsel %vm1045, %v2098, 0.0
      %2106 = vadd.xlane.f32.xlu0 %v2105
      %v2107 = vpop.xlane.xlu0 %2106
      %v2108 = vsel %vm988, %v2099, 0.0
      %2109 = vadd.xlane.f32.xlu0 %v2108
      %v2110 = vpop.xlane.xlu0 %2109
      %v2111 = vmul.f32 %v2104, %v1068
      %v2112 = vmul.f32 %v2107, %v1068
      %v2113 = vmul.f32 %v2110, %v1068
      %v2114 = vsub.f32 %v2097, %v2111
      %v2115 = vsub.f32 %v2098, %v2112
      %v2116 = vsub.f32 %v2099, %v2113
      %v2117 = vmul.f32 %v2114, %v2114
      %v2118 = vmul.f32 %v2115, %v2115
      %v2119 = vmul.f32 %v2116, %v2116
      %v2120 = vsel %vm1045, %v2117, 0.0
      %2121 = vadd.xlane.f32.xlu0 %v2120
      %v2122 = vpop.xlane.xlu0 %2121
      %v2123 = vsel %vm1045, %v2118, 0.0
      %2124 = vadd.xlane.f32.xlu0 %v2123
      %v2125 = vpop.xlane.xlu0 %2124
      %v2126 = vsel %vm988, %v2119, 0.0
      %2127 = vadd.xlane.f32.xlu0 %v2126
      %v2128 = vpop.xlane.xlu0 %2127
      %v2129 = vmul.f32 %v2122, %v1068
      %v2130 = vmul.f32 %v2125, %v1068
      %v2131 = vmul.f32 %v2128, %v1068
      %v2132 = vadd.f32 %v2129, 1e-05
      %v2133 = vadd.f32 %v2130, 1e-05
      %v2134 = vadd.f32 %v2131, 1e-05
      %v2135 = vrsqrt.pop %v2132
      %v2136 = vmul.f32 %v2135, %v2132
      %v2137 = vmul.f32 %v2136, %v2135
      %v2138 = vmul.f32 0.5, %v2137
      %v2139 = vsub.f32 1.5, %v2138
      %v2140 = vmul.f32 %v2135, %v2139
      %vm2141 = vweird.f32 %v2132
      %vm2142 = vweird.f32 %v2135
      %vm2143 = vmor %vm2141, %vm2142
      %v2144 = vsel %vm2143, %v2135, %v2140
      %v2145 = vrsqrt.pop %v2133
      %v2146 = vmul.f32 %v2145, %v2133
      %v2147 = vmul.f32 %v2146, %v2145
      %v2148 = vmul.f32 0.5, %v2147
      %v2149 = vsub.f32 1.5, %v2148
      %v2150 = vmul.f32 %v2145, %v2149
      %vm2151 = vweird.f32 %v2133
      %vm2152 = vweird.f32 %v2145
      %vm2153 = vmor %vm2151, %vm2152
      %v2154 = vsel %vm2153, %v2145, %v2150
      %v2155 = vrsqrt.pop %v2134
      %v2156 = vmul.f32 %v2155, %v2134
      %v2157 = vmul.f32 %v2156, %v2155
      %v2158 = vmul.f32 0.5, %v2157
      %v2159 = vsub.f32 1.5, %v2158
      %v2160 = vmul.f32 %v2155, %v2159
      %vm2161 = vweird.f32 %v2134
      %vm2162 = vweird.f32 %v2155
      %vm2163 = vmor %vm2161, %vm2162
      %v2164 = vsel %vm2163, %v2155, %v2160
      %v2165 = vmul.f32 %v2114, %v2144
      %v2166 = vmul.f32 %v2115, %v2154
      %v2167 = vmul.f32 %v2116, %v2164
      %v2169 = vperm.slane %v2100, 0
      %v2171 = vmul.f32 %v2165, %v2169
      %v2172 = vmul.f32 %v2166, %v2169
      %v2173 = vmul.f32 %v2167, %v2169
      %v2175 = vperm.slane %v2101, 0
      %v2177 = vadd.f32 %v2171, %v2175
      %v2178 = vadd.f32 %v2172, %v2175
      %v2179 = vadd.f32 %v2173, %v2175
      %v2180 = vld [vmem:[%s45] sm:$0xff]
      %v2181 = vld [vmem:[%s45 + $0x8] sm:$0xff]
      %v2182 = vld [vmem:[%s45 + $0x10] sm:$0xff]
      %v2183 = vld [vmem:[%s45 + $0x18] sm:$0xff]
      %v2184 = vld [vmem:[%s47] sm:$0x1]
      %v2186 = vperm.slane %v2184, 0
      %v2189 = vsel %vm1045, %v2177, 0
      %v2192 = vsel %vm1045, %v2178, 0
      %v2195 = vsel %vm1045, %v2179, 0
      %2197 = vmatpush.msra.mxu0 0.0
      %2198 = vmatpush.msra.mxu0 0.0
      %2199 = vmatpush.msra.mxu0 0.0
      %2200 = vmatpush.msra.mxu0 0.0
      %2201 = vmatpush.msra.mxu0 0.0
      %2202 = vmatpush.msra.mxu0 0.0
      %2203 = vmatpush.msra.mxu0 0.0
      %2204 = vmatpush.msra.mxu0 0.0
      %2205 = vmatpush.msra.mxu0 0.0
      %2206 = vmatpush.msra.mxu0 0.0
      %2207 = vmatpush.msra.mxu0 0.0
      %2208 = vmatpush.msra.mxu0 0.0
      %2209 = vmatpush.msra.mxu0 %v2183
      %2210 = vmatpush.msra.mxu0 %v2182
      %2211 = vmatpush.msra.mxu0 %v2181
      %2212 = vmatpush.msra.mxu0 %v2180
      %2213 = vmatmul.f32.gmra.mxu0 %v2189
      %v2214 = vpop.f32.mrf.mxu0
      %v2215 = vadd.f32 %v2186, %v2214
      %2216 = vmatmul.f32.gmra.mxu0 %v2192
      %v2217 = vpop.f32.mrf.mxu0
      %v2218 = vadd.f32 %v2186, %v2217
      %2219 = vmatmul.f32.gmra.mxu0 %v2195
      %v2220 = vpop.f32.mrf.mxu0
      %v2221 = vadd.f32 %v2186, %v2220
      %2222 = vdwg.mxu0
      %v2223 = vmul.f32 %v2215, 1.702
      %v2224 = vmul.f32 %v2218, 1.702
      %v2225 = vmul.f32 %v2221, 1.702
      %v2226 = vxor.u32 %v2223, 2147483648
      %v2227 = vxor.u32 %v2224, 2147483648
      %v2228 = vxor.u32 %v2225, 2147483648
      %v2229 = vmul.f32 %v2226, 1.442695
      %v2230 = vpow.pop %v2229
      %v2231 = vmul.f32 %v2227, 1.442695
      %v2232 = vpow.pop %v2231
      %v2233 = vmul.f32 %v2228, 1.442695
      %v2234 = vpow.pop %v2233
      %v2235 = vadd.f32 %v2230, 1.0
      %v2236 = vadd.f32 %v2232, 1.0
      %v2237 = vadd.f32 %v2234, 1.0
      %v2238 = vrcp.pop %v2235
      %v2239 = vmul.f32 %v2235, %v2238
      %v2240 = vsub.f32 1.0, %v2239
      %v2241 = vmul.f32 %v2238, %v2240
      %v2242 = vadd.f32 %v2238, %v2241
      %vm2243 = vweird.f32 %v2235
      %vm2244 = vweird.f32 %v2238
      %vm2245 = vmor %vm2243, %vm2244
      %v2246 = vsel %vm2245, %v2238, %v2242
      %v2247 = vand.u32 2147483647, %v2235
      %vm2248 = vcmp.eq.f32.partialorder %v2247, 8.507059e+37
      %v2249 = vand.u32 %v2235, 2147483648
      %v2250 = vor.u32 1.1754944e-38, %v2249
      %v2251 = vsel %vm2248, %v2250, %v2246
      %v2252 = vmul.f32 1.0, %v2251
      %v2253 = vrcp.pop %v2236
      %v2254 = vmul.f32 %v2236, %v2253
      %v2255 = vsub.f32 1.0, %v2254
      %v2256 = vmul.f32 %v2253, %v2255
      %v2257 = vadd.f32 %v2253, %v2256
      %vm2258 = vweird.f32 %v2236
      %vm2259 = vweird.f32 %v2253
      %vm2260 = vmor %vm2258, %vm2259
      %v2261 = vsel %vm2260, %v2253, %v2257
      %v2262 = vand.u32 2147483647, %v2236
      %vm2263 = vcmp.eq.f32.partialorder %v2262, 8.507059e+37
      %v2264 = vand.u32 %v2236, 2147483648
      %v2265 = vor.u32 1.1754944e-38, %v2264
      %v2266 = vsel %vm2263, %v2265, %v2261
      %v2267 = vmul.f32 1.0, %v2266
      %v2268 = vrcp.pop %v2237
      %v2269 = vmul.f32 %v2237, %v2268
      %v2270 = vsub.f32 1.0, %v2269
      %v2271 = vmul.f32 %v2268, %v2270
      %v2272 = vadd.f32 %v2268, %v2271
      %vm2273 = vweird.f32 %v2237
      %vm2274 = vweird.f32 %v2268
      %vm2275 = vmor %vm2273, %vm2274
      %v2276 = vsel %vm2275, %v2268, %v2272
      %v2277 = vand.u32 2147483647, %v2237
      %vm2278 = vcmp.eq.f32.partialorder %v2277, 8.507059e+37
      %v2279 = vand.u32 %v2237, 2147483648
      %v2280 = vor.u32 1.1754944e-38, %v2279
      %v2281 = vsel %vm2278, %v2280, %v2276
      %v2282 = vmul.f32 1.0, %v2281
      %v2283 = vmul.f32 %v2215, %v2252
      %v2284 = vmul.f32 %v2218, %v2267
      %v2285 = vmul.f32 %v2221, %v2282
      %v2286 = vld [vmem:[%s49] sm:$0xff]
      %v2287 = vld [vmem:[%s49 + $0x8] sm:$0xff]
      %v2288 = vld [vmem:[%s49 + $0x10] sm:$0xff]
      %v2289 = vld [vmem:[%s49 + $0x18] sm:$0xff]
      %v2290 = vld [vmem:[%s49 + $0x20] sm:$0xff]
      %v2291 = vld [vmem:[%s49 + $0x28] sm:$0xff]
      %v2292 = vld [vmem:[%s49 + $0x30] sm:$0xff]
      %v2293 = vld [vmem:[%s49 + $0x38] sm:$0xff]
      %v2294 = vld [vmem:[%s49 + $0x40] sm:$0xff]
      %v2295 = vld [vmem:[%s49 + $0x48] sm:$0xff]
      %v2296 = vld [vmem:[%s49 + $0x50] sm:$0xff]
      %v2297 = vld [vmem:[%s49 + $0x58] sm:$0xff]
      %v2298 = vld [vmem:[%s49 + $0x60] sm:$0xff]
      %v2299 = vld [vmem:[%s49 + $0x68] sm:$0xff]
      %v2300 = vld [vmem:[%s49 + $0x70] sm:$0xff]
      %v2301 = vld [vmem:[%s49 + $0x78] sm:$0xff]
      %2302 = vmatpush.msra.mxu0 %v2301
      %2303 = vmatpush.msra.mxu0 %v2300
      %2304 = vmatpush.msra.mxu0 %v2299
      %2305 = vmatpush.msra.mxu0 %v2298
      %2306 = vmatpush.msra.mxu0 %v2297
      %2307 = vmatpush.msra.mxu0 %v2296
      %2308 = vmatpush.msra.mxu0 %v2295
      %2309 = vmatpush.msra.mxu0 %v2294
      %2310 = vmatpush.msra.mxu0 %v2293
      %2311 = vmatpush.msra.mxu0 %v2292
      %2312 = vmatpush.msra.mxu0 %v2291
      %2313 = vmatpush.msra.mxu0 %v2290
      %2314 = vmatpush.msra.mxu0 %v2289
      %2315 = vmatpush.msra.mxu0 %v2288
      %2316 = vmatpush.msra.mxu0 %v2287
      %2317 = vmatpush.msra.mxu0 %v2286
      %2318 = vmatmul.f32.gmra.mxu0 %v2283
      %v2319 = vpop.f32.mrf.mxu0
      %v2320 = vadd.f32 0.0, %v2319
      %2321 = vmatmul.f32.gmra.mxu0 %v2284
      %v2322 = vpop.f32.mrf.mxu0
      %v2323 = vadd.f32 0.0, %v2322
      %2324 = vmatmul.f32.gmra.mxu0 %v2285
      %v2325 = vpop.f32.mrf.mxu0
      %v2326 = vadd.f32 0.0, %v2325
      %2327 = vdwg.mxu0
      %v2328 = vadd.f32 %v2097, %v2320
      %v2329 = vadd.f32 %v2098, %v2323
      %v2330 = vadd.f32 %v2099, %v2326
      %v2331 = vld [vmem:[%s51] sm:$0x1]
      %v2333 = vperm.slane %v2331, 0
      %v2335 = vadd.f32 %v2328, %v2333
      %v2336 = vadd.f32 %v2329, %v2333
      %v2337 = vadd.f32 %v2330, %v2333
      %s2338 = scalar_lea.vmem %s13, 1
      %v2339 = vld [vmem:[%s2338] sm:$0x1]
      %s2340 = scalar_lea.vmem %s15, 1
      %v2341 = vld [vmem:[%s2340] sm:$0x1]
      %v2342 = vsel %vm1045, %v2335, 0.0
      %2343 = vadd.xlane.f32.xlu0 %v2342
      %v2344 = vpop.xlane.xlu0 %2343
      %v2345 = vsel %vm1045, %v2336, 0.0
      %2346 = vadd.xlane.f32.xlu0 %v2345
      %v2347 = vpop.xlane.xlu0 %2346
      %v2348 = vsel %vm988, %v2337, 0.0
      %2349 = vadd.xlane.f32.xlu0 %v2348
      %v2350 = vpop.xlane.xlu0 %2349
      %v2351 = vmul.f32 %v2344, %v1068
      %v2352 = vmul.f32 %v2347, %v1068
      %v2353 = vmul.f32 %v2350, %v1068
      %v2354 = vsub.f32 %v2335, %v2351
      %v2355 = vsub.f32 %v2336, %v2352
      %v2356 = vsub.f32 %v2337, %v2353
      %v2357 = vmul.f32 %v2354, %v2354
      %v2358 = vmul.f32 %v2355, %v2355
      %v2359 = vmul.f32 %v2356, %v2356
      %v2360 = vsel %vm1045, %v2357, 0.0
      %2361 = vadd.xlane.f32.xlu0 %v2360
      %v2362 = vpop.xlane.xlu0 %2361
      %v2363 = vsel %vm1045, %v2358, 0.0
      %2364 = vadd.xlane.f32.xlu0 %v2363
      %v2365 = vpop.xlane.xlu0 %2364
      %v2366 = vsel %vm988, %v2359, 0.0
      %2367 = vadd.xlane.f32.xlu0 %v2366
      %v2368 = vpop.xlane.xlu0 %2367
      %v2369 = vmul.f32 %v2362, %v1068
      %v2370 = vmul.f32 %v2365, %v1068
      %v2371 = vmul.f32 %v2368, %v1068
      %v2372 = vadd.f32 %v2369, 1e-05
      %v2373 = vadd.f32 %v2370, 1e-05
      %v2374 = vadd.f32 %v2371, 1e-05
      %v2375 = vrsqrt.pop %v2372
      %v2376 = vmul.f32 %v2375, %v2372
      %v2377 = vmul.f32 %v2376, %v2375
      %v2378 = vmul.f32 0.5, %v2377
      %v2379 = vsub.f32 1.5, %v2378
      %v2380 = vmul.f32 %v2375, %v2379
      %vm2381 = vweird.f32 %v2372
      %vm2382 = vweird.f32 %v2375
      %vm2383 = vmor %vm2381, %vm2382
      %v2384 = vsel %vm2383, %v2375, %v2380
      %v2385 = vrsqrt.pop %v2373
      %v2386 = vmul.f32 %v2385, %v2373
      %v2387 = vmul.f32 %v2386, %v2385
      %v2388 = vmul.f32 0.5, %v2387
      %v2389 = vsub.f32 1.5, %v2388
      %v2390 = vmul.f32 %v2385, %v2389
      %vm2391 = vweird.f32 %v2373
      %vm2392 = vweird.f32 %v2385
      %vm2393 = vmor %vm2391, %vm2392
      %v2394 = vsel %vm2393, %v2385, %v2390
      %v2395 = vrsqrt.pop %v2374
      %v2396 = vmul.f32 %v2395, %v2374
      %v2397 = vmul.f32 %v2396, %v2395
      %v2398 = vmul.f32 0.5, %v2397
      %v2399 = vsub.f32 1.5, %v2398
      %v2400 = vmul.f32 %v2395, %v2399
      %vm2401 = vweird.f32 %v2374
      %vm2402 = vweird.f32 %v2395
      %vm2403 = vmor %vm2401, %vm2402
      %v2404 = vsel %vm2403, %v2395, %v2400
      %v2405 = vmul.f32 %v2354, %v2384
      %v2406 = vmul.f32 %v2355, %v2394
      %v2407 = vmul.f32 %v2356, %v2404
      %v2409 = vperm.slane %v2339, 0
      %v2411 = vmul.f32 %v2405, %v2409
      %v2412 = vmul.f32 %v2406, %v2409
      %v2413 = vmul.f32 %v2407, %v2409
      %v2415 = vperm.slane %v2341, 0
      %v2417 = vadd.f32 %v2411, %v2415
      %v2418 = vadd.f32 %v2412, %v2415
      %v2419 = vadd.f32 %v2413, %v2415
      %s2420 = scalar_lea.vmem %s17, 32
      %v2421 = vld [vmem:[%s2420] sm:$0xff]
      %v2422 = vld [vmem:[%s2420 + $0x8] sm:$0xff]
      %v2423 = vld [vmem:[%s2420 + $0x10] sm:$0xff]
      %v2424 = vld [vmem:[%s2420 + $0x18] sm:$0xff]
      %s2425 = scalar_lea.vmem %s19, 1
      %v2426 = vld [vmem:[%s2425] sm:$0x1]
      %v2428 = vperm.slane %v2426, 0
      %v2431 = vsel %vm1045, %v2417, 0
      %v2434 = vsel %vm1045, %v2418, 0
      %v2437 = vsel %vm1045, %v2419, 0
      %2439 = vmatpush.msra.mxu0 0.0
      %2440 = vmatpush.msra.mxu0 0.0
      %2441 = vmatpush.msra.mxu0 0.0
      %2442 = vmatpush.msra.mxu0 0.0
      %2443 = vmatpush.msra.mxu0 0.0
      %2444 = vmatpush.msra.mxu0 0.0
      %2445 = vmatpush.msra.mxu0 0.0
      %2446 = vmatpush.msra.mxu0 0.0
      %2447 = vmatpush.msra.mxu0 0.0
      %2448 = vmatpush.msra.mxu0 0.0
      %2449 = vmatpush.msra.mxu0 0.0
      %2450 = vmatpush.msra.mxu0 0.0
      %2451 = vmatpush.msra.mxu0 %v2424
      %2452 = vmatpush.msra.mxu0 %v2423
      %2453 = vmatpush.msra.mxu0 %v2422
      %2454 = vmatpush.msra.mxu0 %v2421
      %2455 = vmatmul.f32.gmra.mxu0 %v2431
      %v2456 = vpop.f32.mrf.mxu0
      %v2457 = vadd.f32 %v2428, %v2456
      %2458 = vmatmul.f32.gmra.mxu0 %v2434
      %v2459 = vpop.f32.mrf.mxu0
      %v2460 = vadd.f32 %v2428, %v2459
      %2461 = vmatmul.f32.gmra.mxu0 %v2437
      %v2462 = vpop.f32.mrf.mxu0
      %v2463 = vadd.f32 %v2428, %v2462
      %2464 = vdwg.mxu0
      %s2465 = scalar_lea.vmem %s21, 32
      %v2466 = vld [vmem:[%s2465] sm:$0xff]
      %v2467 = vld [vmem:[%s2465 + $0x8] sm:$0xff]
      %v2468 = vld [vmem:[%s2465 + $0x10] sm:$0xff]
      %v2469 = vld [vmem:[%s2465 + $0x18] sm:$0xff]
      %s2470 = scalar_lea.vmem %s23, 1
      %v2471 = vld [vmem:[%s2470] sm:$0x1]
      %v2473 = vperm.slane %v2471, 0
      %2475 = vmatpush.msra.mxu0 0.0
      %2476 = vmatpush.msra.mxu0 0.0
      %2477 = vmatpush.msra.mxu0 0.0
      %2478 = vmatpush.msra.mxu0 0.0
      %2479 = vmatpush.msra.mxu0 0.0
      %2480 = vmatpush.msra.mxu0 0.0
      %2481 = vmatpush.msra.mxu0 0.0
      %2482 = vmatpush.msra.mxu0 0.0
      %2483 = vmatpush.msra.mxu0 0.0
      %2484 = vmatpush.msra.mxu0 0.0
      %2485 = vmatpush.msra.mxu0 0.0
      %2486 = vmatpush.msra.mxu0 0.0
      %2487 = vmatpush.msra.mxu0 %v2469
      %2488 = vmatpush.msra.mxu0 %v2468
      %2489 = vmatpush.msra.mxu0 %v2467
      %2490 = vmatpush.msra.mxu0 %v2466
      %2491 = vmatmul.f32.gmra.mxu0 %v2431
      %v2492 = vpop.f32.mrf.mxu0
      %v2493 = vadd.f32 %v2473, %v2492
      %2494 = vmatmul.f32.gmra.mxu0 %v2434
      %v2495 = vpop.f32.mrf.mxu0
      %v2496 = vadd.f32 %v2473, %v2495
      %2497 = vmatmul.f32.gmra.mxu0 %v2437
      %v2498 = vpop.f32.mrf.mxu0
      %v2499 = vadd.f32 %v2473, %v2498
      %2500 = vdwg.mxu0
      %s2501 = scalar_lea.vmem %s25, 32
      %v2502 = vld [vmem:[%s2501] sm:$0xff]
      %v2503 = vld [vmem:[%s2501 + $0x8] sm:$0xff]
      %v2504 = vld [vmem:[%s2501 + $0x10] sm:$0xff]
      %v2505 = vld [vmem:[%s2501 + $0x18] sm:$0xff]
      %s2506 = scalar_lea.vmem %s27, 1
      %v2507 = vld [vmem:[%s2506] sm:$0x1]
      %v2509 = vperm.slane %v2507, 0
      %2511 = vmatpush.msra.mxu0 0.0
      %2512 = vmatpush.msra.mxu0 0.0
      %2513 = vmatpush.msra.mxu0 0.0
      %2514 = vmatpush.msra.mxu0 0.0
      %2515 = vmatpush.msra.mxu0 0.0
      %2516 = vmatpush.msra.mxu0 0.0
      %2517 = vmatpush.msra.mxu0 0.0
      %2518 = vmatpush.msra.mxu0 0.0
      %2519 = vmatpush.msra.mxu0 0.0
      %2520 = vmatpush.msra.mxu0 0.0
      %2521 = vmatpush.msra.mxu0 0.0
      %2522 = vmatpush.msra.mxu0 0.0
      %2523 = vmatpush.msra.mxu0 %v2505
      %2524 = vmatpush.msra.mxu0 %v2504
      %2525 = vmatpush.msra.mxu0 %v2503
      %2526 = vmatpush.msra.mxu0 %v2502
      %2527 = vmatmul.f32.gmra.mxu0 %v2431
      %v2528 = vpop.f32.mrf.mxu0
      %v2529 = vadd.f32 %v2509, %v2528
      %2530 = vmatmul.f32.gmra.mxu0 %v2434
      %v2531 = vpop.f32.mrf.mxu0
      %v2532 = vadd.f32 %v2509, %v2531
      %2533 = vmatmul.f32.gmra.mxu0 %v2437
      %v2534 = vpop.f32.mrf.mxu0
      %v2535 = vadd.f32 %v2509, %v2534
      %2536 = vdwg.mxu0
      %v2537 = vld [vmem:[%s33] sm:$0xff]
      %v2538 = vld [vmem:[%s33 + $0x8] sm:$0xff]
      %v2539 = vld [vmem:[%s33 + $0x10] sm:$0xff]
      %v2540 = vld [vmem:[%s33 + $0x18] sm:$0xff]
      %2541 = vmatpush.msra.mxu0 0.0
      %2542 = vmatpush.msra.mxu0 0.0
      %2543 = vmatpush.msra.mxu0 0.0
      %2544 = vmatpush.msra.mxu0 0.0
      %2545 = vmatpush.msra.mxu0 0.0
      %2546 = vmatpush.msra.mxu0 0.0
      %2547 = vmatpush.msra.mxu0 0.0
      %2548 = vmatpush.msra.mxu0 0.0
      %2549 = vmatpush.msra.mxu0 0.0
      %2550 = vmatpush.msra.mxu0 0.0
      %2551 = vmatpush.msra.mxu0 0.0
      %2552 = vmatpush.msra.mxu0 0.0
      %2553 = vmatpush.msra.mxu0 %v2540
      %2554 = vmatpush.msra.mxu0 %v2539
      %2555 = vmatpush.msra.mxu0 %v2538
      %2556 = vmatpush.msra.mxu0 %v2537
      %2557 = vmatmul.f32.gmra.mxu0 %v2431
      %v2558 = vpop.f32.mrf.mxu0
      %v2559 = vadd.f32 0.0, %v2558
      %2560 = vmatmul.f32.gmra.mxu0 %v2434
      %v2561 = vpop.f32.mrf.mxu0
      %v2562 = vadd.f32 0.0, %v2561
      %2563 = vmatmul.f32.gmra.mxu0 %v2437
      %v2564 = vpop.f32.mrf.mxu0
      %v2565 = vadd.f32 0.0, %v2564
      %2566 = vdwg.mxu0
      %v2567 = vld [vmem:[%s35] sm:$0xff]
      %v2569 = vsel %vm1332, %v2559, 0
      %v2572 = vsel %vm1332, %v2562, 0
      %v2575 = vsel %vm1332, %v2565, 0
      %2577 = vmatpush.msra.mxu0 0.0
      %2578 = vmatpush.msra.mxu0 0.0
      %2579 = vmatpush.msra.mxu0 0.0
      %2580 = vmatpush.msra.mxu0 0.0
      %2581 = vmatpush.msra.mxu0 0.0
      %2582 = vmatpush.msra.mxu0 0.0
      %2583 = vmatpush.msra.mxu0 0.0
      %2584 = vmatpush.msra.mxu0 0.0
      %2585 = vmatpush.msra.mxu0 0.0
      %2586 = vmatpush.msra.mxu0 0.0
      %2587 = vmatpush.msra.mxu0 0.0
      %2588 = vmatpush.msra.mxu0 0.0
      %2589 = vmatpush.msra.mxu0 0.0
      %2590 = vmatpush.msra.mxu0 0.0
      %2591 = vmatpush.msra.mxu0 0.0
      %2592 = vmatpush.msra.mxu0 %v2567
      %2593 = vmatmul.f32.gmra.mxu0 %v2569
      %v2594 = vpop.f32.mrf.mxu0
      %v2595 = vadd.f32 0.0, %v2594
      %2596 = vmatmul.f32.gmra.mxu0 %v2572
      %v2597 = vpop.f32.mrf.mxu0
      %v2598 = vadd.f32 0.0, %v2597
      %2599 = vmatmul.f32.gmra.mxu0 %v2575
      %v2600 = vpop.f32.mrf.mxu0
      %v2601 = vadd.f32 0.0, %v2600
      %2602 = vdwg.mxu0
      %v2603 = vmul.f32 %v2595, 2.0
      %v2604 = vmul.f32 %v2598, 2.0
      %v2605 = vmul.f32 %v2601, 2.0
      %v2606 = vadd.f32 %v2457, %v2603
      %v2607 = vadd.f32 %v2460, %v2604
      %v2608 = vadd.f32 %v2463, %v2605
      %v2609 = vld [vmem:[%s37] sm:$0xff]
      %v2610 = vld [vmem:[%s37 + $0x8] sm:$0xff]
      %v2611 = vld [vmem:[%s37 + $0x10] sm:$0xff]
      %v2612 = vld [vmem:[%s37 + $0x18] sm:$0xff]
      %2613 = vmatpush.msra.mxu0 0.0
      %2614 = vmatpush.msra.mxu0 0.0
      %2615 = vmatpush.msra.mxu0 0.0
      %2616 = vmatpush.msra.mxu0 0.0
      %2617 = vmatpush.msra.mxu0 0.0
      %2618 = vmatpush.msra.mxu0 0.0
      %2619 = vmatpush.msra.mxu0 0.0
      %2620 = vmatpush.msra.mxu0 0.0
      %2621 = vmatpush.msra.mxu0 0.0
      %2622 = vmatpush.msra.mxu0 0.0
      %2623 = vmatpush.msra.mxu0 0.0
      %2624 = vmatpush.msra.mxu0 0.0
      %2625 = vmatpush.msra.mxu0 %v2612
      %2626 = vmatpush.msra.mxu0 %v2611
      %2627 = vmatpush.msra.mxu0 %v2610
      %2628 = vmatpush.msra.mxu0 %v2609
      %2629 = vmatmul.f32.gmra.mxu0 %v2431
      %v2630 = vpop.f32.mrf.mxu0
      %v2631 = vadd.f32 0.0, %v2630
      %2632 = vmatmul.f32.gmra.mxu0 %v2434
      %v2633 = vpop.f32.mrf.mxu0
      %v2634 = vadd.f32 0.0, %v2633
      %2635 = vmatmul.f32.gmra.mxu0 %v2437
      %v2636 = vpop.f32.mrf.mxu0
      %v2637 = vadd.f32 0.0, %v2636
      %2638 = vdwg.mxu0
      %v2639 = vld [vmem:[%s39] sm:$0xff]
      %v2641 = vsel %vm1332, %v2631, 0
      %v2644 = vsel %vm1332, %v2634, 0
      %v2647 = vsel %vm1332, %v2637, 0
      %2649 = vmatpush.msra.mxu0 0.0
      %2650 = vmatpush.msra.mxu0 0.0
      %2651 = vmatpush.msra.mxu0 0.0
      %2652 = vmatpush.msra.mxu0 0.0
      %2653 = vmatpush.msra.mxu0 0.0
      %2654 = vmatpush.msra.mxu0 0.0
      %2655 = vmatpush.msra.mxu0 0.0
      %2656 = vmatpush.msra.mxu0 0.0
      %2657 = vmatpush.msra.mxu0 0.0
      %2658 = vmatpush.msra.mxu0 0.0
      %2659 = vmatpush.msra.mxu0 0.0
      %2660 = vmatpush.msra.mxu0 0.0
      %2661 = vmatpush.msra.mxu0 0.0
      %2662 = vmatpush.msra.mxu0 0.0
      %2663 = vmatpush.msra.mxu0 0.0
      %2664 = vmatpush.msra.mxu0 %v2639
      %2665 = vmatmul.f32.gmra.mxu0 %v2641
      %v2666 = vpop.f32.mrf.mxu0
      %v2667 = vadd.f32 0.0, %v2666
      %2668 = vmatmul.f32.gmra.mxu0 %v2644
      %v2669 = vpop.f32.mrf.mxu0
      %v2670 = vadd.f32 0.0, %v2669
      %2671 = vmatmul.f32.gmra.mxu0 %v2647
      %v2672 = vpop.f32.mrf.mxu0
      %v2673 = vadd.f32 0.0, %v2672
      %2674 = vdwg.mxu0
      %v2675 = vmul.f32 %v2667, 2.0
      %v2676 = vmul.f32 %v2670, 2.0
      %v2677 = vmul.f32 %v2673, 2.0
      %v2678 = vadd.f32 %v2529, %v2675
      %v2679 = vadd.f32 %v2532, %v2676
      %v2680 = vadd.f32 %v2535, %v2677
      %v2681 = vmul.f32 %v2606, 0.35355338
      %v2682 = vmul.f32 %v2607, 0.35355338
      %v2683 = vmul.f32 %v2608, 0.35355338
      %v2685 = vsel %vm1332, %v2681, 0
      %v2688 = vsel %vm1332, %v2682, 0
      %v2691 = vsel %vm1332, %v2683, 0
      %v2694 = vsel %vm1332, %v2493, 0
      %v2697 = vsel %vm1332, %v2496, 0
      %v2700 = vsel %vm1332, %v2499, 0
      %2702 = vmatpush.xpose.msra.mxu0 0.0
      %2703 = vmatpush.xpose.msra.mxu0 0.0
      %2704 = vmatpush.xpose.msra.mxu0 0.0
      %2705 = vmatpush.xpose.msra.mxu0 0.0
      %2706 = vmatpush.xpose.msra.mxu0 0.0
      %2707 = vmatpush.xpose.msra.mxu0 0.0
      %2708 = vmatpush.xpose.msra.mxu0 0.0
      %2709 = vmatpush.xpose.msra.mxu0 0.0
      %2710 = vmatpush.xpose.msra.mxu0 0.0
      %2711 = vmatpush.xpose.msra.mxu0 0.0
      %2712 = vmatpush.xpose.msra.mxu0 0.0
      %2713 = vmatpush.xpose.msra.mxu0 0.0
      %2714 = vmatpush.xpose.msra.mxu0 0.0
      %2715 = vmatpush.xpose.msra.mxu0 %v2700
      %2716 = vmatpush.xpose.msra.mxu0 %v2697
      %2717 = vmatpush.xpose.msra.mxu0 %v2694
      %2718 = vmatmul.f32.gmra.mxu0 %v2685
      %v2719 = vpop.f32.mrf.mxu0
      %v2720 = vadd.f32 0.0, %v2719
      %2721 = vmatmul.f32.gmra.mxu0 %v2688
      %v2722 = vpop.f32.mrf.mxu0
      %v2723 = vadd.f32 0.0, %v2722
      %2724 = vmatmul.f32.gmra.mxu0 %v2691
      %v2725 = vpop.f32.mrf.mxu0
      %v2726 = vadd.f32 0.0, %v2725
      %2727 = vdwg.mxu0
      %v2728 = vsel %vm1377, %v2720, -inf
      %2729 = vmax.xlane.f32.xlu0 %v2728
      %v2730 = vpop.xlane.xlu0 %2729
      %v2731 = vsel %vm1377, %v2723, -inf
      %2732 = vmax.xlane.f32.xlu0 %v2731
      %v2733 = vpop.xlane.xlu0 %2732
      %v2734 = vsel %vm1384, %v2726, -inf
      %2735 = vmax.xlane.f32.xlu0 %v2734
      %v2736 = vpop.xlane.xlu0 %2735
      %v2737 = vsub.f32 %v2720, %v2730
      %v2738 = vsub.f32 %v2723, %v2733
      %v2739 = vsub.f32 %v2726, %v2736
      %v2740 = vmul.f32 %v2737, 1.442695
      %v2741 = vpow.pop %v2740
      %v2742 = vmul.f32 %v2738, 1.442695
      %v2743 = vpow.pop %v2742
      %v2744 = vmul.f32 %v2739, 1.442695
      %v2745 = vpow.pop %v2744
      %v2746 = vsel %vm1377, %v2741, 0.0
      %2747 = vadd.xlane.f32.xlu0 %v2746
      %v2748 = vpop.xlane.xlu0 %2747
      %v2749 = vsel %vm1377, %v2743, 0.0
      %2750 = vadd.xlane.f32.xlu0 %v2749
      %v2751 = vpop.xlane.xlu0 %2750
      %v2752 = vsel %vm1384, %v2745, 0.0
      %2753 = vadd.xlane.f32.xlu0 %v2752
      %v2754 = vpop.xlane.xlu0 %2753
      %v2755 = vrcp.pop %v2748
      %v2756 = vmul.f32 %v2748, %v2755
      %v2757 = vsub.f32 1.0, %v2756
      %v2758 = vmul.f32 %v2755, %v2757
      %v2759 = vadd.f32 %v2755, %v2758
      %vm2760 = vweird.f32 %v2748
      %vm2761 = vweird.f32 %v2755
      %vm2762 = vmor %vm2760, %vm2761
      %v2763 = vsel %vm2762, %v2755, %v2759
      %v2764 = vand.u32 2147483647, %v2748
      %vm2765 = vcmp.eq.f32.partialorder %v2764, 8.507059e+37
      %v2766 = vand.u32 %v2748, 2147483648
      %v2767 = vor.u32 1.1754944e-38, %v2766
      %v2768 = vsel %vm2765, %v2767, %v2763
      %v2769 = vmul.f32 %v2741, %v2768
      %v2770 = vrcp.pop %v2751
      %v2771 = vmul.f32 %v2751, %v2770
      %v2772 = vsub.f32 1.0, %v2771
      %v2773 = vmul.f32 %v2770, %v2772
      %v2774 = vadd.f32 %v2770, %v2773
      %vm2775 = vweird.f32 %v2751
      %vm2776 = vweird.f32 %v2770
      %vm2777 = vmor %vm2775, %vm2776
      %v2778 = vsel %vm2777, %v2770, %v2774
      %v2779 = vand.u32 2147483647, %v2751
      %vm2780 = vcmp.eq.f32.partialorder %v2779, 8.507059e+37
      %v2781 = vand.u32 %v2751, 2147483648
      %v2782 = vor.u32 1.1754944e-38, %v2781
      %v2783 = vsel %vm2780, %v2782, %v2778
      %v2784 = vmul.f32 %v2743, %v2783
      %v2785 = vrcp.pop %v2754
      %v2786 = vmul.f32 %v2754, %v2785
      %v2787 = vsub.f32 1.0, %v2786
      %v2788 = vmul.f32 %v2785, %v2787
      %v2789 = vadd.f32 %v2785, %v2788
      %vm2790 = vweird.f32 %v2754
      %vm2791 = vweird.f32 %v2785
      %vm2792 = vmor %vm2790, %vm2791
      %v2793 = vsel %vm2792, %v2785, %v2789
      %v2794 = vand.u32 2147483647, %v2754
      %vm2795 = vcmp.eq.f32.partialorder %v2794, 8.507059e+37
      %v2796 = vand.u32 %v2754, 2147483648
      %v2797 = vor.u32 1.1754944e-38, %v2796
      %v2798 = vsel %vm2795, %v2797, %v2793
      %v2799 = vmul.f32 %v2745, %v2798
      %v2801 = vsel %vm1377, %v2769, 0
      %v2804 = vsel %vm1377, %v2784, 0
      %v2807 = vsel %vm1377, %v2799, 0
      %v2810 = vsel %vm1460, %v2680, 0
      %2812 = vmatpush.msra.mxu0 0.0
      %2813 = vmatpush.msra.mxu0 0.0
      %2814 = vmatpush.msra.mxu0 0.0
      %2815 = vmatpush.msra.mxu0 0.0
      %2816 = vmatpush.msra.mxu0 0.0
      %2817 = vmatpush.msra.mxu0 0.0
      %2818 = vmatpush.msra.mxu0 0.0
      %2819 = vmatpush.msra.mxu0 0.0
      %2820 = vmatpush.msra.mxu0 0.0
      %2821 = vmatpush.msra.mxu0 0.0
      %2822 = vmatpush.msra.mxu0 0.0
      %2823 = vmatpush.msra.mxu0 0.0
      %2824 = vmatpush.msra.mxu0 0.0
      %2825 = vmatpush.msra.mxu0 %v2810
      %2826 = vmatpush.msra.mxu0 %v2679
      %2827 = vmatpush.msra.mxu0 %v2678
      %2828 = vmatmul.f32.gmra.mxu0 %v2801
      %v2829 = vpop.f32.mrf.mxu0
      %v2830 = vadd.f32 0.0, %v2829
      %2831 = vmatmul.f32.gmra.mxu0 %v2804
      %v2832 = vpop.f32.mrf.mxu0
      %v2833 = vadd.f32 0.0, %v2832
      %2834 = vmatmul.f32.gmra.mxu0 %v2807
      %v2835 = vpop.f32.mrf.mxu0
      %v2836 = vadd.f32 0.0, %v2835
      %2837 = vdwg.mxu0
      %2838 = vst.msk [vmem:[#allocation3] sm:$0xff] %vm1332, %v2830
      %2839 = vst.msk [vmem:[#allocation3 + $0x8] sm:$0xff] %vm1332, %v2833
      %2840 = vst.msk [vmem:[#allocation3 + $0x10] sm:$0x1] %vm1492, %v2836
      %2841 = vrot.lane.b32.xlu0 %v2681, 120
      %v2842 = vpop.permute.xlu0 %2841
      %2843 = vrot.lane.b32.xlu0 %v2682, 120
      %v2844 = vpop.permute.xlu0 %2843
      %2845 = vrot.lane.b32.xlu0 %v2683, 120
      %v2846 = vpop.permute.xlu0 %2845
      %2847 = vrot.lane.b32.xlu0 %v2493, 120
      %v2848 = vpop.permute.xlu0 %2847
      %2849 = vrot.lane.b32.xlu0 %v2496, 120
      %v2850 = vpop.permute.xlu0 %2849
      %2851 = vrot.lane.b32.xlu0 %v2499, 120
      %v2852 = vpop.permute.xlu0 %2851
      %v2853 = vsel %vm1332, %v2842, 0
      %v2855 = vsel %vm1332, %v2844, 0
      %v2857 = vsel %vm1332, %v2846, 0
      %v2859 = vsel %vm1332, %v2848, 0
      %v2861 = vsel %vm1332, %v2850, 0
      %v2863 = vsel %vm1332, %v2852, 0
      %2865 = vmatpush.xpose.msra.mxu0 0.0
      %2866 = vmatpush.xpose.msra.mxu0 0.0
      %2867 = vmatpush.xpose.msra.mxu0 0.0
      %2868 = vmatpush.xpose.msra.mxu0 0.0
      %2869 = vmatpush.xpose.msra.mxu0 0.0
      %2870 = vmatpush.xpose.msra.mxu0 0.0
      %2871 = vmatpush.xpose.msra.mxu0 0.0
      %2872 = vmatpush.xpose.msra.mxu0 0.0
      %2873 = vmatpush.xpose.msra.mxu0 0.0
      %2874 = vmatpush.xpose.msra.mxu0 0.0
      %2875 = vmatpush.xpose.msra.mxu0 0.0
      %2876 = vmatpush.xpose.msra.mxu0 0.0
      %2877 = vmatpush.xpose.msra.mxu0 0.0
      %2878 = vmatpush.xpose.msra.mxu0 %v2863
      %2879 = vmatpush.xpose.msra.mxu0 %v2861
      %2880 = vmatpush.xpose.msra.mxu0 %v2859
      %2881 = vmatmul.f32.gmra.mxu0 %v2853
      %v2882 = vpop.f32.mrf.mxu0
      %v2883 = vadd.f32 0.0, %v2882
      %2884 = vmatmul.f32.gmra.mxu0 %v2855
      %v2885 = vpop.f32.mrf.mxu0
      %v2886 = vadd.f32 0.0, %v2885
      %2887 = vmatmul.f32.gmra.mxu0 %v2857
      %v2888 = vpop.f32.mrf.mxu0
      %v2889 = vadd.f32 0.0, %v2888
      %2890 = vdwg.mxu0
      %v2891 = vsel %vm1377, %v2883, -inf
      %2892 = vmax.xlane.f32.xlu0 %v2891
      %v2893 = vpop.xlane.xlu0 %2892
      %v2894 = vsel %vm1377, %v2886, -inf
      %2895 = vmax.xlane.f32.xlu0 %v2894
      %v2896 = vpop.xlane.xlu0 %2895
      %v2897 = vsel %vm1384, %v2889, -inf
      %2898 = vmax.xlane.f32.xlu0 %v2897
      %v2899 = vpop.xlane.xlu0 %2898
      %v2900 = vsub.f32 %v2883, %v2893
      %v2901 = vsub.f32 %v2886, %v2896
      %v2902 = vsub.f32 %v2889, %v2899
      %v2903 = vmul.f32 %v2900, 1.442695
      %v2904 = vpow.pop %v2903
      %v2905 = vmul.f32 %v2901, 1.442695
      %v2906 = vpow.pop %v2905
      %v2907 = vmul.f32 %v2902, 1.442695
      %v2908 = vpow.pop %v2907
      %v2909 = vsel %vm1377, %v2904, 0.0
      %2910 = vadd.xlane.f32.xlu0 %v2909
      %v2911 = vpop.xlane.xlu0 %2910
      %v2912 = vsel %vm1377, %v2906, 0.0
      %2913 = vadd.xlane.f32.xlu0 %v2912
      %v2914 = vpop.xlane.xlu0 %2913
      %v2915 = vsel %vm1384, %v2908, 0.0
      %2916 = vadd.xlane.f32.xlu0 %v2915
      %v2917 = vpop.xlane.xlu0 %2916
      %v2918 = vrcp.pop %v2911
      %v2919 = vmul.f32 %v2911, %v2918
      %v2920 = vsub.f32 1.0, %v2919
      %v2921 = vmul.f32 %v2918, %v2920
      %v2922 = vadd.f32 %v2918, %v2921
      %vm2923 = vweird.f32 %v2911
      %vm2924 = vweird.f32 %v2918
      %vm2925 = vmor %vm2923, %vm2924
      %v2926 = vsel %vm2925, %v2918, %v2922
      %v2927 = vand.u32 2147483647, %v2911
      %vm2928 = vcmp.eq.f32.partialorder %v2927, 8.507059e+37
      %v2929 = vand.u32 %v2911, 2147483648
      %v2930 = vor.u32 1.1754944e-38, %v2929
      %v2931 = vsel %vm2928, %v2930, %v2926
      %v2932 = vmul.f32 %v2904, %v2931
      %v2933 = vrcp.pop %v2914
      %v2934 = vmul.f32 %v2914, %v2933
      %v2935 = vsub.f32 1.0, %v2934
      %v2936 = vmul.f32 %v2933, %v2935
      %v2937 = vadd.f32 %v2933, %v2936
      %vm2938 = vweird.f32 %v2914
      %vm2939 = vweird.f32 %v2933
      %vm2940 = vmor %vm2938, %vm2939
      %v2941 = vsel %vm2940, %v2933, %v2937
      %v2942 = vand.u32 2147483647, %v2914
      %vm2943 = vcmp.eq.f32.partialorder %v2942, 8.507059e+37
      %v2944 = vand.u32 %v2914, 2147483648
      %v2945 = vor.u32 1.1754944e-38, %v2944
      %v2946 = vsel %vm2943, %v2945, %v2941
      %v2947 = vmul.f32 %v2906, %v2946
      %v2948 = vrcp.pop %v2917
      %v2949 = vmul.f32 %v2917, %v2948
      %v2950 = vsub.f32 1.0, %v2949
      %v2951 = vmul.f32 %v2948, %v2950
      %v2952 = vadd.f32 %v2948, %v2951
      %vm2953 = vweird.f32 %v2917
      %vm2954 = vweird.f32 %v2948
      %vm2955 = vmor %vm2953, %vm2954
      %v2956 = vsel %vm2955, %v2948, %v2952
      %v2957 = vand.u32 2147483647, %v2917
      %vm2958 = vcmp.eq.f32.partialorder %v2957, 8.507059e+37
      %v2959 = vand.u32 %v2917, 2147483648
      %v2960 = vor.u32 1.1754944e-38, %v2959
      %v2961 = vsel %vm2958, %v2960, %v2956
      %v2962 = vmul.f32 %v2908, %v2961
      %2965 = vrot.lane.b32.xlu0 %v2678, 120
      %v2966 = vpop.permute.xlu0 %2965
      %2967 = vrot.lane.b32.xlu0 %v2679, 120
      %v2968 = vpop.permute.xlu0 %2967
      %2969 = vrot.lane.b32.xlu0 %v2680, 120
      %v2970 = vpop.permute.xlu0 %2969
      %v2974 = vsel %vm1377, %v2932, 0
      %v2977 = vsel %vm1377, %v2947, 0
      %v2980 = vsel %vm1377, %v2962, 0
      %v2982 = vsel %vm1460, %v2970, 0
      %2984 = vmatpush.msra.mxu0 0.0
      %2985 = vmatpush.msra.mxu0 0.0
      %2986 = vmatpush.msra.mxu0 0.0
      %2987 = vmatpush.msra.mxu0 0.0
      %2988 = vmatpush.msra.mxu0 0.0
      %2989 = vmatpush.msra.mxu0 0.0
      %2990 = vmatpush.msra.mxu0 0.0
      %2991 = vmatpush.msra.mxu0 0.0
      %2992 = vmatpush.msra.mxu0 0.0
      %2993 = vmatpush.msra.mxu0 0.0
      %2994 = vmatpush.msra.mxu0 0.0
      %2995 = vmatpush.msra.mxu0 0.0
      %2996 = vmatpush.msra.mxu0 0.0
      %2997 = vmatpush.msra.mxu0 %v2982
      %2998 = vmatpush.msra.mxu0 %v2968
      %2999 = vmatpush.msra.mxu0 %v2966
      %3000 = vmatmul.f32.gmra.mxu0 %v2974
      %v3001 = vpop.f32.mrf.mxu0
      %v3002 = vadd.f32 0.0, %v3001
      %3003 = vmatmul.f32.gmra.mxu0 %v2977
      %v3004 = vpop.f32.mrf.mxu0
      %v3005 = vadd.f32 0.0, %v3004
      %3006 = vmatmul.f32.gmra.mxu0 %v2980
      %v3007 = vpop.f32.mrf.mxu0
      %v3008 = vadd.f32 0.0, %v3007
      %3009 = vdwg.mxu0
      %3013 = vrot.lane.b32.xlu0 %v3002, 8
      %v3014 = vpop.permute.xlu0 %3013
      %3015 = vrot.lane.b32.xlu0 %v3005, 8
      %v3016 = vpop.permute.xlu0 %3015
      %3017 = vrot.lane.b32.xlu0 %v3008, 8
      %v3018 = vpop.permute.xlu0 %3017
      %3022 = vst.msk [vmem:[#allocation3] sm:$0xff] %vm1675, %v3014
      %3023 = vst.msk [vmem:[#allocation3 + $0x8] sm:$0xff] %vm1675, %v3016
      %3024 = vst.msk [vmem:[#allocation3 + $0x10] sm:$0x1] %vm1678, %v3018
      %3025 = vrot.lane.b32.xlu0 %v2681, 112
      %v3026 = vpop.permute.xlu0 %3025
      %3027 = vrot.lane.b32.xlu0 %v2682, 112
      %v3028 = vpop.permute.xlu0 %3027
      %3029 = vrot.lane.b32.xlu0 %v2683, 112
      %v3030 = vpop.permute.xlu0 %3029
      %3031 = vrot.lane.b32.xlu0 %v2493, 112
      %v3032 = vpop.permute.xlu0 %3031
      %3033 = vrot.lane.b32.xlu0 %v2496, 112
      %v3034 = vpop.permute.xlu0 %3033
      %3035 = vrot.lane.b32.xlu0 %v2499, 112
      %v3036 = vpop.permute.xlu0 %3035
      %v3037 = vsel %vm1332, %v3026, 0
      %v3039 = vsel %vm1332, %v3028, 0
      %v3041 = vsel %vm1332, %v3030, 0
      %v3043 = vsel %vm1332, %v3032, 0
      %v3045 = vsel %vm1332, %v3034, 0
      %v3047 = vsel %vm1332, %v3036, 0
      %3049 = vmatpush.xpose.msra.mxu0 0.0
      %3050 = vmatpush.xpose.msra.mxu0 0.0
      %3051 = vmatpush.xpose.msra.mxu0 0.0
      %3052 = vmatpush.xpose.msra.mxu0 0.0
      %3053 = vmatpush.xpose.msra.mxu0 0.0
      %3054 = vmatpush.xpose.msra.mxu0 0.0
      %3055 = vmatpush.xpose.msra.mxu0 0.0
      %3056 = vmatpush.xpose.msra.mxu0 0.0
      %3057 = vmatpush.xpose.msra.mxu0 0.0
      %3058 = vmatpush.xpose.msra.mxu0 0.0
      %3059 = vmatpush.xpose.msra.mxu0 0.0
      %3060 = vmatpush.xpose.msra.mxu0 0.0
      %3061 = vmatpush.xpose.msra.mxu0 0.0
      %3062 = vmatpush.xpose.msra.mxu0 %v3047
      %3063 = vmatpush.xpose.msra.mxu0 %v3045
      %3064 = vmatpush.xpose.msra.mxu0 %v3043
      %3065 = vmatmul.f32.gmra.mxu0 %v3037
      %v3066 = vpop.f32.mrf.mxu0
      %v3067 = vadd.f32 0.0, %v3066
      %3068 = vmatmul.f32.gmra.mxu0 %v3039
      %v3069 = vpop.f32.mrf.mxu0
      %v3070 = vadd.f32 0.0, %v3069
      %3071 = vmatmul.f32.gmra.mxu0 %v3041
      %v3072 = vpop.f32.mrf.mxu0
      %v3073 = vadd.f32 0.0, %v3072
      %3074 = vdwg.mxu0
      %v3075 = vsel %vm1377, %v3067, -inf
      %3076 = vmax.xlane.f32.xlu0 %v3075
      %v3077 = vpop.xlane.xlu0 %3076
      %v3078 = vsel %vm1377, %v3070, -inf
      %3079 = vmax.xlane.f32.xlu0 %v3078
      %v3080 = vpop.xlane.xlu0 %3079
      %v3081 = vsel %vm1384, %v3073, -inf
      %3082 = vmax.xlane.f32.xlu0 %v3081
      %v3083 = vpop.xlane.xlu0 %3082
      %v3084 = vsub.f32 %v3067, %v3077
      %v3085 = vsub.f32 %v3070, %v3080
      %v3086 = vsub.f32 %v3073, %v3083
      %v3087 = vmul.f32 %v3084, 1.442695
      %v3088 = vpow.pop %v3087
      %v3089 = vmul.f32 %v3085, 1.442695
      %v3090 = vpow.pop %v3089
      %v3091 = vmul.f32 %v3086, 1.442695
      %v3092 = vpow.pop %v3091
      %v3093 = vsel %vm1377, %v3088, 0.0
      %3094 = vadd.xlane.f32.xlu0 %v3093
      %v3095 = vpop.xlane.xlu0 %3094
      %v3096 = vsel %vm1377, %v3090, 0.0
      %3097 = vadd.xlane.f32.xlu0 %v3096
      %v3098 = vpop.xlane.xlu0 %3097
      %v3099 = vsel %vm1384, %v3092, 0.0
      %3100 = vadd.xlane.f32.xlu0 %v3099
      %v3101 = vpop.xlane.xlu0 %3100
      %v3102 = vrcp.pop %v3095
      %v3103 = vmul.f32 %v3095, %v3102
      %v3104 = vsub.f32 1.0, %v3103
      %v3105 = vmul.f32 %v3102, %v3104
      %v3106 = vadd.f32 %v3102, %v3105
      %vm3107 = vweird.f32 %v3095
      %vm3108 = vweird.f32 %v3102
      %vm3109 = vmor %vm3107, %vm3108
      %v3110 = vsel %vm3109, %v3102, %v3106
      %v3111 = vand.u32 2147483647, %v3095
      %vm3112 = vcmp.eq.f32.partialorder %v3111, 8.507059e+37
      %v3113 = vand.u32 %v3095, 2147483648
      %v3114 = vor.u32 1.1754944e-38, %v3113
      %v3115 = vsel %vm3112, %v3114, %v3110
      %v3116 = vmul.f32 %v3088, %v3115
      %v3117 = vrcp.pop %v3098
      %v3118 = vmul.f32 %v3098, %v3117
      %v3119 = vsub.f32 1.0, %v3118
      %v3120 = vmul.f32 %v3117, %v3119
      %v3121 = vadd.f32 %v3117, %v3120
      %vm3122 = vweird.f32 %v3098
      %vm3123 = vweird.f32 %v3117
      %vm3124 = vmor %vm3122, %vm3123
      %v3125 = vsel %vm3124, %v3117, %v3121
      %v3126 = vand.u32 2147483647, %v3098
      %vm3127 = vcmp.eq.f32.partialorder %v3126, 8.507059e+37
      %v3128 = vand.u32 %v3098, 2147483648
      %v3129 = vor.u32 1.1754944e-38, %v3128
      %v3130 = vsel %vm3127, %v3129, %v3125
      %v3131 = vmul.f32 %v3090, %v3130
      %v3132 = vrcp.pop %v3101
      %v3133 = vmul.f32 %v3101, %v3132
      %v3134 = vsub.f32 1.0, %v3133
      %v3135 = vmul.f32 %v3132, %v3134
      %v3136 = vadd.f32 %v3132, %v3135
      %vm3137 = vweird.f32 %v3101
      %vm3138 = vweird.f32 %v3132
      %vm3139 = vmor %vm3137, %vm3138
      %v3140 = vsel %vm3139, %v3132, %v3136
      %v3141 = vand.u32 2147483647, %v3101
      %vm3142 = vcmp.eq.f32.partialorder %v3141, 8.507059e+37
      %v3143 = vand.u32 %v3101, 2147483648
      %v3144 = vor.u32 1.1754944e-38, %v3143
      %v3145 = vsel %vm3142, %v3144, %v3140
      %v3146 = vmul.f32 %v3092, %v3145
      %3147 = vrot.lane.b32.xlu0 %v2678, 112
      %v3148 = vpop.permute.xlu0 %3147
      %3149 = vrot.lane.b32.xlu0 %v2679, 112
      %v3150 = vpop.permute.xlu0 %3149
      %3151 = vrot.lane.b32.xlu0 %v2680, 112
      %v3152 = vpop.permute.xlu0 %3151
      %v3156 = vsel %vm1377, %v3116, 0
      %v3159 = vsel %vm1377, %v3131, 0
      %v3162 = vsel %vm1377, %v3146, 0
      %v3164 = vsel %vm1460, %v3152, 0
      %3166 = vmatpush.msra.mxu0 0.0
      %3167 = vmatpush.msra.mxu0 0.0
      %3168 = vmatpush.msra.mxu0 0.0
      %3169 = vmatpush.msra.mxu0 0.0
      %3170 = vmatpush.msra.mxu0 0.0
      %3171 = vmatpush.msra.mxu0 0.0
      %3172 = vmatpush.msra.mxu0 0.0
      %3173 = vmatpush.msra.mxu0 0.0
      %3174 = vmatpush.msra.mxu0 0.0
      %3175 = vmatpush.msra.mxu0 0.0
      %3176 = vmatpush.msra.mxu0 0.0
      %3177 = vmatpush.msra.mxu0 0.0
      %3178 = vmatpush.msra.mxu0 0.0
      %3179 = vmatpush.msra.mxu0 %v3164
      %3180 = vmatpush.msra.mxu0 %v3150
      %3181 = vmatpush.msra.mxu0 %v3148
      %3182 = vmatmul.f32.gmra.mxu0 %v3156
      %v3183 = vpop.f32.mrf.mxu0
      %v3184 = vadd.f32 0.0, %v3183
      %3185 = vmatmul.f32.gmra.mxu0 %v3159
      %v3186 = vpop.f32.mrf.mxu0
      %v3187 = vadd.f32 0.0, %v3186
      %3188 = vmatmul.f32.gmra.mxu0 %v3162
      %v3189 = vpop.f32.mrf.mxu0
      %v3190 = vadd.f32 0.0, %v3189
      %3191 = vdwg.mxu0
      %3195 = vrot.lane.b32.xlu0 %v3184, 16
      %v3196 = vpop.permute.xlu0 %3195
      %3197 = vrot.lane.b32.xlu0 %v3187, 16
      %v3198 = vpop.permute.xlu0 %3197
      %3199 = vrot.lane.b32.xlu0 %v3190, 16
      %v3200 = vpop.permute.xlu0 %3199
      %3204 = vst.msk [vmem:[#allocation3] sm:$0xff] %vm1859, %v3196
      %3205 = vst.msk [vmem:[#allocation3 + $0x8] sm:$0xff] %vm1859, %v3198
      %3206 = vst.msk [vmem:[#allocation3 + $0x10] sm:$0x1] %vm1862, %v3200
      %3207 = vrot.lane.b32.xlu0 %v2681, 104
      %v3208 = vpop.permute.xlu0 %3207
      %3209 = vrot.lane.b32.xlu0 %v2682, 104
      %v3210 = vpop.permute.xlu0 %3209
      %3211 = vrot.lane.b32.xlu0 %v2683, 104
      %v3212 = vpop.permute.xlu0 %3211
      %3213 = vrot.lane.b32.xlu0 %v2493, 104
      %v3214 = vpop.permute.xlu0 %3213
      %3215 = vrot.lane.b32.xlu0 %v2496, 104
      %v3216 = vpop.permute.xlu0 %3215
      %3217 = vrot.lane.b32.xlu0 %v2499, 104
      %v3218 = vpop.permute.xlu0 %3217
      %v3219 = vsel %vm1332, %v3208, 0
      %v3221 = vsel %vm1332, %v3210, 0
      %v3223 = vsel %vm1332, %v3212, 0
      %v3225 = vsel %vm1332, %v3214, 0
      %v3227 = vsel %vm1332, %v3216, 0
      %v3229 = vsel %vm1332, %v3218, 0
      %3231 = vmatpush.xpose.msra.mxu0 0.0
      %3232 = vmatpush.xpose.msra.mxu0 0.0
      %3233 = vmatpush.xpose.msra.mxu0 0.0
      %3234 = vmatpush.xpose.msra.mxu0 0.0
      %3235 = vmatpush.xpose.msra.mxu0 0.0
      %3236 = vmatpush.xpose.msra.mxu0 0.0
      %3237 = vmatpush.xpose.msra.mxu0 0.0
      %3238 = vmatpush.xpose.msra.mxu0 0.0
      %3239 = vmatpush.xpose.msra.mxu0 0.0
      %3240 = vmatpush.xpose.msra.mxu0 0.0
      %3241 = vmatpush.xpose.msra.mxu0 0.0
      %3242 = vmatpush.xpose.msra.mxu0 0.0
      %3243 = vmatpush.xpose.msra.mxu0 0.0
      %3244 = vmatpush.xpose.msra.mxu0 %v3229
      %3245 = vmatpush.xpose.msra.mxu0 %v3227
      %3246 = vmatpush.xpose.msra.mxu0 %v3225
      %3247 = vmatmul.f32.gmra.mxu0 %v3219
      %v3248 = vpop.f32.mrf.mxu0
      %v3249 = vadd.f32 0.0, %v3248
      %3250 = vmatmul.f32.gmra.mxu0 %v3221
      %v3251 = vpop.f32.mrf.mxu0
      %v3252 = vadd.f32 0.0, %v3251
      %3253 = vmatmul.f32.gmra.mxu0 %v3223
      %v3254 = vpop.f32.mrf.mxu0
      %v3255 = vadd.f32 0.0, %v3254
      %3256 = vdwg.mxu0
      %v3257 = vsel %vm1377, %v3249, -inf
      %3258 = vmax.xlane.f32.xlu0 %v3257
      %v3259 = vpop.xlane.xlu0 %3258
      %v3260 = vsel %vm1377, %v3252, -inf
      %3261 = vmax.xlane.f32.xlu0 %v3260
      %v3262 = vpop.xlane.xlu0 %3261
      %v3263 = vsel %vm1384, %v3255, -inf
      %3264 = vmax.xlane.f32.xlu0 %v3263
      %v3265 = vpop.xlane.xlu0 %3264
      %v3266 = vsub.f32 %v3249, %v3259
      %v3267 = vsub.f32 %v3252, %v3262
      %v3268 = vsub.f32 %v3255, %v3265
      %v3269 = vmul.f32 %v3266, 1.442695
      %v3270 = vpow.pop %v3269
      %v3271 = vmul.f32 %v3267, 1.442695
      %v3272 = vpow.pop %v3271
      %v3273 = vmul.f32 %v3268, 1.442695
      %v3274 = vpow.pop %v3273
      %v3275 = vsel %vm1377, %v3270, 0.0
      %3276 = vadd.xlane.f32.xlu0 %v3275
      %v3277 = vpop.xlane.xlu0 %3276
      %v3278 = vsel %vm1377, %v3272, 0.0
      %3279 = vadd.xlane.f32.xlu0 %v3278
      %v3280 = vpop.xlane.xlu0 %3279
      %v3281 = vsel %vm1384, %v3274, 0.0
      %3282 = vadd.xlane.f32.xlu0 %v3281
      %v3283 = vpop.xlane.xlu0 %3282
      %v3284 = vrcp.pop %v3277
      %v3285 = vmul.f32 %v3277, %v3284
      %v3286 = vsub.f32 1.0, %v3285
      %v3287 = vmul.f32 %v3284, %v3286
      %v3288 = vadd.f32 %v3284, %v3287
      %vm3289 = vweird.f32 %v3277
      %vm3290 = vweird.f32 %v3284
      %vm3291 = vmor %vm3289, %vm3290
      %v3292 = vsel %vm3291, %v3284, %v3288
      %v3293 = vand.u32 2147483647, %v3277
      %vm3294 = vcmp.eq.f32.partialorder %v3293, 8.507059e+37
      %v3295 = vand.u32 %v3277, 2147483648
      %v3296 = vor.u32 1.1754944e-38, %v3295
      %v3297 = vsel %vm3294, %v3296, %v3292
      %v3298 = vmul.f32 %v3270, %v3297
      %v3299 = vrcp.pop %v3280
      %v3300 = vmul.f32 %v3280, %v3299
      %v3301 = vsub.f32 1.0, %v3300
      %v3302 = vmul.f32 %v3299, %v3301
      %v3303 = vadd.f32 %v3299, %v3302
      %vm3304 = vweird.f32 %v3280
      %vm3305 = vweird.f32 %v3299
      %vm3306 = vmor %vm3304, %vm3305
      %v3307 = vsel %vm3306, %v3299, %v3303
      %v3308 = vand.u32 2147483647, %v3280
      %vm3309 = vcmp.eq.f32.partialorder %v3308, 8.507059e+37
      %v3310 = vand.u32 %v3280, 2147483648
      %v3311 = vor.u32 1.1754944e-38, %v3310
      %v3312 = vsel %vm3309, %v3311, %v3307
      %v3313 = vmul.f32 %v3272, %v3312
      %v3314 = vrcp.pop %v3283
      %v3315 = vmul.f32 %v3283, %v3314
      %v3316 = vsub.f32 1.0, %v3315
      %v3317 = vmul.f32 %v3314, %v3316
      %v3318 = vadd.f32 %v3314, %v3317
      %vm3319 = vweird.f32 %v3283
      %vm3320 = vweird.f32 %v3314
      %vm3321 = vmor %vm3319, %vm3320
      %v3322 = vsel %vm3321, %v3314, %v3318
      %v3323 = vand.u32 2147483647, %v3283
      %vm3324 = vcmp.eq.f32.partialorder %v3323, 8.507059e+37
      %v3325 = vand.u32 %v3283, 2147483648
      %v3326 = vor.u32 1.1754944e-38, %v3325
      %v3327 = vsel %vm3324, %v3326, %v3322
      %v3328 = vmul.f32 %v3274, %v3327
      %3329 = vrot.lane.b32.xlu0 %v2678, 104
      %v3330 = vpop.permute.xlu0 %3329
      %3331 = vrot.lane.b32.xlu0 %v2679, 104
      %v3332 = vpop.permute.xlu0 %3331
      %3333 = vrot.lane.b32.xlu0 %v2680, 104
      %v3334 = vpop.permute.xlu0 %3333
      %v3338 = vsel %vm1377, %v3298, 0
      %v3341 = vsel %vm1377, %v3313, 0
      %v3344 = vsel %vm1377, %v3328, 0
      %v3346 = vsel %vm1460, %v3334, 0
      %3348 = vmatpush.msra.mxu0 0.0
      %3349 = vmatpush.msra.mxu0 0.0
      %3350 = vmatpush.msra.mxu0 0.0
      %3351 = vmatpush.msra.mxu0 0.0
      %3352 = vmatpush.msra.mxu0 0.0
      %3353 = vmatpush.msra.mxu0 0.0
      %3354 = vmatpush.msra.mxu0 0.0
      %3355 = vmatpush.msra.mxu0 0.0
      %3356 = vmatpush.msra.mxu0 0.0
      %3357 = vmatpush.msra.mxu0 0.0
      %3358 = vmatpush.msra.mxu0 0.0
      %3359 = vmatpush.msra.mxu0 0.0
      %3360 = vmatpush.msra.mxu0 0.0
      %3361 = vmatpush.msra.mxu0 %v3346
      %3362 = vmatpush.msra.mxu0 %v3332
      %3363 = vmatpush.msra.mxu0 %v3330
      %3364 = vmatmul.f32.gmra.mxu0 %v3338
      %v3365 = vpop.f32.mrf.mxu0
      %v3366 = vadd.f32 0.0, %v3365
      %3367 = vmatmul.f32.gmra.mxu0 %v3341
      %v3368 = vpop.f32.mrf.mxu0
      %v3369 = vadd.f32 0.0, %v3368
      %3370 = vmatmul.f32.gmra.mxu0 %v3344
      %v3371 = vpop.f32.mrf.mxu0
      %v3372 = vadd.f32 0.0, %v3371
      %3373 = vdwg.mxu0
      %3377 = vrot.lane.b32.xlu0 %v3366, 24
      %v3378 = vpop.permute.xlu0 %3377
      %3379 = vrot.lane.b32.xlu0 %v3369, 24
      %v3380 = vpop.permute.xlu0 %3379
      %3381 = vrot.lane.b32.xlu0 %v3372, 24
      %v3382 = vpop.permute.xlu0 %3381
      %3386 = vst.msk [vmem:[#allocation3] sm:$0xff] %vm2043, %v3378
      %3387 = vst.msk [vmem:[#allocation3 + $0x8] sm:$0xff] %vm2043, %v3380
      %3388 = vst.msk [vmem:[#allocation3 + $0x10] sm:$0x1] %vm2046, %v3382
      %v3389 = vld [vmem:[#allocation3] sm:$0xff]
      %v3390 = vld [vmem:[#allocation3 + $0x8] sm:$0xff]
      %v3391 = vld [vmem:[#allocation3 + $0x10] sm:$0x1]
      %s3392 = scalar_lea.vmem %s29, 32
      %v3393 = vld [vmem:[%s3392] sm:$0xff]
      %v3394 = vld [vmem:[%s3392 + $0x8] sm:$0xff]
      %v3395 = vld [vmem:[%s3392 + $0x10] sm:$0xff]
      %v3396 = vld [vmem:[%s3392 + $0x18] sm:$0xff]
      %v3398 = vsel %vm1045, %v3389, 0
      %v3401 = vsel %vm1045, %v3390, 0
      %v3404 = vsel %vm1045, %v3391, 0
      %3406 = vmatpush.msra.mxu0 0.0
      %3407 = vmatpush.msra.mxu0 0.0
      %3408 = vmatpush.msra.mxu0 0.0
      %3409 = vmatpush.msra.mxu0 0.0
      %3410 = vmatpush.msra.mxu0 0.0
      %3411 = vmatpush.msra.mxu0 0.0
      %3412 = vmatpush.msra.mxu0 0.0
      %3413 = vmatpush.msra.mxu0 0.0
      %3414 = vmatpush.msra.mxu0 0.0
      %3415 = vmatpush.msra.mxu0 0.0
      %3416 = vmatpush.msra.mxu0 0.0
      %3417 = vmatpush.msra.mxu0 0.0
      %3418 = vmatpush.msra.mxu0 %v3396
      %3419 = vmatpush.msra.mxu0 %v3395
      %3420 = vmatpush.msra.mxu0 %v3394
      %3421 = vmatpush.msra.mxu0 %v3393
      %3422 = vmatmul.f32.gmra.mxu0 %v3398
      %v3423 = vpop.f32.mrf.mxu0
      %v3424 = vadd.f32 0.0, %v3423
      %3425 = vmatmul.f32.gmra.mxu0 %v3401
      %v3426 = vpop.f32.mrf.mxu0
      %v3427 = vadd.f32 0.0, %v3426
      %3428 = vmatmul.f32.gmra.mxu0 %v3404
      %v3429 = vpop.f32.mrf.mxu0
      %v3430 = vadd.f32 0.0, %v3429
      %3431 = vdwg.mxu0
      %v3432 = vadd.f32 %v2335, %v3424
      %v3433 = vadd.f32 %v2336, %v3427
      %v3434 = vadd.f32 %v2337, %v3430
      %s3435 = scalar_lea.vmem %s31, 1
      %v3436 = vld [vmem:[%s3435] sm:$0x1]
      %v3438 = vperm.slane %v3436, 0
      %v3440 = vadd.f32 %v3432, %v3438
      %v3441 = vadd.f32 %v3433, %v3438
      %v3442 = vadd.f32 %v3434, %v3438
      %s3443 = scalar_lea.vmem %s41, 1
      %v3444 = vld [vmem:[%s3443] sm:$0x1]
      %s3445 = scalar_lea.vmem %s43, 1
      %v3446 = vld [vmem:[%s3445] sm:$0x1]
      %v3447 = vsel %vm1045, %v3440, 0.0
      %3448 = vadd.xlane.f32.xlu0 %v3447
      %v3449 = vpop.xlane.xlu0 %3448
      %v3450 = vsel %vm1045, %v3441, 0.0
      %3451 = vadd.xlane.f32.xlu0 %v3450
      %v3452 = vpop.xlane.xlu0 %3451
      %v3453 = vsel %vm988, %v3442, 0.0
      %3454 = vadd.xlane.f32.xlu0 %v3453
      %v3455 = vpop.xlane.xlu0 %3454
      %v3456 = vmul.f32 %v3449, %v1068
      %v3457 = vmul.f32 %v3452, %v1068
      %v3458 = vmul.f32 %v3455, %v1068
      %v3459 = vsub.f32 %v3440, %v3456
      %v3460 = vsub.f32 %v3441, %v3457
      %v3461 = vsub.f32 %v3442, %v3458
      %v3462 = vmul.f32 %v3459, %v3459
      %v3463 = vmul.f32 %v3460, %v3460
      %v3464 = vmul.f32 %v3461, %v3461
      %v3465 = vsel %vm1045, %v3462, 0.0
      %3466 = vadd.xlane.f32.xlu0 %v3465
      %v3467 = vpop.xlane.xlu0 %3466
      %v3468 = vsel %vm1045, %v3463, 0.0
      %3469 = vadd.xlane.f32.xlu0 %v3468
      %v3470 = vpop.xlane.xlu0 %3469
      %v3471 = vsel %vm988, %v3464, 0.0
      %3472 = vadd.xlane.f32.xlu0 %v3471
      %v3473 = vpop.xlane.xlu0 %3472
      %v3474 = vmul.f32 %v3467, %v1068
      %v3475 = vmul.f32 %v3470, %v1068
      %v3476 = vmul.f32 %v3473, %v1068
      %v3477 = vadd.f32 %v3474, 1e-05
      %v3478 = vadd.f32 %v3475, 1e-05
      %v3479 = vadd.f32 %v3476, 1e-05
      %v3480 = vrsqrt.pop %v3477
      %v3481 = vmul.f32 %v3480, %v3477
      %v3482 = vmul.f32 %v3481, %v3480
      %v3483 = vmul.f32 0.5, %v3482
      %v3484 = vsub.f32 1.5, %v3483
      %v3485 = vmul.f32 %v3480, %v3484
      %vm3486 = vweird.f32 %v3477
      %vm3487 = vweird.f32 %v3480
      %vm3488 = vmor %vm3486, %vm3487
      %v3489 = vsel %vm3488, %v3480, %v3485
      %v3490 = vrsqrt.pop %v3478
      %v3491 = vmul.f32 %v3490, %v3478
      %v3492 = vmul.f32 %v3491, %v3490
      %v3493 = vmul.f32 0.5, %v3492
      %v3494 = vsub.f32 1.5, %v3493
      %v3495 = vmul.f32 %v3490, %v3494
      %vm3496 = vweird.f32 %v3478
      %vm3497 = vweird.f32 %v3490
      %vm3498 = vmor %vm3496, %vm3497
      %v3499 = vsel %vm3498, %v3490, %v3495
      %v3500 = vrsqrt.pop %v3479
      %v3501 = vmul.f32 %v3500, %v3479
      %v3502 = vmul.f32 %v3501, %v3500
      %v3503 = vmul.f32 0.5, %v3502
      %v3504 = vsub.f32 1.5, %v3503
      %v3505 = vmul.f32 %v3500, %v3504
      %vm3506 = vweird.f32 %v3479
      %vm3507 = vweird.f32 %v3500
      %vm3508 = vmor %vm3506, %vm3507
      %v3509 = vsel %vm3508, %v3500, %v3505
      %v3510 = vmul.f32 %v3459, %v3489
      %v3511 = vmul.f32 %v3460, %v3499
      %v3512 = vmul.f32 %v3461, %v3509
      %v3514 = vperm.slane %v3444, 0
      %v3516 = vmul.f32 %v3510, %v3514
      %v3517 = vmul.f32 %v3511, %v3514
      %v3518 = vmul.f32 %v3512, %v3514
      %v3520 = vperm.slane %v3446, 0
      %v3522 = vadd.f32 %v3516, %v3520
      %v3523 = vadd.f32 %v3517, %v3520
      %v3524 = vadd.f32 %v3518, %v3520
      %s3525 = scalar_lea.vmem %s45, 32
      %v3526 = vld [vmem:[%s3525] sm:$0xff]
      %v3527 = vld [vmem:[%s3525 + $0x8] sm:$0xff]
      %v3528 = vld [vmem:[%s3525 + $0x10] sm:$0xff]
      %v3529 = vld [vmem:[%s3525 + $0x18] sm:$0xff]
      %s3530 = scalar_lea.vmem %s47, 1
      %v3531 = vld [vmem:[%s3530] sm:$0x1]
      %v3533 = vperm.slane %v3531, 0
      %v3536 = vsel %vm1045, %v3522, 0
      %v3539 = vsel %vm1045, %v3523, 0
      %v3542 = vsel %vm1045, %v3524, 0
      %3544 = vmatpush.msra.mxu0 0.0
      %3545 = vmatpush.msra.mxu0 0.0
      %3546 = vmatpush.msra.mxu0 0.0
      %3547 = vmatpush.msra.mxu0 0.0
      %3548 = vmatpush.msra.mxu0 0.0
      %3549 = vmatpush.msra.mxu0 0.0
      %3550 = vmatpush.msra.mxu0 0.0
      %3551 = vmatpush.msra.mxu0 0.0
      %3552 = vmatpush.msra.mxu0 0.0
      %3553 = vmatpush.msra.mxu0 0.0
      %3554 = vmatpush.msra.mxu0 0.0
      %3555 = vmatpush.msra.mxu0 0.0
      %3556 = vmatpush.msra.mxu0 %v3529
      %3557 = vmatpush.msra.mxu0 %v3528
      %3558 = vmatpush.msra.mxu0 %v3527
      %3559 = vmatpush.msra.mxu0 %v3526
      %3560 = vmatmul.f32.gmra.mxu0 %v3536
      %v3561 = vpop.f32.mrf.mxu0
      %v3562 = vadd.f32 %v3533, %v3561
      %3563 = vmatmul.f32.gmra.mxu0 %v3539
      %v3564 = vpop.f32.mrf.mxu0
      %v3565 = vadd.f32 %v3533, %v3564
      %3566 = vmatmul.f32.gmra.mxu0 %v3542
      %v3567 = vpop.f32.mrf.mxu0
      %v3568 = vadd.f32 %v3533, %v3567
      %3569 = vdwg.mxu0
      %v3570 = vmul.f32 %v3562, 1.702
      %v3571 = vmul.f32 %v3565, 1.702
      %v3572 = vmul.f32 %v3568, 1.702
      %v3573 = vxor.u32 %v3570, 2147483648
      %v3574 = vxor.u32 %v3571, 2147483648
      %v3575 = vxor.u32 %v3572, 2147483648
      %v3576 = vmul.f32 %v3573, 1.442695
      %v3577 = vpow.pop %v3576
      %v3578 = vmul.f32 %v3574, 1.442695
      %v3579 = vpow.pop %v3578
      %v3580 = vmul.f32 %v3575, 1.442695
      %v3581 = vpow.pop %v3580
      %v3582 = vadd.f32 %v3577, 1.0
      %v3583 = vadd.f32 %v3579, 1.0
      %v3584 = vadd.f32 %v3581, 1.0
      %v3585 = vrcp.pop %v3582
      %v3586 = vmul.f32 %v3582, %v3585
      %v3587 = vsub.f32 1.0, %v3586
      %v3588 = vmul.f32 %v3585, %v3587
      %v3589 = vadd.f32 %v3585, %v3588
      %vm3590 = vweird.f32 %v3582
      %vm3591 = vweird.f32 %v3585
      %vm3592 = vmor %vm3590, %vm3591
      %v3593 = vsel %vm3592, %v3585, %v3589
      %v3594 = vand.u32 2147483647, %v3582
      %vm3595 = vcmp.eq.f32.partialorder %v3594, 8.507059e+37
      %v3596 = vand.u32 %v3582, 2147483648
      %v3597 = vor.u32 1.1754944e-38, %v3596
      %v3598 = vsel %vm3595, %v3597, %v3593
      %v3599 = vmul.f32 1.0, %v3598
      %v3600 = vrcp.pop %v3583
      %v3601 = vmul.f32 %v3583, %v3600
      %v3602 = vsub.f32 1.0, %v3601
      %v3603 = vmul.f32 %v3600, %v3602
      %v3604 = vadd.f32 %v3600, %v3603
      %vm3605 = vweird.f32 %v3583
      %vm3606 = vweird.f32 %v3600
      %vm3607 = vmor %vm3605, %vm3606
      %v3608 = vsel %vm3607, %v3600, %v3604
      %v3609 = vand.u32 2147483647, %v3583
      %vm3610 = vcmp.eq.f32.partialorder %v3609, 8.507059e+37
      %v3611 = vand.u32 %v3583, 2147483648
      %v3612 = vor.u32 1.1754944e-38, %v3611
      %v3613 = vsel %vm3610, %v3612, %v3608
      %v3614 = vmul.f32 1.0, %v3613
      %v3615 = vrcp.pop %v3584
      %v3616 = vmul.f32 %v3584, %v3615
      %v3617 = vsub.f32 1.0, %v3616
      %v3618 = vmul.f32 %v3615, %v3617
      %v3619 = vadd.f32 %v3615, %v3618
      %vm3620 = vweird.f32 %v3584
      %vm3621 = vweird.f32 %v3615
      %vm3622 = vmor %vm3620, %vm3621
      %v3623 = vsel %vm3622, %v3615, %v3619
      %v3624 = vand.u32 2147483647, %v3584
      %vm3625 = vcmp.eq.f32.partialorder %v3624, 8.507059e+37
      %v3626 = vand.u32 %v3584, 2147483648
      %v3627 = vor.u32 1.1754944e-38, %v3626
      %v3628 = vsel %vm3625, %v3627, %v3623
      %v3629 = vmul.f32 1.0, %v3628
      %v3630 = vmul.f32 %v3562, %v3599
      %v3631 = vmul.f32 %v3565, %v3614
      %v3632 = vmul.f32 %v3568, %v3629
      %s3633 = scalar_lea.vmem %s49, 128
      %v3634 = vld [vmem:[%s3633] sm:$0xff]
      %v3635 = vld [vmem:[%s3633 + $0x8] sm:$0xff]
      %v3636 = vld [vmem:[%s3633 + $0x10] sm:$0xff]
      %v3637 = vld [vmem:[%s3633 + $0x18] sm:$0xff]
      %v3638 = vld [vmem:[%s3633 + $0x20] sm:$0xff]
      %v3639 = vld [vmem:[%s3633 + $0x28] sm:$0xff]
      %v3640 = vld [vmem:[%s3633 + $0x30] sm:$0xff]
      %v3641 = vld [vmem:[%s3633 + $0x38] sm:$0xff]
      %v3642 = vld [vmem:[%s3633 + $0x40] sm:$0xff]
      %v3643 = vld [vmem:[%s3633 + $0x48] sm:$0xff]
      %v3644 = vld [vmem:[%s3633 + $0x50] sm:$0xff]
      %v3645 = vld [vmem:[%s3633 + $0x58] sm:$0xff]
      %v3646 = vld [vmem:[%s3633 + $0x60] sm:$0xff]
      %v3647 = vld [vmem:[%s3633 + $0x68] sm:$0xff]
      %v3648 = vld [vmem:[%s3633 + $0x70] sm:$0xff]
      %v3649 = vld [vmem:[%s3633 + $0x78] sm:$0xff]
      %3650 = vmatpush.msra.mxu0 %v3649
      %3651 = vmatpush.msra.mxu0 %v3648
      %3652 = vmatpush.msra.mxu0 %v3647
      %3653 = vmatpush.msra.mxu0 %v3646
      %3654 = vmatpush.msra.mxu0 %v3645
      %3655 = vmatpush.msra.mxu0 %v3644
      %3656 = vmatpush.msra.mxu0 %v3643
      %3657 = vmatpush.msra.mxu0 %v3642
      %3658 = vmatpush.msra.mxu0 %v3641
      %3659 = vmatpush.msra.mxu0 %v3640
      %3660 = vmatpush.msra.mxu0 %v3639
      %3661 = vmatpush.msra.mxu0 %v3638
      %3662 = vmatpush.msra.mxu0 %v3637
      %3663 = vmatpush.msra.mxu0 %v3636
      %3664 = vmatpush.msra.mxu0 %v3635
      %3665 = vmatpush.msra.mxu0 %v3634
      %3666 = vmatmul.f32.gmra.mxu0 %v3630
      %v3667 = vpop.f32.mrf.mxu0
      %v3668 = vadd.f32 0.0, %v3667
      %3669 = vmatmul.f32.gmra.mxu0 %v3631
      %v3670 = vpop.f32.mrf.mxu0
      %v3671 = vadd.f32 0.0, %v3670
      %3672 = vmatmul.f32.gmra.mxu0 %v3632
      %v3673 = vpop.f32.mrf.mxu0
      %v3674 = vadd.f32 0.0, %v3673
      %3675 = vdwg.mxu0
      %v3676 = vadd.f32 %v3440, %v3668
      %v3677 = vadd.f32 %v3441, %v3671
      %v3678 = vadd.f32 %v3442, %v3674
      %s3679 = scalar_lea.vmem %s51, 1
      %v3680 = vld [vmem:[%s3679] sm:$0x1]
      %v3682 = vperm.slane %v3680, 0
      %v3684 = vadd.f32 %v3676, %v3682
      %v3685 = vadd.f32 %v3677, %v3682
      %v3686 = vadd.f32 %v3678, %v3682
      %s3687 = scalar_lea.vmem %s13, 2
      %v3688 = vld [vmem:[%s3687] sm:$0x1]
      %s3689 = scalar_lea.vmem %s15, 2
      %v3690 = vld [vmem:[%s3689] sm:$0x1]
      %v3691 = vsel %vm1045, %v3684, 0.0
      %3692 = vadd.xlane.f32.xlu0 %v3691
      %v3693 = vpop.xlane.xlu0 %3692
      %v3694 = vsel %vm1045, %v3685, 0.0
      %3695 = vadd.xlane.f32.xlu0 %v3694
      %v3696 = vpop.xlane.xlu0 %3695
      %v3697 = vsel %vm988, %v3686, 0.0
      %3698 = vadd.xlane.f32.xlu0 %v3697
      %v3699 = vpop.xlane.xlu0 %3698
      %v3700 = vmul.f32 %v3693, %v1068
      %v3701 = vmul.f32 %v3696, %v1068
      %v3702 = vmul.f32 %v3699, %v1068
      %v3703 = vsub.f32 %v3684, %v3700
      %v3704 = vsub.f32 %v3685, %v3701
      %v3705 = vsub.f32 %v3686, %v3702
      %v3706 = vmul.f32 %v3703, %v3703
      %v3707 = vmul.f32 %v3704, %v3704
      %v3708 = vmul.f32 %v3705, %v3705
      %v3709 = vsel %vm1045, %v3706, 0.0
      %3710 = vadd.xlane.f32.xlu0 %v3709
      %v3711 = vpop.xlane.xlu0 %3710
      %v3712 = vsel %vm1045, %v3707, 0.0
      %3713 = vadd.xlane.f32.xlu0 %v3712
      %v3714 = vpop.xlane.xlu0 %3713
      %v3715 = vsel %vm988, %v3708, 0.0
      %3716 = vadd.xlane.f32.xlu0 %v3715
      %v3717 = vpop.xlane.xlu0 %3716
      %v3718 = vmul.f32 %v3711, %v1068
      %v3719 = vmul.f32 %v3714, %v1068
      %v3720 = vmul.f32 %v3717, %v1068
      %v3721 = vadd.f32 %v3718, 1e-05
      %v3722 = vadd.f32 %v3719, 1e-05
      %v3723 = vadd.f32 %v3720, 1e-05
      %v3724 = vrsqrt.pop %v3721
      %v3725 = vmul.f32 %v3724, %v3721
      %v3726 = vmul.f32 %v3725, %v3724
      %v3727 = vmul.f32 0.5, %v3726
      %v3728 = vsub.f32 1.5, %v3727
      %v3729 = vmul.f32 %v3724, %v3728
      %vm3730 = vweird.f32 %v3721
      %vm3731 = vweird.f32 %v3724
      %vm3732 = vmor %vm3730, %vm3731
      %v3733 = vsel %vm3732, %v3724, %v3729
      %v3734 = vrsqrt.pop %v3722
      %v3735 = vmul.f32 %v3734, %v3722
      %v3736 = vmul.f32 %v3735, %v3734
      %v3737 = vmul.f32 0.5, %v3736
      %v3738 = vsub.f32 1.5, %v3737
      %v3739 = vmul.f32 %v3734, %v3738
      %vm3740 = vweird.f32 %v3722
      %vm3741 = vweird.f32 %v3734
      %vm3742 = vmor %vm3740, %vm3741
      %v3743 = vsel %vm3742, %v3734, %v3739
      %v3744 = vrsqrt.pop %v3723
      %v3745 = vmul.f32 %v3744, %v3723
      %v3746 = vmul.f32 %v3745, %v3744
      %v3747 = vmul.f32 0.5, %v3746
      %v3748 = vsub.f32 1.5, %v3747
      %v3749 = vmul.f32 %v3744, %v3748
      %vm3750 = vweird.f32 %v3723
      %vm3751 = vweird.f32 %v3744
      %vm3752 = vmor %vm3750, %vm3751
      %v3753 = vsel %vm3752, %v3744, %v3749
      %v3754 = vmul.f32 %v3703, %v3733
      %v3755 = vmul.f32 %v3704, %v3743
      %v3756 = vmul.f32 %v3705, %v3753
      %v3758 = vperm.slane %v3688, 0
      %v3760 = vmul.f32 %v3754, %v3758
      %v3761 = vmul.f32 %v3755, %v3758
      %v3762 = vmul.f32 %v3756, %v3758
      %v3764 = vperm.slane %v3690, 0
      %v3766 = vadd.f32 %v3760, %v3764
      %v3767 = vadd.f32 %v3761, %v3764
      %v3768 = vadd.f32 %v3762, %v3764
      %s3769 = scalar_lea.vmem %s17, 64
      %v3770 = vld [vmem:[%s3769] sm:$0xff]
      %v3771 = vld [vmem:[%s3769 + $0x8] sm:$0xff]
      %v3772 = vld [vmem:[%s3769 + $0x10] sm:$0xff]
      %v3773 = vld [vmem:[%s3769 + $0x18] sm:$0xff]
      %s3774 = scalar_lea.vmem %s19, 2
      %v3775 = vld [vmem:[%s3774] sm:$0x1]
      %v3777 = vperm.slane %v3775, 0
      %v3780 = vsel %vm1045, %v3766, 0
      %v3783 = vsel %vm1045, %v3767, 0
      %v3786 = vsel %vm1045, %v3768, 0
      %3788 = vmatpush.msra.mxu0 0.0
      %3789 = vmatpush.msra.mxu0 0.0
      %3790 = vmatpush.msra.mxu0 0.0
      %3791 = vmatpush.msra.mxu0 0.0
      %3792 = vmatpush.msra.mxu0 0.0
      %3793 = vmatpush.msra.mxu0 0.0
      %3794 = vmatpush.msra.mxu0 0.0
      %3795 = vmatpush.msra.mxu0 0.0
      %3796 = vmatpush.msra.mxu0 0.0
      %3797 = vmatpush.msra.mxu0 0.0
      %3798 = vmatpush.msra.mxu0 0.0
      %3799 = vmatpush.msra.mxu0 0.0
      %3800 = vmatpush.msra.mxu0 %v3773
      %3801 = vmatpush.msra.mxu0 %v3772
      %3802 = vmatpush.msra.mxu0 %v3771
      %3803 = vmatpush.msra.mxu0 %v3770
      %3804 = vmatmul.f32.gmra.mxu0 %v3780
      %v3805 = vpop.f32.mrf.mxu0
      %v3806 = vadd.f32 %v3777, %v3805
      %3807 = vmatmul.f32.gmra.mxu0 %v3783
      %v3808 = vpop.f32.mrf.mxu0
      %v3809 = vadd.f32 %v3777, %v3808
      %3810 = vmatmul.f32.gmra.mxu0 %v3786
      %v3811 = vpop.f32.mrf.mxu0
      %v3812 = vadd.f32 %v3777, %v3811
      %3813 = vdwg.mxu0
      %s3814 = scalar_lea.vmem %s21, 64
      %v3815 = vld [vmem:[%s3814] sm:$0xff]
      %v3816 = vld [vmem:[%s3814 + $0x8] sm:$0xff]
      %v3817 = vld [vmem:[%s3814 + $0x10] sm:$0xff]
      %v3818 = vld [vmem:[%s3814 + $0x18] sm:$0xff]
      %s3819 = scalar_lea.vmem %s23, 2
      %v3820 = vld [vmem:[%s3819] sm:$0x1]
      %v3822 = vperm.slane %v3820, 0
      %3824 = vmatpush.msra.mxu0 0.0
      %3825 = vmatpush.msra.mxu0 0.0
      %3826 = vmatpush.msra.mxu0 0.0
      %3827 = vmatpush.msra.mxu0 0.0
      %3828 = vmatpush.msra.mxu0 0.0
      %3829 = vmatpush.msra.mxu0 0.0
      %3830 = vmatpush.msra.mxu0 0.0
      %3831 = vmatpush.msra.mxu0 0.0
      %3832 = vmatpush.msra.mxu0 0.0
      %3833 = vmatpush.msra.mxu0 0.0
      %3834 = vmatpush.msra.mxu0 0.0
      %3835 = vmatpush.msra.mxu0 0.0
      %3836 = vmatpush.msra.mxu0 %v3818
      %3837 = vmatpush.msra.mxu0 %v3817
      %3838 = vmatpush.msra.mxu0 %v3816
      %3839 = vmatpush.msra.mxu0 %v3815
      %3840 = vmatmul.f32.gmra.mxu0 %v3780
      %v3841 = vpop.f32.mrf.mxu0
      %v3842 = vadd.f32 %v3822, %v3841
      %3843 = vmatmul.f32.gmra.mxu0 %v3783
      %v3844 = vpop.f32.mrf.mxu0
      %v3845 = vadd.f32 %v3822, %v3844
      %3846 = vmatmul.f32.gmra.mxu0 %v3786
      %v3847 = vpop.f32.mrf.mxu0
      %v3848 = vadd.f32 %v3822, %v3847
      %3849 = vdwg.mxu0
      %s3850 = scalar_lea.vmem %s25, 64
      %v3851 = vld [vmem:[%s3850] sm:$0xff]
      %v3852 = vld [vmem:[%s3850 + $0x8] sm:$0xff]
      %v3853 = vld [vmem:[%s3850 + $0x10] sm:$0xff]
      %v3854 = vld [vmem:[%s3850 + $0x18] sm:$0xff]
      %s3855 = scalar_lea.vmem %s27, 2
      %v3856 = vld [vmem:[%s3855] sm:$0x1]
      %v3858 = vperm.slane %v3856, 0
      %3860 = vmatpush.msra.mxu0 0.0
      %3861 = vmatpush.msra.mxu0 0.0
      %3862 = vmatpush.msra.mxu0 0.0
      %3863 = vmatpush.msra.mxu0 0.0
      %3864 = vmatpush.msra.mxu0 0.0
      %3865 = vmatpush.msra.mxu0 0.0
      %3866 = vmatpush.msra.mxu0 0.0
      %3867 = vmatpush.msra.mxu0 0.0
      %3868 = vmatpush.msra.mxu0 0.0
      %3869 = vmatpush.msra.mxu0 0.0
      %3870 = vmatpush.msra.mxu0 0.0
      %3871 = vmatpush.msra.mxu0 0.0
      %3872 = vmatpush.msra.mxu0 %v3854
      %3873 = vmatpush.msra.mxu0 %v3853
      %3874 = vmatpush.msra.mxu0 %v3852
      %3875 = vmatpush.msra.mxu0 %v3851
      %3876 = vmatmul.f32.gmra.mxu0 %v3780
      %v3877 = vpop.f32.mrf.mxu0
      %v3878 = vadd.f32 %v3858, %v3877
      %3879 = vmatmul.f32.gmra.mxu0 %v3783
      %v3880 = vpop.f32.mrf.mxu0
      %v3881 = vadd.f32 %v3858, %v3880
      %3882 = vmatmul.f32.gmra.mxu0 %v3786
      %v3883 = vpop.f32.mrf.mxu0
      %v3884 = vadd.f32 %v3858, %v3883
      %3885 = vdwg.mxu0
      %s3886 = scalar_lea.vmem %s33, 32
      %v3887 = vld [vmem:[%s3886] sm:$0xff]
      %v3888 = vld [vmem:[%s3886 + $0x8] sm:$0xff]
      %v3889 = vld [vmem:[%s3886 + $0x10] sm:$0xff]
      %v3890 = vld [vmem:[%s3886 + $0x18] sm:$0xff]
      %3891 = vmatpush.msra.mxu0 0.0
      %3892 = vmatpush.msra.mxu0 0.0
      %3893 = vmatpush.msra.mxu0 0.0
      %3894 = vmatpush.msra.mxu0 0.0
      %3895 = vmatpush.msra.mxu0 0.0
      %3896 = vmatpush.msra.mxu0 0.0
      %3897 = vmatpush.msra.mxu0 0.0
      %3898 = vmatpush.msra.mxu0 0.0
      %3899 = vmatpush.msra.mxu0 0.0
      %3900 = vmatpush.msra.mxu0 0.0
      %3901 = vmatpush.msra.mxu0 0.0
      %3902 = vmatpush.msra.mxu0 0.0
      %3903 = vmatpush.msra.mxu0 %v3890
      %3904 = vmatpush.msra.mxu0 %v3889
      %3905 = vmatpush.msra.mxu0 %v3888
      %3906 = vmatpush.msra.mxu0 %v3887
      %3907 = vmatmul.f32.gmra.mxu0 %v3780
      %v3908 = vpop.f32.mrf.mxu0
      %v3909 = vadd.f32 0.0, %v3908
      %3910 = vmatmul.f32.gmra.mxu0 %v3783
      %v3911 = vpop.f32.mrf.mxu0
      %v3912 = vadd.f32 0.0, %v3911
      %3913 = vmatmul.f32.gmra.mxu0 %v3786
      %v3914 = vpop.f32.mrf.mxu0
      %v3915 = vadd.f32 0.0, %v3914
      %3916 = vdwg.mxu0
      %s3917 = scalar_lea.vmem %s35, 8
      %v3918 = vld [vmem:[%s3917] sm:$0xff]
      %v3920 = vsel %vm1332, %v3909, 0
      %v3923 = vsel %vm1332, %v3912, 0
      %v3926 = vsel %vm1332, %v3915, 0
      %3928 = vmatpush.msra.mxu0 0.0
      %3929 = vmatpush.msra.mxu0 0.0
      %3930 = vmatpush.msra.mxu0 0.0
      %3931 = vmatpush.msra.mxu0 0.0
      %3932 = vmatpush.msra.mxu0 0.0
      %3933 = vmatpush.msra.mxu0 0.0
      %3934 = vmatpush.msra.mxu0 0.0
      %3935 = vmatpush.msra.mxu0 0.0
      %3936 = vmatpush.msra.mxu0 0.0
      %3937 = vmatpush.msra.mxu0 0.0
      %3938 = vmatpush.msra.mxu0 0.0
      %3939 = vmatpush.msra.mxu0 0.0
      %3940 = vmatpush.msra.mxu0 0.0
      %3941 = vmatpush.msra.mxu0 0.0
      %3942 = vmatpush.msra.mxu0 0.0
      %3943 = vmatpush.msra.mxu0 %v3918
      %3944 = vmatmul.f32.gmra.mxu0 %v3920
      %v3945 = vpop.f32.mrf.mxu0
      %v3946 = vadd.f32 0.0, %v3945
      %3947 = vmatmul.f32.gmra.mxu0 %v3923
      %v3948 = vpop.f32.mrf.mxu0
      %v3949 = vadd.f32 0.0, %v3948
      %3950 = vmatmul.f32.gmra.mxu0 %v3926
      %v3951 = vpop.f32.mrf.mxu0
      %v3952 = vadd.f32 0.0, %v3951
      %3953 = vdwg.mxu0
      %v3954 = vmul.f32 %v3946, 2.0
      %v3955 = vmul.f32 %v3949, 2.0
      %v3956 = vmul.f32 %v3952, 2.0
      %v3957 = vadd.f32 %v3806, %v3954
      %v3958 = vadd.f32 %v3809, %v3955
      %v3959 = vadd.f32 %v3812, %v3956
      %s3960 = scalar_lea.vmem %s37, 32
      %v3961 = vld [vmem:[%s3960] sm:$0xff]
      %v3962 = vld [vmem:[%s3960 + $0x8] sm:$0xff]
      %v3963 = vld [vmem:[%s3960 + $0x10] sm:$0xff]
      %v3964 = vld [vmem:[%s3960 + $0x18] sm:$0xff]
      %3965 = vmatpush.msra.mxu0 0.0
      %3966 = vmatpush.msra.mxu0 0.0
      %3967 = vmatpush.msra.mxu0 0.0
      %3968 = vmatpush.msra.mxu0 0.0
      %3969 = vmatpush.msra.mxu0 0.0
      %3970 = vmatpush.msra.mxu0 0.0
      %3971 = vmatpush.msra.mxu0 0.0
      %3972 = vmatpush.msra.mxu0 0.0
      %3973 = vmatpush.msra.mxu0 0.0
      %3974 = vmatpush.msra.mxu0 0.0
      %3975 = vmatpush.msra.mxu0 0.0
      %3976 = vmatpush.msra.mxu0 0.0
      %3977 = vmatpush.msra.mxu0 %v3964
      %3978 = vmatpush.msra.mxu0 %v3963
      %3979 = vmatpush.msra.mxu0 %v3962
      %3980 = vmatpush.msra.mxu0 %v3961
      %3981 = vmatmul.f32.gmra.mxu0 %v3780
      %v3982 = vpop.f32.mrf.mxu0
      %v3983 = vadd.f32 0.0, %v3982
      %3984 = vmatmul.f32.gmra.mxu0 %v3783
      %v3985 = vpop.f32.mrf.mxu0
      %v3986 = vadd.f32 0.0, %v3985
      %3987 = vmatmul.f32.gmra.mxu0 %v3786
      %v3988 = vpop.f32.mrf.mxu0
      %v3989 = vadd.f32 0.0, %v3988
      %3990 = vdwg.mxu0
      %s3991 = scalar_lea.vmem %s39, 8
      %v3992 = vld [vmem:[%s3991] sm:$0xff]
      %v3994 = vsel %vm1332, %v3983, 0
      %v3997 = vsel %vm1332, %v3986, 0
      %v4000 = vsel %vm1332, %v3989, 0
      %4002 = vmatpush.msra.mxu0 0.0
      %4003 = vmatpush.msra.mxu0 0.0
      %4004 = vmatpush.msra.mxu0 0.0
      %4005 = vmatpush.msra.mxu0 0.0
      %4006 = vmatpush.msra.mxu0 0.0
      %4007 = vmatpush.msra.mxu0 0.0
      %4008 = vmatpush.msra.mxu0 0.0
      %4009 = vmatpush.msra.mxu0 0.0
      %4010 = vmatpush.msra.mxu0 0.0
      %4011 = vmatpush.msra.mxu0 0.0
      %4012 = vmatpush.msra.mxu0 0.0
      %4013 = vmatpush.msra.mxu0 0.0
      %4014 = vmatpush.msra.mxu0 0.0
      %4015 = vmatpush.msra.mxu0 0.0
      %4016 = vmatpush.msra.mxu0 0.0
      %4017 = vmatpush.msra.mxu0 %v3992
      %4018 = vmatmul.f32.gmra.mxu0 %v3994
      %v4019 = vpop.f32.mrf.mxu0
      %v4020 = vadd.f32 0.0, %v4019
      %4021 = vmatmul.f32.gmra.mxu0 %v3997
      %v4022 = vpop.f32.mrf.mxu0
      %v4023 = vadd.f32 0.0, %v4022
      %4024 = vmatmul.f32.gmra.mxu0 %v4000
      %v4025 = vpop.f32.mrf.mxu0
      %v4026 = vadd.f32 0.0, %v4025
      %4027 = vdwg.mxu0
      %v4028 = vmul.f32 %v4020, 2.0
      %v4029 = vmul.f32 %v4023, 2.0
      %v4030 = vmul.f32 %v4026, 2.0
      %v4031 = vadd.f32 %v3878, %v4028
      %v4032 = vadd.f32 %v3881, %v4029
      %v4033 = vadd.f32 %v3884, %v4030
      %v4034 = vmul.f32 %v3957, 0.35355338
      %v4035 = vmul.f32 %v3958, 0.35355338
      %v4036 = vmul.f32 %v3959, 0.35355338
      %v4038 = vsel %vm1332, %v4034, 0
      %v4041 = vsel %vm1332, %v4035, 0
      %v4044 = vsel %vm1332, %v4036, 0
      %v4047 = vsel %vm1332, %v3842, 0
      %v4050 = vsel %vm1332, %v3845, 0
      %v4053 = vsel %vm1332, %v3848, 0
      %4055 = vmatpush.xpose.msra.mxu0 0.0
      %4056 = vmatpush.xpose.msra.mxu0 0.0
      %4057 = vmatpush.xpose.msra.mxu0 0.0
      %4058 = vmatpush.xpose.msra.mxu0 0.0
      %4059 = vmatpush.xpose.msra.mxu0 0.0
      %4060 = vmatpush.xpose.msra.mxu0 0.0
      %4061 = vmatpush.xpose.msra.mxu0 0.0
      %4062 = vmatpush.xpose.msra.mxu0 0.0
      %4063 = vmatpush.xpose.msra.mxu0 0.0
      %4064 = vmatpush.xpose.msra.mxu0 0.0
      %4065 = vmatpush.xpose.msra.mxu0 0.0
      %4066 = vmatpush.xpose.msra.mxu0 0.0
      %4067 = vmatpush.xpose.msra.mxu0 0.0
      %4068 = vmatpush.xpose.msra.mxu0 %v4053
      %4069 = vmatpush.xpose.msra.mxu0 %v4050
      %4070 = vmatpush.xpose.msra.mxu0 %v4047
      %4071 = vmatmul.f32.gmra.mxu0 %v4038
      %v4072 = vpop.f32.mrf.mxu0
      %v4073 = vadd.f32 0.0, %v4072
      %4074 = vmatmul.f32.gmra.mxu0 %v4041
      %v4075 = vpop.f32.mrf.mxu0
      %v4076 = vadd.f32 0.0, %v4075
      %4077 = vmatmul.f32.gmra.mxu0 %v4044
      %v4078 = vpop.f32.mrf.mxu0
      %v4079 = vadd.f32 0.0, %v4078
      %4080 = vdwg.mxu0
      %v4081 = vsel %vm1377, %v4073, -inf
      %4082 = vmax.xlane.f32.xlu0 %v4081
      %v4083 = vpop.xlane.xlu0 %4082
      %v4084 = vsel %vm1377, %v4076, -inf
      %4085 = vmax.xlane.f32.xlu0 %v4084
      %v4086 = vpop.xlane.xlu0 %4085
      %v4087 = vsel %vm1384, %v4079, -inf
      %4088 = vmax.xlane.f32.xlu0 %v4087
      %v4089 = vpop.xlane.xlu0 %4088
      %v4090 = vsub.f32 %v4073, %v4083
      %v4091 = vsub.f32 %v4076, %v4086
      %v4092 = vsub.f32 %v4079, %v4089
      %v4093 = vmul.f32 %v4090, 1.442695
      %v4094 = vpow.pop %v4093
      %v4095 = vmul.f32 %v4091, 1.442695
      %v4096 = vpow.pop %v4095
      %v4097 = vmul.f32 %v4092, 1.442695
      %v4098 = vpow.pop %v4097
      %v4099 = vsel %vm1377, %v4094, 0.0
      %4100 = vadd.xlane.f32.xlu0 %v4099
      %v4101 = vpop.xlane.xlu0 %4100
      %v4102 = vsel %vm1377, %v4096, 0.0
      %4103 = vadd.xlane.f32.xlu0 %v4102
      %v4104 = vpop.xlane.xlu0 %4103
      %v4105 = vsel %vm1384, %v4098, 0.0
      %4106 = vadd.xlane.f32.xlu0 %v4105
      %v4107 = vpop.xlane.xlu0 %4106
      %v4108 = vrcp.pop %v4101
      %v4109 = vmul.f32 %v4101, %v4108
      %v4110 = vsub.f32 1.0, %v4109
      %v4111 = vmul.f32 %v4108, %v4110
      %v4112 = vadd.f32 %v4108, %v4111
      %vm4113 = vweird.f32 %v4101
      %vm4114 = vweird.f32 %v4108
      %vm4115 = vmor %vm4113, %vm4114
      %v4116 = vsel %vm4115, %v4108, %v4112
      %v4117 = vand.u32 2147483647, %v4101
      %vm4118 = vcmp.eq.f32.partialorder %v4117, 8.507059e+37
      %v4119 = vand.u32 %v4101, 2147483648
      %v4120 = vor.u32 1.1754944e-38, %v4119
      %v4121 = vsel %vm4118, %v4120, %v4116
      %v4122 = vmul.f32 %v4094, %v4121
      %v4123 = vrcp.pop %v4104
      %v4124 = vmul.f32 %v4104, %v4123
      %v4125 = vsub.f32 1.0, %v4124
      %v4126 = vmul.f32 %v4123, %v4125
      %v4127 = vadd.f32 %v4123, %v4126
      %vm4128 = vweird.f32 %v4104
      %vm4129 = vweird.f32 %v4123
      %vm4130 = vmor %vm4128, %vm4129
      %v4131 = vsel %vm4130, %v4123, %v4127
      %v4132 = vand.u32 2147483647, %v4104
      %vm4133 = vcmp.eq.f32.partialorder %v4132, 8.507059e+37
      %v4134 = vand.u32 %v4104, 2147483648
      %v4135 = vor.u32 1.1754944e-38, %v4134
      %v4136 = vsel %vm4133, %v4135, %v4131
      %v4137 = vmul.f32 %v4096, %v4136
      %v4138 = vrcp.pop %v4107
      %v4139 = vmul.f32 %v4107, %v4138
      %v4140 = vsub.f32 1.0, %v4139
      %v4141 = vmul.f32 %v4138, %v4140
      %v4142 = vadd.f32 %v4138, %v4141
      %vm4143 = vweird.f32 %v4107
      %vm4144 = vweird.f32 %v4138
      %vm4145 = vmor %vm4143, %vm4144
      %v4146 = vsel %vm4145, %v4138, %v4142
      %v4147 = vand.u32 2147483647, %v4107
      %vm4148 = vcmp.eq.f32.partialorder %v4147, 8.507059e+37
      %v4149 = vand.u32 %v4107, 2147483648
      %v4150 = vor.u32 1.1754944e-38, %v4149
      %v4151 = vsel %vm4148, %v4150, %v4146
      %v4152 = vmul.f32 %v4098, %v4151
      %v4154 = vsel %vm1377, %v4122, 0
      %v4157 = vsel %vm1377, %v4137, 0
      %v4160 = vsel %vm1377, %v4152, 0
      %v4163 = vsel %vm1460, %v4033, 0
      %4165 = vmatpush.msra.mxu0 0.0
      %4166 = vmatpush.msra.mxu0 0.0
      %4167 = vmatpush.msra.mxu0 0.0
      %4168 = vmatpush.msra.mxu0 0.0
      %4169 = vmatpush.msra.mxu0 0.0
      %4170 = vmatpush.msra.mxu0 0.0
      %4171 = vmatpush.msra.mxu0 0.0
      %4172 = vmatpush.msra.mxu0 0.0
      %4173 = vmatpush.msra.mxu0 0.0
      %4174 = vmatpush.msra.mxu0 0.0
      %4175 = vmatpush.msra.mxu0 0.0
      %4176 = vmatpush.msra.mxu0 0.0
      %4177 = vmatpush.msra.mxu0 0.0
      %4178 = vmatpush.msra.mxu0 %v4163
      %4179 = vmatpush.msra.mxu0 %v4032
      %4180 = vmatpush.msra.mxu0 %v4031
      %4181 = vmatmul.f32.gmra.mxu0 %v4154
      %v4182 = vpop.f32.mrf.mxu0
      %v4183 = vadd.f32 0.0, %v4182
      %4184 = vmatmul.f32.gmra.mxu0 %v4157
      %v4185 = vpop.f32.mrf.mxu0
      %v4186 = vadd.f32 0.0, %v4185
      %4187 = vmatmul.f32.gmra.mxu0 %v4160
      %v4188 = vpop.f32.mrf.mxu0
      %v4189 = vadd.f32 0.0, %v4188
      %4190 = vdwg.mxu0
      %4191 = vst.msk [vmem:[#allocation3] sm:$0xff] %vm1332, %v4183
      %4192 = vst.msk [vmem:[#allocation3 + $0x8] sm:$0xff] %vm1332, %v4186
      %4193 = vst.msk [vmem:[#allocation3 + $0x10] sm:$0x1] %vm1492, %v4189
      %4194 = vrot.lane.b32.xlu0 %v4034, 120
      %v4195 = vpop.permute.xlu0 %4194
      %4196 = vrot.lane.b32.xlu0 %v4035, 120
      %v4197 = vpop.permute.xlu0 %4196
      %4198 = vrot.lane.b32.xlu0 %v4036, 120
      %v4199 = vpop.permute.xlu0 %4198
      %4200 = vrot.lane.b32.xlu0 %v3842, 120
      %v4201 = vpop.permute.xlu0 %4200
      %4202 = vrot.lane.b32.xlu0 %v3845, 120
      %v4203 = vpop.permute.xlu0 %4202
      %4204 = vrot.lane.b32.xlu0 %v3848, 120
      %v4205 = vpop.permute.xlu0 %4204
      %v4206 = vsel %vm1332, %v4195, 0
      %v4208 = vsel %vm1332, %v4197, 0
      %v4210 = vsel %vm1332, %v4199, 0
      %v4212 = vsel %vm1332, %v4201, 0
      %v4214 = vsel %vm1332, %v4203, 0
      %v4216 = vsel %vm1332, %v4205, 0
      %4218 = vmatpush.xpose.msra.mxu0 0.0
      %4219 = vmatpush.xpose.msra.mxu0 0.0
      %4220 = vmatpush.xpose.msra.mxu0 0.0
      %4221 = vmatpush.xpose.msra.mxu0 0.0
      %4222 = vmatpush.xpose.msra.mxu0 0.0
      %4223 = vmatpush.xpose.msra.mxu0 0.0
      %4224 = vmatpush.xpose.msra.mxu0 0.0
      %4225 = vmatpush.xpose.msra.mxu0 0.0
      %4226 = vmatpush.xpose.msra.mxu0 0.0
      %4227 = vmatpush.xpose.msra.mxu0 0.0
      %4228 = vmatpush.xpose.msra.mxu0 0.0
      %4229 = vmatpush.xpose.msra.mxu0 0.0
      %4230 = vmatpush.xpose.msra.mxu0 0.0
      %4231 = vmatpush.xpose.msra.mxu0 %v4216
      %4232 = vmatpush.xpose.msra.mxu0 %v4214
      %4233 = vmatpush.xpose.msra.mxu0 %v4212
      %4234 = vmatmul.f32.gmra.mxu0 %v4206
      %v4235 = vpop.f32.mrf.mxu0
      %v4236 = vadd.f32 0.0, %v4235
      %4237 = vmatmul.f32.gmra.mxu0 %v4208
      %v4238 = vpop.f32.mrf.mxu0
      %v4239 = vadd.f32 0.0, %v4238
      %4240 = vmatmul.f32.gmra.mxu0 %v4210
      %v4241 = vpop.f32.mrf.mxu0
      %v4242 = vadd.f32 0.0, %v4241
      %4243 = vdwg.mxu0
      %v4244 = vsel %vm1377, %v4236, -inf
      %4245 = vmax.xlane.f32.xlu0 %v4244
      %v4246 = vpop.xlane.xlu0 %4245
      %v4247 = vsel %vm1377, %v4239, -inf
      %4248 = vmax.xlane.f32.xlu0 %v4247
      %v4249 = vpop.xlane.xlu0 %4248
      %v4250 = vsel %vm1384, %v4242, -inf
      %4251 = vmax.xlane.f32.xlu0 %v4250
      %v4252 = vpop.xlane.xlu0 %4251
      %v4253 = vsub.f32 %v4236, %v4246
      %v4254 = vsub.f32 %v4239, %v4249
      %v4255 = vsub.f32 %v4242, %v4252
      %v4256 = vmul.f32 %v4253, 1.442695
      %v4257 = vpow.pop %v4256
      %v4258 = vmul.f32 %v4254, 1.442695
      %v4259 = vpow.pop %v4258
      %v4260 = vmul.f32 %v4255, 1.442695
      %v4261 = vpow.pop %v4260
      %v4262 = vsel %vm1377, %v4257, 0.0
      %4263 = vadd.xlane.f32.xlu0 %v4262
      %v4264 = vpop.xlane.xlu0 %4263
      %v4265 = vsel %vm1377, %v4259, 0.0
      %4266 = vadd.xlane.f32.xlu0 %v4265
      %v4267 = vpop.xlane.xlu0 %4266
      %v4268 = vsel %vm1384, %v4261, 0.0
      %4269 = vadd.xlane.f32.xlu0 %v4268
      %v4270 = vpop.xlane.xlu0 %4269
      %v4271 = vrcp.pop %v4264
      %v4272 = vmul.f32 %v4264, %v4271
      %v4273 = vsub.f32 1.0, %v4272
      %v4274 = vmul.f32 %v4271, %v4273
      %v4275 = vadd.f32 %v4271, %v4274
      %vm4276 = vweird.f32 %v4264
      %vm4277 = vweird.f32 %v4271
      %vm4278 = vmor %vm4276, %vm4277
      %v4279 = vsel %vm4278, %v4271, %v4275
      %v4280 = vand.u32 2147483647, %v4264
      %vm4281 = vcmp.eq.f32.partialorder %v4280, 8.507059e+37
      %v4282 = vand.u32 %v4264, 2147483648
      %v4283 = vor.u32 1.1754944e-38, %v4282
      %v4284 = vsel %vm4281, %v4283, %v4279
      %v4285 = vmul.f32 %v4257, %v4284
      %v4286 = vrcp.pop %v4267
      %v4287 = vmul.f32 %v4267, %v4286
      %v4288 = vsub.f32 1.0, %v4287
      %v4289 = vmul.f32 %v4286, %v4288
      %v4290 = vadd.f32 %v4286, %v4289
      %vm4291 = vweird.f32 %v4267
      %vm4292 = vweird.f32 %v4286
      %vm4293 = vmor %vm4291, %vm4292
      %v4294 = vsel %vm4293, %v4286, %v4290
      %v4295 = vand.u32 2147483647, %v4267
      %vm4296 = vcmp.eq.f32.partialorder %v4295, 8.507059e+37
      %v4297 = vand.u32 %v4267, 2147483648
      %v4298 = vor.u32 1.1754944e-38, %v4297
      %v4299 = vsel %vm4296, %v4298, %v4294
      %v4300 = vmul.f32 %v4259, %v4299
      %v4301 = vrcp.pop %v4270
      %v4302 = vmul.f32 %v4270, %v4301
      %v4303 = vsub.f32 1.0, %v4302
      %v4304 = vmul.f32 %v4301, %v4303
      %v4305 = vadd.f32 %v4301, %v4304
      %vm4306 = vweird.f32 %v4270
      %vm4307 = vweird.f32 %v4301
      %vm4308 = vmor %vm4306, %vm4307
      %v4309 = vsel %vm4308, %v4301, %v4305
      %v4310 = vand.u32 2147483647, %v4270
      %vm4311 = vcmp.eq.f32.partialorder %v4310, 8.507059e+37
      %v4312 = vand.u32 %v4270, 2147483648
      %v4313 = vor.u32 1.1754944e-38, %v4312
      %v4314 = vsel %vm4311, %v4313, %v4309
      %v4315 = vmul.f32 %v4261, %v4314
      %4318 = vrot.lane.b32.xlu0 %v4031, 120
      %v4319 = vpop.permute.xlu0 %4318
      %4320 = vrot.lane.b32.xlu0 %v4032, 120
      %v4321 = vpop.permute.xlu0 %4320
      %4322 = vrot.lane.b32.xlu0 %v4033, 120
      %v4323 = vpop.permute.xlu0 %4322
      %v4327 = vsel %vm1377, %v4285, 0
      %v4330 = vsel %vm1377, %v4300, 0
      %v4333 = vsel %vm1377, %v4315, 0
      %v4335 = vsel %vm1460, %v4323, 0
      %4337 = vmatpush.msra.mxu0 0.0
      %4338 = vmatpush.msra.mxu0 0.0
      %4339 = vmatpush.msra.mxu0 0.0
      %4340 = vmatpush.msra.mxu0 0.0
      %4341 = vmatpush.msra.mxu0 0.0
      %4342 = vmatpush.msra.mxu0 0.0
      %4343 = vmatpush.msra.mxu0 0.0
      %4344 = vmatpush.msra.mxu0 0.0
      %4345 = vmatpush.msra.mxu0 0.0
      %4346 = vmatpush.msra.mxu0 0.0
      %4347 = vmatpush.msra.mxu0 0.0
      %4348 = vmatpush.msra.mxu0 0.0
      %4349 = vmatpush.msra.mxu0 0.0
      %4350 = vmatpush.msra.mxu0 %v4335
      %4351 = vmatpush.msra.mxu0 %v4321
      %4352 = vmatpush.msra.mxu0 %v4319
      %4353 = vmatmul.f32.gmra.mxu0 %v4327
      %v4354 = vpop.f32.mrf.mxu0
      %v4355 = vadd.f32 0.0, %v4354
      %4356 = vmatmul.f32.gmra.mxu0 %v4330
      %v4357 = vpop.f32.mrf.mxu0
      %v4358 = vadd.f32 0.0, %v4357
      %4359 = vmatmul.f32.gmra.mxu0 %v4333
      %v4360 = vpop.f32.mrf.mxu0
      %v4361 = vadd.f32 0.0, %v4360
      %4362 = vdwg.mxu0
      %4366 = vrot.lane.b32.xlu0 %v4355, 8
      %v4367 = vpop.permute.xlu0 %4366
      %4368 = vrot.lane.b32.xlu0 %v4358, 8
      %v4369 = vpop.permute.xlu0 %4368
      %4370 = vrot.lane.b32.xlu0 %v4361, 8
      %v4371 = vpop.permute.xlu0 %4370
      %4375 = vst.msk [vmem:[#allocation3] sm:$0xff] %vm1675, %v4367
      %4376 = vst.msk [vmem:[#allocation3 + $0x8] sm:$0xff] %vm1675, %v4369
      %4377 = vst.msk [vmem:[#allocation3 + $0x10] sm:$0x1] %vm1678, %v4371
      %4378 = vrot.lane.b32.xlu0 %v4034, 112
      %v4379 = vpop.permute.xlu0 %4378
      %4380 = vrot.lane.b32.xlu0 %v4035, 112
      %v4381 = vpop.permute.xlu0 %4380
      %4382 = vrot.lane.b32.xlu0 %v4036, 112
      %v4383 = vpop.permute.xlu0 %4382
      %4384 = vrot.lane.b32.xlu0 %v3842, 112
      %v4385 = vpop.permute.xlu0 %4384
      %4386 = vrot.lane.b32.xlu0 %v3845, 112
      %v4387 = vpop.permute.xlu0 %4386
      %4388 = vrot.lane.b32.xlu0 %v3848, 112
      %v4389 = vpop.permute.xlu0 %4388
      %v4390 = vsel %vm1332, %v4379, 0
      %v4392 = vsel %vm1332, %v4381, 0
      %v4394 = vsel %vm1332, %v4383, 0
      %v4396 = vsel %vm1332, %v4385, 0
      %v4398 = vsel %vm1332, %v4387, 0
      %v4400 = vsel %vm1332, %v4389, 0
      %4402 = vmatpush.xpose.msra.mxu0 0.0
      %4403 = vmatpush.xpose.msra.mxu0 0.0
      %4404 = vmatpush.xpose.msra.mxu0 0.0
      %4405 = vmatpush.xpose.msra.mxu0 0.0
      %4406 = vmatpush.xpose.msra.mxu0 0.0
      %4407 = vmatpush.xpose.msra.mxu0 0.0
      %4408 = vmatpush.xpose.msra.mxu0 0.0
      %4409 = vmatpush.xpose.msra.mxu0 0.0
      %4410 = vmatpush.xpose.msra.mxu0 0.0
      %4411 = vmatpush.xpose.msra.mxu0 0.0
      %4412 = vmatpush.xpose.msra.mxu0 0.0
      %4413 = vmatpush.xpose.msra.mxu0 0.0
      %4414 = vmatpush.xpose.msra.mxu0 0.0
      %4415 = vmatpush.xpose.msra.mxu0 %v4400
      %4416 = vmatpush.xpose.msra.mxu0 %v4398
      %4417 = vmatpush.xpose.msra.mxu0 %v4396
      %4418 = vmatmul.f32.gmra.mxu0 %v4390
      %v4419 = vpop.f32.mrf.mxu0
      %v4420 = vadd.f32 0.0, %v4419
      %4421 = vmatmul.f32.gmra.mxu0 %v4392
      %v4422 = vpop.f32.mrf.mxu0
      %v4423 = vadd.f32 0.0, %v4422
      %4424 = vmatmul.f32.gmra.mxu0 %v4394
      %v4425 = vpop.f32.mrf.mxu0
      %v4426 = vadd.f32 0.0, %v4425
      %4427 = vdwg.mxu0
      %v4428 = vsel %vm1377, %v4420, -inf
      %4429 = vmax.xlane.f32.xlu0 %v4428
      %v4430 = vpop.xlane.xlu0 %4429
      %v4431 = vsel %vm1377, %v4423, -inf
      %4432 = vmax.xlane.f32.xlu0 %v4431
      %v4433 = vpop.xlane.xlu0 %4432
      %v4434 = vsel %vm1384, %v4426, -inf
      %4435 = vmax.xlane.f32.xlu0 %v4434
      %v4436 = vpop.xlane.xlu0 %4435
      %v4437 = vsub.f32 %v4420, %v4430
      %v4438 = vsub.f32 %v4423, %v4433
      %v4439 = vsub.f32 %v4426, %v4436
      %v4440 = vmul.f32 %v4437, 1.442695
      %v4441 = vpow.pop %v4440
      %v4442 = vmul.f32 %v4438, 1.442695
      %v4443 = vpow.pop %v4442
      %v4444 = vmul.f32 %v4439, 1.442695
      %v4445 = vpow.pop %v4444
      %v4446 = vsel %vm1377, %v4441, 0.0
      %4447 = vadd.xlane.f32.xlu0 %v4446
      %v4448 = vpop.xlane.xlu0 %4447
      %v4449 = vsel %vm1377, %v4443, 0.0
      %4450 = vadd.xlane.f32.xlu0 %v4449
      %v4451 = vpop.xlane.xlu0 %4450
      %v4452 = vsel %vm1384, %v4445, 0.0
      %4453 = vadd.xlane.f32.xlu0 %v4452
      %v4454 = vpop.xlane.xlu0 %4453
      %v4455 = vrcp.pop %v4448
      %v4456 = vmul.f32 %v4448, %v4455
      %v4457 = vsub.f32 1.0, %v4456
      %v4458 = vmul.f32 %v4455, %v4457
      %v4459 = vadd.f32 %v4455, %v4458
      %vm4460 = vweird.f32 %v4448
      %vm4461 = vweird.f32 %v4455
      %vm4462 = vmor %vm4460, %vm4461
      %v4463 = vsel %vm4462, %v4455, %v4459
      %v4464 = vand.u32 2147483647, %v4448
      %vm4465 = vcmp.eq.f32.partialorder %v4464, 8.507059e+37
      %v4466 = vand.u32 %v4448, 2147483648
      %v4467 = vor.u32 1.1754944e-38, %v4466
      %v4468 = vsel %vm4465, %v4467, %v4463
      %v4469 = vmul.f32 %v4441, %v4468
      %v4470 = vrcp.pop %v4451
      %v4471 = vmul.f32 %v4451, %v4470
      %v4472 = vsub.f32 1.0, %v4471
      %v4473 = vmul.f32 %v4470, %v4472
      %v4474 = vadd.f32 %v4470, %v4473
      %vm4475 = vweird.f32 %v4451
      %vm4476 = vweird.f32 %v4470
      %vm4477 = vmor %vm4475, %vm4476
      %v4478 = vsel %vm4477, %v4470, %v4474
      %v4479 = vand.u32 2147483647, %v4451
      %vm4480 = vcmp.eq.f32.partialorder %v4479, 8.507059e+37
      %v4481 = vand.u32 %v4451, 2147483648
      %v4482 = vor.u32 1.1754944e-38, %v4481
      %v4483 = vsel %vm4480, %v4482, %v4478
      %v4484 = vmul.f32 %v4443, %v4483
      %v4485 = vrcp.pop %v4454
      %v4486 = vmul.f32 %v4454, %v4485
      %v4487 = vsub.f32 1.0, %v4486
      %v4488 = vmul.f32 %v4485, %v4487
      %v4489 = vadd.f32 %v4485, %v4488
      %vm4490 = vweird.f32 %v4454
      %vm4491 = vweird.f32 %v4485
      %vm4492 = vmor %vm4490, %vm4491
      %v4493 = vsel %vm4492, %v4485, %v4489
      %v4494 = vand.u32 2147483647, %v4454
      %vm4495 = vcmp.eq.f32.partialorder %v4494, 8.507059e+37
      %v4496 = vand.u32 %v4454, 2147483648
      %v4497 = vor.u32 1.1754944e-38, %v4496
      %v4498 = vsel %vm4495, %v4497, %v4493
      %v4499 = vmul.f32 %v4445, %v4498
      %4500 = vrot.lane.b32.xlu0 %v4031, 112
      %v4501 = vpop.permute.xlu0 %4500
      %4502 = vrot.lane.b32.xlu0 %v4032, 112
      %v4503 = vpop.permute.xlu0 %4502
      %4504 = vrot.lane.b32.xlu0 %v4033, 112
      %v4505 = vpop.permute.xlu0 %4504
      %v4509 = vsel %vm1377, %v4469, 0
      %v4512 = vsel %vm1377, %v4484, 0
      %v4515 = vsel %vm1377, %v4499, 0
      %v4517 = vsel %vm1460, %v4505, 0
      %4519 = vmatpush.msra.mxu0 0.0
      %4520 = vmatpush.msra.mxu0 0.0
      %4521 = vmatpush.msra.mxu0 0.0
      %4522 = vmatpush.msra.mxu0 0.0
      %4523 = vmatpush.msra.mxu0 0.0
      %4524 = vmatpush.msra.mxu0 0.0
      %4525 = vmatpush.msra.mxu0 0.0
      %4526 = vmatpush.msra.mxu0 0.0
      %4527 = vmatpush.msra.mxu0 0.0
      %4528 = vmatpush.msra.mxu0 0.0
      %4529 = vmatpush.msra.mxu0 0.0
      %4530 = vmatpush.msra.mxu0 0.0
      %4531 = vmatpush.msra.mxu0 0.0
      %4532 = vmatpush.msra.mxu0 %v4517
      %4533 = vmatpush.msra.mxu0 %v4503
      %4534 = vmatpush.msra.mxu0 %v4501
      %4535 = vmatmul.f32.gmra.mxu0 %v4509
      %v4536 = vpop.f32.mrf.mxu0
      %v4537 = vadd.f32 0.0, %v4536
      %4538 = vmatmul.f32.gmra.mxu0 %v4512
      %v4539 = vpop.f32.mrf.mxu0
      %v4540 = vadd.f32 0.0, %v4539
      %4541 = vmatmul.f32.gmra.mxu0 %v4515
      %v4542 = vpop.f32.mrf.mxu0
      %v4543 = vadd.f32 0.0, %v4542
      %4544 = vdwg.mxu0
      %4548 = vrot.lane.b32.xlu0 %v4537, 16
      %v4549 = vpop.permute.xlu0 %4548
      %4550 = vrot.lane.b32.xlu0 %v4540, 16
      %v4551 = vpop.permute.xlu0 %4550
      %4552 = vrot.lane.b32.xlu0 %v4543, 16
      %v4553 = vpop.permute.xlu0 %4552
      %4557 = vst.msk [vmem:[#allocation3] sm:$0xff] %vm1859, %v4549
      %4558 = vst.msk [vmem:[#allocation3 + $0x8] sm:$0xff] %vm1859, %v4551
      %4559 = vst.msk [vmem:[#allocation3 + $0x10] sm:$0x1] %vm1862, %v4553
      %4560 = vrot.lane.b32.xlu0 %v4034, 104
      %v4561 = vpop.permute.xlu0 %4560
      %4562 = vrot.lane.b32.xlu0 %v4035, 104
      %v4563 = vpop.permute.xlu0 %4562
      %4564 = vrot.lane.b32.xlu0 %v4036, 104
      %v4565 = vpop.permute.xlu0 %4564
      %4566 = vrot.lane.b32.xlu0 %v3842, 104
      %v4567 = vpop.permute.xlu0 %4566
      %4568 = vrot.lane.b32.xlu0 %v3845, 104
      %v4569 = vpop.permute.xlu0 %4568
      %4570 = vrot.lane.b32.xlu0 %v3848, 104
      %v4571 = vpop.permute.xlu0 %4570
      %v4572 = vsel %vm1332, %v4561, 0
      %v4574 = vsel %vm1332, %v4563, 0
      %v4576 = vsel %vm1332, %v4565, 0
      %v4578 = vsel %vm1332, %v4567, 0
      %v4580 = vsel %vm1332, %v4569, 0
      %v4582 = vsel %vm1332, %v4571, 0
      %4584 = vmatpush.xpose.msra.mxu0 0.0
      %4585 = vmatpush.xpose.msra.mxu0 0.0
      %4586 = vmatpush.xpose.msra.mxu0 0.0
      %4587 = vmatpush.xpose.msra.mxu0 0.0
      %4588 = vmatpush.xpose.msra.mxu0 0.0
      %4589 = vmatpush.xpose.msra.mxu0 0.0
      %4590 = vmatpush.xpose.msra.mxu0 0.0
      %4591 = vmatpush.xpose.msra.mxu0 0.0
      %4592 = vmatpush.xpose.msra.mxu0 0.0
      %4593 = vmatpush.xpose.msra.mxu0 0.0
      %4594 = vmatpush.xpose.msra.mxu0 0.0
      %4595 = vmatpush.xpose.msra.mxu0 0.0
      %4596 = vmatpush.xpose.msra.mxu0 0.0
      %4597 = vmatpush.xpose.msra.mxu0 %v4582
      %4598 = vmatpush.xpose.msra.mxu0 %v4580
      %4599 = vmatpush.xpose.msra.mxu0 %v4578
      %4600 = vmatmul.f32.gmra.mxu0 %v4572
      %v4601 = vpop.f32.mrf.mxu0
      %v4602 = vadd.f32 0.0, %v4601
      %4603 = vmatmul.f32.gmra.mxu0 %v4574
      %v4604 = vpop.f32.mrf.mxu0
      %v4605 = vadd.f32 0.0, %v4604
      %4606 = vmatmul.f32.gmra.mxu0 %v4576
      %v4607 = vpop.f32.mrf.mxu0
      %v4608 = vadd.f32 0.0, %v4607
      %4609 = vdwg.mxu0
      %v4610 = vsel %vm1377, %v4602, -inf
      %4611 = vmax.xlane.f32.xlu0 %v4610
      %v4612 = vpop.xlane.xlu0 %4611
      %v4613 = vsel %vm1377, %v4605, -inf
      %4614 = vmax.xlane.f32.xlu0 %v4613
      %v4615 = vpop.xlane.xlu0 %4614
      %v4616 = vsel %vm1384, %v4608, -inf
      %4617 = vmax.xlane.f32.xlu0 %v4616
      %v4618 = vpop.xlane.xlu0 %4617
      %v4619 = vsub.f32 %v4602, %v4612
      %v4620 = vsub.f32 %v4605, %v4615
      %v4621 = vsub.f32 %v4608, %v4618
      %v4622 = vmul.f32 %v4619, 1.442695
      %v4623 = vpow.pop %v4622
      %v4624 = vmul.f32 %v4620, 1.442695
      %v4625 = vpow.pop %v4624
      %v4626 = vmul.f32 %v4621, 1.442695
      %v4627 = vpow.pop %v4626
      %v4628 = vsel %vm1377, %v4623, 0.0
      %4629 = vadd.xlane.f32.xlu0 %v4628
      %v4630 = vpop.xlane.xlu0 %4629
      %v4631 = vsel %vm1377, %v4625, 0.0
      %4632 = vadd.xlane.f32.xlu0 %v4631
      %v4633 = vpop.xlane.xlu0 %4632
      %v4634 = vsel %vm1384, %v4627, 0.0
      %4635 = vadd.xlane.f32.xlu0 %v4634
      %v4636 = vpop.xlane.xlu0 %4635
      %v4637 = vrcp.pop %v4630
      %v4638 = vmul.f32 %v4630, %v4637
      %v4639 = vsub.f32 1.0, %v4638
      %v4640 = vmul.f32 %v4637, %v4639
      %v4641 = vadd.f32 %v4637, %v4640
      %vm4642 = vweird.f32 %v4630
      %vm4643 = vweird.f32 %v4637
      %vm4644 = vmor %vm4642, %vm4643
      %v4645 = vsel %vm4644, %v4637, %v4641
      %v4646 = vand.u32 2147483647, %v4630
      %vm4647 = vcmp.eq.f32.partialorder %v4646, 8.507059e+37
      %v4648 = vand.u32 %v4630, 2147483648
      %v4649 = vor.u32 1.1754944e-38, %v4648
      %v4650 = vsel %vm4647, %v4649, %v4645
      %v4651 = vmul.f32 %v4623, %v4650
      %v4652 = vrcp.pop %v4633
      %v4653 = vmul.f32 %v4633, %v4652
      %v4654 = vsub.f32 1.0, %v4653
      %v4655 = vmul.f32 %v4652, %v4654
      %v4656 = vadd.f32 %v4652, %v4655
      %vm4657 = vweird.f32 %v4633
      %vm4658 = vweird.f32 %v4652
      %vm4659 = vmor %vm4657, %vm4658
      %v4660 = vsel %vm4659, %v4652, %v4656
      %v4661 = vand.u32 2147483647, %v4633
      %vm4662 = vcmp.eq.f32.partialorder %v4661, 8.507059e+37
      %v4663 = vand.u32 %v4633, 2147483648
      %v4664 = vor.u32 1.1754944e-38, %v4663
      %v4665 = vsel %vm4662, %v4664, %v4660
      %v4666 = vmul.f32 %v4625, %v4665
      %v4667 = vrcp.pop %v4636
      %v4668 = vmul.f32 %v4636, %v4667
      %v4669 = vsub.f32 1.0, %v4668
      %v4670 = vmul.f32 %v4667, %v4669
      %v4671 = vadd.f32 %v4667, %v4670
      %vm4672 = vweird.f32 %v4636
      %vm4673 = vweird.f32 %v4667
      %vm4674 = vmor %vm4672, %vm4673
      %v4675 = vsel %vm4674, %v4667, %v4671
      %v4676 = vand.u32 2147483647, %v4636
      %vm4677 = vcmp.eq.f32.partialorder %v4676, 8.507059e+37
      %v4678 = vand.u32 %v4636, 2147483648
      %v4679 = vor.u32 1.1754944e-38, %v4678
      %v4680 = vsel %vm4677, %v4679, %v4675
      %v4681 = vmul.f32 %v4627, %v4680
      %4682 = vrot.lane.b32.xlu0 %v4031, 104
      %v4683 = vpop.permute.xlu0 %4682
      %4684 = vrot.lane.b32.xlu0 %v4032, 104
      %v4685 = vpop.permute.xlu0 %4684
      %4686 = vrot.lane.b32.xlu0 %v4033, 104
      %v4687 = vpop.permute.xlu0 %4686
      %v4691 = vsel %vm1377, %v4651, 0
      %v4694 = vsel %vm1377, %v4666, 0
      %v4697 = vsel %vm1377, %v4681, 0
      %v4699 = vsel %vm1460, %v4687, 0
      %4701 = vmatpush.msra.mxu0 0.0
      %4702 = vmatpush.msra.mxu0 0.0
      %4703 = vmatpush.msra.mxu0 0.0
      %4704 = vmatpush.msra.mxu0 0.0
      %4705 = vmatpush.msra.mxu0 0.0
      %4706 = vmatpush.msra.mxu0 0.0
      %4707 = vmatpush.msra.mxu0 0.0
      %4708 = vmatpush.msra.mxu0 0.0
      %4709 = vmatpush.msra.mxu0 0.0
      %4710 = vmatpush.msra.mxu0 0.0
      %4711 = vmatpush.msra.mxu0 0.0
      %4712 = vmatpush.msra.mxu0 0.0
      %4713 = vmatpush.msra.mxu0 0.0
      %4714 = vmatpush.msra.mxu0 %v4699
      %4715 = vmatpush.msra.mxu0 %v4685
      %4716 = vmatpush.msra.mxu0 %v4683
      %4717 = vmatmul.f32.gmra.mxu0 %v4691
      %v4718 = vpop.f32.mrf.mxu0
      %v4719 = vadd.f32 0.0, %v4718
      %4720 = vmatmul.f32.gmra.mxu0 %v4694
      %v4721 = vpop.f32.mrf.mxu0
      %v4722 = vadd.f32 0.0, %v4721
      %4723 = vmatmul.f32.gmra.mxu0 %v4697
      %v4724 = vpop.f32.mrf.mxu0
      %v4725 = vadd.f32 0.0, %v4724
      %4726 = vdwg.mxu0
      %4730 = vrot.lane.b32.xlu0 %v4719, 24
      %v4731 = vpop.permute.xlu0 %4730
      %4732 = vrot.lane.b32.xlu0 %v4722, 24
      %v4733 = vpop.permute.xlu0 %4732
      %4734 = vrot.lane.b32.xlu0 %v4725, 24
      %v4735 = vpop.permute.xlu0 %4734
      %4739 = vst.msk [vmem:[#allocation3] sm:$0xff] %vm2043, %v4731
      %4740 = vst.msk [vmem:[#allocation3 + $0x8] sm:$0xff] %vm2043, %v4733
      %4741 = vst.msk [vmem:[#allocation3 + $0x10] sm:$0x1] %vm2046, %v4735
      %v4742 = vld [vmem:[#allocation3] sm:$0xff]
      %v4743 = vld [vmem:[#allocation3 + $0x8] sm:$0xff]
      %v4744 = vld [vmem:[#allocation3 + $0x10] sm:$0x1]
      %s4745 = scalar_lea.vmem %s29, 64
      %v4746 = vld [vmem:[%s4745] sm:$0xff]
      %v4747 = vld [vmem:[%s4745 + $0x8] sm:$0xff]
      %v4748 = vld [vmem:[%s4745 + $0x10] sm:$0xff]
      %v4749 = vld [vmem:[%s4745 + $0x18] sm:$0xff]
      %v4751 = vsel %vm1045, %v4742, 0
      %v4754 = vsel %vm1045, %v4743, 0
      %v4757 = vsel %vm1045, %v4744, 0
      %4759 = vmatpush.msra.mxu0 0.0
      %4760 = vmatpush.msra.mxu0 0.0
      %4761 = vmatpush.msra.mxu0 0.0
      %4762 = vmatpush.msra.mxu0 0.0
      %4763 = vmatpush.msra.mxu0 0.0
      %4764 = vmatpush.msra.mxu0 0.0
      %4765 = vmatpush.msra.mxu0 0.0
      %4766 = vmatpush.msra.mxu0 0.0
      %4767 = vmatpush.msra.mxu0 0.0
      %4768 = vmatpush.msra.mxu0 0.0
      %4769 = vmatpush.msra.mxu0 0.0
      %4770 = vmatpush.msra.mxu0 0.0
      %4771 = vmatpush.msra.mxu0 %v4749
      %4772 = vmatpush.msra.mxu0 %v4748
      %4773 = vmatpush.msra.mxu0 %v4747
      %4774 = vmatpush.msra.mxu0 %v4746
      %4775 = vmatmul.f32.gmra.mxu0 %v4751
      %v4776 = vpop.f32.mrf.mxu0
      %v4777 = vadd.f32 0.0, %v4776
      %4778 = vmatmul.f32.gmra.mxu0 %v4754
      %v4779 = vpop.f32.mrf.mxu0
      %v4780 = vadd.f32 0.0, %v4779
      %4781 = vmatmul.f32.gmra.mxu0 %v4757
      %v4782 = vpop.f32.mrf.mxu0
      %v4783 = vadd.f32 0.0, %v4782
      %4784 = vdwg.mxu0
      %v4785 = vadd.f32 %v3684, %v4777
      %v4786 = vadd.f32 %v3685, %v4780
      %v4787 = vadd.f32 %v3686, %v4783
      %s4788 = scalar_lea.vmem %s31, 2
      %v4789 = vld [vmem:[%s4788] sm:$0x1]
      %v4791 = vperm.slane %v4789, 0
      %v4793 = vadd.f32 %v4785, %v4791
      %v4794 = vadd.f32 %v4786, %v4791
      %v4795 = vadd.f32 %v4787, %v4791
      %s4796 = scalar_lea.vmem %s41, 2
      %v4797 = vld [vmem:[%s4796] sm:$0x1]
      %s4798 = scalar_lea.vmem %s43, 2
      %v4799 = vld [vmem:[%s4798] sm:$0x1]
      %v4800 = vsel %vm1045, %v4793, 0.0
      %4801 = vadd.xlane.f32.xlu0 %v4800
      %v4802 = vpop.xlane.xlu0 %4801
      %v4803 = vsel %vm1045, %v4794, 0.0
      %4804 = vadd.xlane.f32.xlu0 %v4803
      %v4805 = vpop.xlane.xlu0 %4804
      %v4806 = vsel %vm988, %v4795, 0.0
      %4807 = vadd.xlane.f32.xlu0 %v4806
      %v4808 = vpop.xlane.xlu0 %4807
      %v4809 = vmul.f32 %v4802, %v1068
      %v4810 = vmul.f32 %v4805, %v1068
      %v4811 = vmul.f32 %v4808, %v1068
      %v4812 = vsub.f32 %v4793, %v4809
      %v4813 = vsub.f32 %v4794, %v4810
      %v4814 = vsub.f32 %v4795, %v4811
      %v4815 = vmul.f32 %v4812, %v4812
      %v4816 = vmul.f32 %v4813, %v4813
      %v4817 = vmul.f32 %v4814, %v4814
      %v4818 = vsel %vm1045, %v4815, 0.0
      %4819 = vadd.xlane.f32.xlu0 %v4818
      %v4820 = vpop.xlane.xlu0 %4819
      %v4821 = vsel %vm1045, %v4816, 0.0
      %4822 = vadd.xlane.f32.xlu0 %v4821
      %v4823 = vpop.xlane.xlu0 %4822
      %v4824 = vsel %vm988, %v4817, 0.0
      %4825 = vadd.xlane.f32.xlu0 %v4824
      %v4826 = vpop.xlane.xlu0 %4825
      %v4827 = vmul.f32 %v4820, %v1068
      %v4828 = vmul.f32 %v4823, %v1068
      %v4829 = vmul.f32 %v4826, %v1068
      %v4830 = vadd.f32 %v4827, 1e-05
      %v4831 = vadd.f32 %v4828, 1e-05
      %v4832 = vadd.f32 %v4829, 1e-05
      %v4833 = vrsqrt.pop %v4830
      %v4834 = vmul.f32 %v4833, %v4830
      %v4835 = vmul.f32 %v4834, %v4833
      %v4836 = vmul.f32 0.5, %v4835
      %v4837 = vsub.f32 1.5, %v4836
      %v4838 = vmul.f32 %v4833, %v4837
      %vm4839 = vweird.f32 %v4830
      %vm4840 = vweird.f32 %v4833
      %vm4841 = vmor %vm4839, %vm4840
      %v4842 = vsel %vm4841, %v4833, %v4838
      %v4843 = vrsqrt.pop %v4831
      %v4844 = vmul.f32 %v4843, %v4831
      %v4845 = vmul.f32 %v4844, %v4843
      %v4846 = vmul.f32 0.5, %v4845
      %v4847 = vsub.f32 1.5, %v4846
      %v4848 = vmul.f32 %v4843, %v4847
      %vm4849 = vweird.f32 %v4831
      %vm4850 = vweird.f32 %v4843
      %vm4851 = vmor %vm4849, %vm4850
      %v4852 = vsel %vm4851, %v4843, %v4848
      %v4853 = vrsqrt.pop %v4832
      %v4854 = vmul.f32 %v4853, %v4832
      %v4855 = vmul.f32 %v4854, %v4853
      %v4856 = vmul.f32 0.5, %v4855
      %v4857 = vsub.f32 1.5, %v4856
      %v4858 = vmul.f32 %v4853, %v4857
      %vm4859 = vweird.f32 %v4832
      %vm4860 = vweird.f32 %v4853
      %vm4861 = vmor %vm4859, %vm4860
      %v4862 = vsel %vm4861, %v4853, %v4858
      %v4863 = vmul.f32 %v4812, %v4842
      %v4864 = vmul.f32 %v4813, %v4852
      %v4865 = vmul.f32 %v4814, %v4862
      %v4867 = vperm.slane %v4797, 0
      %v4869 = vmul.f32 %v4863, %v4867
      %v4870 = vmul.f32 %v4864, %v4867
      %v4871 = vmul.f32 %v4865, %v4867
      %v4873 = vperm.slane %v4799, 0
      %v4875 = vadd.f32 %v4869, %v4873
      %v4876 = vadd.f32 %v4870, %v4873
      %v4877 = vadd.f32 %v4871, %v4873
      %s4878 = scalar_lea.vmem %s45, 64
      %v4879 = vld [vmem:[%s4878] sm:$0xff]
      %v4880 = vld [vmem:[%s4878 + $0x8] sm:$0xff]
      %v4881 = vld [vmem:[%s4878 + $0x10] sm:$0xff]
      %v4882 = vld [vmem:[%s4878 + $0x18] sm:$0xff]
      %s4883 = scalar_lea.vmem %s47, 2
      %v4884 = vld [vmem:[%s4883] sm:$0x1]
      %v4886 = vperm.slane %v4884, 0
      %v4889 = vsel %vm1045, %v4875, 0
      %v4892 = vsel %vm1045, %v4876, 0
      %v4895 = vsel %vm1045, %v4877, 0
      %4897 = vmatpush.msra.mxu0 0.0
      %4898 = vmatpush.msra.mxu0 0.0
      %4899 = vmatpush.msra.mxu0 0.0
      %4900 = vmatpush.msra.mxu0 0.0
      %4901 = vmatpush.msra.mxu0 0.0
      %4902 = vmatpush.msra.mxu0 0.0
      %4903 = vmatpush.msra.mxu0 0.0
      %4904 = vmatpush.msra.mxu0 0.0
      %4905 = vmatpush.msra.mxu0 0.0
      %4906 = vmatpush.msra.mxu0 0.0
      %4907 = vmatpush.msra.mxu0 0.0
      %4908 = vmatpush.msra.mxu0 0.0
      %4909 = vmatpush.msra.mxu0 %v4882
      %4910 = vmatpush.msra.mxu0 %v4881
      %4911 = vmatpush.msra.mxu0 %v4880
      %4912 = vmatpush.msra.mxu0 %v4879
      %4913 = vmatmul.f32.gmra.mxu0 %v4889
      %v4914 = vpop.f32.mrf.mxu0
      %v4915 = vadd.f32 %v4886, %v4914
      %4916 = vmatmul.f32.gmra.mxu0 %v4892
      %v4917 = vpop.f32.mrf.mxu0
      %v4918 = vadd.f32 %v4886, %v4917
      %4919 = vmatmul.f32.gmra.mxu0 %v4895
      %v4920 = vpop.f32.mrf.mxu0
      %v4921 = vadd.f32 %v4886, %v4920
      %4922 = vdwg.mxu0
      %v4923 = vmul.f32 %v4915, 1.702
      %v4924 = vmul.f32 %v4918, 1.702
      %v4925 = vmul.f32 %v4921, 1.702
      %v4926 = vxor.u32 %v4923, 2147483648
      %v4927 = vxor.u32 %v4924, 2147483648
      %v4928 = vxor.u32 %v4925, 2147483648
      %v4929 = vmul.f32 %v4926, 1.442695
      %v4930 = vpow.pop %v4929
      %v4931 = vmul.f32 %v4927, 1.442695
      %v4932 = vpow.pop %v4931
      %v4933 = vmul.f32 %v4928, 1.442695
      %v4934 = vpow.pop %v4933
      %v4935 = vadd.f32 %v4930, 1.0
      %v4936 = vadd.f32 %v4932, 1.0
      %v4937 = vadd.f32 %v4934, 1.0
      %v4938 = vrcp.pop %v4935
      %v4939 = vmul.f32 %v4935, %v4938
      %v4940 = vsub.f32 1.0, %v4939
      %v4941 = vmul.f32 %v4938, %v4940
      %v4942 = vadd.f32 %v4938, %v4941
      %vm4943 = vweird.f32 %v4935
      %vm4944 = vweird.f32 %v4938
      %vm4945 = vmor %vm4943, %vm4944
      %v4946 = vsel %vm4945, %v4938, %v4942
      %v4947 = vand.u32 2147483647, %v4935
      %vm4948 = vcmp.eq.f32.partialorder %v4947, 8.507059e+37
      %v4949 = vand.u32 %v4935, 2147483648
      %v4950 = vor.u32 1.1754944e-38, %v4949
      %v4951 = vsel %vm4948, %v4950, %v4946
      %v4952 = vmul.f32 1.0, %v4951
      %v4953 = vrcp.pop %v4936
      %v4954 = vmul.f32 %v4936, %v4953
      %v4955 = vsub.f32 1.0, %v4954
      %v4956 = vmul.f32 %v4953, %v4955
      %v4957 = vadd.f32 %v4953, %v4956
      %vm4958 = vweird.f32 %v4936
      %vm4959 = vweird.f32 %v4953
      %vm4960 = vmor %vm4958, %vm4959
      %v4961 = vsel %vm4960, %v4953, %v4957
      %v4962 = vand.u32 2147483647, %v4936
      %vm4963 = vcmp.eq.f32.partialorder %v4962, 8.507059e+37
      %v4964 = vand.u32 %v4936, 2147483648
      %v4965 = vor.u32 1.1754944e-38, %v4964
      %v4966 = vsel %vm4963, %v4965, %v4961
      %v4967 = vmul.f32 1.0, %v4966
      %v4968 = vrcp.pop %v4937
      %v4969 = vmul.f32 %v4937, %v4968
      %v4970 = vsub.f32 1.0, %v4969
      %v4971 = vmul.f32 %v4968, %v4970
      %v4972 = vadd.f32 %v4968, %v4971
      %vm4973 = vweird.f32 %v4937
      %vm4974 = vweird.f32 %v4968
      %vm4975 = vmor %vm4973, %vm4974
      %v4976 = vsel %vm4975, %v4968, %v4972
      %v4977 = vand.u32 2147483647, %v4937
      %vm4978 = vcmp.eq.f32.partialorder %v4977, 8.507059e+37
      %v4979 = vand.u32 %v4937, 2147483648
      %v4980 = vor.u32 1.1754944e-38, %v4979
      %v4981 = vsel %vm4978, %v4980, %v4976
      %v4982 = vmul.f32 1.0, %v4981
      %v4983 = vmul.f32 %v4915, %v4952
      %v4984 = vmul.f32 %v4918, %v4967
      %v4985 = vmul.f32 %v4921, %v4982
      %s4986 = scalar_lea.vmem %s49, 256
      %v4987 = vld [vmem:[%s4986] sm:$0xff]
      %v4988 = vld [vmem:[%s4986 + $0x8] sm:$0xff]
      %v4989 = vld [vmem:[%s4986 + $0x10] sm:$0xff]
      %v4990 = vld [vmem:[%s4986 + $0x18] sm:$0xff]
      %v4991 = vld [vmem:[%s4986 + $0x20] sm:$0xff]
      %v4992 = vld [vmem:[%s4986 + $0x28] sm:$0xff]
      %v4993 = vld [vmem:[%s4986 + $0x30] sm:$0xff]
      %v4994 = vld [vmem:[%s4986 + $0x38] sm:$0xff]
      %v4995 = vld [vmem:[%s4986 + $0x40] sm:$0xff]
      %v4996 = vld [vmem:[%s4986 + $0x48] sm:$0xff]
      %v4997 = vld [vmem:[%s4986 + $0x50] sm:$0xff]
      %v4998 = vld [vmem:[%s4986 + $0x58] sm:$0xff]
      %v4999 = vld [vmem:[%s4986 + $0x60] sm:$0xff]
      %v5000 = vld [vmem:[%s4986 + $0x68] sm:$0xff]
      %v5001 = vld [vmem:[%s4986 + $0x70] sm:$0xff]
      %v5002 = vld [vmem:[%s4986 + $0x78] sm:$0xff]
      %5003 = vmatpush.msra.mxu0 %v5002
      %5004 = vmatpush.msra.mxu0 %v5001
      %5005 = vmatpush.msra.mxu0 %v5000
      %5006 = vmatpush.msra.mxu0 %v4999
      %5007 = vmatpush.msra.mxu0 %v4998
      %5008 = vmatpush.msra.mxu0 %v4997
      %5009 = vmatpush.msra.mxu0 %v4996
      %5010 = vmatpush.msra.mxu0 %v4995
      %5011 = vmatpush.msra.mxu0 %v4994
      %5012 = vmatpush.msra.mxu0 %v4993
      %5013 = vmatpush.msra.mxu0 %v4992
      %5014 = vmatpush.msra.mxu0 %v4991
      %5015 = vmatpush.msra.mxu0 %v4990
      %5016 = vmatpush.msra.mxu0 %v4989
      %5017 = vmatpush.msra.mxu0 %v4988
      %5018 = vmatpush.msra.mxu0 %v4987
      %5019 = vmatmul.f32.gmra.mxu0 %v4983
      %v5020 = vpop.f32.mrf.mxu0
      %v5021 = vadd.f32 0.0, %v5020
      %5022 = vmatmul.f32.gmra.mxu0 %v4984
      %v5023 = vpop.f32.mrf.mxu0
      %5024 = vmatmul.f32.gmra.mxu0 %v4985
      %v5025 = vpop.f32.mrf.mxu0
      %5026 = vdwg.mxu0
      %v5027 = vadd.f32 %v4793, %v5021
      %s5028 = scalar_lea.vmem %s51, 2
      %v5029 = vld [vmem:[%s5028] sm:$0x1]
      %v5031 = vperm.slane %v5029, 0
      %v5033 = vadd.f32 %v5027, %v5031
      %v5034 = vld [vmem:[%s53] sm:$0x1]
      %v5035 = vld [vmem:[%s55] sm:$0x1]
      %v5036 = vsel %vm988, %v5033, 0.0
      %5037 = vadd.xlane.f32.xlu0 %v5036
      %v5038 = vpop.xlane.xlu0 %5037
      %v5039 = vmul.f32 %v5038, %v1068
      %v5040 = vsub.f32 %v5033, %v5039
      %v5041 = vmul.f32 %v5040, %v5040
      %v5042 = vsel %vm988, %v5041, 0.0
      %5043 = vadd.xlane.f32.xlu0 %v5042
      %v5044 = vpop.xlane.xlu0 %5043
      %v5045 = vmul.f32 %v5044, %v1068
      %v5046 = vadd.f32 %v5045, 1e-05
      %v5047 = vrsqrt.pop %v5046
      %v5048 = vmul.f32 %v5047, %v5046
      %v5049 = vmul.f32 %v5048, %v5047
      %v5050 = vmul.f32 0.5, %v5049
      %v5051 = vsub.f32 1.5, %v5050
      %v5052 = vmul.f32 %v5047, %v5051
      %vm5053 = vweird.f32 %v5046
      %vm5054 = vweird.f32 %v5047
      %vm5055 = vmor %vm5053, %vm5054
      %v5056 = vsel %vm5055, %v5047, %v5052
      %v5057 = vmul.f32 %v5040, %v5056
      %v5058 = vmul.f32 %v5057, %v5034
      %v5059 = vadd.f32 %v5058, %v5035
      %v5060 = vld [vmem:[%s57] sm:$0xff]
      %v5061 = vld [vmem:[%s57 + $0x8] sm:$0xff]
      %v5062 = vld [vmem:[%s57 + $0x10] sm:$0xff]
      %v5063 = vld [vmem:[%s57 + $0x18] sm:$0xff]
      %v5065 = vsel %vm1045, %v5059, 0
      %5067 = vmatpush.msra.mxu0 0.0
      %5068 = vmatpush.msra.mxu0 0.0
      %5069 = vmatpush.msra.mxu0 0.0
      %5070 = vmatpush.msra.mxu0 0.0
      %5071 = vmatpush.msra.mxu0 0.0
      %5072 = vmatpush.msra.mxu0 0.0
      %5073 = vmatpush.msra.mxu0 0.0
      %5074 = vmatpush.msra.mxu0 0.0
      %5075 = vmatpush.msra.mxu0 0.0
      %5076 = vmatpush.msra.mxu0 0.0
      %5077 = vmatpush.msra.mxu0 0.0
      %5078 = vmatpush.msra.mxu0 0.0
      %5079 = vmatpush.msra.mxu0 %v5063
      %5080 = vmatpush.msra.mxu0 %v5062
      %5081 = vmatpush.msra.mxu0 %v5061
      %5082 = vmatpush.msra.mxu0 %v5060
      %5083 = vmatmul.f32.gmra.mxu0 %v5065
      %v5084 = vpop.f32.mrf.mxu0
      %v5085 = vadd.f32 0.0, %v5084
      %5086 = vdwg.mxu0
      %v5087 = vld [vmem:[%s59] sm:$0xff]
      %v5088 = vld [vmem:[%s59 + $0x8] sm:$0xff]
      %v5089 = vld [vmem:[#allocation4] sm:$0x1]
      %vm5090 = vcmask 130048
      %v5092 = vsel %vm5090, %v5085, 0
      %5094 = vmatpush.msra.mxu0 0.0
      %5095 = vmatpush.msra.mxu0 0.0
      %5096 = vmatpush.msra.mxu0 0.0
      %5097 = vmatpush.msra.mxu0 0.0
      %5098 = vmatpush.msra.mxu0 0.0
      %5099 = vmatpush.msra.mxu0 0.0
      %5100 = vmatpush.msra.mxu0 0.0
      %5101 = vmatpush.msra.mxu0 0.0
      %5102 = vmatpush.msra.mxu0 0.0
      %5103 = vmatpush.msra.mxu0 0.0
      %5104 = vmatpush.msra.mxu0 0.0
      %5105 = vmatpush.msra.mxu0 0.0
      %5106 = vmatpush.msra.mxu0 0.0
      %5107 = vmatpush.msra.mxu0 0.0
      %5108 = vmatpush.msra.mxu0 %v5088
      %5109 = vmatpush.msra.mxu0 %v5087
      %5110 = vmatmul.f32.gmra.mxu0 %v5092
      %v5111 = vpop.f32.mrf.mxu0
      %v5112 = vadd.f32 %v5089, %v5111
      %5113 = vdwg.mxu0
      %vm5114 = vcmask 0
      %5115 = vst.msk [vmem:[%s956] sm:$0x1] %vm5114, %v5112
      %p5116 = scmp.lt.s32.totalorder %s76, 1
      %s5117 = scalar_select %p5116, %s76, 1
      %s5118 = scalar_lea.vmem %s63, %s5117
      // Predicated region
      $region145: #{vlm_detector_forward.1} parent=143 // pred_check
        %p5119 = pneg %p750
      $region146: #{vlm_detector_forward.1} parent=143 // pred_check_branch
        %5121 = sbr.rel (%p5119) target = $region148
      $region147: #{vlm_detector_forward.1} parent=143 // pred_region
        _
      $region148: #{vlm_detector_forward.1} parent=143 // pred_fallthru
        _
    $region144: #{vlm_detector_forward.1} parent=5 // pred_fallthru
      _
    %p5122 = scmp.le.s32.totalorder 2, %s71
    // Predicated region
    $region149: #{vlm_detector_forward.1} parent=5 // pred_check
      %p5123 = pneg %p5122
    $region150: #{vlm_detector_forward.1} parent=5 // pred_check_branch
      %5125 = sbr.rel (%p5123) target = $region152
    $region151: #{vlm_detector_forward.1} parent=5 // pred_region
      %s5126 = ssub.s32 %s71, 2
      // Predicated region
      $region153: #{vlm_detector_forward.1} parent=151 // pred_check
        %p5127 = pneg %p756
      $region154: #{vlm_detector_forward.1} parent=151 // pred_check_branch
        %5129 = sbr.rel (%p5127) target = $region156
      $region155: #{vlm_detector_forward.1} parent=151 // pred_region
        %p5130 = scmp.lt.s32.totalorder %s77, 1
        %s5131 = scalar_select %p5130, %s77, 1
        %s5132 = scalar_lea.vmem %s63, %s5131
      $region156: #{vlm_detector_forward.1} parent=151 // pred_fallthru
        _
    $region152: #{vlm_detector_forward.1} parent=5 // pred_fallthru
      _
  $region6: #{vlm_detector_forward.1} parent=0 // loop_footer
    %s75 = sadd.s32 1, %s71
  $region7: #{vlm_detector_forward.1} parent=0 // loop_footer_branch
    %70 = sbr.rel target = $region3
  $region8: #{vlm_detector_forward.1} parent=0 // loop_exit
    _

</llo_original>
